<compile_context>
chip_gen: v6e
topology: v6e:2x2x1
jax: 0.10.0
libtpu: 0.0.40
codegen_flags: <defaults>
</compile_context>

<pallas_src>
import math

import jax
import jax.numpy as jnp
import numpy as np
from jax import lax
from jax.experimental import pallas as pl
from jax.experimental.pallas import tpu as pltpu


def _round_up(x, m):
    return (x + m - 1) // m * m


def _pick_time_chunk(T, time_chunk):
    """Largest chunk <= time_chunk, preferring one that divides T exactly so no
    padded timesteps run.  Falls back to padding (harmless: mask == 0 there) if
    T only has tiny divisors (keeps the hoisted chunk matmuls wide)."""
    tc = min(T, time_chunk)
    for cand in range(tc, 0, -1):
        if T % cand == 0:
            if cand >= max(1, tc // 2):
                tc = cand
            break
    return tc


def _mgru_kernel(x_ref,
                 wdT_ref, bd_ref,      # fused temporal decay    (chunk-hoisted)
                 wmT_ref, bm_ref,      # fused m-consuming       (chunk-hoisted)
                 wbTa_ref,             # beta, gamma_x part      (chunk-hoisted)
                 wcTb_ref, bc_ref,     # concat, r part + bias   (chunk-hoisted)
                 woT_ref, bo_ref,      # output layer            (per step)
                 wcTa_ref,             # concat, x_c part        (per step)
                 wzT_ref, bz_ref,      # FeatureRegression       (per step)
                 wihTa_ref,            # GRU ih, c_c part        (per step)
                 whhT_ref, bhh_ref,    # GRU hh                  (per step)
                 chat_ref, imp_ref, loss_ref,
                 hid_ref, lacc_ref,
                 gh_scr, beta_scr, gim_scr, rwc_scr, ms_scr):
    c = pl.program_id(0)
    n_chunks = pl.num_programs(0)
    Tc = x_ref.shape[1]
    Bp = x_ref.shape[2]
    Dp = x_ref.shape[3]
    Hp = whhT_ref.shape[0]
    TB = Tc * Bp

    @pl.when(c == 0)
    def _():
        hid_ref[...] = jnp.zeros_like(hid_ref)
        lacc_ref[...] = jnp.zeros_like(lacc_ref)

    mm = woT_ref.dtype  # bf16: MXU-native operands, f32 accumulation

    def dot(a, b):
        return jnp.dot(a.astype(mm), b, preferred_element_type=jnp.float32)

    # ---- Chunk-hoisted, time-invariant work: fat M = Tc*Bp matmuls ----------
    d_all = x_ref[1].reshape(TB, Dp)
    m3 = x_ref[2]                                    # [Tc, Bp, Dp]
    m_all = m3.reshape(TB, Dp)
    r_all = x_ref[3].reshape(TB, Dp)

    # [gamma_x | gamma_h] = exp(-relu(d @ [WxT | WhT] + [bx | bh]))
    gamma = jnp.exp(-jnp.maximum(dot(d_all, wdT_ref[...]) + bd_ref[...], 0.0))
    gh_scr[...] = gamma[:, Dp:].reshape(Tc, Bp, Hp)

    # m @ [Wb_mT | Wih_mT] + [bb | bih]  (beta m-part | GRU-ih m-part)
    m_out = dot(m_all, wmT_ref[...]) + bm_ref[...]
    gim_scr[...] = m_out[:, Dp:].reshape(Tc, Bp, 3 * Hp)
    beta_scr[...] = jax.nn.sigmoid(dot(gamma[:, :Dp], wbTa_ref[...])
                                   + m_out[:, :Dp]).reshape(Tc, Bp, Dp)

    # concat_lyaer r contribution, bias bc folded in.
    rwc_scr[...] = (dot(r_all, wcTb_ref[...]) + bc_ref[...]).reshape(Tc, Bp, Dp)

    # Per-timestep mask scale m / (sum(m) + 1e-5): one lane reduce + one
    # sublane reduce per chunk, approximate reciprocal on the EUP.
    msum = jnp.sum(jnp.sum(m3, axis=2, keepdims=True), axis=1, keepdims=True)
    ms_scr[...] = m3 * pl.reciprocal(msum + 1e-5, approx=True)

    # ---- Per-step weights: load once, pre-broadcast biases (no per-iter bcast)
    woT = woT_ref[...]
    wcTa = wcTa_ref[...]
    wzT = wzT_ref[...]
    wihTa = wihTa_ref[...]
    whhT = whhT_ref[...]
    bo = jnp.broadcast_to(bo_ref[...], (Bp, Dp))
    bz = jnp.broadcast_to(bz_ref[...], (Bp, Dp))
    bhh = jnp.broadcast_to(bhh_ref[...], (Bp, 3 * Hp))

    def step(i, carry):
        hid, lacc = carry
        v = x_ref[0, i]                 # [Bp, Dp]
        m = x_ref[2, i]
        gamma_h = gh_scr[i]
        beta = beta_scr[i]
        gi_m = gim_scr[i]
        rwc = rwc_scr[i]
        mscale = ms_scr[i]

        mv = m * v
        om = 1.0 - m

        x_hat = dot(hid, woT) + bo
        x_c = mv + om * x_hat
        concat_hat = dot(x_c, wcTa) + rwc            # bc already folded into rwc
        a_c = mv + om * concat_hat
        z_hat = dot(a_c, wzT) + bz
        c_hat = beta * z_hat + (1.0 - beta) * x_hat
        c_c = mv + om * c_hat

        # Deferred loss: elementwise accumulate, scaled by m/denom; reduced to
        # a scalar only once, at the last grid step.
        err = (jnp.abs(v - x_hat) + jnp.abs(v - concat_hat)
               + jnp.abs(v - z_hat) + jnp.abs(v - c_hat))
        lacc = lacc + err * mscale

        chat_ref[i] = c_hat
        imp_ref[i] = c_c

        # GRUCell(cat([c_c, m]), hid * gamma_h) — PyTorch gate order (r, z, n).
        h_prev = hid * gamma_h
        gi = dot(c_c, wihTa) + gi_m
        gh = dot(h_prev, whhT) + bhh
        rg = jax.nn.sigmoid(gi[:, 0:Hp] + gh[:, 0:Hp])      # 128-lane aligned views
        zg = jax.nn.sigmoid(gi[:, Hp:2 * Hp] + gh[:, Hp:2 * Hp])
        ng = jnp.tanh(gi[:, 2 * Hp:] + rg * gh[:, 2 * Hp:])
        hid_new = (1.0 - zg) * ng + zg * h_prev
        return hid_new, lacc

    hid, lacc = lax.fori_loop(0, Tc, step, (hid_ref[...], lacc_ref[...]),
                              unroll=True)
    hid_ref[...] = hid
    lacc_ref[...] = lacc

    @pl.when(c == n_chunks - 1)
    def _():
        loss_ref[...] = jnp.reshape(jnp.sum(lacc), (1, 1))


def init_params(key, input_size, hidden_size):
    D, H = input_size, hidden_size
    ks = jax.random.split(key, 16)

    def u(k, shape, bound):
        return jax.random.uniform(k, shape, jnp.float32, -bound, bound)

    p = {}
    # TemporalDecay(D -> D) and (D -> H): stdv = 1/sqrt(output_size)
    p["wx"] = u(ks[0], (D, D), 1.0 / math.sqrt(D)); p["bx"] = u(ks[1], (D,), 1.0 / math.sqrt(D))
    p["wh"] = u(ks[2], (H, D), 1.0 / math.sqrt(H)); p["bh"] = u(ks[3], (H,), 1.0 / math.sqrt(H))
    # output_layer: Linear(H -> D)
    p["wo"] = u(ks[4], (D, H), 1.0 / math.sqrt(H)); p["bo"] = u(ks[5], (D,), 1.0 / math.sqrt(H))
    # concat_lyaer: Linear(2D -> D)
    p["wc"] = u(ks[6], (D, 2 * D), 1.0 / math.sqrt(2 * D)); p["bc"] = u(ks[7], (D,), 1.0 / math.sqrt(2 * D))
    # z_layer: FeatureRegression(D)
    p["wz"] = u(ks[8], (D, D), 1.0 / math.sqrt(D)); p["bz"] = u(ks[9], (D,), 1.0 / math.sqrt(D))
    # beta_layer: Linear(2D -> D)
    p["wb"] = u(ks[10], (D, 2 * D), 1.0 / math.sqrt(2 * D)); p["bb"] = u(ks[11], (D,), 1.0 / math.sqrt(2 * D))
    # GRUCell(2D, H)
    gb = 1.0 / math.sqrt(H)
    p["wih"] = u(ks[12], (3 * H, 2 * D), gb); p["bih"] = u(ks[13], (3 * H,), gb)
    p["whh"] = u(ks[14], (3 * H, H), gb); p["bhh"] = u(ks[15], (3 * H,), gb)
    return p


def mgru_rbf_forward(inp, params, hidden_size, *, time_chunk=16):
    # inp: [B, 4, T, D] (matches PyTorch input[:, k] indexing), float32
    B, C, T, D = inp.shape
    assert C == 4
    H = hidden_size
    f32 = jnp.float32
    bf16 = jnp.bfloat16

    Dp = _round_up(D, 128)
    Hp = _round_up(H, 128)
    Bp = _round_up(B, 8)
    Tc = _pick_time_chunk(T, time_chunk)
    Tp = _round_up(T, Tc)
    n_chunks = Tp // Tc

    # Fused, padded, stream-major data: [4, Tp, Bp, Dp] (contiguous per-stream
    # chunk loads for the hoisted matmuls).
    x = jnp.transpose(inp.astype(f32), (1, 2, 0, 3))             # [4, T, B, D]
    xp = jnp.zeros((4, Tp, Bp, Dp), f32).at[:, :T, :B, :D].set(x)

    def pad2(a, rows, cols):
        return jnp.zeros((rows, cols), f32).at[:a.shape[0], :a.shape[1]].set(a)

    def pad_row(b, cols):
        return pad2(b.reshape(1, -1), 1, cols)

    def pad_gate_cols(a, rows):
        # a: [r, 3H] -> [rows, 3*Hp], each gate slab placed at a 128-aligned slot.
        out = jnp.zeros((rows, 3 * Hp), f32)
        for g in range(3):
            out = out.at[:a.shape[0], g * Hp:g * Hp + H].set(a[:, g * H:(g + 1) * H])
        return out

    # Fused temporal-decay weight: d @ [WxT | WhT] + [bx | bh].
    wxT = pad2(params["wx"].T, Dp, Dp)
    whT = pad2(params["wh"].T, Dp, Hp)
    wdT = jnp.concatenate([wxT, whT], axis=1).astype(bf16)       # [Dp, Dp+Hp]
    bd = jnp.concatenate([pad_row(params["bx"], Dp),
                          pad_row(params["bh"], Hp)], axis=1)    # [1, Dp+Hp] f32

    woT = pad2(params["wo"].T, Hp, Dp).astype(bf16)
    bo = pad_row(params["bo"], Dp)

    wcT = params["wc"].T                                         # [2D, D]
    wcTa = pad2(wcT[:D], Dp, Dp).astype(bf16)                    # x_c part
    wcTb = pad2(wcT[D:], Dp, Dp).astype(bf16)                    # r part (hoisted)
    bc = pad_row(params["bc"], Dp)

    wz_masked = params["wz"] * (1.0 - jnp.eye(D, dtype=f32))     # FeatureRegression diag mask
    wzT = pad2(wz_masked.T, Dp, Dp).astype(bf16)
    bz = pad_row(params["bz"], Dp)

    wbT = params["wb"].T                                         # [2D, D]
    wbTa = pad2(wbT[:D], Dp, Dp).astype(bf16)                    # gamma_x part (hoisted)
    wbTb = pad2(wbT[D:], Dp, Dp)                                 # m part (fused below)

    wihT = params["wih"].T                                       # [2D, 3H]
    wihTa = pad_gate_cols(wihT[:D], Dp).astype(bf16)             # c_c part [Dp, 3Hp]
    wihTb = pad_gate_cols(wihT[D:], Dp)                          # m part (fused below)
    bih = pad_gate_cols(params["bih"].reshape(1, -1), 1)         # [1, 3Hp]

    # Fused m-consuming matmul: m @ [WbTb | WihTb] + [bb | bih]  (hoisted).
    wmT = jnp.concatenate([wbTb, wihTb], axis=1).astype(bf16)    # [Dp, Dp+3Hp]
    bm = jnp.concatenate([pad_row(params["bb"], Dp), bih], axis=1)

    whhT = pad_gate_cols(params["whh"].T, Hp).astype(bf16)       # [Hp, 3Hp]
    bhh = pad_gate_cols(params["bhh"].reshape(1, -1), 1)         # [1, 3Hp]

    weights = [wdT, bd, wmT, bm, wbTa, wcTb, bc,
               woT, bo, wcTa, wzT, bz, wihTa, whhT, bhh]

    data_spec = pl.BlockSpec((4, Tc, Bp, Dp), lambda c: (0, c, 0, 0))

    def full_spec(arr):
        # Weights are grid-invariant (constant index map).  For large D/H on
        # v7x (64 MiB VMEM), consider pipeline_mode=pl.Buffered(1) here and an
        # explicit vmem_limit_bytes; bf16 weights already halve the footprint.
        nd = arr.ndim
        return pl.BlockSpec(arr.shape, lambda c, _nd=nd: (0,) * _nd)

    grid_spec = pltpu.PrefetchScalarGridSpec(
        num_scalar_prefetch=0,
        grid=(n_chunks,),
        in_specs=[data_spec] + [full_spec(w) for w in weights],
        out_specs=[
            pl.BlockSpec((Tc, Bp, Dp), lambda c: (c, 0, 0)),     # c_hat (lane-dense)
            pl.BlockSpec((Tc, Bp, Dp), lambda c: (c, 0, 0)),     # imputations
            pl.BlockSpec((1, 1), lambda c: (0, 0)),              # loss
        ],
        scratch_shapes=[
            pltpu.VMEM((Bp, Hp), f32),            # hidden state (persists across chunks)
            pltpu.VMEM((Bp, Dp), f32),            # elementwise loss accumulator
            pltpu.VMEM((Tc, Bp, Hp), f32),        # gamma_h       (chunk-hoisted)
            pltpu.VMEM((Tc, Bp, Dp), f32),        # beta          (chunk-hoisted)
            pltpu.VMEM((Tc, Bp, 3 * Hp), f32),    # GRU-ih m part (chunk-hoisted)
            pltpu.VMEM((Tc, Bp, Dp), f32),        # r@Wc + bc     (chunk-hoisted)
            pltpu.VMEM((Tc, Bp, Dp), f32),        # mask scale m/(sum(m)+eps)
        ],
    )

    # Note: the recurrence is serial in T; for B >= 16 on v7x a leading
    # "parallel" batch-block grid axis (with per-block hid/lacc scratch) would
    # shard the batch across the two TensorCores.  No-op at the demo B=8.
    chat_tm, imp_tm, loss = pl.pallas_call(
        _mgru_kernel,
        out_shape=(
            jax.ShapeDtypeStruct((Tp, Bp, Dp), f32),
            jax.ShapeDtypeStruct((Tp, Bp, Dp), f32),
            jax.ShapeDtypeStruct((1, 1), f32),
        ),
        grid_spec=grid_spec,
        compiler_params=pltpu.CompilerParams(
            dimension_semantics=("arbitrary",)),
    )(xp, *weights)

    c_hat_list = jnp.transpose(chat_tm[:T, :B, :D], (1, 0, 2))   # [B, T, D]
    imputations = jnp.transpose(imp_tm[:T, :B, :D], (1, 0, 2))   # [B, T, D]
    x_loss = loss[0, 0] * 5.0
    return c_hat_list, imputations, x_loss


def mgru_rbf_reference(inp, params, hidden_size):
    # Pure-JAX mirror of the PyTorch forward (f32, HIGHEST precision), for checking.
    B, _, T, D = inp.shape
    H = hidden_size
    f32 = jnp.float32
    hi = jax.lax.Precision.HIGHEST
    values, delta, masks, rbfs = (inp[:, k].astype(f32) for k in range(4))
    wz_m = params["wz"] * (1.0 - jnp.eye(D, dtype=f32))

    def lin(x, w, b):
        return jnp.dot(x, w.T, precision=hi) + b

    hid = jnp.zeros((B, H), f32)
    x_loss = 0.0
    chats, imps = [], []
    for i in range(T):
        v, d, m, r = values[:, i], delta[:, i], masks[:, i], rbfs[:, i]
        gamma_x = jnp.exp(-jnp.maximum(lin(d, params["wx"], params["bx"]), 0.0))
        gamma_h = jnp.exp(-jnp.maximum(lin(d, params["wh"], params["bh"]), 0.0))
        x_hat = lin(hid, params["wo"], params["bo"])
        denom = jnp.sum(m) + 1e-5
        x_loss += jnp.sum(jnp.abs(v - x_hat) * m) / denom
        x_c = m * v + (1 - m) * x_hat
        concat_hat = lin(jnp.concatenate([x_c, r], axis=1), params["wc"], params["bc"])
        x_loss += jnp.sum(jnp.abs(v - concat_hat) * m) / denom
        a_c = m * v + (1 - m) * concat_hat
        z_hat = lin(a_c, wz_m, params["bz"])
        x_loss += jnp.sum(jnp.abs(v - z_hat) * m) / denom
        beta = jax.nn.sigmoid(lin(jnp.concatenate([gamma_x, m], axis=1),
                                  params["wb"], params["bb"]))
        c_hat = beta * z_hat + (1 - beta) * x_hat
        x_loss += jnp.sum(jnp.abs(v - c_hat) * m) / denom
        c_c = m * v + (1 - m) * c_hat
        chats.append(c_hat)
        imps.append(c_c)
        h_prev = hid * gamma_h
        gi = lin(jnp.concatenate([c_c, m], axis=1), params["wih"], params["bih"])
        gh = lin(h_prev, params["whh"], params["bhh"])
        rg = jax.nn.sigmoid(gi[:, :H] + gh[:, :H])
        zg = jax.nn.sigmoid(gi[:, H:2 * H] + gh[:, H:2 * H])
        ng = jnp.tanh(gi[:, 2 * H:] + rg * gh[:, 2 * H:])
        hid = (1 - zg) * ng + zg * h_prev
    return jnp.stack(chats, 1), jnp.stack(imps, 1), x_loss * 5.0


if __name__ == "__main__":
    B, D, H, T = 8, 16, 32, 8

    key = jax.random.PRNGKey(0)
    k_par, k_v, k_d, k_m, k_r = jax.random.split(key, 5)

    params = init_params(k_par, D, H)

    values = jax.random.normal(k_v, (B, T, D), jnp.float32)
    delta = jnp.abs(jax.random.normal(k_d, (B, T, D), jnp.float32))
    masks = (jax.random.uniform(k_m, (B, T, D)) > 0.3).astype(jnp.float32)
    rbfs = jax.random.normal(k_r, (B, T, D), jnp.float32)
    inp = jnp.stack([values, delta, masks, rbfs], axis=1)  # [B, 4, T, D]

    c_hat_list, imputations, x_loss = jax.block_until_ready(
        jax.jit(mgru_rbf_forward, static_argnums=2)(inp, params, H))

    assert c_hat_list.shape == (B, T, D)
    assert imputations.shape == (B, T, D)
    assert np.isfinite(np.asarray(c_hat_list)).all()
    assert np.isfinite(np.asarray(imputations)).all()
    assert np.isfinite(float(x_loss))

    # Numerical check against a pure-JAX reference of the PyTorch forward.
    # Kernel matmuls use bf16 operands with f32 accumulation (MXU-native on
    # v5e/v6e/v7x); tolerance reflects bf16 operand quantization compounded
    # through the T-step hidden-state recurrence vs the f32 HIGHEST reference.
    ref_c, ref_i, ref_l = jax.jit(mgru_rbf_reference, static_argnums=2)(inp, params, H)
    tol = 2e-2
    np.testing.assert_allclose(np.asarray(c_hat_list), np.asarray(ref_c),
                               rtol=tol, atol=tol)
    np.testing.assert_allclose(np.asarray(imputations), np.asarray(ref_i),
                               rtol=tol, atol=tol)
    np.testing.assert_allclose(float(x_loss), float(ref_l), rtol=tol, atol=tol)

    print("KERNEL_OK")
</pallas_src>

<mosaic_0001>
module attributes {stable_mosaic.version = 11 : i64} {
  func.func @_mgru_kernel(%arg0: i32, %arg1: memref<4x8x8x128xf32, #tpu.memory_space<vmem>>, %arg2: memref<128x256xbf16, #tpu.memory_space<vmem>>, %arg3: memref<1x256xf32, #tpu.memory_space<vmem>>, %arg4: memref<128x512xbf16, #tpu.memory_space<vmem>>, %arg5: memref<1x512xf32, #tpu.memory_space<vmem>>, %arg6: memref<128x128xbf16, #tpu.memory_space<vmem>>, %arg7: memref<128x128xbf16, #tpu.memory_space<vmem>>, %arg8: memref<1x128xf32, #tpu.memory_space<vmem>>, %arg9: memref<128x128xbf16, #tpu.memory_space<vmem>>, %arg10: memref<1x128xf32, #tpu.memory_space<vmem>>, %arg11: memref<128x128xbf16, #tpu.memory_space<vmem>>, %arg12: memref<128x128xbf16, #tpu.memory_space<vmem>>, %arg13: memref<1x128xf32, #tpu.memory_space<vmem>>, %arg14: memref<128x384xbf16, #tpu.memory_space<vmem>>, %arg15: memref<128x384xbf16, #tpu.memory_space<vmem>>, %arg16: memref<1x384xf32, #tpu.memory_space<vmem>>, %arg17: memref<8x8x128xf32, #tpu.memory_space<vmem>>, %arg18: memref<8x8x128xf32, #tpu.memory_space<vmem>>, %arg19: memref<1x1xf32, #tpu.memory_space<vmem>>, %arg20: memref<8x128xf32, #tpu.memory_space<vmem>>, %arg21: memref<8x128xf32, #tpu.memory_space<vmem>>, %arg22: memref<8x8x128xf32, #tpu.memory_space<vmem>>, %arg23: memref<8x8x128xf32, #tpu.memory_space<vmem>>, %arg24: memref<8x8x384xf32, #tpu.memory_space<vmem>>, %arg25: memref<8x8x128xf32, #tpu.memory_space<vmem>>, %arg26: memref<8x8x128xf32, #tpu.memory_space<vmem>>) attributes {dimension_semantics = [#tpu.dimension_semantics<arbitrary>], iteration_bounds = array<i64: 1>, scalar_prefetch = 0 : i64, scratch_operands = 7 : i64, tpu.core_type = #tpu.core_type<tc>, window_params = [{transform_indices = @transform_0, window_bounds = array<i64: 4, 8, 8, 128>}, {pipeline_mode = #tpu.pipeline_mode<synchronous>, transform_indices = @transform_1, window_bounds = array<i64: 128, 256>}, {pipeline_mode = #tpu.pipeline_mode<synchronous>, transform_indices = @transform_2, window_bounds = array<i64: 1, 256>}, {pipeline_mode = #tpu.pipeline_mode<synchronous>, transform_indices = @transform_3, window_bounds = array<i64: 128, 512>}, {pipeline_mode = #tpu.pipeline_mode<synchronous>, transform_indices = @transform_4, window_bounds = array<i64: 1, 512>}, {pipeline_mode = #tpu.pipeline_mode<synchronous>, transform_indices = @transform_5, window_bounds = array<i64: 128, 128>}, {pipeline_mode = #tpu.pipeline_mode<synchronous>, transform_indices = @transform_6, window_bounds = array<i64: 128, 128>}, {pipeline_mode = #tpu.pipeline_mode<synchronous>, transform_indices = @transform_7, window_bounds = array<i64: 1, 128>}, {pipeline_mode = #tpu.pipeline_mode<synchronous>, transform_indices = @transform_8, window_bounds = array<i64: 128, 128>}, {pipeline_mode = #tpu.pipeline_mode<synchronous>, transform_indices = @transform_9, window_bounds = array<i64: 1, 128>}, {pipeline_mode = #tpu.pipeline_mode<synchronous>, transform_indices = @transform_10, window_bounds = array<i64: 128, 128>}, {pipeline_mode = #tpu.pipeline_mode<synchronous>, transform_indices = @transform_11, window_bounds = array<i64: 128, 128>}, {pipeline_mode = #tpu.pipeline_mode<synchronous>, transform_indices = @transform_12, window_bounds = array<i64: 1, 128>}, {pipeline_mode = #tpu.pipeline_mode<synchronous>, transform_indices = @transform_13, window_bounds = array<i64: 128, 384>}, {pipeline_mode = #tpu.pipeline_mode<synchronous>, transform_indices = @transform_14, window_bounds = array<i64: 128, 384>}, {pipeline_mode = #tpu.pipeline_mode<synchronous>, transform_indices = @transform_15, window_bounds = array<i64: 1, 384>}, {transform_indices = @transform_16, window_bounds = array<i64: 8, 8, 128>}, {transform_indices = @transform_17, window_bounds = array<i64: 8, 8, 128>}, {pipeline_mode = #tpu.pipeline_mode<synchronous>, transform_indices = @transform_18, window_bounds = array<i64: 1, 1>}]} {
    %c0_i32 = arith.constant 0 : i32
    %0 = arith.cmpi eq, %arg0, %c0_i32 : i32
    %1 = arith.extui %0 : i1 to i32
    %c0_i32_0 = arith.constant 0 : i32
    %2 = arith.cmpi ne, %1, %c0_i32_0 : i32
    scf.if %2 {
      %cst_314 = arith.constant 0.000000e+00 : f32
      %871 = vector.broadcast %cst_314 : f32 to vector<8x128xf32>
      %c0_315 = arith.constant 0 : index
      %c0_316 = arith.constant 0 : index
      %872 = vector.load %arg20[%c0_315, %c0_316] : memref<8x128xf32, #tpu.memory_space<vmem>>, vector<8x128xf32>
      tpu.vector_store %arg20[%c0_315, %c0_316], %871 {strides = array<i32>} : memref<8x128xf32, #tpu.memory_space<vmem>>, vector<8x128xf32>,
      %cst_317 = arith.constant 0.000000e+00 : f32
      %873 = vector.broadcast %cst_317 : f32 to vector<8x128xf32>
      %c0_318 = arith.constant 0 : index
      %c0_319 = arith.constant 0 : index
      %874 = vector.load %arg21[%c0_318, %c0_319] : memref<8x128xf32, #tpu.memory_space<vmem>>, vector<8x128xf32>
      tpu.vector_store %arg21[%c0_318, %c0_319], %873 {strides = array<i32>} : memref<8x128xf32, #tpu.memory_space<vmem>>, vector<8x128xf32>,
    } else {
    }
    %c1 = arith.constant 1 : index
    %c0 = arith.constant 0 : index
    %c0_1 = arith.constant 0 : index
    %c0_2 = arith.constant 0 : index
    %3 = vector.load %arg1[%c1, %c0, %c0_1, %c0_2] : memref<4x8x8x128xf32, #tpu.memory_space<vmem>>, vector<1x8x8x128xf32>
    %4 = vector.shape_cast %3 : vector<1x8x8x128xf32> to vector<8x8x128xf32>
    %5 = vector.shape_cast %4 : vector<8x8x128xf32> to vector<64x128xf32>
    %c2 = arith.constant 2 : index
    %c0_3 = arith.constant 0 : index
    %c0_4 = arith.constant 0 : index
    %c0_5 = arith.constant 0 : index
    %6 = vector.load %arg1[%c2, %c0_3, %c0_4, %c0_5] : memref<4x8x8x128xf32, #tpu.memory_space<vmem>>, vector<1x8x8x128xf32>
    %7 = vector.shape_cast %6 : vector<1x8x8x128xf32> to vector<8x8x128xf32>
    %8 = vector.shape_cast %7 : vector<8x8x128xf32> to vector<64x128xf32>
    %c3 = arith.constant 3 : index
    %c0_6 = arith.constant 0 : index
    %c0_7 = arith.constant 0 : index
    %c0_8 = arith.constant 0 : index
    %9 = vector.load %arg1[%c3, %c0_6, %c0_7, %c0_8] : memref<4x8x8x128xf32, #tpu.memory_space<vmem>>, vector<1x8x8x128xf32>
    %10 = vector.shape_cast %9 : vector<1x8x8x128xf32> to vector<8x8x128xf32>
    %11 = vector.shape_cast %10 : vector<8x8x128xf32> to vector<64x128xf32>
    %c0_9 = arith.constant 0 : index
    %c0_10 = arith.constant 0 : index
    %12 = vector.load %arg2[%c0_9, %c0_10] : memref<128x256xbf16, #tpu.memory_space<vmem>>, vector<128x256xbf16>
    %13 = arith.truncf %5 : vector<64x128xf32> to vector<64x128xbf16>
    %cst = arith.constant dense<0.000000e+00> : vector<64x256xf32>
    %14 = tpu.matmul %13, %12, %cst {dimension_numbers = #tpu.dot_dimension_numbers<[1], [0], [0], [1], [0, 0, 1, 1], [], []>} : vector<64x128xbf16>, vector<128x256xbf16>, vector<64x256xf32> -> vector<64x256xf32>
    %c0_11 = arith.constant 0 : index
    %c0_12 = arith.constant 0 : index
    %15 = vector.load %arg3[%c0_11, %c0_12] : memref<1x256xf32, #tpu.memory_space<vmem>>, vector<1x256xf32>
    %16 = vector.broadcast %15 : vector<1x256xf32> to vector<64x256xf32>
    %17 = arith.addf %14, %16 : vector<64x256xf32>
    %cst_13 = arith.constant 0.000000e+00 : f32
    %18 = vector.broadcast %cst_13 : f32 to vector<64x256xf32>
    %19 = arith.maximumf %17, %18 : vector<64x256xf32>
    %cst_14 = arith.constant 0.000000e+00 : f32
    %20 = vector.broadcast %cst_14 : f32 to vector<64x256xf32>
    %21 = arith.subf %20, %19 : vector<64x256xf32>
    %22 = math.exp %21 : vector<64x256xf32>
    %23 = vector.extract_strided_slice %22 {offsets = [0, 128], sizes = [64, 128], strides = [1, 1]} : vector<64x256xf32> to vector<64x128xf32>
    %24 = vector.shape_cast %23 : vector<64x128xf32> to vector<8x8x128xf32>
    %c0_15 = arith.constant 0 : index
    %c0_16 = arith.constant 0 : index
    %c0_17 = arith.constant 0 : index
    %25 = vector.load %arg22[%c0_15, %c0_16, %c0_17] : memref<8x8x128xf32, #tpu.memory_space<vmem>>, vector<8x8x128xf32>
    tpu.vector_store %arg22[%c0_15, %c0_16, %c0_17], %24 {strides = array<i32>} : memref<8x8x128xf32, #tpu.memory_space<vmem>>, vector<8x8x128xf32>,
    %c0_18 = arith.constant 0 : index
    %c0_19 = arith.constant 0 : index
    %26 = vector.load %arg4[%c0_18, %c0_19] : memref<128x512xbf16, #tpu.memory_space<vmem>>, vector<128x512xbf16>
    %27 = arith.truncf %8 : vector<64x128xf32> to vector<64x128xbf16>
    %cst_20 = arith.constant dense<0.000000e+00> : vector<64x512xf32>
    %28 = tpu.matmul %27, %26, %cst_20 {dimension_numbers = #tpu.dot_dimension_numbers<[1], [0], [0], [1], [0, 0, 1, 1], [], []>} : vector<64x128xbf16>, vector<128x512xbf16>, vector<64x512xf32> -> vector<64x512xf32>
    %c0_21 = arith.constant 0 : index
    %c0_22 = arith.constant 0 : index
    %29 = vector.load %arg5[%c0_21, %c0_22] : memref<1x512xf32, #tpu.memory_space<vmem>>, vector<1x512xf32>
    %30 = vector.broadcast %29 : vector<1x512xf32> to vector<64x512xf32>
    %31 = arith.addf %28, %30 : vector<64x512xf32>
    %32 = vector.extract_strided_slice %31 {offsets = [0, 128], sizes = [64, 384], strides = [1, 1]} : vector<64x512xf32> to vector<64x384xf32>
    %33 = vector.shape_cast %32 : vector<64x384xf32> to vector<8x8x384xf32>
    %c0_23 = arith.constant 0 : index
    %c0_24 = arith.constant 0 : index
    %c0_25 = arith.constant 0 : index
    %34 = vector.load %arg24[%c0_23, %c0_24, %c0_25] : memref<8x8x384xf32, #tpu.memory_space<vmem>>, vector<8x8x384xf32>
    tpu.vector_store %arg24[%c0_23, %c0_24, %c0_25], %33 {strides = array<i32>} : memref<8x8x384xf32, #tpu.memory_space<vmem>>, vector<8x8x384xf32>,
    %35 = vector.extract_strided_slice %22 {offsets = [0, 0], sizes = [64, 128], strides = [1, 1]} : vector<64x256xf32> to vector<64x128xf32>
    %c0_26 = arith.constant 0 : index
    %c0_27 = arith.constant 0 : index
    %36 = vector.load %arg6[%c0_26, %c0_27] : memref<128x128xbf16, #tpu.memory_space<vmem>>, vector<128x128xbf16>
    %37 = arith.truncf %35 : vector<64x128xf32> to vector<64x128xbf16>
    %cst_28 = arith.constant dense<0.000000e+00> : vector<64x128xf32>
    %38 = tpu.matmul %37, %36, %cst_28 {dimension_numbers = #tpu.dot_dimension_numbers<[1], [0], [0], [1], [0, 0, 1, 1], [], []>} : vector<64x128xbf16>, vector<128x128xbf16>, vector<64x128xf32> -> vector<64x128xf32>
    %39 = vector.extract_strided_slice %31 {offsets = [0, 0], sizes = [64, 128], strides = [1, 1]} : vector<64x512xf32> to vector<64x128xf32>
    %40 = arith.addf %38, %39 : vector<64x128xf32>
    %41 = arith.negf %40 : vector<64x128xf32>
    %42 = math.exp %41 : vector<64x128xf32>
    %cst_29 = arith.constant 1.000000e+00 : f32
    %43 = vector.broadcast %cst_29 : f32 to vector<64x128xf32>
    %44 = arith.addf %43, %42 : vector<64x128xf32>
    %45 = arith.divf %43, %44 : vector<64x128xf32>
    %46 = vector.shape_cast %45 : vector<64x128xf32> to vector<8x8x128xf32>
    %c0_30 = arith.constant 0 : index
    %c0_31 = arith.constant 0 : index
    %c0_32 = arith.constant 0 : index
    %47 = vector.load %arg23[%c0_30, %c0_31, %c0_32] : memref<8x8x128xf32, #tpu.memory_space<vmem>>, vector<8x8x128xf32>
    tpu.vector_store %arg23[%c0_30, %c0_31, %c0_32], %46 {strides = array<i32>} : memref<8x8x128xf32, #tpu.memory_space<vmem>>, vector<8x8x128xf32>,
    %c0_33 = arith.constant 0 : index
    %c0_34 = arith.constant 0 : index
    %48 = vector.load %arg7[%c0_33, %c0_34] : memref<128x128xbf16, #tpu.memory_space<vmem>>, vector<128x128xbf16>
    %49 = arith.truncf %11 : vector<64x128xf32> to vector<64x128xbf16>
    %cst_35 = arith.constant dense<0.000000e+00> : vector<64x128xf32>
    %50 = tpu.matmul %49, %48, %cst_35 {dimension_numbers = #tpu.dot_dimension_numbers<[1], [0], [0], [1], [0, 0, 1, 1], [], []>} : vector<64x128xbf16>, vector<128x128xbf16>, vector<64x128xf32> -> vector<64x128xf32>
    %c0_36 = arith.constant 0 : index
    %c0_37 = arith.constant 0 : index
    %51 = vector.load %arg8[%c0_36, %c0_37] : memref<1x128xf32, #tpu.memory_space<vmem>>, vector<1x128xf32>
    %52 = vector.broadcast %51 : vector<1x128xf32> to vector<64x128xf32>
    %53 = arith.addf %50, %52 : vector<64x128xf32>
    %54 = vector.shape_cast %53 : vector<64x128xf32> to vector<8x8x128xf32>
    %c0_38 = arith.constant 0 : index
    %c0_39 = arith.constant 0 : index
    %c0_40 = arith.constant 0 : index
    %55 = vector.load %arg25[%c0_38, %c0_39, %c0_40] : memref<8x8x128xf32, #tpu.memory_space<vmem>>, vector<8x8x128xf32>
    tpu.vector_store %arg25[%c0_38, %c0_39, %c0_40], %54 {strides = array<i32>} : memref<8x8x128xf32, #tpu.memory_space<vmem>>, vector<8x8x128xf32>,
    %cst_41 = arith.constant dense<0.000000e+00> : vector<8x8xf32>
    %56 = vector.multi_reduction <add>, %7, %cst_41 [2] : vector<8x8x128xf32> to vector<8x8xf32>
    %57 = vector.shape_cast %56 : vector<8x8xf32> to vector<8x8x1xf32>
    %cst_42 = arith.constant dense<0.000000e+00> : vector<8x1xf32>
    %58 = vector.multi_reduction <add>, %57, %cst_42 [1] : vector<8x8x1xf32> to vector<8x1xf32>
    %59 = vector.shape_cast %58 : vector<8x1xf32> to vector<8x1x1xf32>
    %cst_43 = arith.constant 9.99999974E-6 : f32
    %60 = vector.broadcast %cst_43 : f32 to vector<8x1x1xf32>
    %61 = arith.addf %59, %60 : vector<8x1x1xf32>
    %62 = tpu.reciprocal %61 {approx = true} : vector<8x1x1xf32> -> vector<8x1x1xf32>
    %63 = vector.broadcast %62 : vector<8x1x1xf32> to vector<8x8x128xf32>
    %64 = arith.mulf %7, %63 : vector<8x8x128xf32>
    %c0_44 = arith.constant 0 : index
    %c0_45 = arith.constant 0 : index
    %c0_46 = arith.constant 0 : index
    %65 = vector.load %arg26[%c0_44, %c0_45, %c0_46] : memref<8x8x128xf32, #tpu.memory_space<vmem>>, vector<8x8x128xf32>
    tpu.vector_store %arg26[%c0_44, %c0_45, %c0_46], %64 {strides = array<i32>} : memref<8x8x128xf32, #tpu.memory_space<vmem>>, vector<8x8x128xf32>,
    %c0_47 = arith.constant 0 : index
    %c0_48 = arith.constant 0 : index
    %66 = vector.load %arg9[%c0_47, %c0_48] : memref<128x128xbf16, #tpu.memory_space<vmem>>, vector<128x128xbf16>
    %c0_49 = arith.constant 0 : index
    %c0_50 = arith.constant 0 : index
    %67 = vector.load %arg11[%c0_49, %c0_50] : memref<128x128xbf16, #tpu.memory_space<vmem>>, vector<128x128xbf16>
    %c0_51 = arith.constant 0 : index
    %c0_52 = arith.constant 0 : index
    %68 = vector.load %arg12[%c0_51, %c0_52] : memref<128x128xbf16, #tpu.memory_space<vmem>>, vector<128x128xbf16>
    %c0_53 = arith.constant 0 : index
    %c0_54 = arith.constant 0 : index
    %69 = vector.load %arg14[%c0_53, %c0_54] : memref<128x384xbf16, #tpu.memory_space<vmem>>, vector<128x384xbf16>
    %c0_55 = arith.constant 0 : index
    %c0_56 = arith.constant 0 : index
    %70 = vector.load %arg15[%c0_55, %c0_56] : memref<128x384xbf16, #tpu.memory_space<vmem>>, vector<128x384xbf16>
    %c0_57 = arith.constant 0 : index
    %c0_58 = arith.constant 0 : index
    %71 = vector.load %arg10[%c0_57, %c0_58] : memref<1x128xf32, #tpu.memory_space<vmem>>, vector<1x128xf32>
    %72 = vector.shape_cast %71 : vector<1x128xf32> to vector<1x128xf32>
    %73 = vector.broadcast %72 : vector<1x128xf32> to vector<8x128xf32>
    %c0_59 = arith.constant 0 : index
    %c0_60 = arith.constant 0 : index
    %74 = vector.load %arg13[%c0_59, %c0_60] : memref<1x128xf32, #tpu.memory_space<vmem>>, vector<1x128xf32>
    %75 = vector.shape_cast %74 : vector<1x128xf32> to vector<1x128xf32>
    %76 = vector.broadcast %75 : vector<1x128xf32> to vector<8x128xf32>
    %c0_61 = arith.constant 0 : index
    %c0_62 = arith.constant 0 : index
    %77 = vector.load %arg16[%c0_61, %c0_62] : memref<1x384xf32, #tpu.memory_space<vmem>>, vector<1x384xf32>
    %78 = vector.shape_cast %77 : vector<1x384xf32> to vector<1x384xf32>
    %79 = vector.broadcast %78 : vector<1x384xf32> to vector<8x384xf32>
    %c0_63 = arith.constant 0 : index
    %c0_64 = arith.constant 0 : index
    %80 = vector.load %arg20[%c0_63, %c0_64] : memref<8x128xf32, #tpu.memory_space<vmem>>, vector<8x128xf32>
    %c0_65 = arith.constant 0 : index
    %c0_66 = arith.constant 0 : index
    %81 = vector.load %arg21[%c0_65, %c0_66] : memref<8x128xf32, #tpu.memory_space<vmem>>, vector<8x128xf32>
    %c0_i32_67 = arith.constant 0 : i32
    %c0_68 = arith.constant 0 : index
    %82 = arith.index_cast %c0_i32_67 : i32 to index
    %c0_69 = arith.constant 0 : index
    %c0_70 = arith.constant 0 : index
    %83 = vector.load %arg1[%c0_68, %82, %c0_69, %c0_70] : memref<4x8x8x128xf32, #tpu.memory_space<vmem>>, vector<1x1x8x128xf32>
    %84 = vector.shape_cast %83 : vector<1x1x8x128xf32> to vector<8x128xf32>
    %c2_71 = arith.constant 2 : index
    %85 = arith.index_cast %c0_i32_67 : i32 to index
    %c0_72 = arith.constant 0 : index
    %c0_73 = arith.constant 0 : index
    %86 = vector.load %arg1[%c2_71, %85, %c0_72, %c0_73] : memref<4x8x8x128xf32, #tpu.memory_space<vmem>>, vector<1x1x8x128xf32>
    %87 = vector.shape_cast %86 : vector<1x1x8x128xf32> to vector<8x128xf32>
    %88 = arith.index_cast %c0_i32_67 : i32 to index
    %c0_74 = arith.constant 0 : index
    %c0_75 = arith.constant 0 : index
    %89 = vector.load %arg22[%88, %c0_74, %c0_75] : memref<8x8x128xf32, #tpu.memory_space<vmem>>, vector<1x8x128xf32>
    %90 = vector.shape_cast %89 : vector<1x8x128xf32> to vector<8x128xf32>
    %91 = arith.index_cast %c0_i32_67 : i32 to index
    %c0_76 = arith.constant 0 : index
    %c0_77 = arith.constant 0 : index
    %92 = vector.load %arg23[%91, %c0_76, %c0_77] : memref<8x8x128xf32, #tpu.memory_space<vmem>>, vector<1x8x128xf32>
    %93 = vector.shape_cast %92 : vector<1x8x128xf32> to vector<8x128xf32>
    %94 = arith.index_cast %c0_i32_67 : i32 to index
    %c0_78 = arith.constant 0 : index
    %c0_79 = arith.constant 0 : index
    %95 = vector.load %arg24[%94, %c0_78, %c0_79] : memref<8x8x384xf32, #tpu.memory_space<vmem>>, vector<1x8x384xf32>
    %96 = vector.shape_cast %95 : vector<1x8x384xf32> to vector<8x384xf32>
    %97 = arith.index_cast %c0_i32_67 : i32 to index
    %c0_80 = arith.constant 0 : index
    %c0_81 = arith.constant 0 : index
    %98 = vector.load %arg25[%97, %c0_80, %c0_81] : memref<8x8x128xf32, #tpu.memory_space<vmem>>, vector<1x8x128xf32>
    %99 = vector.shape_cast %98 : vector<1x8x128xf32> to vector<8x128xf32>
    %100 = arith.index_cast %c0_i32_67 : i32 to index
    %c0_82 = arith.constant 0 : index
    %c0_83 = arith.constant 0 : index
    %101 = vector.load %arg26[%100, %c0_82, %c0_83] : memref<8x8x128xf32, #tpu.memory_space<vmem>>, vector<1x8x128xf32>
    %102 = vector.shape_cast %101 : vector<1x8x128xf32> to vector<8x128xf32>
    %103 = arith.mulf %87, %84 : vector<8x128xf32>
    %cst_84 = arith.constant 1.000000e+00 : f32
    %104 = vector.broadcast %cst_84 : f32 to vector<8x128xf32>
    %105 = arith.subf %104, %87 : vector<8x128xf32>
    %106 = arith.truncf %80 : vector<8x128xf32> to vector<8x128xbf16>
    %cst_85 = arith.constant dense<0.000000e+00> : vector<8x128xf32>
    %107 = tpu.matmul %106, %66, %cst_85 {dimension_numbers = #tpu.dot_dimension_numbers<[1], [0], [0], [1], [0, 0, 1, 1], [], []>} : vector<8x128xbf16>, vector<128x128xbf16>, vector<8x128xf32> -> vector<8x128xf32>
    %108 = arith.addf %107, %73 : vector<8x128xf32>
    %109 = arith.mulf %105, %108 : vector<8x128xf32>
    %110 = arith.addf %103, %109 : vector<8x128xf32>
    %111 = arith.truncf %110 : vector<8x128xf32> to vector<8x128xbf16>
    %cst_86 = arith.constant dense<0.000000e+00> : vector<8x128xf32>
    %112 = tpu.matmul %111, %67, %cst_86 {dimension_numbers = #tpu.dot_dimension_numbers<[1], [0], [0], [1], [0, 0, 1, 1], [], []>} : vector<8x128xbf16>, vector<128x128xbf16>, vector<8x128xf32> -> vector<8x128xf32>
    %113 = arith.addf %112, %99 : vector<8x128xf32>
    %114 = arith.mulf %105, %113 : vector<8x128xf32>
    %115 = arith.addf %103, %114 : vector<8x128xf32>
    %116 = arith.truncf %115 : vector<8x128xf32> to vector<8x128xbf16>
    %cst_87 = arith.constant dense<0.000000e+00> : vector<8x128xf32>
    %117 = tpu.matmul %116, %68, %cst_87 {dimension_numbers = #tpu.dot_dimension_numbers<[1], [0], [0], [1], [0, 0, 1, 1], [], []>} : vector<8x128xbf16>, vector<128x128xbf16>, vector<8x128xf32> -> vector<8x128xf32>
    %118 = arith.addf %117, %76 : vector<8x128xf32>
    %119 = arith.mulf %93, %118 : vector<8x128xf32>
    %cst_88 = arith.constant 1.000000e+00 : f32
    %120 = vector.broadcast %cst_88 : f32 to vector<8x128xf32>
    %121 = arith.subf %120, %93 : vector<8x128xf32>
    %122 = arith.mulf %121, %108 : vector<8x128xf32>
    %123 = arith.addf %119, %122 : vector<8x128xf32>
    %124 = arith.mulf %105, %123 : vector<8x128xf32>
    %125 = arith.addf %103, %124 : vector<8x128xf32>
    %126 = arith.subf %84, %108 : vector<8x128xf32>
    %127 = math.absf %126 : vector<8x128xf32>
    %128 = arith.subf %84, %113 : vector<8x128xf32>
    %129 = math.absf %128 : vector<8x128xf32>
    %130 = arith.addf %127, %129 : vector<8x128xf32>
    %131 = arith.subf %84, %118 : vector<8x128xf32>
    %132 = math.absf %131 : vector<8x128xf32>
    %133 = arith.addf %130, %132 : vector<8x128xf32>
    %134 = arith.subf %84, %123 : vector<8x128xf32>
    %135 = math.absf %134 : vector<8x128xf32>
    %136 = arith.addf %133, %135 : vector<8x128xf32>
    %137 = arith.mulf %136, %102 : vector<8x128xf32>
    %138 = arith.addf %81, %137 : vector<8x128xf32>
    %139 = arith.index_cast %c0_i32_67 : i32 to index
    %c0_89 = arith.constant 0 : index
    %c0_90 = arith.constant 0 : index
    %140 = vector.load %arg17[%139, %c0_89, %c0_90] : memref<8x8x128xf32, #tpu.memory_space<vmem>>, vector<1x8x128xf32>
    %141 = vector.shape_cast %140 : vector<1x8x128xf32> to vector<8x128xf32>
    %142 = vector.shape_cast %123 : vector<8x128xf32> to vector<1x8x128xf32>
    tpu.vector_store %arg17[%139, %c0_89, %c0_90], %142 {strides = array<i32>} : memref<8x8x128xf32, #tpu.memory_space<vmem>>, vector<1x8x128xf32>,
    %143 = arith.index_cast %c0_i32_67 : i32 to index
    %c0_91 = arith.constant 0 : index
    %c0_92 = arith.constant 0 : index
    %144 = vector.load %arg18[%143, %c0_91, %c0_92] : memref<8x8x128xf32, #tpu.memory_space<vmem>>, vector<1x8x128xf32>
    %145 = vector.shape_cast %144 : vector<1x8x128xf32> to vector<8x128xf32>
    %146 = vector.shape_cast %125 : vector<8x128xf32> to vector<1x8x128xf32>
    tpu.vector_store %arg18[%143, %c0_91, %c0_92], %146 {strides = array<i32>} : memref<8x8x128xf32, #tpu.memory_space<vmem>>, vector<1x8x128xf32>,
    %147 = arith.mulf %80, %90 : vector<8x128xf32>
    %148 = arith.truncf %125 : vector<8x128xf32> to vector<8x128xbf16>
    %cst_93 = arith.constant dense<0.000000e+00> : vector<8x384xf32>
    %149 = tpu.matmul %148, %69, %cst_93 {dimension_numbers = #tpu.dot_dimension_numbers<[1], [0], [0], [1], [0, 0, 1, 1], [], []>} : vector<8x128xbf16>, vector<128x384xbf16>, vector<8x384xf32> -> vector<8x384xf32>
    %150 = arith.addf %149, %96 : vector<8x384xf32>
    %151 = arith.truncf %147 : vector<8x128xf32> to vector<8x128xbf16>
    %cst_94 = arith.constant dense<0.000000e+00> : vector<8x384xf32>
    %152 = tpu.matmul %151, %70, %cst_94 {dimension_numbers = #tpu.dot_dimension_numbers<[1], [0], [0], [1], [0, 0, 1, 1], [], []>} : vector<8x128xbf16>, vector<128x384xbf16>, vector<8x384xf32> -> vector<8x384xf32>
    %153 = arith.addf %152, %79 : vector<8x384xf32>
    %154 = vector.extract_strided_slice %150 {offsets = [0, 0], sizes = [8, 128], strides = [1, 1]} : vector<8x384xf32> to vector<8x128xf32>
    %155 = vector.extract_strided_slice %153 {offsets = [0, 0], sizes = [8, 128], strides = [1, 1]} : vector<8x384xf32> to vector<8x128xf32>
    %156 = arith.addf %154, %155 : vector<8x128xf32>
    %157 = arith.negf %156 : vector<8x128xf32>
    %158 = math.exp %157 : vector<8x128xf32>
    %cst_95 = arith.constant 1.000000e+00 : f32
    %159 = vector.broadcast %cst_95 : f32 to vector<8x128xf32>
    %160 = arith.addf %159, %158 : vector<8x128xf32>
    %161 = arith.divf %159, %160 : vector<8x128xf32>
    %162 = vector.extract_strided_slice %150 {offsets = [0, 128], sizes = [8, 128], strides = [1, 1]} : vector<8x384xf32> to vector<8x128xf32>
    %163 = vector.extract_strided_slice %153 {offsets = [0, 128], sizes = [8, 128], strides = [1, 1]} : vector<8x384xf32> to vector<8x128xf32>
    %164 = arith.addf %162, %163 : vector<8x128xf32>
    %165 = arith.negf %164 : vector<8x128xf32>
    %166 = math.exp %165 : vector<8x128xf32>
    %cst_96 = arith.constant 1.000000e+00 : f32
    %167 = vector.broadcast %cst_96 : f32 to vector<8x128xf32>
    %168 = arith.addf %167, %166 : vector<8x128xf32>
    %169 = arith.divf %167, %168 : vector<8x128xf32>
    %170 = vector.extract_strided_slice %150 {offsets = [0, 256], sizes = [8, 128], strides = [1, 1]} : vector<8x384xf32> to vector<8x128xf32>
    %171 = vector.extract_strided_slice %153 {offsets = [0, 256], sizes = [8, 128], strides = [1, 1]} : vector<8x384xf32> to vector<8x128xf32>
    %172 = arith.mulf %161, %171 : vector<8x128xf32>
    %173 = arith.addf %170, %172 : vector<8x128xf32>
    %174 = math.tanh %173 : vector<8x128xf32>
    %cst_97 = arith.constant 1.000000e+00 : f32
    %175 = vector.broadcast %cst_97 : f32 to vector<8x128xf32>
    %176 = arith.subf %175, %169 : vector<8x128xf32>
    %177 = arith.mulf %176, %174 : vector<8x128xf32>
    %178 = arith.mulf %169, %147 : vector<8x128xf32>
    %179 = arith.addf %177, %178 : vector<8x128xf32>
    %c1_i32 = arith.constant 1 : i32
    %c0_98 = arith.constant 0 : index
    %180 = arith.index_cast %c1_i32 : i32 to index
    %c0_99 = arith.constant 0 : index
    %c0_100 = arith.constant 0 : index
    %181 = vector.load %arg1[%c0_98, %180, %c0_99, %c0_100] : memref<4x8x8x128xf32, #tpu.memory_space<vmem>>, vector<1x1x8x128xf32>
    %182 = vector.shape_cast %181 : vector<1x1x8x128xf32> to vector<8x128xf32>
    %c2_101 = arith.constant 2 : index
    %183 = arith.index_cast %c1_i32 : i32 to index
    %c0_102 = arith.constant 0 : index
    %c0_103 = arith.constant 0 : index
    %184 = vector.load %arg1[%c2_101, %183, %c0_102, %c0_103] : memref<4x8x8x128xf32, #tpu.memory_space<vmem>>, vector<1x1x8x128xf32>
    %185 = vector.shape_cast %184 : vector<1x1x8x128xf32> to vector<8x128xf32>
    %186 = arith.index_cast %c1_i32 : i32 to index
    %c0_104 = arith.constant 0 : index
    %c0_105 = arith.constant 0 : index
    %187 = vector.load %arg22[%186, %c0_104, %c0_105] : memref<8x8x128xf32, #tpu.memory_space<vmem>>, vector<1x8x128xf32>
    %188 = vector.shape_cast %187 : vector<1x8x128xf32> to vector<8x128xf32>
    %189 = arith.index_cast %c1_i32 : i32 to index
    %c0_106 = arith.constant 0 : index
    %c0_107 = arith.constant 0 : index
    %190 = vector.load %arg23[%189, %c0_106, %c0_107] : memref<8x8x128xf32, #tpu.memory_space<vmem>>, vector<1x8x128xf32>
    %191 = vector.shape_cast %190 : vector<1x8x128xf32> to vector<8x128xf32>
    %192 = arith.index_cast %c1_i32 : i32 to index
    %c0_108 = arith.constant 0 : index
    %c0_109 = arith.constant 0 : index
    %193 = vector.load %arg24[%192, %c0_108, %c0_109] : memref<8x8x384xf32, #tpu.memory_space<vmem>>, vector<1x8x384xf32>
    %194 = vector.shape_cast %193 : vector<1x8x384xf32> to vector<8x384xf32>
    %195 = arith.index_cast %c1_i32 : i32 to index
    %c0_110 = arith.constant 0 : index
    %c0_111 = arith.constant 0 : index
    %196 = vector.load %arg25[%195, %c0_110, %c0_111] : memref<8x8x128xf32, #tpu.memory_space<vmem>>, vector<1x8x128xf32>
    %197 = vector.shape_cast %196 : vector<1x8x128xf32> to vector<8x128xf32>
    %198 = arith.index_cast %c1_i32 : i32 to index
    %c0_112 = arith.constant 0 : index
    %c0_113 = arith.constant 0 : index
    %199 = vector.load %arg26[%198, %c0_112, %c0_113] : memref<8x8x128xf32, #tpu.memory_space<vmem>>, vector<1x8x128xf32>
    %200 = vector.shape_cast %199 : vector<1x8x128xf32> to vector<8x128xf32>
    %201 = arith.mulf %185, %182 : vector<8x128xf32>
    %cst_114 = arith.constant 1.000000e+00 : f32
    %202 = vector.broadcast %cst_114 : f32 to vector<8x128xf32>
    %203 = arith.subf %202, %185 : vector<8x128xf32>
    %204 = arith.truncf %179 : vector<8x128xf32> to vector<8x128xbf16>
    %cst_115 = arith.constant dense<0.000000e+00> : vector<8x128xf32>
    %205 = tpu.matmul %204, %66, %cst_115 {dimension_numbers = #tpu.dot_dimension_numbers<[1], [0], [0], [1], [0, 0, 1, 1], [], []>} : vector<8x128xbf16>, vector<128x128xbf16>, vector<8x128xf32> -> vector<8x128xf32>
    %206 = arith.addf %205, %73 : vector<8x128xf32>
    %207 = arith.mulf %203, %206 : vector<8x128xf32>
    %208 = arith.addf %201, %207 : vector<8x128xf32>
    %209 = arith.truncf %208 : vector<8x128xf32> to vector<8x128xbf16>
    %cst_116 = arith.constant dense<0.000000e+00> : vector<8x128xf32>
    %210 = tpu.matmul %209, %67, %cst_116 {dimension_numbers = #tpu.dot_dimension_numbers<[1], [0], [0], [1], [0, 0, 1, 1], [], []>} : vector<8x128xbf16>, vector<128x128xbf16>, vector<8x128xf32> -> vector<8x128xf32>
    %211 = arith.addf %210, %197 : vector<8x128xf32>
    %212 = arith.mulf %203, %211 : vector<8x128xf32>
    %213 = arith.addf %201, %212 : vector<8x128xf32>
    %214 = arith.truncf %213 : vector<8x128xf32> to vector<8x128xbf16>
    %cst_117 = arith.constant dense<0.000000e+00> : vector<8x128xf32>
    %215 = tpu.matmul %214, %68, %cst_117 {dimension_numbers = #tpu.dot_dimension_numbers<[1], [0], [0], [1], [0, 0, 1, 1], [], []>} : vector<8x128xbf16>, vector<128x128xbf16>, vector<8x128xf32> -> vector<8x128xf32>
    %216 = arith.addf %215, %76 : vector<8x128xf32>
    %217 = arith.mulf %191, %216 : vector<8x128xf32>
    %cst_118 = arith.constant 1.000000e+00 : f32
    %218 = vector.broadcast %cst_118 : f32 to vector<8x128xf32>
    %219 = arith.subf %218, %191 : vector<8x128xf32>
    %220 = arith.mulf %219, %206 : vector<8x128xf32>
    %221 = arith.addf %217, %220 : vector<8x128xf32>
    %222 = arith.mulf %203, %221 : vector<8x128xf32>
    %223 = arith.addf %201, %222 : vector<8x128xf32>
    %224 = arith.subf %182, %206 : vector<8x128xf32>
    %225 = math.absf %224 : vector<8x128xf32>
    %226 = arith.subf %182, %211 : vector<8x128xf32>
    %227 = math.absf %226 : vector<8x128xf32>
    %228 = arith.addf %225, %227 : vector<8x128xf32>
    %229 = arith.subf %182, %216 : vector<8x128xf32>
    %230 = math.absf %229 : vector<8x128xf32>
    %231 = arith.addf %228, %230 : vector<8x128xf32>
    %232 = arith.subf %182, %221 : vector<8x128xf32>
    %233 = math.absf %232 : vector<8x128xf32>
    %234 = arith.addf %231, %233 : vector<8x128xf32>
    %235 = arith.mulf %234, %200 : vector<8x128xf32>
    %236 = arith.addf %138, %235 : vector<8x128xf32>
    %237 = arith.index_cast %c1_i32 : i32 to index
    %c0_119 = arith.constant 0 : index
    %c0_120 = arith.constant 0 : index
    %238 = vector.load %arg17[%237, %c0_119, %c0_120] : memref<8x8x128xf32, #tpu.memory_space<vmem>>, vector<1x8x128xf32>
    %239 = vector.shape_cast %238 : vector<1x8x128xf32> to vector<8x128xf32>
    %240 = vector.shape_cast %221 : vector<8x128xf32> to vector<1x8x128xf32>
    tpu.vector_store %arg17[%237, %c0_119, %c0_120], %240 {strides = array<i32>} : memref<8x8x128xf32, #tpu.memory_space<vmem>>, vector<1x8x128xf32>,
    %241 = arith.index_cast %c1_i32 : i32 to index
    %c0_121 = arith.constant 0 : index
    %c0_122 = arith.constant 0 : index
    %242 = vector.load %arg18[%241, %c0_121, %c0_122] : memref<8x8x128xf32, #tpu.memory_space<vmem>>, vector<1x8x128xf32>
    %243 = vector.shape_cast %242 : vector<1x8x128xf32> to vector<8x128xf32>
    %244 = vector.shape_cast %223 : vector<8x128xf32> to vector<1x8x128xf32>
    tpu.vector_store %arg18[%241, %c0_121, %c0_122], %244 {strides = array<i32>} : memref<8x8x128xf32, #tpu.memory_space<vmem>>, vector<1x8x128xf32>,
    %245 = arith.mulf %179, %188 : vector<8x128xf32>
    %246 = arith.truncf %223 : vector<8x128xf32> to vector<8x128xbf16>
    %cst_123 = arith.constant dense<0.000000e+00> : vector<8x384xf32>
    %247 = tpu.matmul %246, %69, %cst_123 {dimension_numbers = #tpu.dot_dimension_numbers<[1], [0], [0], [1], [0, 0, 1, 1], [], []>} : vector<8x128xbf16>, vector<128x384xbf16>, vector<8x384xf32> -> vector<8x384xf32>
    %248 = arith.addf %247, %194 : vector<8x384xf32>
    %249 = arith.truncf %245 : vector<8x128xf32> to vector<8x128xbf16>
    %cst_124 = arith.constant dense<0.000000e+00> : vector<8x384xf32>
    %250 = tpu.matmul %249, %70, %cst_124 {dimension_numbers = #tpu.dot_dimension_numbers<[1], [0], [0], [1], [0, 0, 1, 1], [], []>} : vector<8x128xbf16>, vector<128x384xbf16>, vector<8x384xf32> -> vector<8x384xf32>
    %251 = arith.addf %250, %79 : vector<8x384xf32>
    %252 = vector.extract_strided_slice %248 {offsets = [0, 0], sizes = [8, 128], strides = [1, 1]} : vector<8x384xf32> to vector<8x128xf32>
    %253 = vector.extract_strided_slice %251 {offsets = [0, 0], sizes = [8, 128], strides = [1, 1]} : vector<8x384xf32> to vector<8x128xf32>
    %254 = arith.addf %252, %253 : vector<8x128xf32>
    %255 = arith.negf %254 : vector<8x128xf32>
    %256 = math.exp %255 : vector<8x128xf32>
    %cst_125 = arith.constant 1.000000e+00 : f32
    %257 = vector.broadcast %cst_125 : f32 to vector<8x128xf32>
    %258 = arith.addf %257, %256 : vector<8x128xf32>
    %259 = arith.divf %257, %258 : vector<8x128xf32>
    %260 = vector.extract_strided_slice %248 {offsets = [0, 128], sizes = [8, 128], strides = [1, 1]} : vector<8x384xf32> to vector<8x128xf32>
    %261 = vector.extract_strided_slice %251 {offsets = [0, 128], sizes = [8, 128], strides = [1, 1]} : vector<8x384xf32> to vector<8x128xf32>
    %262 = arith.addf %260, %261 : vector<8x128xf32>
    %263 = arith.negf %262 : vector<8x128xf32>
    %264 = math.exp %263 : vector<8x128xf32>
    %cst_126 = arith.constant 1.000000e+00 : f32
    %265 = vector.broadcast %cst_126 : f32 to vector<8x128xf32>
    %266 = arith.addf %265, %264 : vector<8x128xf32>
    %267 = arith.divf %265, %266 : vector<8x128xf32>
    %268 = vector.extract_strided_slice %248 {offsets = [0, 256], sizes = [8, 128], strides = [1, 1]} : vector<8x384xf32> to vector<8x128xf32>
    %269 = vector.extract_strided_slice %251 {offsets = [0, 256], sizes = [8, 128], strides = [1, 1]} : vector<8x384xf32> to vector<8x128xf32>
    %270 = arith.mulf %259, %269 : vector<8x128xf32>
    %271 = arith.addf %268, %270 : vector<8x128xf32>
    %272 = math.tanh %271 : vector<8x128xf32>
    %cst_127 = arith.constant 1.000000e+00 : f32
    %273 = vector.broadcast %cst_127 : f32 to vector<8x128xf32>
    %274 = arith.subf %273, %267 : vector<8x128xf32>
    %275 = arith.mulf %274, %272 : vector<8x128xf32>
    %276 = arith.mulf %267, %245 : vector<8x128xf32>
    %277 = arith.addf %275, %276 : vector<8x128xf32>
    %c2_i32 = arith.constant 2 : i32
    %c0_128 = arith.constant 0 : index
    %278 = arith.index_cast %c2_i32 : i32 to index
    %c0_129 = arith.constant 0 : index
    %c0_130 = arith.constant 0 : index
    %279 = vector.load %arg1[%c0_128, %278, %c0_129, %c0_130] : memref<4x8x8x128xf32, #tpu.memory_space<vmem>>, vector<1x1x8x128xf32>
    %280 = vector.shape_cast %279 : vector<1x1x8x128xf32> to vector<8x128xf32>
    %c2_131 = arith.constant 2 : index
    %281 = arith.index_cast %c2_i32 : i32 to index
    %c0_132 = arith.constant 0 : index
    %c0_133 = arith.constant 0 : index
    %282 = vector.load %arg1[%c2_131, %281, %c0_132, %c0_133] : memref<4x8x8x128xf32, #tpu.memory_space<vmem>>, vector<1x1x8x128xf32>
    %283 = vector.shape_cast %282 : vector<1x1x8x128xf32> to vector<8x128xf32>
    %284 = arith.index_cast %c2_i32 : i32 to index
    %c0_134 = arith.constant 0 : index
    %c0_135 = arith.constant 0 : index
    %285 = vector.load %arg22[%284, %c0_134, %c0_135] : memref<8x8x128xf32, #tpu.memory_space<vmem>>, vector<1x8x128xf32>
    %286 = vector.shape_cast %285 : vector<1x8x128xf32> to vector<8x128xf32>
    %287 = arith.index_cast %c2_i32 : i32 to index
    %c0_136 = arith.constant 0 : index
    %c0_137 = arith.constant 0 : index
    %288 = vector.load %arg23[%287, %c0_136, %c0_137] : memref<8x8x128xf32, #tpu.memory_space<vmem>>, vector<1x8x128xf32>
    %289 = vector.shape_cast %288 : vector<1x8x128xf32> to vector<8x128xf32>
    %290 = arith.index_cast %c2_i32 : i32 to index
    %c0_138 = arith.constant 0 : index
    %c0_139 = arith.constant 0 : index
    %291 = vector.load %arg24[%290, %c0_138, %c0_139] : memref<8x8x384xf32, #tpu.memory_space<vmem>>, vector<1x8x384xf32>
    %292 = vector.shape_cast %291 : vector<1x8x384xf32> to vector<8x384xf32>
    %293 = arith.index_cast %c2_i32 : i32 to index
    %c0_140 = arith.constant 0 : index
    %c0_141 = arith.constant 0 : index
    %294 = vector.load %arg25[%293, %c0_140, %c0_141] : memref<8x8x128xf32, #tpu.memory_space<vmem>>, vector<1x8x128xf32>
    %295 = vector.shape_cast %294 : vector<1x8x128xf32> to vector<8x128xf32>
    %296 = arith.index_cast %c2_i32 : i32 to index
    %c0_142 = arith.constant 0 : index
    %c0_143 = arith.constant 0 : index
    %297 = vector.load %arg26[%296, %c0_142, %c0_143] : memref<8x8x128xf32, #tpu.memory_space<vmem>>, vector<1x8x128xf32>
    %298 = vector.shape_cast %297 : vector<1x8x128xf32> to vector<8x128xf32>
    %299 = arith.mulf %283, %280 : vector<8x128xf32>
    %cst_144 = arith.constant 1.000000e+00 : f32
    %300 = vector.broadcast %cst_144 : f32 to vector<8x128xf32>
    %301 = arith.subf %300, %283 : vector<8x128xf32>
    %302 = arith.truncf %277 : vector<8x128xf32> to vector<8x128xbf16>
    %cst_145 = arith.constant dense<0.000000e+00> : vector<8x128xf32>
    %303 = tpu.matmul %302, %66, %cst_145 {dimension_numbers = #tpu.dot_dimension_numbers<[1], [0], [0], [1], [0, 0, 1, 1], [], []>} : vector<8x128xbf16>, vector<128x128xbf16>, vector<8x128xf32> -> vector<8x128xf32>
    %304 = arith.addf %303, %73 : vector<8x128xf32>
    %305 = arith.mulf %301, %304 : vector<8x128xf32>
    %306 = arith.addf %299, %305 : vector<8x128xf32>
    %307 = arith.truncf %306 : vector<8x128xf32> to vector<8x128xbf16>
    %cst_146 = arith.constant dense<0.000000e+00> : vector<8x128xf32>
    %308 = tpu.matmul %307, %67, %cst_146 {dimension_numbers = #tpu.dot_dimension_numbers<[1], [0], [0], [1], [0, 0, 1, 1], [], []>} : vector<8x128xbf16>, vector<128x128xbf16>, vector<8x128xf32> -> vector<8x128xf32>
    %309 = arith.addf %308, %295 : vector<8x128xf32>
    %310 = arith.mulf %301, %309 : vector<8x128xf32>
    %311 = arith.addf %299, %310 : vector<8x128xf32>
    %312 = arith.truncf %311 : vector<8x128xf32> to vector<8x128xbf16>
    %cst_147 = arith.constant dense<0.000000e+00> : vector<8x128xf32>
    %313 = tpu.matmul %312, %68, %cst_147 {dimension_numbers = #tpu.dot_dimension_numbers<[1], [0], [0], [1], [0, 0, 1, 1], [], []>} : vector<8x128xbf16>, vector<128x128xbf16>, vector<8x128xf32> -> vector<8x128xf32>
    %314 = arith.addf %313, %76 : vector<8x128xf32>
    %315 = arith.mulf %289, %314 : vector<8x128xf32>
    %cst_148 = arith.constant 1.000000e+00 : f32
    %316 = vector.broadcast %cst_148 : f32 to vector<8x128xf32>
    %317 = arith.subf %316, %289 : vector<8x128xf32>
    %318 = arith.mulf %317, %304 : vector<8x128xf32>
    %319 = arith.addf %315, %318 : vector<8x128xf32>
    %320 = arith.mulf %301, %319 : vector<8x128xf32>
    %321 = arith.addf %299, %320 : vector<8x128xf32>
    %322 = arith.subf %280, %304 : vector<8x128xf32>
    %323 = math.absf %322 : vector<8x128xf32>
    %324 = arith.subf %280, %309 : vector<8x128xf32>
    %325 = math.absf %324 : vector<8x128xf32>
    %326 = arith.addf %323, %325 : vector<8x128xf32>
    %327 = arith.subf %280, %314 : vector<8x128xf32>
    %328 = math.absf %327 : vector<8x128xf32>
    %329 = arith.addf %326, %328 : vector<8x128xf32>
    %330 = arith.subf %280, %319 : vector<8x128xf32>
    %331 = math.absf %330 : vector<8x128xf32>
    %332 = arith.addf %329, %331 : vector<8x128xf32>
    %333 = arith.mulf %332, %298 : vector<8x128xf32>
    %334 = arith.addf %236, %333 : vector<8x128xf32>
    %335 = arith.index_cast %c2_i32 : i32 to index
    %c0_149 = arith.constant 0 : index
    %c0_150 = arith.constant 0 : index
    %336 = vector.load %arg17[%335, %c0_149, %c0_150] : memref<8x8x128xf32, #tpu.memory_space<vmem>>, vector<1x8x128xf32>
    %337 = vector.shape_cast %336 : vector<1x8x128xf32> to vector<8x128xf32>
    %338 = vector.shape_cast %319 : vector<8x128xf32> to vector<1x8x128xf32>
    tpu.vector_store %arg17[%335, %c0_149, %c0_150], %338 {strides = array<i32>} : memref<8x8x128xf32, #tpu.memory_space<vmem>>, vector<1x8x128xf32>,
    %339 = arith.index_cast %c2_i32 : i32 to index
    %c0_151 = arith.constant 0 : index
    %c0_152 = arith.constant 0 : index
    %340 = vector.load %arg18[%339, %c0_151, %c0_152] : memref<8x8x128xf32, #tpu.memory_space<vmem>>, vector<1x8x128xf32>
    %341 = vector.shape_cast %340 : vector<1x8x128xf32> to vector<8x128xf32>
    %342 = vector.shape_cast %321 : vector<8x128xf32> to vector<1x8x128xf32>
    tpu.vector_store %arg18[%339, %c0_151, %c0_152], %342 {strides = array<i32>} : memref<8x8x128xf32, #tpu.memory_space<vmem>>, vector<1x8x128xf32>,
    %343 = arith.mulf %277, %286 : vector<8x128xf32>
    %344 = arith.truncf %321 : vector<8x128xf32> to vector<8x128xbf16>
    %cst_153 = arith.constant dense<0.000000e+00> : vector<8x384xf32>
    %345 = tpu.matmul %344, %69, %cst_153 {dimension_numbers = #tpu.dot_dimension_numbers<[1], [0], [0], [1], [0, 0, 1, 1], [], []>} : vector<8x128xbf16>, vector<128x384xbf16>, vector<8x384xf32> -> vector<8x384xf32>
    %346 = arith.addf %345, %292 : vector<8x384xf32>
    %347 = arith.truncf %343 : vector<8x128xf32> to vector<8x128xbf16>
    %cst_154 = arith.constant dense<0.000000e+00> : vector<8x384xf32>
    %348 = tpu.matmul %347, %70, %cst_154 {dimension_numbers = #tpu.dot_dimension_numbers<[1], [0], [0], [1], [0, 0, 1, 1], [], []>} : vector<8x128xbf16>, vector<128x384xbf16>, vector<8x384xf32> -> vector<8x384xf32>
    %349 = arith.addf %348, %79 : vector<8x384xf32>
    %350 = vector.extract_strided_slice %346 {offsets = [0, 0], sizes = [8, 128], strides = [1, 1]} : vector<8x384xf32> to vector<8x128xf32>
    %351 = vector.extract_strided_slice %349 {offsets = [0, 0], sizes = [8, 128], strides = [1, 1]} : vector<8x384xf32> to vector<8x128xf32>
    %352 = arith.addf %350, %351 : vector<8x128xf32>
    %353 = arith.negf %352 : vector<8x128xf32>
    %354 = math.exp %353 : vector<8x128xf32>
    %cst_155 = arith.constant 1.000000e+00 : f32
    %355 = vector.broadcast %cst_155 : f32 to vector<8x128xf32>
    %356 = arith.addf %355, %354 : vector<8x128xf32>
    %357 = arith.divf %355, %356 : vector<8x128xf32>
    %358 = vector.extract_strided_slice %346 {offsets = [0, 128], sizes = [8, 128], strides = [1, 1]} : vector<8x384xf32> to vector<8x128xf32>
    %359 = vector.extract_strided_slice %349 {offsets = [0, 128], sizes = [8, 128], strides = [1, 1]} : vector<8x384xf32> to vector<8x128xf32>
    %360 = arith.addf %358, %359 : vector<8x128xf32>
    %361 = arith.negf %360 : vector<8x128xf32>
    %362 = math.exp %361 : vector<8x128xf32>
    %cst_156 = arith.constant 1.000000e+00 : f32
    %363 = vector.broadcast %cst_156 : f32 to vector<8x128xf32>
    %364 = arith.addf %363, %362 : vector<8x128xf32>
    %365 = arith.divf %363, %364 : vector<8x128xf32>
    %366 = vector.extract_strided_slice %346 {offsets = [0, 256], sizes = [8, 128], strides = [1, 1]} : vector<8x384xf32> to vector<8x128xf32>
    %367 = vector.extract_strided_slice %349 {offsets = [0, 256], sizes = [8, 128], strides = [1, 1]} : vector<8x384xf32> to vector<8x128xf32>
    %368 = arith.mulf %357, %367 : vector<8x128xf32>
    %369 = arith.addf %366, %368 : vector<8x128xf32>
    %370 = math.tanh %369 : vector<8x128xf32>
    %cst_157 = arith.constant 1.000000e+00 : f32
    %371 = vector.broadcast %cst_157 : f32 to vector<8x128xf32>
    %372 = arith.subf %371, %365 : vector<8x128xf32>
    %373 = arith.mulf %372, %370 : vector<8x128xf32>
    %374 = arith.mulf %365, %343 : vector<8x128xf32>
    %375 = arith.addf %373, %374 : vector<8x128xf32>
    %c3_i32 = arith.constant 3 : i32
    %c0_158 = arith.constant 0 : index
    %376 = arith.index_cast %c3_i32 : i32 to index
    %c0_159 = arith.constant 0 : index
    %c0_160 = arith.constant 0 : index
    %377 = vector.load %arg1[%c0_158, %376, %c0_159, %c0_160] : memref<4x8x8x128xf32, #tpu.memory_space<vmem>>, vector<1x1x8x128xf32>
    %378 = vector.shape_cast %377 : vector<1x1x8x128xf32> to vector<8x128xf32>
    %c2_161 = arith.constant 2 : index
    %379 = arith.index_cast %c3_i32 : i32 to index
    %c0_162 = arith.constant 0 : index
    %c0_163 = arith.constant 0 : index
    %380 = vector.load %arg1[%c2_161, %379, %c0_162, %c0_163] : memref<4x8x8x128xf32, #tpu.memory_space<vmem>>, vector<1x1x8x128xf32>
    %381 = vector.shape_cast %380 : vector<1x1x8x128xf32> to vector<8x128xf32>
    %382 = arith.index_cast %c3_i32 : i32 to index
    %c0_164 = arith.constant 0 : index
    %c0_165 = arith.constant 0 : index
    %383 = vector.load %arg22[%382, %c0_164, %c0_165] : memref<8x8x128xf32, #tpu.memory_space<vmem>>, vector<1x8x128xf32>
    %384 = vector.shape_cast %383 : vector<1x8x128xf32> to vector<8x128xf32>
    %385 = arith.index_cast %c3_i32 : i32 to index
    %c0_166 = arith.constant 0 : index
    %c0_167 = arith.constant 0 : index
    %386 = vector.load %arg23[%385, %c0_166, %c0_167] : memref<8x8x128xf32, #tpu.memory_space<vmem>>, vector<1x8x128xf32>
    %387 = vector.shape_cast %386 : vector<1x8x128xf32> to vector<8x128xf32>
    %388 = arith.index_cast %c3_i32 : i32 to index
    %c0_168 = arith.constant 0 : index
    %c0_169 = arith.constant 0 : index
    %389 = vector.load %arg24[%388, %c0_168, %c0_169] : memref<8x8x384xf32, #tpu.memory_space<vmem>>, vector<1x8x384xf32>
    %390 = vector.shape_cast %389 : vector<1x8x384xf32> to vector<8x384xf32>
    %391 = arith.index_cast %c3_i32 : i32 to index
    %c0_170 = arith.constant 0 : index
    %c0_171 = arith.constant 0 : index
    %392 = vector.load %arg25[%391, %c0_170, %c0_171] : memref<8x8x128xf32, #tpu.memory_space<vmem>>, vector<1x8x128xf32>
    %393 = vector.shape_cast %392 : vector<1x8x128xf32> to vector<8x128xf32>
    %394 = arith.index_cast %c3_i32 : i32 to index
    %c0_172 = arith.constant 0 : index
    %c0_173 = arith.constant 0 : index
    %395 = vector.load %arg26[%394, %c0_172, %c0_173] : memref<8x8x128xf32, #tpu.memory_space<vmem>>, vector<1x8x128xf32>
    %396 = vector.shape_cast %395 : vector<1x8x128xf32> to vector<8x128xf32>
    %397 = arith.mulf %381, %378 : vector<8x128xf32>
    %cst_174 = arith.constant 1.000000e+00 : f32
    %398 = vector.broadcast %cst_174 : f32 to vector<8x128xf32>
    %399 = arith.subf %398, %381 : vector<8x128xf32>
    %400 = arith.truncf %375 : vector<8x128xf32> to vector<8x128xbf16>
    %cst_175 = arith.constant dense<0.000000e+00> : vector<8x128xf32>
    %401 = tpu.matmul %400, %66, %cst_175 {dimension_numbers = #tpu.dot_dimension_numbers<[1], [0], [0], [1], [0, 0, 1, 1], [], []>} : vector<8x128xbf16>, vector<128x128xbf16>, vector<8x128xf32> -> vector<8x128xf32>
    %402 = arith.addf %401, %73 : vector<8x128xf32>
    %403 = arith.mulf %399, %402 : vector<8x128xf32>
    %404 = arith.addf %397, %403 : vector<8x128xf32>
    %405 = arith.truncf %404 : vector<8x128xf32> to vector<8x128xbf16>
    %cst_176 = arith.constant dense<0.000000e+00> : vector<8x128xf32>
    %406 = tpu.matmul %405, %67, %cst_176 {dimension_numbers = #tpu.dot_dimension_numbers<[1], [0], [0], [1], [0, 0, 1, 1], [], []>} : vector<8x128xbf16>, vector<128x128xbf16>, vector<8x128xf32> -> vector<8x128xf32>
    %407 = arith.addf %406, %393 : vector<8x128xf32>
    %408 = arith.mulf %399, %407 : vector<8x128xf32>
    %409 = arith.addf %397, %408 : vector<8x128xf32>
    %410 = arith.truncf %409 : vector<8x128xf32> to vector<8x128xbf16>
    %cst_177 = arith.constant dense<0.000000e+00> : vector<8x128xf32>
    %411 = tpu.matmul %410, %68, %cst_177 {dimension_numbers = #tpu.dot_dimension_numbers<[1], [0], [0], [1], [0, 0, 1, 1], [], []>} : vector<8x128xbf16>, vector<128x128xbf16>, vector<8x128xf32> -> vector<8x128xf32>
    %412 = arith.addf %411, %76 : vector<8x128xf32>
    %413 = arith.mulf %387, %412 : vector<8x128xf32>
    %cst_178 = arith.constant 1.000000e+00 : f32
    %414 = vector.broadcast %cst_178 : f32 to vector<8x128xf32>
    %415 = arith.subf %414, %387 : vector<8x128xf32>
    %416 = arith.mulf %415, %402 : vector<8x128xf32>
    %417 = arith.addf %413, %416 : vector<8x128xf32>
    %418 = arith.mulf %399, %417 : vector<8x128xf32>
    %419 = arith.addf %397, %418 : vector<8x128xf32>
    %420 = arith.subf %378, %402 : vector<8x128xf32>
    %421 = math.absf %420 : vector<8x128xf32>
    %422 = arith.subf %378, %407 : vector<8x128xf32>
    %423 = math.absf %422 : vector<8x128xf32>
    %424 = arith.addf %421, %423 : vector<8x128xf32>
    %425 = arith.subf %378, %412 : vector<8x128xf32>
    %426 = math.absf %425 : vector<8x128xf32>
    %427 = arith.addf %424, %426 : vector<8x128xf32>
    %428 = arith.subf %378, %417 : vector<8x128xf32>
    %429 = math.absf %428 : vector<8x128xf32>
    %430 = arith.addf %427, %429 : vector<8x128xf32>
    %431 = arith.mulf %430, %396 : vector<8x128xf32>
    %432 = arith.addf %334, %431 : vector<8x128xf32>
    %433 = arith.index_cast %c3_i32 : i32 to index
    %c0_179 = arith.constant 0 : index
    %c0_180 = arith.constant 0 : index
    %434 = vector.load %arg17[%433, %c0_179, %c0_180] : memref<8x8x128xf32, #tpu.memory_space<vmem>>, vector<1x8x128xf32>
    %435 = vector.shape_cast %434 : vector<1x8x128xf32> to vector<8x128xf32>
    %436 = vector.shape_cast %417 : vector<8x128xf32> to vector<1x8x128xf32>
    tpu.vector_store %arg17[%433, %c0_179, %c0_180], %436 {strides = array<i32>} : memref<8x8x128xf32, #tpu.memory_space<vmem>>, vector<1x8x128xf32>,
    %437 = arith.index_cast %c3_i32 : i32 to index
    %c0_181 = arith.constant 0 : index
    %c0_182 = arith.constant 0 : index
    %438 = vector.load %arg18[%437, %c0_181, %c0_182] : memref<8x8x128xf32, #tpu.memory_space<vmem>>, vector<1x8x128xf32>
    %439 = vector.shape_cast %438 : vector<1x8x128xf32> to vector<8x128xf32>
    %440 = vector.shape_cast %419 : vector<8x128xf32> to vector<1x8x128xf32>
    tpu.vector_store %arg18[%437, %c0_181, %c0_182], %440 {strides = array<i32>} : memref<8x8x128xf32, #tpu.memory_space<vmem>>, vector<1x8x128xf32>,
    %441 = arith.mulf %375, %384 : vector<8x128xf32>
    %442 = arith.truncf %419 : vector<8x128xf32> to vector<8x128xbf16>
    %cst_183 = arith.constant dense<0.000000e+00> : vector<8x384xf32>
    %443 = tpu.matmul %442, %69, %cst_183 {dimension_numbers = #tpu.dot_dimension_numbers<[1], [0], [0], [1], [0, 0, 1, 1], [], []>} : vector<8x128xbf16>, vector<128x384xbf16>, vector<8x384xf32> -> vector<8x384xf32>
    %444 = arith.addf %443, %390 : vector<8x384xf32>
    %445 = arith.truncf %441 : vector<8x128xf32> to vector<8x128xbf16>
    %cst_184 = arith.constant dense<0.000000e+00> : vector<8x384xf32>
    %446 = tpu.matmul %445, %70, %cst_184 {dimension_numbers = #tpu.dot_dimension_numbers<[1], [0], [0], [1], [0, 0, 1, 1], [], []>} : vector<8x128xbf16>, vector<128x384xbf16>, vector<8x384xf32> -> vector<8x384xf32>
    %447 = arith.addf %446, %79 : vector<8x384xf32>
    %448 = vector.extract_strided_slice %444 {offsets = [0, 0], sizes = [8, 128], strides = [1, 1]} : vector<8x384xf32> to vector<8x128xf32>
    %449 = vector.extract_strided_slice %447 {offsets = [0, 0], sizes = [8, 128], strides = [1, 1]} : vector<8x384xf32> to vector<8x128xf32>
    %450 = arith.addf %448, %449 : vector<8x128xf32>
    %451 = arith.negf %450 : vector<8x128xf32>
    %452 = math.exp %451 : vector<8x128xf32>
    %cst_185 = arith.constant 1.000000e+00 : f32
    %453 = vector.broadcast %cst_185 : f32 to vector<8x128xf32>
    %454 = arith.addf %453, %452 : vector<8x128xf32>
    %455 = arith.divf %453, %454 : vector<8x128xf32>
    %456 = vector.extract_strided_slice %444 {offsets = [0, 128], sizes = [8, 128], strides = [1, 1]} : vector<8x384xf32> to vector<8x128xf32>
    %457 = vector.extract_strided_slice %447 {offsets = [0, 128], sizes = [8, 128], strides = [1, 1]} : vector<8x384xf32> to vector<8x128xf32>
    %458 = arith.addf %456, %457 : vector<8x128xf32>
    %459 = arith.negf %458 : vector<8x128xf32>
    %460 = math.exp %459 : vector<8x128xf32>
    %cst_186 = arith.constant 1.000000e+00 : f32
    %461 = vector.broadcast %cst_186 : f32 to vector<8x128xf32>
    %462 = arith.addf %461, %460 : vector<8x128xf32>
    %463 = arith.divf %461, %462 : vector<8x128xf32>
    %464 = vector.extract_strided_slice %444 {offsets = [0, 256], sizes = [8, 128], strides = [1, 1]} : vector<8x384xf32> to vector<8x128xf32>
    %465 = vector.extract_strided_slice %447 {offsets = [0, 256], sizes = [8, 128], strides = [1, 1]} : vector<8x384xf32> to vector<8x128xf32>
    %466 = arith.mulf %455, %465 : vector<8x128xf32>
    %467 = arith.addf %464, %466 : vector<8x128xf32>
    %468 = math.tanh %467 : vector<8x128xf32>
    %cst_187 = arith.constant 1.000000e+00 : f32
    %469 = vector.broadcast %cst_187 : f32 to vector<8x128xf32>
    %470 = arith.subf %469, %463 : vector<8x128xf32>
    %471 = arith.mulf %470, %468 : vector<8x128xf32>
    %472 = arith.mulf %463, %441 : vector<8x128xf32>
    %473 = arith.addf %471, %472 : vector<8x128xf32>
    %c4_i32 = arith.constant 4 : i32
    %c0_188 = arith.constant 0 : index
    %474 = arith.index_cast %c4_i32 : i32 to index
    %c0_189 = arith.constant 0 : index
    %c0_190 = arith.constant 0 : index
    %475 = vector.load %arg1[%c0_188, %474, %c0_189, %c0_190] : memref<4x8x8x128xf32, #tpu.memory_space<vmem>>, vector<1x1x8x128xf32>
    %476 = vector.shape_cast %475 : vector<1x1x8x128xf32> to vector<8x128xf32>
    %c2_191 = arith.constant 2 : index
    %477 = arith.index_cast %c4_i32 : i32 to index
    %c0_192 = arith.constant 0 : index
    %c0_193 = arith.constant 0 : index
    %478 = vector.load %arg1[%c2_191, %477, %c0_192, %c0_193] : memref<4x8x8x128xf32, #tpu.memory_space<vmem>>, vector<1x1x8x128xf32>
    %479 = vector.shape_cast %478 : vector<1x1x8x128xf32> to vector<8x128xf32>
    %480 = arith.index_cast %c4_i32 : i32 to index
    %c0_194 = arith.constant 0 : index
    %c0_195 = arith.constant 0 : index
    %481 = vector.load %arg22[%480, %c0_194, %c0_195] : memref<8x8x128xf32, #tpu.memory_space<vmem>>, vector<1x8x128xf32>
    %482 = vector.shape_cast %481 : vector<1x8x128xf32> to vector<8x128xf32>
    %483 = arith.index_cast %c4_i32 : i32 to index
    %c0_196 = arith.constant 0 : index
    %c0_197 = arith.constant 0 : index
    %484 = vector.load %arg23[%483, %c0_196, %c0_197] : memref<8x8x128xf32, #tpu.memory_space<vmem>>, vector<1x8x128xf32>
    %485 = vector.shape_cast %484 : vector<1x8x128xf32> to vector<8x128xf32>
    %486 = arith.index_cast %c4_i32 : i32 to index
    %c0_198 = arith.constant 0 : index
    %c0_199 = arith.constant 0 : index
    %487 = vector.load %arg24[%486, %c0_198, %c0_199] : memref<8x8x384xf32, #tpu.memory_space<vmem>>, vector<1x8x384xf32>
    %488 = vector.shape_cast %487 : vector<1x8x384xf32> to vector<8x384xf32>
    %489 = arith.index_cast %c4_i32 : i32 to index
    %c0_200 = arith.constant 0 : index
    %c0_201 = arith.constant 0 : index
    %490 = vector.load %arg25[%489, %c0_200, %c0_201] : memref<8x8x128xf32, #tpu.memory_space<vmem>>, vector<1x8x128xf32>
    %491 = vector.shape_cast %490 : vector<1x8x128xf32> to vector<8x128xf32>
    %492 = arith.index_cast %c4_i32 : i32 to index
    %c0_202 = arith.constant 0 : index
    %c0_203 = arith.constant 0 : index
    %493 = vector.load %arg26[%492, %c0_202, %c0_203] : memref<8x8x128xf32, #tpu.memory_space<vmem>>, vector<1x8x128xf32>
    %494 = vector.shape_cast %493 : vector<1x8x128xf32> to vector<8x128xf32>
    %495 = arith.mulf %479, %476 : vector<8x128xf32>
    %cst_204 = arith.constant 1.000000e+00 : f32
    %496 = vector.broadcast %cst_204 : f32 to vector<8x128xf32>
    %497 = arith.subf %496, %479 : vector<8x128xf32>
    %498 = arith.truncf %473 : vector<8x128xf32> to vector<8x128xbf16>
    %cst_205 = arith.constant dense<0.000000e+00> : vector<8x128xf32>
    %499 = tpu.matmul %498, %66, %cst_205 {dimension_numbers = #tpu.dot_dimension_numbers<[1], [0], [0], [1], [0, 0, 1, 1], [], []>} : vector<8x128xbf16>, vector<128x128xbf16>, vector<8x128xf32> -> vector<8x128xf32>
    %500 = arith.addf %499, %73 : vector<8x128xf32>
    %501 = arith.mulf %497, %500 : vector<8x128xf32>
    %502 = arith.addf %495, %501 : vector<8x128xf32>
    %503 = arith.truncf %502 : vector<8x128xf32> to vector<8x128xbf16>
    %cst_206 = arith.constant dense<0.000000e+00> : vector<8x128xf32>
    %504 = tpu.matmul %503, %67, %cst_206 {dimension_numbers = #tpu.dot_dimension_numbers<[1], [0], [0], [1], [0, 0, 1, 1], [], []>} : vector<8x128xbf16>, vector<128x128xbf16>, vector<8x128xf32> -> vector<8x128xf32>
    %505 = arith.addf %504, %491 : vector<8x128xf32>
    %506 = arith.mulf %497, %505 : vector<8x128xf32>
    %507 = arith.addf %495, %506 : vector<8x128xf32>
    %508 = arith.truncf %507 : vector<8x128xf32> to vector<8x128xbf16>
    %cst_207 = arith.constant dense<0.000000e+00> : vector<8x128xf32>
    %509 = tpu.matmul %508, %68, %cst_207 {dimension_numbers = #tpu.dot_dimension_numbers<[1], [0], [0], [1], [0, 0, 1, 1], [], []>} : vector<8x128xbf16>, vector<128x128xbf16>, vector<8x128xf32> -> vector<8x128xf32>
    %510 = arith.addf %509, %76 : vector<8x128xf32>
    %511 = arith.mulf %485, %510 : vector<8x128xf32>
    %cst_208 = arith.constant 1.000000e+00 : f32
    %512 = vector.broadcast %cst_208 : f32 to vector<8x128xf32>
    %513 = arith.subf %512, %485 : vector<8x128xf32>
    %514 = arith.mulf %513, %500 : vector<8x128xf32>
    %515 = arith.addf %511, %514 : vector<8x128xf32>
    %516 = arith.mulf %497, %515 : vector<8x128xf32>
    %517 = arith.addf %495, %516 : vector<8x128xf32>
    %518 = arith.subf %476, %500 : vector<8x128xf32>
    %519 = math.absf %518 : vector<8x128xf32>
    %520 = arith.subf %476, %505 : vector<8x128xf32>
    %521 = math.absf %520 : vector<8x128xf32>
    %522 = arith.addf %519, %521 : vector<8x128xf32>
    %523 = arith.subf %476, %510 : vector<8x128xf32>
    %524 = math.absf %523 : vector<8x128xf32>
    %525 = arith.addf %522, %524 : vector<8x128xf32>
    %526 = arith.subf %476, %515 : vector<8x128xf32>
    %527 = math.absf %526 : vector<8x128xf32>
    %528 = arith.addf %525, %527 : vector<8x128xf32>
    %529 = arith.mulf %528, %494 : vector<8x128xf32>
    %530 = arith.addf %432, %529 : vector<8x128xf32>
    %531 = arith.index_cast %c4_i32 : i32 to index
    %c0_209 = arith.constant 0 : index
    %c0_210 = arith.constant 0 : index
    %532 = vector.load %arg17[%531, %c0_209, %c0_210] : memref<8x8x128xf32, #tpu.memory_space<vmem>>, vector<1x8x128xf32>
    %533 = vector.shape_cast %532 : vector<1x8x128xf32> to vector<8x128xf32>
    %534 = vector.shape_cast %515 : vector<8x128xf32> to vector<1x8x128xf32>
    tpu.vector_store %arg17[%531, %c0_209, %c0_210], %534 {strides = array<i32>} : memref<8x8x128xf32, #tpu.memory_space<vmem>>, vector<1x8x128xf32>,
    %535 = arith.index_cast %c4_i32 : i32 to index
    %c0_211 = arith.constant 0 : index
    %c0_212 = arith.constant 0 : index
    %536 = vector.load %arg18[%535, %c0_211, %c0_212] : memref<8x8x128xf32, #tpu.memory_space<vmem>>, vector<1x8x128xf32>
    %537 = vector.shape_cast %536 : vector<1x8x128xf32> to vector<8x128xf32>
    %538 = vector.shape_cast %517 : vector<8x128xf32> to vector<1x8x128xf32>
    tpu.vector_store %arg18[%535, %c0_211, %c0_212], %538 {strides = array<i32>} : memref<8x8x128xf32, #tpu.memory_space<vmem>>, vector<1x8x128xf32>,
    %539 = arith.mulf %473, %482 : vector<8x128xf32>
    %540 = arith.truncf %517 : vector<8x128xf32> to vector<8x128xbf16>
    %cst_213 = arith.constant dense<0.000000e+00> : vector<8x384xf32>
    %541 = tpu.matmul %540, %69, %cst_213 {dimension_numbers = #tpu.dot_dimension_numbers<[1], [0], [0], [1], [0, 0, 1, 1], [], []>} : vector<8x128xbf16>, vector<128x384xbf16>, vector<8x384xf32> -> vector<8x384xf32>
    %542 = arith.addf %541, %488 : vector<8x384xf32>
    %543 = arith.truncf %539 : vector<8x128xf32> to vector<8x128xbf16>
    %cst_214 = arith.constant dense<0.000000e+00> : vector<8x384xf32>
    %544 = tpu.matmul %543, %70, %cst_214 {dimension_numbers = #tpu.dot_dimension_numbers<[1], [0], [0], [1], [0, 0, 1, 1], [], []>} : vector<8x128xbf16>, vector<128x384xbf16>, vector<8x384xf32> -> vector<8x384xf32>
    %545 = arith.addf %544, %79 : vector<8x384xf32>
    %546 = vector.extract_strided_slice %542 {offsets = [0, 0], sizes = [8, 128], strides = [1, 1]} : vector<8x384xf32> to vector<8x128xf32>
    %547 = vector.extract_strided_slice %545 {offsets = [0, 0], sizes = [8, 128], strides = [1, 1]} : vector<8x384xf32> to vector<8x128xf32>
    %548 = arith.addf %546, %547 : vector<8x128xf32>
    %549 = arith.negf %548 : vector<8x128xf32>
    %550 = math.exp %549 : vector<8x128xf32>
    %cst_215 = arith.constant 1.000000e+00 : f32
    %551 = vector.broadcast %cst_215 : f32 to vector<8x128xf32>
    %552 = arith.addf %551, %550 : vector<8x128xf32>
    %553 = arith.divf %551, %552 : vector<8x128xf32>
    %554 = vector.extract_strided_slice %542 {offsets = [0, 128], sizes = [8, 128], strides = [1, 1]} : vector<8x384xf32> to vector<8x128xf32>
    %555 = vector.extract_strided_slice %545 {offsets = [0, 128], sizes = [8, 128], strides = [1, 1]} : vector<8x384xf32> to vector<8x128xf32>
    %556 = arith.addf %554, %555 : vector<8x128xf32>
    %557 = arith.negf %556 : vector<8x128xf32>
    %558 = math.exp %557 : vector<8x128xf32>
    %cst_216 = arith.constant 1.000000e+00 : f32
    %559 = vector.broadcast %cst_216 : f32 to vector<8x128xf32>
    %560 = arith.addf %559, %558 : vector<8x128xf32>
    %561 = arith.divf %559, %560 : vector<8x128xf32>
    %562 = vector.extract_strided_slice %542 {offsets = [0, 256], sizes = [8, 128], strides = [1, 1]} : vector<8x384xf32> to vector<8x128xf32>
    %563 = vector.extract_strided_slice %545 {offsets = [0, 256], sizes = [8, 128], strides = [1, 1]} : vector<8x384xf32> to vector<8x128xf32>
    %564 = arith.mulf %553, %563 : vector<8x128xf32>
    %565 = arith.addf %562, %564 : vector<8x128xf32>
    %566 = math.tanh %565 : vector<8x128xf32>
    %cst_217 = arith.constant 1.000000e+00 : f32
    %567 = vector.broadcast %cst_217 : f32 to vector<8x128xf32>
    %568 = arith.subf %567, %561 : vector<8x128xf32>
    %569 = arith.mulf %568, %566 : vector<8x128xf32>
    %570 = arith.mulf %561, %539 : vector<8x128xf32>
    %571 = arith.addf %569, %570 : vector<8x128xf32>
    %c5_i32 = arith.constant 5 : i32
    %c0_218 = arith.constant 0 : index
    %572 = arith.index_cast %c5_i32 : i32 to index
    %c0_219 = arith.constant 0 : index
    %c0_220 = arith.constant 0 : index
    %573 = vector.load %arg1[%c0_218, %572, %c0_219, %c0_220] : memref<4x8x8x128xf32, #tpu.memory_space<vmem>>, vector<1x1x8x128xf32>
    %574 = vector.shape_cast %573 : vector<1x1x8x128xf32> to vector<8x128xf32>
    %c2_221 = arith.constant 2 : index
    %575 = arith.index_cast %c5_i32 : i32 to index
    %c0_222 = arith.constant 0 : index
    %c0_223 = arith.constant 0 : index
    %576 = vector.load %arg1[%c2_221, %575, %c0_222, %c0_223] : memref<4x8x8x128xf32, #tpu.memory_space<vmem>>, vector<1x1x8x128xf32>
    %577 = vector.shape_cast %576 : vector<1x1x8x128xf32> to vector<8x128xf32>
    %578 = arith.index_cast %c5_i32 : i32 to index
    %c0_224 = arith.constant 0 : index
    %c0_225 = arith.constant 0 : index
    %579 = vector.load %arg22[%578, %c0_224, %c0_225] : memref<8x8x128xf32, #tpu.memory_space<vmem>>, vector<1x8x128xf32>
    %580 = vector.shape_cast %579 : vector<1x8x128xf32> to vector<8x128xf32>
    %581 = arith.index_cast %c5_i32 : i32 to index
    %c0_226 = arith.constant 0 : index
    %c0_227 = arith.constant 0 : index
    %582 = vector.load %arg23[%581, %c0_226, %c0_227] : memref<8x8x128xf32, #tpu.memory_space<vmem>>, vector<1x8x128xf32>
    %583 = vector.shape_cast %582 : vector<1x8x128xf32> to vector<8x128xf32>
    %584 = arith.index_cast %c5_i32 : i32 to index
    %c0_228 = arith.constant 0 : index
    %c0_229 = arith.constant 0 : index
    %585 = vector.load %arg24[%584, %c0_228, %c0_229] : memref<8x8x384xf32, #tpu.memory_space<vmem>>, vector<1x8x384xf32>
    %586 = vector.shape_cast %585 : vector<1x8x384xf32> to vector<8x384xf32>
    %587 = arith.index_cast %c5_i32 : i32 to index
    %c0_230 = arith.constant 0 : index
    %c0_231 = arith.constant 0 : index
    %588 = vector.load %arg25[%587, %c0_230, %c0_231] : memref<8x8x128xf32, #tpu.memory_space<vmem>>, vector<1x8x128xf32>
    %589 = vector.shape_cast %588 : vector<1x8x128xf32> to vector<8x128xf32>
    %590 = arith.index_cast %c5_i32 : i32 to index
    %c0_232 = arith.constant 0 : index
    %c0_233 = arith.constant 0 : index
    %591 = vector.load %arg26[%590, %c0_232, %c0_233] : memref<8x8x128xf32, #tpu.memory_space<vmem>>, vector<1x8x128xf32>
    %592 = vector.shape_cast %591 : vector<1x8x128xf32> to vector<8x128xf32>
    %593 = arith.mulf %577, %574 : vector<8x128xf32>
    %cst_234 = arith.constant 1.000000e+00 : f32
    %594 = vector.broadcast %cst_234 : f32 to vector<8x128xf32>
    %595 = arith.subf %594, %577 : vector<8x128xf32>
    %596 = arith.truncf %571 : vector<8x128xf32> to vector<8x128xbf16>
    %cst_235 = arith.constant dense<0.000000e+00> : vector<8x128xf32>
    %597 = tpu.matmul %596, %66, %cst_235 {dimension_numbers = #tpu.dot_dimension_numbers<[1], [0], [0], [1], [0, 0, 1, 1], [], []>} : vector<8x128xbf16>, vector<128x128xbf16>, vector<8x128xf32> -> vector<8x128xf32>
    %598 = arith.addf %597, %73 : vector<8x128xf32>
    %599 = arith.mulf %595, %598 : vector<8x128xf32>
    %600 = arith.addf %593, %599 : vector<8x128xf32>
    %601 = arith.truncf %600 : vector<8x128xf32> to vector<8x128xbf16>
    %cst_236 = arith.constant dense<0.000000e+00> : vector<8x128xf32>
    %602 = tpu.matmul %601, %67, %cst_236 {dimension_numbers = #tpu.dot_dimension_numbers<[1], [0], [0], [1], [0, 0, 1, 1], [], []>} : vector<8x128xbf16>, vector<128x128xbf16>, vector<8x128xf32> -> vector<8x128xf32>
    %603 = arith.addf %602, %589 : vector<8x128xf32>
    %604 = arith.mulf %595, %603 : vector<8x128xf32>
    %605 = arith.addf %593, %604 : vector<8x128xf32>
    %606 = arith.truncf %605 : vector<8x128xf32> to vector<8x128xbf16>
    %cst_237 = arith.constant dense<0.000000e+00> : vector<8x128xf32>
    %607 = tpu.matmul %606, %68, %cst_237 {dimension_numbers = #tpu.dot_dimension_numbers<[1], [0], [0], [1], [0, 0, 1, 1], [], []>} : vector<8x128xbf16>, vector<128x128xbf16>, vector<8x128xf32> -> vector<8x128xf32>
    %608 = arith.addf %607, %76 : vector<8x128xf32>
    %609 = arith.mulf %583, %608 : vector<8x128xf32>
    %cst_238 = arith.constant 1.000000e+00 : f32
    %610 = vector.broadcast %cst_238 : f32 to vector<8x128xf32>
    %611 = arith.subf %610, %583 : vector<8x128xf32>
    %612 = arith.mulf %611, %598 : vector<8x128xf32>
    %613 = arith.addf %609, %612 : vector<8x128xf32>
    %614 = arith.mulf %595, %613 : vector<8x128xf32>
    %615 = arith.addf %593, %614 : vector<8x128xf32>
    %616 = arith.subf %574, %598 : vector<8x128xf32>
    %617 = math.absf %616 : vector<8x128xf32>
    %618 = arith.subf %574, %603 : vector<8x128xf32>
    %619 = math.absf %618 : vector<8x128xf32>
    %620 = arith.addf %617, %619 : vector<8x128xf32>
    %621 = arith.subf %574, %608 : vector<8x128xf32>
    %622 = math.absf %621 : vector<8x128xf32>
    %623 = arith.addf %620, %622 : vector<8x128xf32>
    %624 = arith.subf %574, %613 : vector<8x128xf32>
    %625 = math.absf %624 : vector<8x128xf32>
    %626 = arith.addf %623, %625 : vector<8x128xf32>
    %627 = arith.mulf %626, %592 : vector<8x128xf32>
    %628 = arith.addf %530, %627 : vector<8x128xf32>
    %629 = arith.index_cast %c5_i32 : i32 to index
    %c0_239 = arith.constant 0 : index
    %c0_240 = arith.constant 0 : index
    %630 = vector.load %arg17[%629, %c0_239, %c0_240] : memref<8x8x128xf32, #tpu.memory_space<vmem>>, vector<1x8x128xf32>
    %631 = vector.shape_cast %630 : vector<1x8x128xf32> to vector<8x128xf32>
    %632 = vector.shape_cast %613 : vector<8x128xf32> to vector<1x8x128xf32>
    tpu.vector_store %arg17[%629, %c0_239, %c0_240], %632 {strides = array<i32>} : memref<8x8x128xf32, #tpu.memory_space<vmem>>, vector<1x8x128xf32>,
    %633 = arith.index_cast %c5_i32 : i32 to index
    %c0_241 = arith.constant 0 : index
    %c0_242 = arith.constant 0 : index
    %634 = vector.load %arg18[%633, %c0_241, %c0_242] : memref<8x8x128xf32, #tpu.memory_space<vmem>>, vector<1x8x128xf32>
    %635 = vector.shape_cast %634 : vector<1x8x128xf32> to vector<8x128xf32>
    %636 = vector.shape_cast %615 : vector<8x128xf32> to vector<1x8x128xf32>
    tpu.vector_store %arg18[%633, %c0_241, %c0_242], %636 {strides = array<i32>} : memref<8x8x128xf32, #tpu.memory_space<vmem>>, vector<1x8x128xf32>,
    %637 = arith.mulf %571, %580 : vector<8x128xf32>
    %638 = arith.truncf %615 : vector<8x128xf32> to vector<8x128xbf16>
    %cst_243 = arith.constant dense<0.000000e+00> : vector<8x384xf32>
    %639 = tpu.matmul %638, %69, %cst_243 {dimension_numbers = #tpu.dot_dimension_numbers<[1], [0], [0], [1], [0, 0, 1, 1], [], []>} : vector<8x128xbf16>, vector<128x384xbf16>, vector<8x384xf32> -> vector<8x384xf32>
    %640 = arith.addf %639, %586 : vector<8x384xf32>
    %641 = arith.truncf %637 : vector<8x128xf32> to vector<8x128xbf16>
    %cst_244 = arith.constant dense<0.000000e+00> : vector<8x384xf32>
    %642 = tpu.matmul %641, %70, %cst_244 {dimension_numbers = #tpu.dot_dimension_numbers<[1], [0], [0], [1], [0, 0, 1, 1], [], []>} : vector<8x128xbf16>, vector<128x384xbf16>, vector<8x384xf32> -> vector<8x384xf32>
    %643 = arith.addf %642, %79 : vector<8x384xf32>
    %644 = vector.extract_strided_slice %640 {offsets = [0, 0], sizes = [8, 128], strides = [1, 1]} : vector<8x384xf32> to vector<8x128xf32>
    %645 = vector.extract_strided_slice %643 {offsets = [0, 0], sizes = [8, 128], strides = [1, 1]} : vector<8x384xf32> to vector<8x128xf32>
    %646 = arith.addf %644, %645 : vector<8x128xf32>
    %647 = arith.negf %646 : vector<8x128xf32>
    %648 = math.exp %647 : vector<8x128xf32>
    %cst_245 = arith.constant 1.000000e+00 : f32
    %649 = vector.broadcast %cst_245 : f32 to vector<8x128xf32>
    %650 = arith.addf %649, %648 : vector<8x128xf32>
    %651 = arith.divf %649, %650 : vector<8x128xf32>
    %652 = vector.extract_strided_slice %640 {offsets = [0, 128], sizes = [8, 128], strides = [1, 1]} : vector<8x384xf32> to vector<8x128xf32>
    %653 = vector.extract_strided_slice %643 {offsets = [0, 128], sizes = [8, 128], strides = [1, 1]} : vector<8x384xf32> to vector<8x128xf32>
    %654 = arith.addf %652, %653 : vector<8x128xf32>
    %655 = arith.negf %654 : vector<8x128xf32>
    %656 = math.exp %655 : vector<8x128xf32>
    %cst_246 = arith.constant 1.000000e+00 : f32
    %657 = vector.broadcast %cst_246 : f32 to vector<8x128xf32>
    %658 = arith.addf %657, %656 : vector<8x128xf32>
    %659 = arith.divf %657, %658 : vector<8x128xf32>
    %660 = vector.extract_strided_slice %640 {offsets = [0, 256], sizes = [8, 128], strides = [1, 1]} : vector<8x384xf32> to vector<8x128xf32>
    %661 = vector.extract_strided_slice %643 {offsets = [0, 256], sizes = [8, 128], strides = [1, 1]} : vector<8x384xf32> to vector<8x128xf32>
    %662 = arith.mulf %651, %661 : vector<8x128xf32>
    %663 = arith.addf %660, %662 : vector<8x128xf32>
    %664 = math.tanh %663 : vector<8x128xf32>
    %cst_247 = arith.constant 1.000000e+00 : f32
    %665 = vector.broadcast %cst_247 : f32 to vector<8x128xf32>
    %666 = arith.subf %665, %659 : vector<8x128xf32>
    %667 = arith.mulf %666, %664 : vector<8x128xf32>
    %668 = arith.mulf %659, %637 : vector<8x128xf32>
    %669 = arith.addf %667, %668 : vector<8x128xf32>
    %c6_i32 = arith.constant 6 : i32
    %c0_248 = arith.constant 0 : index
    %670 = arith.index_cast %c6_i32 : i32 to index
    %c0_249 = arith.constant 0 : index
    %c0_250 = arith.constant 0 : index
    %671 = vector.load %arg1[%c0_248, %670, %c0_249, %c0_250] : memref<4x8x8x128xf32, #tpu.memory_space<vmem>>, vector<1x1x8x128xf32>
    %672 = vector.shape_cast %671 : vector<1x1x8x128xf32> to vector<8x128xf32>
    %c2_251 = arith.constant 2 : index
    %673 = arith.index_cast %c6_i32 : i32 to index
    %c0_252 = arith.constant 0 : index
    %c0_253 = arith.constant 0 : index
    %674 = vector.load %arg1[%c2_251, %673, %c0_252, %c0_253] : memref<4x8x8x128xf32, #tpu.memory_space<vmem>>, vector<1x1x8x128xf32>
    %675 = vector.shape_cast %674 : vector<1x1x8x128xf32> to vector<8x128xf32>
    %676 = arith.index_cast %c6_i32 : i32 to index
    %c0_254 = arith.constant 0 : index
    %c0_255 = arith.constant 0 : index
    %677 = vector.load %arg22[%676, %c0_254, %c0_255] : memref<8x8x128xf32, #tpu.memory_space<vmem>>, vector<1x8x128xf32>
    %678 = vector.shape_cast %677 : vector<1x8x128xf32> to vector<8x128xf32>
    %679 = arith.index_cast %c6_i32 : i32 to index
    %c0_256 = arith.constant 0 : index
    %c0_257 = arith.constant 0 : index
    %680 = vector.load %arg23[%679, %c0_256, %c0_257] : memref<8x8x128xf32, #tpu.memory_space<vmem>>, vector<1x8x128xf32>
    %681 = vector.shape_cast %680 : vector<1x8x128xf32> to vector<8x128xf32>
    %682 = arith.index_cast %c6_i32 : i32 to index
    %c0_258 = arith.constant 0 : index
    %c0_259 = arith.constant 0 : index
    %683 = vector.load %arg24[%682, %c0_258, %c0_259] : memref<8x8x384xf32, #tpu.memory_space<vmem>>, vector<1x8x384xf32>
    %684 = vector.shape_cast %683 : vector<1x8x384xf32> to vector<8x384xf32>
    %685 = arith.index_cast %c6_i32 : i32 to index
    %c0_260 = arith.constant 0 : index
    %c0_261 = arith.constant 0 : index
    %686 = vector.load %arg25[%685, %c0_260, %c0_261] : memref<8x8x128xf32, #tpu.memory_space<vmem>>, vector<1x8x128xf32>
    %687 = vector.shape_cast %686 : vector<1x8x128xf32> to vector<8x128xf32>
    %688 = arith.index_cast %c6_i32 : i32 to index
    %c0_262 = arith.constant 0 : index
    %c0_263 = arith.constant 0 : index
    %689 = vector.load %arg26[%688, %c0_262, %c0_263] : memref<8x8x128xf32, #tpu.memory_space<vmem>>, vector<1x8x128xf32>
    %690 = vector.shape_cast %689 : vector<1x8x128xf32> to vector<8x128xf32>
    %691 = arith.mulf %675, %672 : vector<8x128xf32>
    %cst_264 = arith.constant 1.000000e+00 : f32
    %692 = vector.broadcast %cst_264 : f32 to vector<8x128xf32>
    %693 = arith.subf %692, %675 : vector<8x128xf32>
    %694 = arith.truncf %669 : vector<8x128xf32> to vector<8x128xbf16>
    %cst_265 = arith.constant dense<0.000000e+00> : vector<8x128xf32>
    %695 = tpu.matmul %694, %66, %cst_265 {dimension_numbers = #tpu.dot_dimension_numbers<[1], [0], [0], [1], [0, 0, 1, 1], [], []>} : vector<8x128xbf16>, vector<128x128xbf16>, vector<8x128xf32> -> vector<8x128xf32>
    %696 = arith.addf %695, %73 : vector<8x128xf32>
    %697 = arith.mulf %693, %696 : vector<8x128xf32>
    %698 = arith.addf %691, %697 : vector<8x128xf32>
    %699 = arith.truncf %698 : vector<8x128xf32> to vector<8x128xbf16>
    %cst_266 = arith.constant dense<0.000000e+00> : vector<8x128xf32>
    %700 = tpu.matmul %699, %67, %cst_266 {dimension_numbers = #tpu.dot_dimension_numbers<[1], [0], [0], [1], [0, 0, 1, 1], [], []>} : vector<8x128xbf16>, vector<128x128xbf16>, vector<8x128xf32> -> vector<8x128xf32>
    %701 = arith.addf %700, %687 : vector<8x128xf32>
    %702 = arith.mulf %693, %701 : vector<8x128xf32>
    %703 = arith.addf %691, %702 : vector<8x128xf32>
    %704 = arith.truncf %703 : vector<8x128xf32> to vector<8x128xbf16>
    %cst_267 = arith.constant dense<0.000000e+00> : vector<8x128xf32>
    %705 = tpu.matmul %704, %68, %cst_267 {dimension_numbers = #tpu.dot_dimension_numbers<[1], [0], [0], [1], [0, 0, 1, 1], [], []>} : vector<8x128xbf16>, vector<128x128xbf16>, vector<8x128xf32> -> vector<8x128xf32>
    %706 = arith.addf %705, %76 : vector<8x128xf32>
    %707 = arith.mulf %681, %706 : vector<8x128xf32>
    %cst_268 = arith.constant 1.000000e+00 : f32
    %708 = vector.broadcast %cst_268 : f32 to vector<8x128xf32>
    %709 = arith.subf %708, %681 : vector<8x128xf32>
    %710 = arith.mulf %709, %696 : vector<8x128xf32>
    %711 = arith.addf %707, %710 : vector<8x128xf32>
    %712 = arith.mulf %693, %711 : vector<8x128xf32>
    %713 = arith.addf %691, %712 : vector<8x128xf32>
    %714 = arith.subf %672, %696 : vector<8x128xf32>
    %715 = math.absf %714 : vector<8x128xf32>
    %716 = arith.subf %672, %701 : vector<8x128xf32>
    %717 = math.absf %716 : vector<8x128xf32>
    %718 = arith.addf %715, %717 : vector<8x128xf32>
    %719 = arith.subf %672, %706 : vector<8x128xf32>
    %720 = math.absf %719 : vector<8x128xf32>
    %721 = arith.addf %718, %720 : vector<8x128xf32>
    %722 = arith.subf %672, %711 : vector<8x128xf32>
    %723 = math.absf %722 : vector<8x128xf32>
    %724 = arith.addf %721, %723 : vector<8x128xf32>
    %725 = arith.mulf %724, %690 : vector<8x128xf32>
    %726 = arith.addf %628, %725 : vector<8x128xf32>
    %727 = arith.index_cast %c6_i32 : i32 to index
    %c0_269 = arith.constant 0 : index
    %c0_270 = arith.constant 0 : index
    %728 = vector.load %arg17[%727, %c0_269, %c0_270] : memref<8x8x128xf32, #tpu.memory_space<vmem>>, vector<1x8x128xf32>
    %729 = vector.shape_cast %728 : vector<1x8x128xf32> to vector<8x128xf32>
    %730 = vector.shape_cast %711 : vector<8x128xf32> to vector<1x8x128xf32>
    tpu.vector_store %arg17[%727, %c0_269, %c0_270], %730 {strides = array<i32>} : memref<8x8x128xf32, #tpu.memory_space<vmem>>, vector<1x8x128xf32>,
    %731 = arith.index_cast %c6_i32 : i32 to index
    %c0_271 = arith.constant 0 : index
    %c0_272 = arith.constant 0 : index
    %732 = vector.load %arg18[%731, %c0_271, %c0_272] : memref<8x8x128xf32, #tpu.memory_space<vmem>>, vector<1x8x128xf32>
    %733 = vector.shape_cast %732 : vector<1x8x128xf32> to vector<8x128xf32>
    %734 = vector.shape_cast %713 : vector<8x128xf32> to vector<1x8x128xf32>
    tpu.vector_store %arg18[%731, %c0_271, %c0_272], %734 {strides = array<i32>} : memref<8x8x128xf32, #tpu.memory_space<vmem>>, vector<1x8x128xf32>,
    %735 = arith.mulf %669, %678 : vector<8x128xf32>
    %736 = arith.truncf %713 : vector<8x128xf32> to vector<8x128xbf16>
    %cst_273 = arith.constant dense<0.000000e+00> : vector<8x384xf32>
    %737 = tpu.matmul %736, %69, %cst_273 {dimension_numbers = #tpu.dot_dimension_numbers<[1], [0], [0], [1], [0, 0, 1, 1], [], []>} : vector<8x128xbf16>, vector<128x384xbf16>, vector<8x384xf32> -> vector<8x384xf32>
    %738 = arith.addf %737, %684 : vector<8x384xf32>
    %739 = arith.truncf %735 : vector<8x128xf32> to vector<8x128xbf16>
    %cst_274 = arith.constant dense<0.000000e+00> : vector<8x384xf32>
    %740 = tpu.matmul %739, %70, %cst_274 {dimension_numbers = #tpu.dot_dimension_numbers<[1], [0], [0], [1], [0, 0, 1, 1], [], []>} : vector<8x128xbf16>, vector<128x384xbf16>, vector<8x384xf32> -> vector<8x384xf32>
    %741 = arith.addf %740, %79 : vector<8x384xf32>
    %742 = vector.extract_strided_slice %738 {offsets = [0, 0], sizes = [8, 128], strides = [1, 1]} : vector<8x384xf32> to vector<8x128xf32>
    %743 = vector.extract_strided_slice %741 {offsets = [0, 0], sizes = [8, 128], strides = [1, 1]} : vector<8x384xf32> to vector<8x128xf32>
    %744 = arith.addf %742, %743 : vector<8x128xf32>
    %745 = arith.negf %744 : vector<8x128xf32>
    %746 = math.exp %745 : vector<8x128xf32>
    %cst_275 = arith.constant 1.000000e+00 : f32
    %747 = vector.broadcast %cst_275 : f32 to vector<8x128xf32>
    %748 = arith.addf %747, %746 : vector<8x128xf32>
    %749 = arith.divf %747, %748 : vector<8x128xf32>
    %750 = vector.extract_strided_slice %738 {offsets = [0, 128], sizes = [8, 128], strides = [1, 1]} : vector<8x384xf32> to vector<8x128xf32>
    %751 = vector.extract_strided_slice %741 {offsets = [0, 128], sizes = [8, 128], strides = [1, 1]} : vector<8x384xf32> to vector<8x128xf32>
    %752 = arith.addf %750, %751 : vector<8x128xf32>
    %753 = arith.negf %752 : vector<8x128xf32>
    %754 = math.exp %753 : vector<8x128xf32>
    %cst_276 = arith.constant 1.000000e+00 : f32
    %755 = vector.broadcast %cst_276 : f32 to vector<8x128xf32>
    %756 = arith.addf %755, %754 : vector<8x128xf32>
    %757 = arith.divf %755, %756 : vector<8x128xf32>
    %758 = vector.extract_strided_slice %738 {offsets = [0, 256], sizes = [8, 128], strides = [1, 1]} : vector<8x384xf32> to vector<8x128xf32>
    %759 = vector.extract_strided_slice %741 {offsets = [0, 256], sizes = [8, 128], strides = [1, 1]} : vector<8x384xf32> to vector<8x128xf32>
    %760 = arith.mulf %749, %759 : vector<8x128xf32>
    %761 = arith.addf %758, %760 : vector<8x128xf32>
    %762 = math.tanh %761 : vector<8x128xf32>
    %cst_277 = arith.constant 1.000000e+00 : f32
    %763 = vector.broadcast %cst_277 : f32 to vector<8x128xf32>
    %764 = arith.subf %763, %757 : vector<8x128xf32>
    %765 = arith.mulf %764, %762 : vector<8x128xf32>
    %766 = arith.mulf %757, %735 : vector<8x128xf32>
    %767 = arith.addf %765, %766 : vector<8x128xf32>
    %c7_i32 = arith.constant 7 : i32
    %c0_278 = arith.constant 0 : index
    %768 = arith.index_cast %c7_i32 : i32 to index
    %c0_279 = arith.constant 0 : index
    %c0_280 = arith.constant 0 : index
    %769 = vector.load %arg1[%c0_278, %768, %c0_279, %c0_280] : memref<4x8x8x128xf32, #tpu.memory_space<vmem>>, vector<1x1x8x128xf32>
    %770 = vector.shape_cast %769 : vector<1x1x8x128xf32> to vector<8x128xf32>
    %c2_281 = arith.constant 2 : index
    %771 = arith.index_cast %c7_i32 : i32 to index
    %c0_282 = arith.constant 0 : index
    %c0_283 = arith.constant 0 : index
    %772 = vector.load %arg1[%c2_281, %771, %c0_282, %c0_283] : memref<4x8x8x128xf32, #tpu.memory_space<vmem>>, vector<1x1x8x128xf32>
    %773 = vector.shape_cast %772 : vector<1x1x8x128xf32> to vector<8x128xf32>
    %774 = arith.index_cast %c7_i32 : i32 to index
    %c0_284 = arith.constant 0 : index
    %c0_285 = arith.constant 0 : index
    %775 = vector.load %arg22[%774, %c0_284, %c0_285] : memref<8x8x128xf32, #tpu.memory_space<vmem>>, vector<1x8x128xf32>
    %776 = vector.shape_cast %775 : vector<1x8x128xf32> to vector<8x128xf32>
    %777 = arith.index_cast %c7_i32 : i32 to index
    %c0_286 = arith.constant 0 : index
    %c0_287 = arith.constant 0 : index
    %778 = vector.load %arg23[%777, %c0_286, %c0_287] : memref<8x8x128xf32, #tpu.memory_space<vmem>>, vector<1x8x128xf32>
    %779 = vector.shape_cast %778 : vector<1x8x128xf32> to vector<8x128xf32>
    %780 = arith.index_cast %c7_i32 : i32 to index
    %c0_288 = arith.constant 0 : index
    %c0_289 = arith.constant 0 : index
    %781 = vector.load %arg24[%780, %c0_288, %c0_289] : memref<8x8x384xf32, #tpu.memory_space<vmem>>, vector<1x8x384xf32>
    %782 = vector.shape_cast %781 : vector<1x8x384xf32> to vector<8x384xf32>
    %783 = arith.index_cast %c7_i32 : i32 to index
    %c0_290 = arith.constant 0 : index
    %c0_291 = arith.constant 0 : index
    %784 = vector.load %arg25[%783, %c0_290, %c0_291] : memref<8x8x128xf32, #tpu.memory_space<vmem>>, vector<1x8x128xf32>
    %785 = vector.shape_cast %784 : vector<1x8x128xf32> to vector<8x128xf32>
    %786 = arith.index_cast %c7_i32 : i32 to index
    %c0_292 = arith.constant 0 : index
    %c0_293 = arith.constant 0 : index
    %787 = vector.load %arg26[%786, %c0_292, %c0_293] : memref<8x8x128xf32, #tpu.memory_space<vmem>>, vector<1x8x128xf32>
    %788 = vector.shape_cast %787 : vector<1x8x128xf32> to vector<8x128xf32>
    %789 = arith.mulf %773, %770 : vector<8x128xf32>
    %cst_294 = arith.constant 1.000000e+00 : f32
    %790 = vector.broadcast %cst_294 : f32 to vector<8x128xf32>
    %791 = arith.subf %790, %773 : vector<8x128xf32>
    %792 = arith.truncf %767 : vector<8x128xf32> to vector<8x128xbf16>
    %cst_295 = arith.constant dense<0.000000e+00> : vector<8x128xf32>
    %793 = tpu.matmul %792, %66, %cst_295 {dimension_numbers = #tpu.dot_dimension_numbers<[1], [0], [0], [1], [0, 0, 1, 1], [], []>} : vector<8x128xbf16>, vector<128x128xbf16>, vector<8x128xf32> -> vector<8x128xf32>
    %794 = arith.addf %793, %73 : vector<8x128xf32>
    %795 = arith.mulf %791, %794 : vector<8x128xf32>
    %796 = arith.addf %789, %795 : vector<8x128xf32>
    %797 = arith.truncf %796 : vector<8x128xf32> to vector<8x128xbf16>
    %cst_296 = arith.constant dense<0.000000e+00> : vector<8x128xf32>
    %798 = tpu.matmul %797, %67, %cst_296 {dimension_numbers = #tpu.dot_dimension_numbers<[1], [0], [0], [1], [0, 0, 1, 1], [], []>} : vector<8x128xbf16>, vector<128x128xbf16>, vector<8x128xf32> -> vector<8x128xf32>
    %799 = arith.addf %798, %785 : vector<8x128xf32>
    %800 = arith.mulf %791, %799 : vector<8x128xf32>
    %801 = arith.addf %789, %800 : vector<8x128xf32>
    %802 = arith.truncf %801 : vector<8x128xf32> to vector<8x128xbf16>
    %cst_297 = arith.constant dense<0.000000e+00> : vector<8x128xf32>
    %803 = tpu.matmul %802, %68, %cst_297 {dimension_numbers = #tpu.dot_dimension_numbers<[1], [0], [0], [1], [0, 0, 1, 1], [], []>} : vector<8x128xbf16>, vector<128x128xbf16>, vector<8x128xf32> -> vector<8x128xf32>
    %804 = arith.addf %803, %76 : vector<8x128xf32>
    %805 = arith.mulf %779, %804 : vector<8x128xf32>
    %cst_298 = arith.constant 1.000000e+00 : f32
    %806 = vector.broadcast %cst_298 : f32 to vector<8x128xf32>
    %807 = arith.subf %806, %779 : vector<8x128xf32>
    %808 = arith.mulf %807, %794 : vector<8x128xf32>
    %809 = arith.addf %805, %808 : vector<8x128xf32>
    %810 = arith.mulf %791, %809 : vector<8x128xf32>
    %811 = arith.addf %789, %810 : vector<8x128xf32>
    %812 = arith.subf %770, %794 : vector<8x128xf32>
    %813 = math.absf %812 : vector<8x128xf32>
    %814 = arith.subf %770, %799 : vector<8x128xf32>
    %815 = math.absf %814 : vector<8x128xf32>
    %816 = arith.addf %813, %815 : vector<8x128xf32>
    %817 = arith.subf %770, %804 : vector<8x128xf32>
    %818 = math.absf %817 : vector<8x128xf32>
    %819 = arith.addf %816, %818 : vector<8x128xf32>
    %820 = arith.subf %770, %809 : vector<8x128xf32>
    %821 = math.absf %820 : vector<8x128xf32>
    %822 = arith.addf %819, %821 : vector<8x128xf32>
    %823 = arith.mulf %822, %788 : vector<8x128xf32>
    %824 = arith.addf %726, %823 : vector<8x128xf32>
    %825 = arith.index_cast %c7_i32 : i32 to index
    %c0_299 = arith.constant 0 : index
    %c0_300 = arith.constant 0 : index
    %826 = vector.load %arg17[%825, %c0_299, %c0_300] : memref<8x8x128xf32, #tpu.memory_space<vmem>>, vector<1x8x128xf32>
    %827 = vector.shape_cast %826 : vector<1x8x128xf32> to vector<8x128xf32>
    %828 = vector.shape_cast %809 : vector<8x128xf32> to vector<1x8x128xf32>
    tpu.vector_store %arg17[%825, %c0_299, %c0_300], %828 {strides = array<i32>} : memref<8x8x128xf32, #tpu.memory_space<vmem>>, vector<1x8x128xf32>,
    %829 = arith.index_cast %c7_i32 : i32 to index
    %c0_301 = arith.constant 0 : index
    %c0_302 = arith.constant 0 : index
    %830 = vector.load %arg18[%829, %c0_301, %c0_302] : memref<8x8x128xf32, #tpu.memory_space<vmem>>, vector<1x8x128xf32>
    %831 = vector.shape_cast %830 : vector<1x8x128xf32> to vector<8x128xf32>
    %832 = vector.shape_cast %811 : vector<8x128xf32> to vector<1x8x128xf32>
    tpu.vector_store %arg18[%829, %c0_301, %c0_302], %832 {strides = array<i32>} : memref<8x8x128xf32, #tpu.memory_space<vmem>>, vector<1x8x128xf32>,
    %833 = arith.mulf %767, %776 : vector<8x128xf32>
    %834 = arith.truncf %811 : vector<8x128xf32> to vector<8x128xbf16>
    %cst_303 = arith.constant dense<0.000000e+00> : vector<8x384xf32>
    %835 = tpu.matmul %834, %69, %cst_303 {dimension_numbers = #tpu.dot_dimension_numbers<[1], [0], [0], [1], [0, 0, 1, 1], [], []>} : vector<8x128xbf16>, vector<128x384xbf16>, vector<8x384xf32> -> vector<8x384xf32>
    %836 = arith.addf %835, %782 : vector<8x384xf32>
    %837 = arith.truncf %833 : vector<8x128xf32> to vector<8x128xbf16>
    %cst_304 = arith.constant dense<0.000000e+00> : vector<8x384xf32>
    %838 = tpu.matmul %837, %70, %cst_304 {dimension_numbers = #tpu.dot_dimension_numbers<[1], [0], [0], [1], [0, 0, 1, 1], [], []>} : vector<8x128xbf16>, vector<128x384xbf16>, vector<8x384xf32> -> vector<8x384xf32>
    %839 = arith.addf %838, %79 : vector<8x384xf32>
    %840 = vector.extract_strided_slice %836 {offsets = [0, 0], sizes = [8, 128], strides = [1, 1]} : vector<8x384xf32> to vector<8x128xf32>
    %841 = vector.extract_strided_slice %839 {offsets = [0, 0], sizes = [8, 128], strides = [1, 1]} : vector<8x384xf32> to vector<8x128xf32>
    %842 = arith.addf %840, %841 : vector<8x128xf32>
    %843 = arith.negf %842 : vector<8x128xf32>
    %844 = math.exp %843 : vector<8x128xf32>
    %cst_305 = arith.constant 1.000000e+00 : f32
    %845 = vector.broadcast %cst_305 : f32 to vector<8x128xf32>
    %846 = arith.addf %845, %844 : vector<8x128xf32>
    %847 = arith.divf %845, %846 : vector<8x128xf32>
    %848 = vector.extract_strided_slice %836 {offsets = [0, 128], sizes = [8, 128], strides = [1, 1]} : vector<8x384xf32> to vector<8x128xf32>
    %849 = vector.extract_strided_slice %839 {offsets = [0, 128], sizes = [8, 128], strides = [1, 1]} : vector<8x384xf32> to vector<8x128xf32>
    %850 = arith.addf %848, %849 : vector<8x128xf32>
    %851 = arith.negf %850 : vector<8x128xf32>
    %852 = math.exp %851 : vector<8x128xf32>
    %cst_306 = arith.constant 1.000000e+00 : f32
    %853 = vector.broadcast %cst_306 : f32 to vector<8x128xf32>
    %854 = arith.addf %853, %852 : vector<8x128xf32>
    %855 = arith.divf %853, %854 : vector<8x128xf32>
    %856 = vector.extract_strided_slice %836 {offsets = [0, 256], sizes = [8, 128], strides = [1, 1]} : vector<8x384xf32> to vector<8x128xf32>
    %857 = vector.extract_strided_slice %839 {offsets = [0, 256], sizes = [8, 128], strides = [1, 1]} : vector<8x384xf32> to vector<8x128xf32>
    %858 = arith.mulf %847, %857 : vector<8x128xf32>
    %859 = arith.addf %856, %858 : vector<8x128xf32>
    %860 = math.tanh %859 : vector<8x128xf32>
    %cst_307 = arith.constant 1.000000e+00 : f32
    %861 = vector.broadcast %cst_307 : f32 to vector<8x128xf32>
    %862 = arith.subf %861, %855 : vector<8x128xf32>
    %863 = arith.mulf %862, %860 : vector<8x128xf32>
    %864 = arith.mulf %855, %833 : vector<8x128xf32>
    %865 = arith.addf %863, %864 : vector<8x128xf32>
    %c8_i32 = arith.constant 8 : i32
    %c0_308 = arith.constant 0 : index
    %c0_309 = arith.constant 0 : index
    %866 = vector.load %arg20[%c0_308, %c0_309] : memref<8x128xf32, #tpu.memory_space<vmem>>, vector<8x128xf32>
    tpu.vector_store %arg20[%c0_308, %c0_309], %865 {strides = array<i32>} : memref<8x128xf32, #tpu.memory_space<vmem>>, vector<8x128xf32>,
    %c0_310 = arith.constant 0 : index
    %c0_311 = arith.constant 0 : index
    %867 = vector.load %arg21[%c0_310, %c0_311] : memref<8x128xf32, #tpu.memory_space<vmem>>, vector<8x128xf32>
    tpu.vector_store %arg21[%c0_310, %c0_311], %824 {strides = array<i32>} : memref<8x128xf32, #tpu.memory_space<vmem>>, vector<8x128xf32>,
    %c0_i32_312 = arith.constant 0 : i32
    %868 = arith.cmpi eq, %arg0, %c0_i32_312 : i32
    %869 = arith.extui %868 : i1 to i32
    %c0_i32_313 = arith.constant 0 : i32
    %870 = arith.cmpi ne, %869, %c0_i32_313 : i32
    scf.if %870 {
      %871 = vector.shape_cast %824 : vector<8x128xf32> to vector<1x8x128xf32>
      %cst_314 = arith.constant dense<0.000000e+00> : vector<1xf32>
      %872 = vector.multi_reduction <add>, %871, %cst_314 [1, 2] : vector<1x8x128xf32> to vector<1xf32>
      %873 = vector.shape_cast %872 : vector<1xf32> to vector<1x1x1xf32>
      %874 = vector.extract %873[0, 0, 0] : f32 from vector<1x1x1xf32>
      %875 = vector.broadcast %874 : f32 to vector<1x1xf32>
      %c0_315 = arith.constant 0 : index
      %c0_316 = arith.constant 0 : index
      %876 = vector.load %arg19[%c0_315, %c0_316] : memref<1x1xf32, #tpu.memory_space<vmem>>, vector<1x1xf32>
      tpu.vector_store %arg19[%c0_315, %c0_316], %875 {strides = array<i32>} : memref<1x1xf32, #tpu.memory_space<vmem>>, vector<1x1xf32>,
    } else {
    }
    return
  }
  func.func @transform_0(%arg0: i32) -> (i32, i32, i32, i32) {
    %c0_i32 = arith.constant 0 : i32
    %c0_i32_0 = arith.constant 0 : i32
    %c0_i32_1 = arith.constant 0 : i32
    %c0_i32_2 = arith.constant 0 : i32
    return %c0_i32, %arg0, %c0_i32_0, %c0_i32_1 : i32, i32, i32, i32
  }
  func.func @transform_1(%arg0: i32) -> (i32, i32) {
    %c0_i32 = arith.constant 0 : i32
    %c0_i32_0 = arith.constant 0 : i32
    %c0_i32_1 = arith.constant 0 : i32
    return %c0_i32, %c0_i32_0 : i32, i32
  }
  func.func @transform_2(%arg0: i32) -> (i32, i32) {
    %c0_i32 = arith.constant 0 : i32
    %c0_i32_0 = arith.constant 0 : i32
    %c0_i32_1 = arith.constant 0 : i32
    return %c0_i32, %c0_i32_0 : i32, i32
  }
  func.func @transform_3(%arg0: i32) -> (i32, i32) {
    %c0_i32 = arith.constant 0 : i32
    %c0_i32_0 = arith.constant 0 : i32
    %c0_i32_1 = arith.constant 0 : i32
    return %c0_i32, %c0_i32_0 : i32, i32
  }
  func.func @transform_4(%arg0: i32) -> (i32, i32) {
    %c0_i32 = arith.constant 0 : i32
    %c0_i32_0 = arith.constant 0 : i32
    %c0_i32_1 = arith.constant 0 : i32
    return %c0_i32, %c0_i32_0 : i32, i32
  }
  func.func @transform_5(%arg0: i32) -> (i32, i32) {
    %c0_i32 = arith.constant 0 : i32
    %c0_i32_0 = arith.constant 0 : i32
    %c0_i32_1 = arith.constant 0 : i32
    return %c0_i32, %c0_i32_0 : i32, i32
  }
  func.func @transform_6(%arg0: i32) -> (i32, i32) {
    %c0_i32 = arith.constant 0 : i32
    %c0_i32_0 = arith.constant 0 : i32
    %c0_i32_1 = arith.constant 0 : i32
    return %c0_i32, %c0_i32_0 : i32, i32
  }
  func.func @transform_7(%arg0: i32) -> (i32, i32) {
    %c0_i32 = arith.constant 0 : i32
    %c0_i32_0 = arith.constant 0 : i32
    %c0_i32_1 = arith.constant 0 : i32
    return %c0_i32, %c0_i32_0 : i32, i32
  }
  func.func @transform_8(%arg0: i32) -> (i32, i32) {
    %c0_i32 = arith.constant 0 : i32
    %c0_i32_0 = arith.constant 0 : i32
    %c0_i32_1 = arith.constant 0 : i32
    return %c0_i32, %c0_i32_0 : i32, i32
  }
  func.func @transform_9(%arg0: i32) -> (i32, i32) {
    %c0_i32 = arith.constant 0 : i32
    %c0_i32_0 = arith.constant 0 : i32
    %c0_i32_1 = arith.constant 0 : i32
    return %c0_i32, %c0_i32_0 : i32, i32
  }
  func.func @transform_10(%arg0: i32) -> (i32, i32) {
    %c0_i32 = arith.constant 0 : i32
    %c0_i32_0 = arith.constant 0 : i32
    %c0_i32_1 = arith.constant 0 : i32
    return %c0_i32, %c0_i32_0 : i32, i32
  }
  func.func @transform_11(%arg0: i32) -> (i32, i32) {
    %c0_i32 = arith.constant 0 : i32
    %c0_i32_0 = arith.constant 0 : i32
    %c0_i32_1 = arith.constant 0 : i32
    return %c0_i32, %c0_i32_0 : i32, i32
  }
  func.func @transform_12(%arg0: i32) -> (i32, i32) {
    %c0_i32 = arith.constant 0 : i32
    %c0_i32_0 = arith.constant 0 : i32
    %c0_i32_1 = arith.constant 0 : i32
    return %c0_i32, %c0_i32_0 : i32, i32
  }
  func.func @transform_13(%arg0: i32) -> (i32, i32) {
    %c0_i32 = arith.constant 0 : i32
    %c0_i32_0 = arith.constant 0 : i32
    %c0_i32_1 = arith.constant 0 : i32
    return %c0_i32, %c0_i32_0 : i32, i32
  }
  func.func @transform_14(%arg0: i32) -> (i32, i32) {
    %c0_i32 = arith.constant 0 : i32
    %c0_i32_0 = arith.constant 0 : i32
    %c0_i32_1 = arith.constant 0 : i32
    return %c0_i32, %c0_i32_0 : i32, i32
  }
  func.func @transform_15(%arg0: i32) -> (i32, i32) {
    %c0_i32 = arith.constant 0 : i32
    %c0_i32_0 = arith.constant 0 : i32
    %c0_i32_1 = arith.constant 0 : i32
    return %c0_i32, %c0_i32_0 : i32, i32
  }
  func.func @transform_16(%arg0: i32) -> (i32, i32, i32) {
    %c0_i32 = arith.constant 0 : i32
    %c0_i32_0 = arith.constant 0 : i32
    %c0_i32_1 = arith.constant 0 : i32
    return %arg0, %c0_i32, %c0_i32_0 : i32, i32, i32
  }
  func.func @transform_17(%arg0: i32) -> (i32, i32, i32) {
    %c0_i32 = arith.constant 0 : i32
    %c0_i32_0 = arith.constant 0 : i32
    %c0_i32_1 = arith.constant 0 : i32
    return %arg0, %c0_i32, %c0_i32_0 : i32, i32, i32
  }
  func.func @transform_18(%arg0: i32) -> (i32, i32) {
    %c0_i32 = arith.constant 0 : i32
    %c0_i32_0 = arith.constant 0 : i32
    %c0_i32_1 = arith.constant 0 : i32
    return %c0_i32, %c0_i32_0 : i32, i32
  }
}

</mosaic_0001>

<llo_original>
// kernel: mgru_rbf_forward.1
$region0: #{mgru_rbf_forward.1}
  #allocation0 [shape = 'u32[]', space=smem, size = 0x4, offset = 0x4, fixed_abs, tag = 'smem constant byte address 0x4 - core index']
  #allocation1 [shape = 'u32[144,128]{1,0:T(1,128)}', space=vmem, size = 0x12000, scoped, tag = 'internal scratch']
  #allocation2 [shape = 'f32[8,128]{1,0:T(8,128)}', space=vmem, size = 0x1000, scoped, tag = 'scratch operand']
  #allocation3 [shape = 'f32[8,128]{1,0:T(8,128)}', space=vmem, size = 0x1000, scoped, tag = 'scratch operand']
  #allocation4 [shape = 'f32[8,8,128]{2,1,0:T(8,128)}', space=vmem, size = 0x8000, scoped, tag = 'scratch operand']
  #allocation5 [shape = 'f32[8,8,128]{2,1,0:T(8,128)}', space=vmem, size = 0x8000, scoped, tag = 'scratch operand']
  #allocation6 [shape = 'f32[8,8,384]{2,1,0:T(8,128)}', space=vmem, size = 0x18000, scoped, tag = 'scratch operand']
  #allocation7 [shape = 'f32[8,8,128]{2,1,0:T(8,128)}', space=vmem, size = 0x8000, scoped, tag = 'scratch operand']
  #allocation8 [shape = 'f32[8,8,128]{2,1,0:T(8,128)}', space=vmem, size = 0x8000, scoped, tag = 'scratch operand']
  %s0 = inlined_call_operand.vmem [shape: f32[4,8,8,128], index: 0, kind: input, shape index: {}]
  %s1 = inlined_call_operand.vmem [shape: bf16[128,256], index: 1, kind: input, shape index: {}]
  %s2 = inlined_call_operand.vmem [shape: f32[1,256], index: 2, kind: input, shape index: {}]
  %s3 = inlined_call_operand.vmem [shape: bf16[128,512], index: 3, kind: input, shape index: {}]
  %s4 = inlined_call_operand.vmem [shape: f32[1,512], index: 4, kind: input, shape index: {}]
  %s5 = inlined_call_operand.vmem [shape: bf16[128,128], index: 5, kind: input, shape index: {}]
  %s6 = inlined_call_operand.vmem [shape: bf16[128,128], index: 6, kind: input, shape index: {}]
  %s7 = inlined_call_operand.vmem [shape: f32[1,128], index: 7, kind: input, shape index: {}]
  %s8 = inlined_call_operand.vmem [shape: bf16[128,128], index: 8, kind: input, shape index: {}]
  %s9 = inlined_call_operand.vmem [shape: f32[1,128], index: 9, kind: input, shape index: {}]
  %s10 = inlined_call_operand.vmem [shape: bf16[128,128], index: 10, kind: input, shape index: {}]
  %s11 = inlined_call_operand.vmem [shape: bf16[128,128], index: 11, kind: input, shape index: {}]
  %s12 = inlined_call_operand.vmem [shape: f32[1,128], index: 12, kind: input, shape index: {}]
  %s13 = inlined_call_operand.vmem [shape: bf16[128,384], index: 13, kind: input, shape index: {}]
  %s14 = inlined_call_operand.vmem [shape: bf16[128,384], index: 14, kind: input, shape index: {}]
  %s15 = inlined_call_operand.vmem [shape: f32[1,384], index: 15, kind: input, shape index: {}]
  %s16 = inlined_call_operand.vmem [shape: f32[8,8,128], index: 16, kind: output, shape index: {0}]
  %s17 = inlined_call_operand.vmem [shape: f32[8,8,128], index: 17, kind: output, shape index: {1}]
  %s18 = inlined_call_operand.hbm [shape: f32[1,1], index: 18, kind: output, shape index: {2}]
  %19 = xla_tuple %s16, %s17, %s18
  %s20 = sld [smem:[#allocation0]]
  $region98: #{mgru_rbf_forward.1} parent=0
    _
  %s22 = ssub.s32 1, %s20
  %s23 = scalar_select 0, %s22, %s20
  $region1: #{mgru_rbf_forward.1} parent=0
    #allocation9 [shape = 'u8[512]{0}', space=vmem, size = 0x400, scoped, tag = 'output window, operand 2, single buffered']
    #allocation10 [shape = 's32[1]{0}', space=sflag, size = 0x4, scoped, tag = 'scoped memory for mgru_rbf_forward.1']
    %24 = vsyncpa [#allocation10], 0
    // Predicated region
    $region2: #{mgru_rbf_forward.1} parent=1 // pred_check
      _
    $region3: #{mgru_rbf_forward.1} parent=1 // pred_check_branch
      %26 = sbr.rel (0) target = $region5
    $region4: #{mgru_rbf_forward.1} parent=1 // pred_region
      _
    $region5: #{mgru_rbf_forward.1} parent=1 // pred_fallthru
      _
    // Predicated region
    $region6: #{mgru_rbf_forward.1} parent=1 // pred_check
      _
    $region7: #{mgru_rbf_forward.1} parent=1 // pred_check_branch
      %28 = sbr.rel (0) target = $region9
    $region8: #{mgru_rbf_forward.1} parent=1 // pred_region
      _
    $region9: #{mgru_rbf_forward.1} parent=1 // pred_fallthru
      _
    // Predicated region
    $region10: #{mgru_rbf_forward.1} parent=1 // pred_check
      _
    $region11: #{mgru_rbf_forward.1} parent=1 // pred_check_branch
      %30 = sbr.rel (0) target = $region13
    $region12: #{mgru_rbf_forward.1} parent=1 // pred_region
      _
    $region13: #{mgru_rbf_forward.1} parent=1 // pred_fallthru
      _
    // Predicated region
    $region14: #{mgru_rbf_forward.1} parent=1 // pred_check
      _
    $region15: #{mgru_rbf_forward.1} parent=1 // pred_check_branch
      %32 = sbr.rel (0) target = $region17
    $region16: #{mgru_rbf_forward.1} parent=1 // pred_region
      _
    $region17: #{mgru_rbf_forward.1} parent=1 // pred_fallthru
      _
    // Predicated region
    $region18: #{mgru_rbf_forward.1} parent=1 // pred_check
      _
    $region19: #{mgru_rbf_forward.1} parent=1 // pred_check_branch
      %34 = sbr.rel (0) target = $region21
    $region20: #{mgru_rbf_forward.1} parent=1 // pred_region
      _
    $region21: #{mgru_rbf_forward.1} parent=1 // pred_fallthru
      _
    // Predicated region
    $region22: #{mgru_rbf_forward.1} parent=1 // pred_check
      _
    $region23: #{mgru_rbf_forward.1} parent=1 // pred_check_branch
      %36 = sbr.rel (0) target = $region25
    $region24: #{mgru_rbf_forward.1} parent=1 // pred_region
      _
    $region25: #{mgru_rbf_forward.1} parent=1 // pred_fallthru
      _
    // Predicated region
    $region26: #{mgru_rbf_forward.1} parent=1 // pred_check
      _
    $region27: #{mgru_rbf_forward.1} parent=1 // pred_check_branch
      %38 = sbr.rel (0) target = $region29
    $region28: #{mgru_rbf_forward.1} parent=1 // pred_region
      _
    $region29: #{mgru_rbf_forward.1} parent=1 // pred_fallthru
      _
    // Predicated region
    $region30: #{mgru_rbf_forward.1} parent=1 // pred_check
      _
    $region31: #{mgru_rbf_forward.1} parent=1 // pred_check_branch
      %40 = sbr.rel (0) target = $region33
    $region32: #{mgru_rbf_forward.1} parent=1 // pred_region
      _
    $region33: #{mgru_rbf_forward.1} parent=1 // pred_fallthru
      _
    // Predicated region
    $region34: #{mgru_rbf_forward.1} parent=1 // pred_check
      _
    $region35: #{mgru_rbf_forward.1} parent=1 // pred_check_branch
      %42 = sbr.rel (0) target = $region37
    $region36: #{mgru_rbf_forward.1} parent=1 // pred_region
      _
    $region37: #{mgru_rbf_forward.1} parent=1 // pred_fallthru
      _
    // Predicated region
    $region38: #{mgru_rbf_forward.1} parent=1 // pred_check
      _
    $region39: #{mgru_rbf_forward.1} parent=1 // pred_check_branch
      %44 = sbr.rel (0) target = $region41
    $region40: #{mgru_rbf_forward.1} parent=1 // pred_region
      _
    $region41: #{mgru_rbf_forward.1} parent=1 // pred_fallthru
      _
    // Predicated region
    $region42: #{mgru_rbf_forward.1} parent=1 // pred_check
      _
    $region43: #{mgru_rbf_forward.1} parent=1 // pred_check_branch
      %46 = sbr.rel (0) target = $region45
    $region44: #{mgru_rbf_forward.1} parent=1 // pred_region
      _
    $region45: #{mgru_rbf_forward.1} parent=1 // pred_fallthru
      _
    // Predicated region
    $region46: #{mgru_rbf_forward.1} parent=1 // pred_check
      _
    $region47: #{mgru_rbf_forward.1} parent=1 // pred_check_branch
      %48 = sbr.rel (0) target = $region49
    $region48: #{mgru_rbf_forward.1} parent=1 // pred_region
      _
    $region49: #{mgru_rbf_forward.1} parent=1 // pred_fallthru
      _
    // Predicated region
    $region50: #{mgru_rbf_forward.1} parent=1 // pred_check
      _
    $region51: #{mgru_rbf_forward.1} parent=1 // pred_check_branch
      %50 = sbr.rel (0) target = $region53
    $region52: #{mgru_rbf_forward.1} parent=1 // pred_region
      _
    $region53: #{mgru_rbf_forward.1} parent=1 // pred_fallthru
      _
    // Predicated region
    $region54: #{mgru_rbf_forward.1} parent=1 // pred_check
      _
    $region55: #{mgru_rbf_forward.1} parent=1 // pred_check_branch
      %52 = sbr.rel (0) target = $region57
    $region56: #{mgru_rbf_forward.1} parent=1 // pred_region
      _
    $region57: #{mgru_rbf_forward.1} parent=1 // pred_fallthru
      _
    // Predicated region
    $region58: #{mgru_rbf_forward.1} parent=1 // pred_check
      _
    $region59: #{mgru_rbf_forward.1} parent=1 // pred_check_branch
      %54 = sbr.rel (0) target = $region61
    $region60: #{mgru_rbf_forward.1} parent=1 // pred_region
      _
    $region61: #{mgru_rbf_forward.1} parent=1 // pred_fallthru
      _
    // Predicated region
    $region62: #{mgru_rbf_forward.1} parent=1 // pred_check
      _
    $region63: #{mgru_rbf_forward.1} parent=1 // pred_check_branch
      %56 = sbr.rel (0) target = $region65
    $region64: #{mgru_rbf_forward.1} parent=1 // pred_region
      _
    $region65: #{mgru_rbf_forward.1} parent=1 // pred_fallthru
      _
    %p58 = scmp.eq.s32.totalorder 0, 0
    // Predicated region
    $region66: #{mgru_rbf_forward.1} parent=1 // pred_check
      %p59 = pneg %p58
    $region67: #{mgru_rbf_forward.1} parent=1 // pred_check_branch
      %61 = sbr.rel (%p59) target = $region69
    $region68: #{mgru_rbf_forward.1} parent=1 // pred_region
      %62 = vst [vmem:[#allocation2] sm:$0xff] 0.0
      %63 = vst [vmem:[#allocation3] sm:$0xff] 0.0
    $region69: #{mgru_rbf_forward.1} parent=1 // pred_fallthru
      _
    %s64 = scalar_lea.vmem %s0, 64
    %v65 = vld [vmem:[%s64] sm:$0xff]
    %v66 = vld [vmem:[%s64 + $0x8] sm:$0xff]
    %v67 = vld [vmem:[%s64 + $0x10] sm:$0xff]
    %v68 = vld [vmem:[%s64 + $0x18] sm:$0xff]
    %v69 = vld [vmem:[%s64 + $0x20] sm:$0xff]
    %v70 = vld [vmem:[%s64 + $0x28] sm:$0xff]
    %v71 = vld [vmem:[%s64 + $0x30] sm:$0xff]
    %v72 = vld [vmem:[%s64 + $0x38] sm:$0xff]
    %s73 = scalar_lea.vmem %s0, 128
    %v74 = vld [vmem:[%s73] sm:$0xff]
    %v75 = vld [vmem:[%s73 + $0x8] sm:$0xff]
    %v76 = vld [vmem:[%s73 + $0x10] sm:$0xff]
    %v77 = vld [vmem:[%s73 + $0x18] sm:$0xff]
    %v78 = vld [vmem:[%s73 + $0x20] sm:$0xff]
    %v79 = vld [vmem:[%s73 + $0x28] sm:$0xff]
    %v80 = vld [vmem:[%s73 + $0x30] sm:$0xff]
    %v81 = vld [vmem:[%s73 + $0x38] sm:$0xff]
    %s82 = scalar_lea.vmem %s0, 192
    %v83 = vld [vmem:[%s82] sm:$0xff]
    %v84 = vld [vmem:[%s82 + $0x8] sm:$0xff]
    %v85 = vld [vmem:[%s82 + $0x10] sm:$0xff]
    %v86 = vld [vmem:[%s82 + $0x18] sm:$0xff]
    %v87 = vld [vmem:[%s82 + $0x20] sm:$0xff]
    %v88 = vld [vmem:[%s82 + $0x28] sm:$0xff]
    %v89 = vld [vmem:[%s82 + $0x30] sm:$0xff]
    %v90 = vld [vmem:[%s82 + $0x38] sm:$0xff]
    %v91 = vld [vmem:[%s1] sm:$0xff]
    %v92 = vld [vmem:[%s1 + $0x8] sm:$0xff]
    %v93 = vld [vmem:[%s1 + $0x10] sm:$0xff]
    %v94 = vld [vmem:[%s1 + $0x18] sm:$0xff]
    %v95 = vld [vmem:[%s1 + $0x20] sm:$0xff]
    %v96 = vld [vmem:[%s1 + $0x28] sm:$0xff]
    %v97 = vld [vmem:[%s1 + $0x30] sm:$0xff]
    %v98 = vld [vmem:[%s1 + $0x38] sm:$0xff]
    %v99 = vld [vmem:[%s1 + $0x40] sm:$0xff]
    %v100 = vld [vmem:[%s1 + $0x48] sm:$0xff]
    %v101 = vld [vmem:[%s1 + $0x50] sm:$0xff]
    %v102 = vld [vmem:[%s1 + $0x58] sm:$0xff]
    %v103 = vld [vmem:[%s1 + $0x60] sm:$0xff]
    %v104 = vld [vmem:[%s1 + $0x68] sm:$0xff]
    %v105 = vld [vmem:[%s1 + $0x70] sm:$0xff]
    %v106 = vld [vmem:[%s1 + $0x78] sm:$0xff]
    %v107 = vpack.c.bf16 %v66, %v65
    %v108 = vpack.c.bf16 %v68, %v67
    %v109 = vpack.c.bf16 %v70, %v69
    %v110 = vpack.c.bf16 %v72, %v71
    %v111 = vld [vmem:[%s2] sm:$0x3]
    %v113 = vlaneseq
    %v114 = vshrl.u32 %v113, 7
    %v115 = vsub.s32 0, %v114
    %v116 = vrot.slane %v111, %v115
    %v117 = vlaneseq
    %v118 = vshrl.u32 %v117, 7
    %v119 = vsub.s32 1, %v118
    %v120 = vrot.slane %v111, %v119
    %v139 = vunpack.c.l.b16 %v91
    %v140 = vunpack.c.h.b16 %v91
    %v141 = vunpack.c.l.b16 %v92
    %v142 = vunpack.c.h.b16 %v92
    %v143 = vunpack.c.l.b16 %v93
    %v144 = vunpack.c.h.b16 %v93
    %v145 = vunpack.c.l.b16 %v94
    %v146 = vunpack.c.h.b16 %v94
    %v147 = vunpack.c.l.b16 %v95
    %v148 = vunpack.c.h.b16 %v95
    %v149 = vunpack.c.l.b16 %v96
    %v150 = vunpack.c.h.b16 %v96
    %v151 = vunpack.c.l.b16 %v97
    %v152 = vunpack.c.h.b16 %v97
    %v153 = vunpack.c.l.b16 %v98
    %v154 = vunpack.c.h.b16 %v98
    %v155 = vunpack.c.l.b16 %v99
    %v156 = vunpack.c.h.b16 %v99
    %v157 = vunpack.c.l.b16 %v100
    %v158 = vunpack.c.h.b16 %v100
    %v159 = vunpack.c.l.b16 %v101
    %v160 = vunpack.c.h.b16 %v101
    %v161 = vunpack.c.l.b16 %v102
    %v162 = vunpack.c.h.b16 %v102
    %v163 = vunpack.c.l.b16 %v103
    %v164 = vunpack.c.h.b16 %v103
    %v165 = vunpack.c.l.b16 %v104
    %v166 = vunpack.c.h.b16 %v104
    %v167 = vunpack.c.l.b16 %v105
    %v168 = vunpack.c.h.b16 %v105
    %v169 = vunpack.c.l.b16 %v106
    %v170 = vunpack.c.h.b16 %v106
    %v171 = vpack.c.b16 %v141, %v139
    %v172 = vpack.c.b16 %v142, %v140
    %v173 = vpack.c.b16 %v145, %v143
    %v174 = vpack.c.b16 %v146, %v144
    %v175 = vpack.c.b16 %v149, %v147
    %v176 = vpack.c.b16 %v150, %v148
    %v177 = vpack.c.b16 %v153, %v151
    %v178 = vpack.c.b16 %v154, %v152
    %v179 = vpack.c.b16 %v157, %v155
    %v180 = vpack.c.b16 %v158, %v156
    %v181 = vpack.c.b16 %v161, %v159
    %v182 = vpack.c.b16 %v162, %v160
    %v183 = vpack.c.b16 %v165, %v163
    %v184 = vpack.c.b16 %v166, %v164
    %v185 = vpack.c.b16 %v169, %v167
    %v186 = vpack.c.b16 %v170, %v168
    %203 = vmatprep.subr.bf16.mxu0 %v186
    %204 = vmatpush1.bf16.msra.mxu0 %v185
    %205 = vmatprep.subr.bf16.mxu0 %v184
    %206 = vmatpush1.bf16.msra.mxu0 %v183
    %207 = vmatprep.subr.bf16.mxu0 %v182
    %208 = vmatpush1.bf16.msra.mxu0 %v181
    %209 = vmatprep.subr.bf16.mxu0 %v180
    %210 = vmatpush1.bf16.msra.mxu0 %v179
    %211 = vmatprep.subr.bf16.mxu0 %v178
    %212 = vmatpush1.bf16.msra.mxu0 %v177
    %213 = vmatprep.subr.bf16.mxu0 %v176
    %214 = vmatpush1.bf16.msra.mxu0 %v175
    %215 = vmatprep.subr.bf16.mxu0 %v174
    %216 = vmatpush1.bf16.msra.mxu0 %v173
    %217 = vmatprep.subr.bf16.mxu0 %v172
    %218 = vmatpush1.bf16.msra.mxu0 %v171
    %219 = vmatprep.subr.bf16.mxu0 0
    %220 = vmatpush2.bf16.msra.mxu0 0
    %221 = vmatprep.subr.bf16.mxu0 0
    %222 = vmatpush2.bf16.msra.mxu0 0
    %223 = vmatprep.subr.bf16.mxu0 0
    %224 = vmatpush2.bf16.msra.mxu0 0
    %225 = vmatprep.subr.bf16.mxu0 0
    %226 = vmatpush2.bf16.msra.mxu0 0
    %227 = vmatprep.subr.bf16.mxu0 0
    %228 = vmatpush2.bf16.msra.mxu0 0
    %229 = vmatprep.subr.bf16.mxu0 0
    %230 = vmatpush2.bf16.msra.mxu0 0
    %231 = vmatprep.subr.bf16.mxu0 0
    %232 = vmatpush2.bf16.msra.mxu0 0
    %233 = vmatprep.subr.bf16.mxu0 0
    %234 = vmatpush2.bf16.msra.mxu0 0
    %235 = vmatprep.mubr.bf16.mxu0 0
    %236 = vmatmul.mubr.bf16.gmra.mxu0 %v107
    %v237 = vpop.f32.mrf.mxu0
    %v238 = vadd.f32 %v116, %v237
    %v239 = vpop.f32.mrf.mxu0
    %v240 = vadd.f32 %v120, %v239
    %v241 = vpop.f32.mrf.mxu0
    %v242 = vadd.f32 %v116, %v241
    %v243 = vpop.f32.mrf.mxu0
    %v244 = vadd.f32 %v120, %v243
    %245 = vmatprep.mubr.bf16.mxu0 0
    %246 = vmatmul.mubr.bf16.gmra.mxu0 %v108
    %v247 = vpop.f32.mrf.mxu0
    %v248 = vadd.f32 %v116, %v247
    %v249 = vpop.f32.mrf.mxu0
    %v250 = vadd.f32 %v120, %v249
    %v251 = vpop.f32.mrf.mxu0
    %v252 = vadd.f32 %v116, %v251
    %v253 = vpop.f32.mrf.mxu0
    %v254 = vadd.f32 %v120, %v253
    %255 = vmatprep.mubr.bf16.mxu0 0
    %256 = vmatmul.mubr.bf16.gmra.mxu0 %v109
    %v257 = vpop.f32.mrf.mxu0
    %v258 = vadd.f32 %v116, %v257
    %v259 = vpop.f32.mrf.mxu0
    %v260 = vadd.f32 %v120, %v259
    %v261 = vpop.f32.mrf.mxu0
    %v262 = vadd.f32 %v116, %v261
    %v263 = vpop.f32.mrf.mxu0
    %v264 = vadd.f32 %v120, %v263
    %265 = vmatprep.mubr.bf16.mxu0 0
    %266 = vmatmul.mubr.bf16.gmra.mxu0 %v110
    %v267 = vpop.f32.mrf.mxu0
    %v268 = vadd.f32 %v116, %v267
    %v269 = vpop.f32.mrf.mxu0
    %v270 = vadd.f32 %v120, %v269
    %v271 = vpop.f32.mrf.mxu0
    %v272 = vadd.f32 %v116, %v271
    %v273 = vpop.f32.mrf.mxu0
    %v274 = vadd.f32 %v120, %v273
    %275 = vdwg.mxu0
    %v276 = vmax.f32 %v238, 0.0
    %v277 = vmax.f32 %v240, 0.0
    %v278 = vmax.f32 %v242, 0.0
    %v279 = vmax.f32 %v244, 0.0
    %v280 = vmax.f32 %v248, 0.0
    %v281 = vmax.f32 %v250, 0.0
    %v282 = vmax.f32 %v252, 0.0
    %v283 = vmax.f32 %v254, 0.0
    %v284 = vmax.f32 %v258, 0.0
    %v285 = vmax.f32 %v260, 0.0
    %v286 = vmax.f32 %v262, 0.0
    %v287 = vmax.f32 %v264, 0.0
    %v288 = vmax.f32 %v268, 0.0
    %v289 = vmax.f32 %v270, 0.0
    %v290 = vmax.f32 %v272, 0.0
    %v291 = vmax.f32 %v274, 0.0
    %v292 = vsub.f32 0.0, %v276
    %v293 = vsub.f32 0.0, %v277
    %v294 = vsub.f32 0.0, %v278
    %v295 = vsub.f32 0.0, %v279
    %v296 = vsub.f32 0.0, %v280
    %v297 = vsub.f32 0.0, %v281
    %v298 = vsub.f32 0.0, %v282
    %v299 = vsub.f32 0.0, %v283
    %v300 = vsub.f32 0.0, %v284
    %v301 = vsub.f32 0.0, %v285
    %v302 = vsub.f32 0.0, %v286
    %v303 = vsub.f32 0.0, %v287
    %v304 = vsub.f32 0.0, %v288
    %v305 = vsub.f32 0.0, %v289
    %v306 = vsub.f32 0.0, %v290
    %v307 = vsub.f32 0.0, %v291
    %v308 = vmul.f32 %v292, 1.442695
    %v309 = vpow.pop %v308
    %v310 = vmul.f32 %v293, 1.442695
    %v311 = vpow.pop %v310
    %v312 = vmul.f32 %v294, 1.442695
    %v313 = vpow.pop %v312
    %v314 = vmul.f32 %v295, 1.442695
    %v315 = vpow.pop %v314
    %v316 = vmul.f32 %v296, 1.442695
    %v317 = vpow.pop %v316
    %v318 = vmul.f32 %v297, 1.442695
    %v319 = vpow.pop %v318
    %v320 = vmul.f32 %v298, 1.442695
    %v321 = vpow.pop %v320
    %v322 = vmul.f32 %v299, 1.442695
    %v323 = vpow.pop %v322
    %v324 = vmul.f32 %v300, 1.442695
    %v325 = vpow.pop %v324
    %v326 = vmul.f32 %v301, 1.442695
    %v327 = vpow.pop %v326
    %v328 = vmul.f32 %v302, 1.442695
    %v329 = vpow.pop %v328
    %v330 = vmul.f32 %v303, 1.442695
    %v331 = vpow.pop %v330
    %v332 = vmul.f32 %v304, 1.442695
    %v333 = vpow.pop %v332
    %v334 = vmul.f32 %v305, 1.442695
    %v335 = vpow.pop %v334
    %v336 = vmul.f32 %v306, 1.442695
    %v337 = vpow.pop %v336
    %v338 = vmul.f32 %v307, 1.442695
    %v339 = vpow.pop %v338
    %340 = vst [vmem:[#allocation4] sm:$0xff] %v311
    %341 = vst [vmem:[#allocation4 + $0x8] sm:$0xff] %v315
    %342 = vst [vmem:[#allocation4 + $0x10] sm:$0xff] %v319
    %343 = vst [vmem:[#allocation4 + $0x18] sm:$0xff] %v323
    %344 = vst [vmem:[#allocation4 + $0x20] sm:$0xff] %v327
    %345 = vst [vmem:[#allocation4 + $0x28] sm:$0xff] %v331
    %346 = vst [vmem:[#allocation4 + $0x30] sm:$0xff] %v335
    %347 = vst [vmem:[#allocation4 + $0x38] sm:$0xff] %v339
    %v348 = vld [vmem:[%s3] sm:$0xff]
    %v349 = vld [vmem:[%s3 + $0x8] sm:$0xff]
    %v350 = vld [vmem:[%s3 + $0x10] sm:$0xff]
    %v351 = vld [vmem:[%s3 + $0x18] sm:$0xff]
    %v352 = vld [vmem:[%s3 + $0x20] sm:$0xff]
    %v353 = vld [vmem:[%s3 + $0x28] sm:$0xff]
    %v354 = vld [vmem:[%s3 + $0x30] sm:$0xff]
    %v355 = vld [vmem:[%s3 + $0x38] sm:$0xff]
    %v356 = vld [vmem:[%s3 + $0x40] sm:$0xff]
    %v357 = vld [vmem:[%s3 + $0x48] sm:$0xff]
    %v358 = vld [vmem:[%s3 + $0x50] sm:$0xff]
    %v359 = vld [vmem:[%s3 + $0x58] sm:$0xff]
    %v360 = vld [vmem:[%s3 + $0x60] sm:$0xff]
    %v361 = vld [vmem:[%s3 + $0x68] sm:$0xff]
    %v362 = vld [vmem:[%s3 + $0x70] sm:$0xff]
    %v363 = vld [vmem:[%s3 + $0x78] sm:$0xff]
    %v364 = vld [vmem:[%s3 + $0x80] sm:$0xff]
    %v365 = vld [vmem:[%s3 + $0x88] sm:$0xff]
    %v366 = vld [vmem:[%s3 + $0x90] sm:$0xff]
    %v367 = vld [vmem:[%s3 + $0x98] sm:$0xff]
    %v368 = vld [vmem:[%s3 + $0xa0] sm:$0xff]
    %v369 = vld [vmem:[%s3 + $0xa8] sm:$0xff]
    %v370 = vld [vmem:[%s3 + $0xb0] sm:$0xff]
    %v371 = vld [vmem:[%s3 + $0xb8] sm:$0xff]
    %v372 = vld [vmem:[%s3 + $0xc0] sm:$0xff]
    %v373 = vld [vmem:[%s3 + $0xc8] sm:$0xff]
    %v374 = vld [vmem:[%s3 + $0xd0] sm:$0xff]
    %v375 = vld [vmem:[%s3 + $0xd8] sm:$0xff]
    %v376 = vld [vmem:[%s3 + $0xe0] sm:$0xff]
    %v377 = vld [vmem:[%s3 + $0xe8] sm:$0xff]
    %v378 = vld [vmem:[%s3 + $0xf0] sm:$0xff]
    %v379 = vld [vmem:[%s3 + $0xf8] sm:$0xff]
    %v380 = vpack.c.bf16 %v75, %v74
    %v381 = vpack.c.bf16 %v77, %v76
    %v382 = vpack.c.bf16 %v79, %v78
    %v383 = vpack.c.bf16 %v81, %v80
    %v384 = vld [vmem:[%s4] sm:$0xf]
    %v386 = vlaneseq
    %v387 = vshrl.u32 %v386, 7
    %v388 = vsub.s32 0, %v387
    %v389 = vrot.slane %v384, %v388
    %v390 = vlaneseq
    %v391 = vshrl.u32 %v390, 7
    %v392 = vsub.s32 1, %v391
    %v393 = vrot.slane %v384, %v392
    %v394 = vlaneseq
    %v395 = vshrl.u32 %v394, 7
    %v396 = vsub.s32 2, %v395
    %v397 = vrot.slane %v384, %v396
    %v398 = vlaneseq
    %v399 = vshrl.u32 %v398, 7
    %v400 = vsub.s32 3, %v399
    %v401 = vrot.slane %v384, %v400
    %v438 = vunpack.c.l.b16 %v348
    %v439 = vunpack.c.h.b16 %v348
    %v440 = vunpack.c.l.b16 %v349
    %v441 = vunpack.c.h.b16 %v349
    %v442 = vunpack.c.l.b16 %v350
    %v443 = vunpack.c.h.b16 %v350
    %v444 = vunpack.c.l.b16 %v351
    %v445 = vunpack.c.h.b16 %v351
    %v446 = vunpack.c.l.b16 %v352
    %v447 = vunpack.c.h.b16 %v352
    %v448 = vunpack.c.l.b16 %v353
    %v449 = vunpack.c.h.b16 %v353
    %v450 = vunpack.c.l.b16 %v354
    %v451 = vunpack.c.h.b16 %v354
    %v452 = vunpack.c.l.b16 %v355
    %v453 = vunpack.c.h.b16 %v355
    %v454 = vunpack.c.l.b16 %v356
    %v455 = vunpack.c.h.b16 %v356
    %v456 = vunpack.c.l.b16 %v357
    %v457 = vunpack.c.h.b16 %v357
    %v458 = vunpack.c.l.b16 %v358
    %v459 = vunpack.c.h.b16 %v358
    %v460 = vunpack.c.l.b16 %v359
    %v461 = vunpack.c.h.b16 %v359
    %v462 = vunpack.c.l.b16 %v360
    %v463 = vunpack.c.h.b16 %v360
    %v464 = vunpack.c.l.b16 %v361
    %v465 = vunpack.c.h.b16 %v361
    %v466 = vunpack.c.l.b16 %v362
    %v467 = vunpack.c.h.b16 %v362
    %v468 = vunpack.c.l.b16 %v363
    %v469 = vunpack.c.h.b16 %v363
    %v470 = vunpack.c.l.b16 %v364
    %v471 = vunpack.c.h.b16 %v364
    %v472 = vunpack.c.l.b16 %v365
    %v473 = vunpack.c.h.b16 %v365
    %v474 = vunpack.c.l.b16 %v366
    %v475 = vunpack.c.h.b16 %v366
    %v476 = vunpack.c.l.b16 %v367
    %v477 = vunpack.c.h.b16 %v367
    %v478 = vunpack.c.l.b16 %v368
    %v479 = vunpack.c.h.b16 %v368
    %v480 = vunpack.c.l.b16 %v369
    %v481 = vunpack.c.h.b16 %v369
    %v482 = vunpack.c.l.b16 %v370
    %v483 = vunpack.c.h.b16 %v370
    %v484 = vunpack.c.l.b16 %v371
    %v485 = vunpack.c.h.b16 %v371
    %v486 = vunpack.c.l.b16 %v372
    %v487 = vunpack.c.h.b16 %v372
    %v488 = vunpack.c.l.b16 %v373
    %v489 = vunpack.c.h.b16 %v373
    %v490 = vunpack.c.l.b16 %v374
    %v491 = vunpack.c.h.b16 %v374
    %v492 = vunpack.c.l.b16 %v375
    %v493 = vunpack.c.h.b16 %v375
    %v494 = vunpack.c.l.b16 %v376
    %v495 = vunpack.c.h.b16 %v376
    %v496 = vunpack.c.l.b16 %v377
    %v497 = vunpack.c.h.b16 %v377
    %v498 = vunpack.c.l.b16 %v378
    %v499 = vunpack.c.h.b16 %v378
    %v500 = vunpack.c.l.b16 %v379
    %v501 = vunpack.c.h.b16 %v379
    %v502 = vpack.c.b16 %v442, %v438
    %v503 = vpack.c.b16 %v443, %v439
    %v504 = vpack.c.b16 %v444, %v440
    %v505 = vpack.c.b16 %v445, %v441
    %v506 = vpack.c.b16 %v450, %v446
    %v507 = vpack.c.b16 %v451, %v447
    %v508 = vpack.c.b16 %v452, %v448
    %v509 = vpack.c.b16 %v453, %v449
    %v510 = vpack.c.b16 %v458, %v454
    %v511 = vpack.c.b16 %v459, %v455
    %v512 = vpack.c.b16 %v460, %v456
    %v513 = vpack.c.b16 %v461, %v457
    %v514 = vpack.c.b16 %v466, %v462
    %v515 = vpack.c.b16 %v467, %v463
    %v516 = vpack.c.b16 %v468, %v464
    %v517 = vpack.c.b16 %v469, %v465
    %v518 = vpack.c.b16 %v474, %v470
    %v519 = vpack.c.b16 %v475, %v471
    %v520 = vpack.c.b16 %v476, %v472
    %v521 = vpack.c.b16 %v477, %v473
    %v522 = vpack.c.b16 %v482, %v478
    %v523 = vpack.c.b16 %v483, %v479
    %v524 = vpack.c.b16 %v484, %v480
    %v525 = vpack.c.b16 %v485, %v481
    %v526 = vpack.c.b16 %v490, %v486
    %v527 = vpack.c.b16 %v491, %v487
    %v528 = vpack.c.b16 %v492, %v488
    %v529 = vpack.c.b16 %v493, %v489
    %v530 = vpack.c.b16 %v498, %v494
    %v531 = vpack.c.b16 %v499, %v495
    %v532 = vpack.c.b16 %v500, %v496
    %v533 = vpack.c.b16 %v501, %v497
    %566 = vmatprep.subr.bf16.mxu0 %v531
    %567 = vmatpush1.bf16.msra.mxu0 %v530
    %568 = vmatprep.subr.bf16.mxu0 %v527
    %569 = vmatpush1.bf16.msra.mxu0 %v526
    %570 = vmatprep.subr.bf16.mxu0 %v523
    %571 = vmatpush1.bf16.msra.mxu0 %v522
    %572 = vmatprep.subr.bf16.mxu0 %v519
    %573 = vmatpush1.bf16.msra.mxu0 %v518
    %574 = vmatprep.subr.bf16.mxu0 %v515
    %575 = vmatpush1.bf16.msra.mxu0 %v514
    %576 = vmatprep.subr.bf16.mxu0 %v511
    %577 = vmatpush1.bf16.msra.mxu0 %v510
    %578 = vmatprep.subr.bf16.mxu0 %v507
    %579 = vmatpush1.bf16.msra.mxu0 %v506
    %580 = vmatprep.subr.bf16.mxu0 %v503
    %581 = vmatpush1.bf16.msra.mxu0 %v502
    %582 = vmatprep.subr.bf16.mxu0 0
    %583 = vmatpush2.bf16.msra.mxu0 0
    %584 = vmatprep.subr.bf16.mxu0 0
    %585 = vmatpush2.bf16.msra.mxu0 0
    %586 = vmatprep.subr.bf16.mxu0 0
    %587 = vmatpush2.bf16.msra.mxu0 0
    %588 = vmatprep.subr.bf16.mxu0 0
    %589 = vmatpush2.bf16.msra.mxu0 0
    %590 = vmatprep.subr.bf16.mxu0 0
    %591 = vmatpush2.bf16.msra.mxu0 0
    %592 = vmatprep.subr.bf16.mxu0 0
    %593 = vmatpush2.bf16.msra.mxu0 0
    %594 = vmatprep.subr.bf16.mxu0 0
    %595 = vmatpush2.bf16.msra.mxu0 0
    %596 = vmatprep.subr.bf16.mxu0 0
    %597 = vmatpush2.bf16.msra.mxu0 0
    %598 = vmatprep.mubr.bf16.mxu0 0
    %599 = vmatmul.mubr.bf16.gmra.mxu0 %v380
    %v600 = vpop.f32.mrf.mxu0
    %v601 = vadd.f32 %v389, %v600
    %v602 = vpop.f32.mrf.mxu0
    %v603 = vadd.f32 %v393, %v602
    %v604 = vpop.f32.mrf.mxu0
    %v605 = vadd.f32 %v389, %v604
    %v606 = vpop.f32.mrf.mxu0
    %v607 = vadd.f32 %v393, %v606
    %608 = vmatprep.mubr.bf16.mxu0 0
    %609 = vmatmul.mubr.bf16.gmra.mxu0 %v381
    %v610 = vpop.f32.mrf.mxu0
    %v611 = vadd.f32 %v389, %v610
    %v612 = vpop.f32.mrf.mxu0
    %v613 = vadd.f32 %v393, %v612
    %v614 = vpop.f32.mrf.mxu0
    %v615 = vadd.f32 %v389, %v614
    %v616 = vpop.f32.mrf.mxu0
    %v617 = vadd.f32 %v393, %v616
    %618 = vmatprep.mubr.bf16.mxu0 0
    %619 = vmatmul.mubr.bf16.gmra.mxu0 %v382
    %v620 = vpop.f32.mrf.mxu0
    %v621 = vadd.f32 %v389, %v620
    %v622 = vpop.f32.mrf.mxu0
    %v623 = vadd.f32 %v393, %v622
    %v624 = vpop.f32.mrf.mxu0
    %v625 = vadd.f32 %v389, %v624
    %v626 = vpop.f32.mrf.mxu0
    %v627 = vadd.f32 %v393, %v626
    %628 = vmatprep.mubr.bf16.mxu0 0
    %629 = vmatmul.mubr.bf16.gmra.mxu0 %v383
    %v630 = vpop.f32.mrf.mxu0
    %v631 = vadd.f32 %v389, %v630
    %v632 = vpop.f32.mrf.mxu0
    %v633 = vadd.f32 %v393, %v632
    %v634 = vpop.f32.mrf.mxu0
    %v635 = vadd.f32 %v389, %v634
    %v636 = vpop.f32.mrf.mxu0
    %v637 = vadd.f32 %v393, %v636
    %638 = vdwg.mxu0
    %639 = vmatprep.subr.bf16.mxu0 %v533
    %640 = vmatpush1.bf16.msra.mxu0 %v532
    %641 = vmatprep.subr.bf16.mxu0 %v529
    %642 = vmatpush1.bf16.msra.mxu0 %v528
    %643 = vmatprep.subr.bf16.mxu0 %v525
    %644 = vmatpush1.bf16.msra.mxu0 %v524
    %645 = vmatprep.subr.bf16.mxu0 %v521
    %646 = vmatpush1.bf16.msra.mxu0 %v520
    %647 = vmatprep.subr.bf16.mxu0 %v517
    %648 = vmatpush1.bf16.msra.mxu0 %v516
    %649 = vmatprep.subr.bf16.mxu0 %v513
    %650 = vmatpush1.bf16.msra.mxu0 %v512
    %651 = vmatprep.subr.bf16.mxu0 %v509
    %652 = vmatpush1.bf16.msra.mxu0 %v508
    %653 = vmatprep.subr.bf16.mxu0 %v505
    %654 = vmatpush1.bf16.msra.mxu0 %v504
    %655 = vmatprep.subr.bf16.mxu0 0
    %656 = vmatpush2.bf16.msra.mxu0 0
    %657 = vmatprep.subr.bf16.mxu0 0
    %658 = vmatpush2.bf16.msra.mxu0 0
    %659 = vmatprep.subr.bf16.mxu0 0
    %660 = vmatpush2.bf16.msra.mxu0 0
    %661 = vmatprep.subr.bf16.mxu0 0
    %662 = vmatpush2.bf16.msra.mxu0 0
    %663 = vmatprep.subr.bf16.mxu0 0
    %664 = vmatpush2.bf16.msra.mxu0 0
    %665 = vmatprep.subr.bf16.mxu0 0
    %666 = vmatpush2.bf16.msra.mxu0 0
    %667 = vmatprep.subr.bf16.mxu0 0
    %668 = vmatpush2.bf16.msra.mxu0 0
    %669 = vmatprep.subr.bf16.mxu0 0
    %670 = vmatpush2.bf16.msra.mxu0 0
    %671 = vmatprep.mubr.bf16.mxu0 0
    %672 = vmatmul.mubr.bf16.gmra.mxu0 %v380
    %v673 = vpop.f32.mrf.mxu0
    %v674 = vadd.f32 %v397, %v673
    %v675 = vpop.f32.mrf.mxu0
    %v676 = vadd.f32 %v401, %v675
    %v677 = vpop.f32.mrf.mxu0
    %v678 = vadd.f32 %v397, %v677
    %v679 = vpop.f32.mrf.mxu0
    %v680 = vadd.f32 %v401, %v679
    %681 = vmatprep.mubr.bf16.mxu0 0
    %682 = vmatmul.mubr.bf16.gmra.mxu0 %v381
    %v683 = vpop.f32.mrf.mxu0
    %v684 = vadd.f32 %v397, %v683
    %v685 = vpop.f32.mrf.mxu0
    %v686 = vadd.f32 %v401, %v685
    %v687 = vpop.f32.mrf.mxu0
    %v688 = vadd.f32 %v397, %v687
    %v689 = vpop.f32.mrf.mxu0
    %v690 = vadd.f32 %v401, %v689
    %691 = vmatprep.mubr.bf16.mxu0 0
    %692 = vmatmul.mubr.bf16.gmra.mxu0 %v382
    %v693 = vpop.f32.mrf.mxu0
    %v694 = vadd.f32 %v397, %v693
    %v695 = vpop.f32.mrf.mxu0
    %v696 = vadd.f32 %v401, %v695
    %v697 = vpop.f32.mrf.mxu0
    %v698 = vadd.f32 %v397, %v697
    %v699 = vpop.f32.mrf.mxu0
    %v700 = vadd.f32 %v401, %v699
    %701 = vmatprep.mubr.bf16.mxu0 0
    %702 = vmatmul.mubr.bf16.gmra.mxu0 %v383
    %v703 = vpop.f32.mrf.mxu0
    %v704 = vadd.f32 %v397, %v703
    %v705 = vpop.f32.mrf.mxu0
    %v706 = vadd.f32 %v401, %v705
    %v707 = vpop.f32.mrf.mxu0
    %v708 = vadd.f32 %v397, %v707
    %v709 = vpop.f32.mrf.mxu0
    %v710 = vadd.f32 %v401, %v709
    %711 = vdwg.mxu0
    %712 = vst [vmem:[#allocation6] sm:$0xff] %v603
    %713 = vst [vmem:[#allocation6 + $0x8] sm:$0xff] %v674
    %714 = vst [vmem:[#allocation6 + $0x10] sm:$0xff] %v676
    %715 = vst [vmem:[#allocation6 + $0x18] sm:$0xff] %v607
    %716 = vst [vmem:[#allocation6 + $0x20] sm:$0xff] %v678
    %717 = vst [vmem:[#allocation6 + $0x28] sm:$0xff] %v680
    %718 = vst [vmem:[#allocation6 + $0x30] sm:$0xff] %v613
    %719 = vst [vmem:[#allocation6 + $0x38] sm:$0xff] %v684
    %720 = vst [vmem:[#allocation6 + $0x40] sm:$0xff] %v686
    %721 = vst [vmem:[#allocation6 + $0x48] sm:$0xff] %v617
    %722 = vst [vmem:[#allocation6 + $0x50] sm:$0xff] %v688
    %723 = vst [vmem:[#allocation6 + $0x58] sm:$0xff] %v690
    %724 = vst [vmem:[#allocation6 + $0x60] sm:$0xff] %v623
    %725 = vst [vmem:[#allocation6 + $0x68] sm:$0xff] %v694
    %726 = vst [vmem:[#allocation6 + $0x70] sm:$0xff] %v696
    %727 = vst [vmem:[#allocation6 + $0x78] sm:$0xff] %v627
    %728 = vst [vmem:[#allocation6 + $0x80] sm:$0xff] %v698
    %729 = vst [vmem:[#allocation6 + $0x88] sm:$0xff] %v700
    %730 = vst [vmem:[#allocation6 + $0x90] sm:$0xff] %v633
    %731 = vst [vmem:[#allocation6 + $0x98] sm:$0xff] %v704
    %732 = vst [vmem:[#allocation6 + $0xa0] sm:$0xff] %v706
    %733 = vst [vmem:[#allocation6 + $0xa8] sm:$0xff] %v637
    %734 = vst [vmem:[#allocation6 + $0xb0] sm:$0xff] %v708
    %735 = vst [vmem:[#allocation6 + $0xb8] sm:$0xff] %v710
    %v736 = vld [vmem:[%s5] sm:$0xf]
    %v737 = vld [vmem:[%s5 + $0x4] sm:$0xf]
    %v738 = vld [vmem:[%s5 + $0x8] sm:$0xf]
    %v739 = vld [vmem:[%s5 + $0xc] sm:$0xf]
    %v740 = vld [vmem:[%s5 + $0x10] sm:$0xf]
    %v741 = vld [vmem:[%s5 + $0x14] sm:$0xf]
    %v742 = vld [vmem:[%s5 + $0x18] sm:$0xf]
    %v743 = vld [vmem:[%s5 + $0x1c] sm:$0xf]
    %v744 = vld [vmem:[%s5 + $0x20] sm:$0xf]
    %v745 = vld [vmem:[%s5 + $0x24] sm:$0xf]
    %v746 = vld [vmem:[%s5 + $0x28] sm:$0xf]
    %v747 = vld [vmem:[%s5 + $0x2c] sm:$0xf]
    %v748 = vld [vmem:[%s5 + $0x30] sm:$0xf]
    %v749 = vld [vmem:[%s5 + $0x34] sm:$0xf]
    %v750 = vld [vmem:[%s5 + $0x38] sm:$0xf]
    %v751 = vld [vmem:[%s5 + $0x3c] sm:$0xf]
    %v752 = vpack.c.bf16 %v313, %v309
    %v753 = vpack.c.bf16 %v321, %v317
    %v754 = vpack.c.bf16 %v329, %v325
    %v755 = vpack.c.bf16 %v337, %v333
    %v772 = vunpack.c.l.b16 %v736
    %v773 = vunpack.c.l.b16 %v737
    %v774 = vunpack.c.l.b16 %v738
    %v775 = vunpack.c.l.b16 %v739
    %v776 = vunpack.c.l.b16 %v740
    %v777 = vunpack.c.l.b16 %v741
    %v778 = vunpack.c.l.b16 %v742
    %v779 = vunpack.c.l.b16 %v743
    %v780 = vunpack.c.l.b16 %v744
    %v781 = vunpack.c.l.b16 %v745
    %v782 = vunpack.c.l.b16 %v746
    %v783 = vunpack.c.l.b16 %v747
    %v784 = vunpack.c.l.b16 %v748
    %v785 = vunpack.c.l.b16 %v749
    %v786 = vunpack.c.l.b16 %v750
    %v787 = vunpack.c.l.b16 %v751
    %v788 = vpack.c.b16 %v773, %v772
    %v789 = vpack.c.b16 %v775, %v774
    %v790 = vpack.c.b16 %v777, %v776
    %v791 = vpack.c.b16 %v779, %v778
    %v792 = vpack.c.b16 %v781, %v780
    %v793 = vpack.c.b16 %v783, %v782
    %v794 = vpack.c.b16 %v785, %v784
    %v795 = vpack.c.b16 %v787, %v786
    %804 = vmatprep.subr.bf16.mxu0 0
    %805 = vmatpush1.bf16.msra.mxu0 %v795
    %806 = vmatprep.subr.bf16.mxu0 0
    %807 = vmatpush1.bf16.msra.mxu0 %v794
    %808 = vmatprep.subr.bf16.mxu0 0
    %809 = vmatpush1.bf16.msra.mxu0 %v793
    %810 = vmatprep.subr.bf16.mxu0 0
    %811 = vmatpush1.bf16.msra.mxu0 %v792
    %812 = vmatprep.subr.bf16.mxu0 0
    %813 = vmatpush1.bf16.msra.mxu0 %v791
    %814 = vmatprep.subr.bf16.mxu0 0
    %815 = vmatpush1.bf16.msra.mxu0 %v790
    %816 = vmatprep.subr.bf16.mxu0 0
    %817 = vmatpush1.bf16.msra.mxu0 %v789
    %818 = vmatprep.subr.bf16.mxu0 0
    %819 = vmatpush1.bf16.msra.mxu0 %v788
    %820 = vmatprep.subr.bf16.mxu0 0
    %821 = vmatpush2.bf16.msra.mxu0 0
    %822 = vmatprep.subr.bf16.mxu0 0
    %823 = vmatpush2.bf16.msra.mxu0 0
    %824 = vmatprep.subr.bf16.mxu0 0
    %825 = vmatpush2.bf16.msra.mxu0 0
    %826 = vmatprep.subr.bf16.mxu0 0
    %827 = vmatpush2.bf16.msra.mxu0 0
    %828 = vmatprep.subr.bf16.mxu0 0
    %829 = vmatpush2.bf16.msra.mxu0 0
    %830 = vmatprep.subr.bf16.mxu0 0
    %831 = vmatpush2.bf16.msra.mxu0 0
    %832 = vmatprep.subr.bf16.mxu0 0
    %833 = vmatpush2.bf16.msra.mxu0 0
    %834 = vmatprep.subr.bf16.mxu0 0
    %835 = vmatpush2.bf16.msra.mxu0 0
    %836 = vmatprep.mubr.bf16.mxu0 0
    %837 = vmatmul.mubr.bf16.gmra.mxu0 %v752
    %v838 = vpop.f32.mrf.mxu0
    %v839 = vadd.f32 %v601, %v838
    %v840 = vpop.f32.mrf.mxu0
    %v841 = vpop.f32.mrf.mxu0
    %v842 = vadd.f32 %v605, %v841
    %v843 = vpop.f32.mrf.mxu0
    %844 = vmatprep.mubr.bf16.mxu0 0
    %845 = vmatmul.mubr.bf16.gmra.mxu0 %v753
    %v846 = vpop.f32.mrf.mxu0
    %v847 = vadd.f32 %v611, %v846
    %v848 = vpop.f32.mrf.mxu0
    %v849 = vpop.f32.mrf.mxu0
    %v850 = vadd.f32 %v615, %v849
    %v851 = vpop.f32.mrf.mxu0
    %852 = vmatprep.mubr.bf16.mxu0 0
    %853 = vmatmul.mubr.bf16.gmra.mxu0 %v754
    %v854 = vpop.f32.mrf.mxu0
    %v855 = vadd.f32 %v621, %v854
    %v856 = vpop.f32.mrf.mxu0
    %v857 = vpop.f32.mrf.mxu0
    %v858 = vadd.f32 %v625, %v857
    %v859 = vpop.f32.mrf.mxu0
    %860 = vmatprep.mubr.bf16.mxu0 0
    %861 = vmatmul.mubr.bf16.gmra.mxu0 %v755
    %v862 = vpop.f32.mrf.mxu0
    %v863 = vadd.f32 %v631, %v862
    %v864 = vpop.f32.mrf.mxu0
    %v865 = vpop.f32.mrf.mxu0
    %v866 = vadd.f32 %v635, %v865
    %v867 = vpop.f32.mrf.mxu0
    %868 = vdwg.mxu0
    %v869 = vxor.u32 %v839, 2147483648
    %v870 = vxor.u32 %v842, 2147483648
    %v871 = vxor.u32 %v847, 2147483648
    %v872 = vxor.u32 %v850, 2147483648
    %v873 = vxor.u32 %v855, 2147483648
    %v874 = vxor.u32 %v858, 2147483648
    %v875 = vxor.u32 %v863, 2147483648
    %v876 = vxor.u32 %v866, 2147483648
    %v877 = vmul.f32 %v869, 1.442695
    %v878 = vpow.pop %v877
    %v879 = vmul.f32 %v870, 1.442695
    %v880 = vpow.pop %v879
    %v881 = vmul.f32 %v871, 1.442695
    %v882 = vpow.pop %v881
    %v883 = vmul.f32 %v872, 1.442695
    %v884 = vpow.pop %v883
    %v885 = vmul.f32 %v873, 1.442695
    %v886 = vpow.pop %v885
    %v887 = vmul.f32 %v874, 1.442695
    %v888 = vpow.pop %v887
    %v889 = vmul.f32 %v875, 1.442695
    %v890 = vpow.pop %v889
    %v891 = vmul.f32 %v876, 1.442695
    %v892 = vpow.pop %v891
    %v893 = vadd.f32 %v878, 1.0
    %v894 = vadd.f32 %v880, 1.0
    %v895 = vadd.f32 %v882, 1.0
    %v896 = vadd.f32 %v884, 1.0
    %v897 = vadd.f32 %v886, 1.0
    %v898 = vadd.f32 %v888, 1.0
    %v899 = vadd.f32 %v890, 1.0
    %v900 = vadd.f32 %v892, 1.0
    %v901 = vrcp.pop %v893
    %v902 = vmul.f32 1.0, %v901
    %v903 = vrcp.pop %v894
    %v904 = vmul.f32 1.0, %v903
    %v905 = vrcp.pop %v895
    %v906 = vmul.f32 1.0, %v905
    %v907 = vrcp.pop %v896
    %v908 = vmul.f32 1.0, %v907
    %v909 = vrcp.pop %v897
    %v910 = vmul.f32 1.0, %v909
    %v911 = vrcp.pop %v898
    %v912 = vmul.f32 1.0, %v911
    %v913 = vrcp.pop %v899
    %v914 = vmul.f32 1.0, %v913
    %v915 = vrcp.pop %v900
    %v916 = vmul.f32 1.0, %v915
    %917 = vst [vmem:[#allocation5] sm:$0xff] %v902
    %918 = vst [vmem:[#allocation5 + $0x8] sm:$0xff] %v904
    %919 = vst [vmem:[#allocation5 + $0x10] sm:$0xff] %v906
    %920 = vst [vmem:[#allocation5 + $0x18] sm:$0xff] %v908
    %921 = vst [vmem:[#allocation5 + $0x20] sm:$0xff] %v910
    %922 = vst [vmem:[#allocation5 + $0x28] sm:$0xff] %v912
    %923 = vst [vmem:[#allocation5 + $0x30] sm:$0xff] %v914
    %924 = vst [vmem:[#allocation5 + $0x38] sm:$0xff] %v916
    %v925 = vld [vmem:[%s6] sm:$0xf]
    %v926 = vld [vmem:[%s6 + $0x4] sm:$0xf]
    %v927 = vld [vmem:[%s6 + $0x8] sm:$0xf]
    %v928 = vld [vmem:[%s6 + $0xc] sm:$0xf]
    %v929 = vld [vmem:[%s6 + $0x10] sm:$0xf]
    %v930 = vld [vmem:[%s6 + $0x14] sm:$0xf]
    %v931 = vld [vmem:[%s6 + $0x18] sm:$0xf]
    %v932 = vld [vmem:[%s6 + $0x1c] sm:$0xf]
    %v933 = vld [vmem:[%s6 + $0x20] sm:$0xf]
    %v934 = vld [vmem:[%s6 + $0x24] sm:$0xf]
    %v935 = vld [vmem:[%s6 + $0x28] sm:$0xf]
    %v936 = vld [vmem:[%s6 + $0x2c] sm:$0xf]
    %v937 = vld [vmem:[%s6 + $0x30] sm:$0xf]
    %v938 = vld [vmem:[%s6 + $0x34] sm:$0xf]
    %v939 = vld [vmem:[%s6 + $0x38] sm:$0xf]
    %v940 = vld [vmem:[%s6 + $0x3c] sm:$0xf]
    %v941 = vpack.c.bf16 %v84, %v83
    %v942 = vpack.c.bf16 %v86, %v85
    %v943 = vpack.c.bf16 %v88, %v87
    %v944 = vpack.c.bf16 %v90, %v89
    %v945 = vld [vmem:[%s7] sm:$0x1]
    %v947 = vlaneseq
    %v948 = vshrl.u32 %v947, 7
    %v949 = vsub.s32 0, %v948
    %v950 = vrot.slane %v945, %v949
    %v968 = vunpack.c.l.b16 %v925
    %v969 = vunpack.c.l.b16 %v926
    %v970 = vunpack.c.l.b16 %v927
    %v971 = vunpack.c.l.b16 %v928
    %v972 = vunpack.c.l.b16 %v929
    %v973 = vunpack.c.l.b16 %v930
    %v974 = vunpack.c.l.b16 %v931
    %v975 = vunpack.c.l.b16 %v932
    %v976 = vunpack.c.l.b16 %v933
    %v977 = vunpack.c.l.b16 %v934
    %v978 = vunpack.c.l.b16 %v935
    %v979 = vunpack.c.l.b16 %v936
    %v980 = vunpack.c.l.b16 %v937
    %v981 = vunpack.c.l.b16 %v938
    %v982 = vunpack.c.l.b16 %v939
    %v983 = vunpack.c.l.b16 %v940
    %v984 = vpack.c.b16 %v969, %v968
    %v985 = vpack.c.b16 %v971, %v970
    %v986 = vpack.c.b16 %v973, %v972
    %v987 = vpack.c.b16 %v975, %v974
    %v988 = vpack.c.b16 %v977, %v976
    %v989 = vpack.c.b16 %v979, %v978
    %v990 = vpack.c.b16 %v981, %v980
    %v991 = vpack.c.b16 %v983, %v982
    %1000 = vmatprep.subr.bf16.mxu0 0
    %1001 = vmatpush1.bf16.msra.mxu0 %v991
    %1002 = vmatprep.subr.bf16.mxu0 0
    %1003 = vmatpush1.bf16.msra.mxu0 %v990
    %1004 = vmatprep.subr.bf16.mxu0 0
    %1005 = vmatpush1.bf16.msra.mxu0 %v989
    %1006 = vmatprep.subr.bf16.mxu0 0
    %1007 = vmatpush1.bf16.msra.mxu0 %v988
    %1008 = vmatprep.subr.bf16.mxu0 0
    %1009 = vmatpush1.bf16.msra.mxu0 %v987
    %1010 = vmatprep.subr.bf16.mxu0 0
    %1011 = vmatpush1.bf16.msra.mxu0 %v986
    %1012 = vmatprep.subr.bf16.mxu0 0
    %1013 = vmatpush1.bf16.msra.mxu0 %v985
    %1014 = vmatprep.subr.bf16.mxu0 0
    %1015 = vmatpush1.bf16.msra.mxu0 %v984
    %1016 = vmatprep.subr.bf16.mxu0 0
    %1017 = vmatpush2.bf16.msra.mxu0 0
    %1018 = vmatprep.subr.bf16.mxu0 0
    %1019 = vmatpush2.bf16.msra.mxu0 0
    %1020 = vmatprep.subr.bf16.mxu0 0
    %1021 = vmatpush2.bf16.msra.mxu0 0
    %1022 = vmatprep.subr.bf16.mxu0 0
    %1023 = vmatpush2.bf16.msra.mxu0 0
    %1024 = vmatprep.subr.bf16.mxu0 0
    %1025 = vmatpush2.bf16.msra.mxu0 0
    %1026 = vmatprep.subr.bf16.mxu0 0
    %1027 = vmatpush2.bf16.msra.mxu0 0
    %1028 = vmatprep.subr.bf16.mxu0 0
    %1029 = vmatpush2.bf16.msra.mxu0 0
    %1030 = vmatprep.subr.bf16.mxu0 0
    %1031 = vmatpush2.bf16.msra.mxu0 0
    %1032 = vmatprep.mubr.bf16.mxu0 0
    %1033 = vmatmul.mubr.bf16.gmra.mxu0 %v941
    %v1034 = vpop.f32.mrf.mxu0
    %v1035 = vadd.f32 %v950, %v1034
    %v1036 = vpop.f32.mrf.mxu0
    %v1037 = vpop.f32.mrf.mxu0
    %v1038 = vadd.f32 %v950, %v1037
    %v1039 = vpop.f32.mrf.mxu0
    %1040 = vmatprep.mubr.bf16.mxu0 0
    %1041 = vmatmul.mubr.bf16.gmra.mxu0 %v942
    %v1042 = vpop.f32.mrf.mxu0
    %v1043 = vadd.f32 %v950, %v1042
    %v1044 = vpop.f32.mrf.mxu0
    %v1045 = vpop.f32.mrf.mxu0
    %v1046 = vadd.f32 %v950, %v1045
    %v1047 = vpop.f32.mrf.mxu0
    %1048 = vmatprep.mubr.bf16.mxu0 0
    %1049 = vmatmul.mubr.bf16.gmra.mxu0 %v943
    %v1050 = vpop.f32.mrf.mxu0
    %v1051 = vadd.f32 %v950, %v1050
    %v1052 = vpop.f32.mrf.mxu0
    %v1053 = vpop.f32.mrf.mxu0
    %v1054 = vadd.f32 %v950, %v1053
    %v1055 = vpop.f32.mrf.mxu0
    %1056 = vmatprep.mubr.bf16.mxu0 0
    %1057 = vmatmul.mubr.bf16.gmra.mxu0 %v944
    %v1058 = vpop.f32.mrf.mxu0
    %v1059 = vadd.f32 %v950, %v1058
    %v1060 = vpop.f32.mrf.mxu0
    %v1061 = vpop.f32.mrf.mxu0
    %v1062 = vadd.f32 %v950, %v1061
    %v1063 = vpop.f32.mrf.mxu0
    %1064 = vdwg.mxu0
    %1065 = vst [vmem:[#allocation7] sm:$0xff] %v1035
    %1066 = vst [vmem:[#allocation7 + $0x8] sm:$0xff] %v1038
    %1067 = vst [vmem:[#allocation7 + $0x10] sm:$0xff] %v1043
    %1068 = vst [vmem:[#allocation7 + $0x18] sm:$0xff] %v1046
    %1069 = vst [vmem:[#allocation7 + $0x20] sm:$0xff] %v1051
    %1070 = vst [vmem:[#allocation7 + $0x28] sm:$0xff] %v1054
    %1071 = vst [vmem:[#allocation7 + $0x30] sm:$0xff] %v1059
    %1072 = vst [vmem:[#allocation7 + $0x38] sm:$0xff] %v1062
    %1073 = vadd.xlane.f32.xlu0 %v74
    %v1074 = vpop.xlane.xlu0 %1073
    %1075 = vadd.xlane.f32.xlu0 %v75
    %v1076 = vpop.xlane.xlu0 %1075
    %1077 = vadd.xlane.f32.xlu0 %v76
    %v1078 = vpop.xlane.xlu0 %1077
    %1079 = vadd.xlane.f32.xlu0 %v77
    %v1080 = vpop.xlane.xlu0 %1079
    %1081 = vadd.xlane.f32.xlu0 %v78
    %v1082 = vpop.xlane.xlu0 %1081
    %1083 = vadd.xlane.f32.xlu0 %v79
    %v1084 = vpop.xlane.xlu0 %1083
    %1085 = vadd.xlane.f32.xlu0 %v80
    %v1086 = vpop.xlane.xlu0 %1085
    %1087 = vadd.xlane.f32.xlu0 %v81
    %v1088 = vpop.xlane.xlu0 %1087
    %v1089 = vrot.slane %v1074, 4
    %v1090 = vadd.f32 %v1074, %v1089
    %v1091 = vrot.slane %v1090, 2
    %v1092 = vadd.f32 %v1090, %v1091
    %v1093 = vrot.slane %v1092, 1
    %v1094 = vadd.f32 %v1092, %v1093
    %v1095 = vrot.slane %v1076, 4
    %v1096 = vadd.f32 %v1076, %v1095
    %v1097 = vrot.slane %v1096, 2
    %v1098 = vadd.f32 %v1096, %v1097
    %v1099 = vrot.slane %v1098, 1
    %v1100 = vadd.f32 %v1098, %v1099
    %v1101 = vrot.slane %v1078, 4
    %v1102 = vadd.f32 %v1078, %v1101
    %v1103 = vrot.slane %v1102, 2
    %v1104 = vadd.f32 %v1102, %v1103
    %v1105 = vrot.slane %v1104, 1
    %v1106 = vadd.f32 %v1104, %v1105
    %v1107 = vrot.slane %v1080, 4
    %v1108 = vadd.f32 %v1080, %v1107
    %v1109 = vrot.slane %v1108, 2
    %v1110 = vadd.f32 %v1108, %v1109
    %v1111 = vrot.slane %v1110, 1
    %v1112 = vadd.f32 %v1110, %v1111
    %v1113 = vrot.slane %v1082, 4
    %v1114 = vadd.f32 %v1082, %v1113
    %v1115 = vrot.slane %v1114, 2
    %v1116 = vadd.f32 %v1114, %v1115
    %v1117 = vrot.slane %v1116, 1
    %v1118 = vadd.f32 %v1116, %v1117
    %v1119 = vrot.slane %v1084, 4
    %v1120 = vadd.f32 %v1084, %v1119
    %v1121 = vrot.slane %v1120, 2
    %v1122 = vadd.f32 %v1120, %v1121
    %v1123 = vrot.slane %v1122, 1
    %v1124 = vadd.f32 %v1122, %v1123
    %v1125 = vrot.slane %v1086, 4
    %v1126 = vadd.f32 %v1086, %v1125
    %v1127 = vrot.slane %v1126, 2
    %v1128 = vadd.f32 %v1126, %v1127
    %v1129 = vrot.slane %v1128, 1
    %v1130 = vadd.f32 %v1128, %v1129
    %v1131 = vrot.slane %v1088, 4
    %v1132 = vadd.f32 %v1088, %v1131
    %v1133 = vrot.slane %v1132, 2
    %v1134 = vadd.f32 %v1132, %v1133
    %v1135 = vrot.slane %v1134, 1
    %v1136 = vadd.f32 %v1134, %v1135
    %v1137 = vadd.f32 %v1094, 1e-05
    %v1138 = vadd.f32 %v1100, 1e-05
    %v1139 = vadd.f32 %v1106, 1e-05
    %v1140 = vadd.f32 %v1112, 1e-05
    %v1141 = vadd.f32 %v1118, 1e-05
    %v1142 = vadd.f32 %v1124, 1e-05
    %v1143 = vadd.f32 %v1130, 1e-05
    %v1144 = vadd.f32 %v1136, 1e-05
    %v1145 = vrcp.pop %v1137
    %v1146 = vrcp.pop %v1138
    %v1147 = vrcp.pop %v1139
    %v1148 = vrcp.pop %v1140
    %v1149 = vrcp.pop %v1141
    %v1150 = vrcp.pop %v1142
    %v1151 = vrcp.pop %v1143
    %v1152 = vrcp.pop %v1144
    %v1153 = vmul.f32 %v74, %v1145
    %v1154 = vmul.f32 %v75, %v1146
    %v1155 = vmul.f32 %v76, %v1147
    %v1156 = vmul.f32 %v77, %v1148
    %v1157 = vmul.f32 %v78, %v1149
    %v1158 = vmul.f32 %v79, %v1150
    %v1159 = vmul.f32 %v80, %v1151
    %v1160 = vmul.f32 %v81, %v1152
    %1161 = vst [vmem:[#allocation8] sm:$0xff] %v1153
    %1162 = vst [vmem:[#allocation8 + $0x8] sm:$0xff] %v1154
    %1163 = vst [vmem:[#allocation8 + $0x10] sm:$0xff] %v1155
    %1164 = vst [vmem:[#allocation8 + $0x18] sm:$0xff] %v1156
    %1165 = vst [vmem:[#allocation8 + $0x20] sm:$0xff] %v1157
    %1166 = vst [vmem:[#allocation8 + $0x28] sm:$0xff] %v1158
    %1167 = vst [vmem:[#allocation8 + $0x30] sm:$0xff] %v1159
    %1168 = vst [vmem:[#allocation8 + $0x38] sm:$0xff] %v1160
    %v1169 = vld [vmem:[%s8] sm:$0xf]
    %v1170 = vld [vmem:[%s8 + $0x4] sm:$0xf]
    %v1171 = vld [vmem:[%s8 + $0x8] sm:$0xf]
    %v1172 = vld [vmem:[%s8 + $0xc] sm:$0xf]
    %v1173 = vld [vmem:[%s8 + $0x10] sm:$0xf]
    %v1174 = vld [vmem:[%s8 + $0x14] sm:$0xf]
    %v1175 = vld [vmem:[%s8 + $0x18] sm:$0xf]
    %v1176 = vld [vmem:[%s8 + $0x1c] sm:$0xf]
    %v1177 = vld [vmem:[%s8 + $0x20] sm:$0xf]
    %v1178 = vld [vmem:[%s8 + $0x24] sm:$0xf]
    %v1179 = vld [vmem:[%s8 + $0x28] sm:$0xf]
    %v1180 = vld [vmem:[%s8 + $0x2c] sm:$0xf]
    %v1181 = vld [vmem:[%s8 + $0x30] sm:$0xf]
    %v1182 = vld [vmem:[%s8 + $0x34] sm:$0xf]
    %v1183 = vld [vmem:[%s8 + $0x38] sm:$0xf]
    %v1184 = vld [vmem:[%s8 + $0x3c] sm:$0xf]
    %v1185 = vld [vmem:[%s10] sm:$0xf]
    %v1186 = vld [vmem:[%s10 + $0x4] sm:$0xf]
    %v1187 = vld [vmem:[%s10 + $0x8] sm:$0xf]
    %v1188 = vld [vmem:[%s10 + $0xc] sm:$0xf]
    %v1189 = vld [vmem:[%s10 + $0x10] sm:$0xf]
    %v1190 = vld [vmem:[%s10 + $0x14] sm:$0xf]
    %v1191 = vld [vmem:[%s10 + $0x18] sm:$0xf]
    %v1192 = vld [vmem:[%s10 + $0x1c] sm:$0xf]
    %v1193 = vld [vmem:[%s10 + $0x20] sm:$0xf]
    %v1194 = vld [vmem:[%s10 + $0x24] sm:$0xf]
    %v1195 = vld [vmem:[%s10 + $0x28] sm:$0xf]
    %v1196 = vld [vmem:[%s10 + $0x2c] sm:$0xf]
    %v1197 = vld [vmem:[%s10 + $0x30] sm:$0xf]
    %v1198 = vld [vmem:[%s10 + $0x34] sm:$0xf]
    %v1199 = vld [vmem:[%s10 + $0x38] sm:$0xf]
    %v1200 = vld [vmem:[%s10 + $0x3c] sm:$0xf]
    %v1201 = vld [vmem:[%s11] sm:$0xf]
    %v1202 = vld [vmem:[%s11 + $0x4] sm:$0xf]
    %v1203 = vld [vmem:[%s11 + $0x8] sm:$0xf]
    %v1204 = vld [vmem:[%s11 + $0xc] sm:$0xf]
    %v1205 = vld [vmem:[%s11 + $0x10] sm:$0xf]
    %v1206 = vld [vmem:[%s11 + $0x14] sm:$0xf]
    %v1207 = vld [vmem:[%s11 + $0x18] sm:$0xf]
    %v1208 = vld [vmem:[%s11 + $0x1c] sm:$0xf]
    %v1209 = vld [vmem:[%s11 + $0x20] sm:$0xf]
    %v1210 = vld [vmem:[%s11 + $0x24] sm:$0xf]
    %v1211 = vld [vmem:[%s11 + $0x28] sm:$0xf]
    %v1212 = vld [vmem:[%s11 + $0x2c] sm:$0xf]
    %v1213 = vld [vmem:[%s11 + $0x30] sm:$0xf]
    %v1214 = vld [vmem:[%s11 + $0x34] sm:$0xf]
    %v1215 = vld [vmem:[%s11 + $0x38] sm:$0xf]
    %v1216 = vld [vmem:[%s11 + $0x3c] sm:$0xf]
    %v1217 = vld [vmem:[%s13] sm:$0xff]
    %v1218 = vld [vmem:[%s13 + $0x8] sm:$0xf]
    %v1219 = vld [vmem:[%s13 + $0xc] sm:$0xff]
    %v1220 = vld [vmem:[%s13 + $0x14] sm:$0xf]
    %v1221 = vld [vmem:[%s13 + $0x18] sm:$0xff]
    %v1222 = vld [vmem:[%s13 + $0x20] sm:$0xf]
    %v1223 = vld [vmem:[%s13 + $0x24] sm:$0xff]
    %v1224 = vld [vmem:[%s13 + $0x2c] sm:$0xf]
    %v1225 = vld [vmem:[%s13 + $0x30] sm:$0xff]
    %v1226 = vld [vmem:[%s13 + $0x38] sm:$0xf]
    %v1227 = vld [vmem:[%s13 + $0x3c] sm:$0xff]
    %v1228 = vld [vmem:[%s13 + $0x44] sm:$0xf]
    %v1229 = vld [vmem:[%s13 + $0x48] sm:$0xff]
    %v1230 = vld [vmem:[%s13 + $0x50] sm:$0xf]
    %v1231 = vld [vmem:[%s13 + $0x54] sm:$0xff]
    %v1232 = vld [vmem:[%s13 + $0x5c] sm:$0xf]
    %v1233 = vld [vmem:[%s13 + $0x60] sm:$0xff]
    %v1234 = vld [vmem:[%s13 + $0x68] sm:$0xf]
    %v1235 = vld [vmem:[%s13 + $0x6c] sm:$0xff]
    %v1236 = vld [vmem:[%s13 + $0x74] sm:$0xf]
    %v1237 = vld [vmem:[%s13 + $0x78] sm:$0xff]
    %v1238 = vld [vmem:[%s13 + $0x80] sm:$0xf]
    %v1239 = vld [vmem:[%s13 + $0x84] sm:$0xff]
    %v1240 = vld [vmem:[%s13 + $0x8c] sm:$0xf]
    %v1241 = vld [vmem:[%s13 + $0x90] sm:$0xff]
    %v1242 = vld [vmem:[%s13 + $0x98] sm:$0xf]
    %v1243 = vld [vmem:[%s13 + $0x9c] sm:$0xff]
    %v1244 = vld [vmem:[%s13 + $0xa4] sm:$0xf]
    %v1245 = vld [vmem:[%s13 + $0xa8] sm:$0xff]
    %v1246 = vld [vmem:[%s13 + $0xb0] sm:$0xf]
    %v1247 = vld [vmem:[%s13 + $0xb4] sm:$0xff]
    %v1248 = vld [vmem:[%s13 + $0xbc] sm:$0xf]
    %v1249 = vld [vmem:[%s14] sm:$0xff]
    %v1250 = vld [vmem:[%s14 + $0x8] sm:$0xf]
    %v1251 = vld [vmem:[%s14 + $0xc] sm:$0xff]
    %v1252 = vld [vmem:[%s14 + $0x14] sm:$0xf]
    %v1253 = vld [vmem:[%s14 + $0x18] sm:$0xff]
    %v1254 = vld [vmem:[%s14 + $0x20] sm:$0xf]
    %v1255 = vld [vmem:[%s14 + $0x24] sm:$0xff]
    %v1256 = vld [vmem:[%s14 + $0x2c] sm:$0xf]
    %v1257 = vld [vmem:[%s14 + $0x30] sm:$0xff]
    %v1258 = vld [vmem:[%s14 + $0x38] sm:$0xf]
    %v1259 = vld [vmem:[%s14 + $0x3c] sm:$0xff]
    %v1260 = vld [vmem:[%s14 + $0x44] sm:$0xf]
    %v1261 = vld [vmem:[%s14 + $0x48] sm:$0xff]
    %v1262 = vld [vmem:[%s14 + $0x50] sm:$0xf]
    %v1263 = vld [vmem:[%s14 + $0x54] sm:$0xff]
    %v1264 = vld [vmem:[%s14 + $0x5c] sm:$0xf]
    %v1265 = vld [vmem:[%s14 + $0x60] sm:$0xff]
    %v1266 = vld [vmem:[%s14 + $0x68] sm:$0xf]
    %v1267 = vld [vmem:[%s14 + $0x6c] sm:$0xff]
    %v1268 = vld [vmem:[%s14 + $0x74] sm:$0xf]
    %v1269 = vld [vmem:[%s14 + $0x78] sm:$0xff]
    %v1270 = vld [vmem:[%s14 + $0x80] sm:$0xf]
    %v1271 = vld [vmem:[%s14 + $0x84] sm:$0xff]
    %v1272 = vld [vmem:[%s14 + $0x8c] sm:$0xf]
    %v1273 = vld [vmem:[%s14 + $0x90] sm:$0xff]
    %v1274 = vld [vmem:[%s14 + $0x98] sm:$0xf]
    %v1275 = vld [vmem:[%s14 + $0x9c] sm:$0xff]
    %v1276 = vld [vmem:[%s14 + $0xa4] sm:$0xf]
    %v1277 = vld [vmem:[%s14 + $0xa8] sm:$0xff]
    %v1278 = vld [vmem:[%s14 + $0xb0] sm:$0xf]
    %v1279 = vld [vmem:[%s14 + $0xb4] sm:$0xff]
    %v1280 = vld [vmem:[%s14 + $0xbc] sm:$0xf]
    %v1281 = vld [vmem:[%s9] sm:$0x1]
    %v1283 = vlaneseq
    %v1284 = vshrl.u32 %v1283, 7
    %v1285 = vsub.s32 0, %v1284
    %v1286 = vrot.slane %v1281, %v1285
    %v1288 = vld [vmem:[%s12] sm:$0x1]
    %v1290 = vlaneseq
    %v1291 = vshrl.u32 %v1290, 7
    %v1292 = vsub.s32 0, %v1291
    %v1293 = vrot.slane %v1288, %v1292
    %v1295 = vld [vmem:[%s15] sm:$0x7]
    %v1297 = vlaneseq
    %v1298 = vshrl.u32 %v1297, 7
    %v1299 = vsub.s32 0, %v1298
    %v1300 = vrot.slane %v1295, %v1299
    %v1301 = vlaneseq
    %v1302 = vshrl.u32 %v1301, 7
    %v1303 = vsub.s32 1, %v1302
    %v1304 = vrot.slane %v1295, %v1303
    %v1305 = vlaneseq
    %v1306 = vshrl.u32 %v1305, 7
    %v1307 = vsub.s32 2, %v1306
    %v1308 = vrot.slane %v1295, %v1307
    %v1312 = vld [vmem:[#allocation2] sm:$0xff]
    %v1313 = vld [vmem:[#allocation3] sm:$0xff]
    %v1314 = vld [vmem:[%s0] sm:$0xff]
    %v1315 = vld [vmem:[%s73] sm:$0xff]
    %v1316 = vld [vmem:[#allocation4] sm:$0xff]
    %v1317 = vld [vmem:[#allocation5] sm:$0xff]
    %v1318 = vld [vmem:[#allocation6] sm:$0xff]
    %v1319 = vld [vmem:[#allocation6 + $0x8] sm:$0xff]
    %v1320 = vld [vmem:[#allocation6 + $0x10] sm:$0xff]
    %v1321 = vld [vmem:[#allocation7] sm:$0xff]
    %v1322 = vld [vmem:[#allocation8] sm:$0xff]
    %v1323 = vmul.f32 %v1315, %v1314
    %v1324 = vsub.f32 1.0, %v1315
    %v1325 = vpack.c.bf16 %v1312, %v1312
    %v1342 = vunpack.c.l.b16 %v1169
    %v1343 = vunpack.c.l.b16 %v1170
    %v1344 = vunpack.c.l.b16 %v1171
    %v1345 = vunpack.c.l.b16 %v1172
    %v1346 = vunpack.c.l.b16 %v1173
    %v1347 = vunpack.c.l.b16 %v1174
    %v1348 = vunpack.c.l.b16 %v1175
    %v1349 = vunpack.c.l.b16 %v1176
    %v1350 = vunpack.c.l.b16 %v1177
    %v1351 = vunpack.c.l.b16 %v1178
    %v1352 = vunpack.c.l.b16 %v1179
    %v1353 = vunpack.c.l.b16 %v1180
    %v1354 = vunpack.c.l.b16 %v1181
    %v1355 = vunpack.c.l.b16 %v1182
    %v1356 = vunpack.c.l.b16 %v1183
    %v1357 = vunpack.c.l.b16 %v1184
    %v1358 = vpack.c.b16 %v1343, %v1342
    %v1359 = vpack.c.b16 %v1345, %v1344
    %v1360 = vpack.c.b16 %v1347, %v1346
    %v1361 = vpack.c.b16 %v1349, %v1348
    %v1362 = vpack.c.b16 %v1351, %v1350
    %v1363 = vpack.c.b16 %v1353, %v1352
    %v1364 = vpack.c.b16 %v1355, %v1354
    %v1365 = vpack.c.b16 %v1357, %v1356
    %1374 = vmatprep.subr.bf16.mxu0 0
    %1375 = vmatpush1.bf16.msra.mxu0 %v1365
    %1376 = vmatprep.subr.bf16.mxu0 0
    %1377 = vmatpush1.bf16.msra.mxu0 %v1364
    %1378 = vmatprep.subr.bf16.mxu0 0
    %1379 = vmatpush1.bf16.msra.mxu0 %v1363
    %1380 = vmatprep.subr.bf16.mxu0 0
    %1381 = vmatpush1.bf16.msra.mxu0 %v1362
    %1382 = vmatprep.subr.bf16.mxu0 0
    %1383 = vmatpush1.bf16.msra.mxu0 %v1361
    %1384 = vmatprep.subr.bf16.mxu0 0
    %1385 = vmatpush1.bf16.msra.mxu0 %v1360
    %1386 = vmatprep.subr.bf16.mxu0 0
    %1387 = vmatpush1.bf16.msra.mxu0 %v1359
    %1388 = vmatprep.subr.bf16.mxu0 0
    %1389 = vmatpush1.bf16.msra.mxu0 %v1358
    %1390 = vmatprep.subr.bf16.mxu0 0
    %1391 = vmatpush2.bf16.msra.mxu0 0
    %1392 = vmatprep.subr.bf16.mxu0 0
    %1393 = vmatpush2.bf16.msra.mxu0 0
    %1394 = vmatprep.subr.bf16.mxu0 0
    %1395 = vmatpush2.bf16.msra.mxu0 0
    %1396 = vmatprep.subr.bf16.mxu0 0
    %1397 = vmatpush2.bf16.msra.mxu0 0
    %1398 = vmatprep.subr.bf16.mxu0 0
    %1399 = vmatpush2.bf16.msra.mxu0 0
    %1400 = vmatprep.subr.bf16.mxu0 0
    %1401 = vmatpush2.bf16.msra.mxu0 0
    %1402 = vmatprep.subr.bf16.mxu0 0
    %1403 = vmatpush2.bf16.msra.mxu0 0
    %1404 = vmatprep.subr.bf16.mxu0 0
    %1405 = vmatpush2.bf16.msra.mxu0 0
    %1406 = vmatprep.mubr.bf16.mxu0 0
    %1407 = vmatmul.mubr.bf16.gmra.mxu0 %v1325
    %v1408 = vpop.f32.mrf.mxu0
    %v1409 = vadd.f32 %v1286, %v1408
    %v1410 = vpop.f32.mrf.mxu0
    %v1411 = vpop.f32.mrf.mxu0
    %v1412 = vpop.f32.mrf.mxu0
    %1413 = vdwg.mxu0
    %v1414 = vmul.f32 %v1324, %v1409
    %v1415 = vadd.f32 %v1323, %v1414
    %v1416 = vpack.c.bf16 %v1415, %v1415
    %v1433 = vunpack.c.l.b16 %v1185
    %v1434 = vunpack.c.l.b16 %v1186
    %v1435 = vunpack.c.l.b16 %v1187
    %v1436 = vunpack.c.l.b16 %v1188
    %v1437 = vunpack.c.l.b16 %v1189
    %v1438 = vunpack.c.l.b16 %v1190
    %v1439 = vunpack.c.l.b16 %v1191
    %v1440 = vunpack.c.l.b16 %v1192
    %v1441 = vunpack.c.l.b16 %v1193
    %v1442 = vunpack.c.l.b16 %v1194
    %v1443 = vunpack.c.l.b16 %v1195
    %v1444 = vunpack.c.l.b16 %v1196
    %v1445 = vunpack.c.l.b16 %v1197
    %v1446 = vunpack.c.l.b16 %v1198
    %v1447 = vunpack.c.l.b16 %v1199
    %v1448 = vunpack.c.l.b16 %v1200
    %v1449 = vpack.c.b16 %v1434, %v1433
    %v1450 = vpack.c.b16 %v1436, %v1435
    %v1451 = vpack.c.b16 %v1438, %v1437
    %v1452 = vpack.c.b16 %v1440, %v1439
    %v1453 = vpack.c.b16 %v1442, %v1441
    %v1454 = vpack.c.b16 %v1444, %v1443
    %v1455 = vpack.c.b16 %v1446, %v1445
    %v1456 = vpack.c.b16 %v1448, %v1447
    %1465 = vmatprep.subr.bf16.mxu0 0
    %1466 = vmatpush1.bf16.msra.mxu0 %v1456
    %1467 = vmatprep.subr.bf16.mxu0 0
    %1468 = vmatpush1.bf16.msra.mxu0 %v1455
    %1469 = vmatprep.subr.bf16.mxu0 0
    %1470 = vmatpush1.bf16.msra.mxu0 %v1454
    %1471 = vmatprep.subr.bf16.mxu0 0
    %1472 = vmatpush1.bf16.msra.mxu0 %v1453
    %1473 = vmatprep.subr.bf16.mxu0 0
    %1474 = vmatpush1.bf16.msra.mxu0 %v1452
    %1475 = vmatprep.subr.bf16.mxu0 0
    %1476 = vmatpush1.bf16.msra.mxu0 %v1451
    %1477 = vmatprep.subr.bf16.mxu0 0
    %1478 = vmatpush1.bf16.msra.mxu0 %v1450
    %1479 = vmatprep.subr.bf16.mxu0 0
    %1480 = vmatpush1.bf16.msra.mxu0 %v1449
    %1481 = vmatprep.subr.bf16.mxu0 0
    %1482 = vmatpush2.bf16.msra.mxu0 0
    %1483 = vmatprep.subr.bf16.mxu0 0
    %1484 = vmatpush2.bf16.msra.mxu0 0
    %1485 = vmatprep.subr.bf16.mxu0 0
    %1486 = vmatpush2.bf16.msra.mxu0 0
    %1487 = vmatprep.subr.bf16.mxu0 0
    %1488 = vmatpush2.bf16.msra.mxu0 0
    %1489 = vmatprep.subr.bf16.mxu0 0
    %1490 = vmatpush2.bf16.msra.mxu0 0
    %1491 = vmatprep.subr.bf16.mxu0 0
    %1492 = vmatpush2.bf16.msra.mxu0 0
    %1493 = vmatprep.subr.bf16.mxu0 0
    %1494 = vmatpush2.bf16.msra.mxu0 0
    %1495 = vmatprep.subr.bf16.mxu0 0
    %1496 = vmatpush2.bf16.msra.mxu0 0
    %1497 = vmatprep.mubr.bf16.mxu0 0
    %1498 = vmatmul.mubr.bf16.gmra.mxu0 %v1416
    %v1499 = vpop.f32.mrf.mxu0
    %v1500 = vadd.f32 %v1321, %v1499
    %v1501 = vpop.f32.mrf.mxu0
    %v1502 = vpop.f32.mrf.mxu0
    %v1503 = vpop.f32.mrf.mxu0
    %1504 = vdwg.mxu0
    %v1505 = vmul.f32 %v1324, %v1500
    %v1506 = vadd.f32 %v1323, %v1505
    %v1507 = vpack.c.bf16 %v1506, %v1506
    %v1524 = vunpack.c.l.b16 %v1201
    %v1525 = vunpack.c.l.b16 %v1202
    %v1526 = vunpack.c.l.b16 %v1203
    %v1527 = vunpack.c.l.b16 %v1204
    %v1528 = vunpack.c.l.b16 %v1205
    %v1529 = vunpack.c.l.b16 %v1206
    %v1530 = vunpack.c.l.b16 %v1207
    %v1531 = vunpack.c.l.b16 %v1208
    %v1532 = vunpack.c.l.b16 %v1209
    %v1533 = vunpack.c.l.b16 %v1210
    %v1534 = vunpack.c.l.b16 %v1211
    %v1535 = vunpack.c.l.b16 %v1212
    %v1536 = vunpack.c.l.b16 %v1213
    %v1537 = vunpack.c.l.b16 %v1214
    %v1538 = vunpack.c.l.b16 %v1215
    %v1539 = vunpack.c.l.b16 %v1216
    %v1540 = vpack.c.b16 %v1525, %v1524
    %v1541 = vpack.c.b16 %v1527, %v1526
    %v1542 = vpack.c.b16 %v1529, %v1528
    %v1543 = vpack.c.b16 %v1531, %v1530
    %v1544 = vpack.c.b16 %v1533, %v1532
    %v1545 = vpack.c.b16 %v1535, %v1534
    %v1546 = vpack.c.b16 %v1537, %v1536
    %v1547 = vpack.c.b16 %v1539, %v1538
    %1556 = vmatprep.subr.bf16.mxu0 0
    %1557 = vmatpush1.bf16.msra.mxu0 %v1547
    %1558 = vmatprep.subr.bf16.mxu0 0
    %1559 = vmatpush1.bf16.msra.mxu0 %v1546
    %1560 = vmatprep.subr.bf16.mxu0 0
    %1561 = vmatpush1.bf16.msra.mxu0 %v1545
    %1562 = vmatprep.subr.bf16.mxu0 0
    %1563 = vmatpush1.bf16.msra.mxu0 %v1544
    %1564 = vmatprep.subr.bf16.mxu0 0
    %1565 = vmatpush1.bf16.msra.mxu0 %v1543
    %1566 = vmatprep.subr.bf16.mxu0 0
    %1567 = vmatpush1.bf16.msra.mxu0 %v1542
    %1568 = vmatprep.subr.bf16.mxu0 0
    %1569 = vmatpush1.bf16.msra.mxu0 %v1541
    %1570 = vmatprep.subr.bf16.mxu0 0
    %1571 = vmatpush1.bf16.msra.mxu0 %v1540
    %1572 = vmatprep.subr.bf16.mxu0 0
    %1573 = vmatpush2.bf16.msra.mxu0 0
    %1574 = vmatprep.subr.bf16.mxu0 0
    %1575 = vmatpush2.bf16.msra.mxu0 0
    %1576 = vmatprep.subr.bf16.mxu0 0
    %1577 = vmatpush2.bf16.msra.mxu0 0
    %1578 = vmatprep.subr.bf16.mxu0 0
    %1579 = vmatpush2.bf16.msra.mxu0 0
    %1580 = vmatprep.subr.bf16.mxu0 0
    %1581 = vmatpush2.bf16.msra.mxu0 0
    %1582 = vmatprep.subr.bf16.mxu0 0
    %1583 = vmatpush2.bf16.msra.mxu0 0
    %1584 = vmatprep.subr.bf16.mxu0 0
    %1585 = vmatpush2.bf16.msra.mxu0 0
    %1586 = vmatprep.subr.bf16.mxu0 0
    %1587 = vmatpush2.bf16.msra.mxu0 0
    %1588 = vmatprep.mubr.bf16.mxu0 0
    %1589 = vmatmul.mubr.bf16.gmra.mxu0 %v1507
    %v1590 = vpop.f32.mrf.mxu0
    %v1591 = vadd.f32 %v1293, %v1590
    %v1592 = vpop.f32.mrf.mxu0
    %v1593 = vpop.f32.mrf.mxu0
    %v1594 = vpop.f32.mrf.mxu0
    %1595 = vdwg.mxu0
    %v1596 = vmul.f32 %v1317, %v1591
    %v1597 = vsub.f32 1.0, %v1317
    %v1598 = vmul.f32 %v1597, %v1409
    %v1599 = vadd.f32 %v1596, %v1598
    %v1600 = vmul.f32 %v1324, %v1599
    %v1601 = vadd.f32 %v1323, %v1600
    %v1602 = vsub.f32 %v1314, %v1409
    %v1603 = vand.u32 2147483647, %v1602
    %v1604 = vsub.f32 %v1314, %v1500
    %v1605 = vand.u32 2147483647, %v1604
    %v1606 = vadd.f32 %v1603, %v1605
    %v1607 = vsub.f32 %v1314, %v1591
    %v1608 = vand.u32 2147483647, %v1607
    %v1609 = vadd.f32 %v1606, %v1608
    %v1610 = vsub.f32 %v1314, %v1599
    %v1611 = vand.u32 2147483647, %v1610
    %v1612 = vadd.f32 %v1609, %v1611
    %v1613 = vmul.f32 %v1612, %v1322
    %v1614 = vadd.f32 %v1313, %v1613
    %1615 = vst [vmem:[%s16] sm:$0xff] %v1599
    %1616 = vst [vmem:[%s17] sm:$0xff] %v1601
    %v1617 = vmul.f32 %v1312, %v1316
    %v1618 = vpack.c.bf16 %v1601, %v1601
    %v1651 = vunpack.c.l.b16 %v1217
    %v1652 = vunpack.c.h.b16 %v1217
    %v1653 = vunpack.c.l.b16 %v1218
    %v1654 = vunpack.c.l.b16 %v1219
    %v1655 = vunpack.c.h.b16 %v1219
    %v1656 = vunpack.c.l.b16 %v1220
    %v1657 = vunpack.c.l.b16 %v1221
    %v1658 = vunpack.c.h.b16 %v1221
    %v1659 = vunpack.c.l.b16 %v1222
    %v1660 = vunpack.c.l.b16 %v1223
    %v1661 = vunpack.c.h.b16 %v1223
    %v1662 = vunpack.c.l.b16 %v1224
    %v1663 = vunpack.c.l.b16 %v1225
    %v1664 = vunpack.c.h.b16 %v1225
    %v1665 = vunpack.c.l.b16 %v1226
    %v1666 = vunpack.c.l.b16 %v1227
    %v1667 = vunpack.c.h.b16 %v1227
    %v1668 = vunpack.c.l.b16 %v1228
    %v1669 = vunpack.c.l.b16 %v1229
    %v1670 = vunpack.c.h.b16 %v1229
    %v1671 = vunpack.c.l.b16 %v1230
    %v1672 = vunpack.c.l.b16 %v1231
    %v1673 = vunpack.c.h.b16 %v1231
    %v1674 = vunpack.c.l.b16 %v1232
    %v1675 = vunpack.c.l.b16 %v1233
    %v1676 = vunpack.c.h.b16 %v1233
    %v1677 = vunpack.c.l.b16 %v1234
    %v1678 = vunpack.c.l.b16 %v1235
    %v1679 = vunpack.c.h.b16 %v1235
    %v1680 = vunpack.c.l.b16 %v1236
    %v1681 = vunpack.c.l.b16 %v1237
    %v1682 = vunpack.c.h.b16 %v1237
    %v1683 = vunpack.c.l.b16 %v1238
    %v1684 = vunpack.c.l.b16 %v1239
    %v1685 = vunpack.c.h.b16 %v1239
    %v1686 = vunpack.c.l.b16 %v1240
    %v1687 = vunpack.c.l.b16 %v1241
    %v1688 = vunpack.c.h.b16 %v1241
    %v1689 = vunpack.c.l.b16 %v1242
    %v1690 = vunpack.c.l.b16 %v1243
    %v1691 = vunpack.c.h.b16 %v1243
    %v1692 = vunpack.c.l.b16 %v1244
    %v1693 = vunpack.c.l.b16 %v1245
    %v1694 = vunpack.c.h.b16 %v1245
    %v1695 = vunpack.c.l.b16 %v1246
    %v1696 = vunpack.c.l.b16 %v1247
    %v1697 = vunpack.c.h.b16 %v1247
    %v1698 = vunpack.c.l.b16 %v1248
    %v1699 = vpack.c.b16 %v1654, %v1651
    %v1700 = vpack.c.b16 %v1655, %v1652
    %v1701 = vpack.c.b16 %v1656, %v1653
    %v1702 = vpack.c.b16 %v1660, %v1657
    %v1703 = vpack.c.b16 %v1661, %v1658
    %v1704 = vpack.c.b16 %v1662, %v1659
    %v1705 = vpack.c.b16 %v1666, %v1663
    %v1706 = vpack.c.b16 %v1667, %v1664
    %v1707 = vpack.c.b16 %v1668, %v1665
    %v1708 = vpack.c.b16 %v1672, %v1669
    %v1709 = vpack.c.b16 %v1673, %v1670
    %v1710 = vpack.c.b16 %v1674, %v1671
    %v1711 = vpack.c.b16 %v1678, %v1675
    %v1712 = vpack.c.b16 %v1679, %v1676
    %v1713 = vpack.c.b16 %v1680, %v1677
    %v1714 = vpack.c.b16 %v1684, %v1681
    %v1715 = vpack.c.b16 %v1685, %v1682
    %v1716 = vpack.c.b16 %v1686, %v1683
    %v1717 = vpack.c.b16 %v1690, %v1687
    %v1718 = vpack.c.b16 %v1691, %v1688
    %v1719 = vpack.c.b16 %v1692, %v1689
    %v1720 = vpack.c.b16 %v1696, %v1693
    %v1721 = vpack.c.b16 %v1697, %v1694
    %v1722 = vpack.c.b16 %v1698, %v1695
    %1747 = vmatprep.subr.bf16.mxu0 %v1721
    %1748 = vmatpush1.bf16.msra.mxu0 %v1720
    %1749 = vmatprep.subr.bf16.mxu0 %v1718
    %1750 = vmatpush1.bf16.msra.mxu0 %v1717
    %1751 = vmatprep.subr.bf16.mxu0 %v1715
    %1752 = vmatpush1.bf16.msra.mxu0 %v1714
    %1753 = vmatprep.subr.bf16.mxu0 %v1712
    %1754 = vmatpush1.bf16.msra.mxu0 %v1711
    %1755 = vmatprep.subr.bf16.mxu0 %v1709
    %1756 = vmatpush1.bf16.msra.mxu0 %v1708
    %1757 = vmatprep.subr.bf16.mxu0 %v1706
    %1758 = vmatpush1.bf16.msra.mxu0 %v1705
    %1759 = vmatprep.subr.bf16.mxu0 %v1703
    %1760 = vmatpush1.bf16.msra.mxu0 %v1702
    %1761 = vmatprep.subr.bf16.mxu0 %v1700
    %1762 = vmatpush1.bf16.msra.mxu0 %v1699
    %1763 = vmatprep.subr.bf16.mxu0 0
    %1764 = vmatpush2.bf16.msra.mxu0 0
    %1765 = vmatprep.subr.bf16.mxu0 0
    %1766 = vmatpush2.bf16.msra.mxu0 0
    %1767 = vmatprep.subr.bf16.mxu0 0
    %1768 = vmatpush2.bf16.msra.mxu0 0
    %1769 = vmatprep.subr.bf16.mxu0 0
    %1770 = vmatpush2.bf16.msra.mxu0 0
    %1771 = vmatprep.subr.bf16.mxu0 0
    %1772 = vmatpush2.bf16.msra.mxu0 0
    %1773 = vmatprep.subr.bf16.mxu0 0
    %1774 = vmatpush2.bf16.msra.mxu0 0
    %1775 = vmatprep.subr.bf16.mxu0 0
    %1776 = vmatpush2.bf16.msra.mxu0 0
    %1777 = vmatprep.subr.bf16.mxu0 0
    %1778 = vmatpush2.bf16.msra.mxu0 0
    %1779 = vmatprep.mubr.bf16.mxu0 0
    %1780 = vmatmul.mubr.bf16.gmra.mxu0 %v1618
    %v1781 = vpop.f32.mrf.mxu0
    %v1782 = vadd.f32 %v1318, %v1781
    %v1783 = vpop.f32.mrf.mxu0
    %v1784 = vadd.f32 %v1319, %v1783
    %v1785 = vpop.f32.mrf.mxu0
    %v1786 = vpop.f32.mrf.mxu0
    %1787 = vdwg.mxu0
    %1788 = vmatprep.subr.bf16.mxu0 0
    %1789 = vmatpush1.bf16.msra.mxu0 %v1722
    %1790 = vmatprep.subr.bf16.mxu0 0
    %1791 = vmatpush1.bf16.msra.mxu0 %v1719
    %1792 = vmatprep.subr.bf16.mxu0 0
    %1793 = vmatpush1.bf16.msra.mxu0 %v1716
    %1794 = vmatprep.subr.bf16.mxu0 0
    %1795 = vmatpush1.bf16.msra.mxu0 %v1713
    %1796 = vmatprep.subr.bf16.mxu0 0
    %1797 = vmatpush1.bf16.msra.mxu0 %v1710
    %1798 = vmatprep.subr.bf16.mxu0 0
    %1799 = vmatpush1.bf16.msra.mxu0 %v1707
    %1800 = vmatprep.subr.bf16.mxu0 0
    %1801 = vmatpush1.bf16.msra.mxu0 %v1704
    %1802 = vmatprep.subr.bf16.mxu0 0
    %1803 = vmatpush1.bf16.msra.mxu0 %v1701
    %1804 = vmatprep.subr.bf16.mxu0 0
    %1805 = vmatpush2.bf16.msra.mxu0 0
    %1806 = vmatprep.subr.bf16.mxu0 0
    %1807 = vmatpush2.bf16.msra.mxu0 0
    %1808 = vmatprep.subr.bf16.mxu0 0
    %1809 = vmatpush2.bf16.msra.mxu0 0
    %1810 = vmatprep.subr.bf16.mxu0 0
    %1811 = vmatpush2.bf16.msra.mxu0 0
    %1812 = vmatprep.subr.bf16.mxu0 0
    %1813 = vmatpush2.bf16.msra.mxu0 0
    %1814 = vmatprep.subr.bf16.mxu0 0
    %1815 = vmatpush2.bf16.msra.mxu0 0
    %1816 = vmatprep.subr.bf16.mxu0 0
    %1817 = vmatpush2.bf16.msra.mxu0 0
    %1818 = vmatprep.subr.bf16.mxu0 0
    %1819 = vmatpush2.bf16.msra.mxu0 0
    %1820 = vmatprep.mubr.bf16.mxu0 0
    %1821 = vmatmul.mubr.bf16.gmra.mxu0 %v1618
    %v1822 = vpop.f32.mrf.mxu0
    %v1823 = vadd.f32 %v1320, %v1822
    %v1824 = vpop.f32.mrf.mxu0
    %v1825 = vpop.f32.mrf.mxu0
    %v1826 = vpop.f32.mrf.mxu0
    %1827 = vdwg.mxu0
    %v1828 = vpack.c.bf16 %v1617, %v1617
    %v1861 = vunpack.c.l.b16 %v1249
    %v1862 = vunpack.c.h.b16 %v1249
    %v1863 = vunpack.c.l.b16 %v1250
    %v1864 = vunpack.c.l.b16 %v1251
    %v1865 = vunpack.c.h.b16 %v1251
    %v1866 = vunpack.c.l.b16 %v1252
    %v1867 = vunpack.c.l.b16 %v1253
    %v1868 = vunpack.c.h.b16 %v1253
    %v1869 = vunpack.c.l.b16 %v1254
    %v1870 = vunpack.c.l.b16 %v1255
    %v1871 = vunpack.c.h.b16 %v1255
    %v1872 = vunpack.c.l.b16 %v1256
    %v1873 = vunpack.c.l.b16 %v1257
    %v1874 = vunpack.c.h.b16 %v1257
    %v1875 = vunpack.c.l.b16 %v1258
    %v1876 = vunpack.c.l.b16 %v1259
    %v1877 = vunpack.c.h.b16 %v1259
    %v1878 = vunpack.c.l.b16 %v1260
    %v1879 = vunpack.c.l.b16 %v1261
    %v1880 = vunpack.c.h.b16 %v1261
    %v1881 = vunpack.c.l.b16 %v1262
    %v1882 = vunpack.c.l.b16 %v1263
    %v1883 = vunpack.c.h.b16 %v1263
    %v1884 = vunpack.c.l.b16 %v1264
    %v1885 = vunpack.c.l.b16 %v1265
    %v1886 = vunpack.c.h.b16 %v1265
    %v1887 = vunpack.c.l.b16 %v1266
    %v1888 = vunpack.c.l.b16 %v1267
    %v1889 = vunpack.c.h.b16 %v1267
    %v1890 = vunpack.c.l.b16 %v1268
    %v1891 = vunpack.c.l.b16 %v1269
    %v1892 = vunpack.c.h.b16 %v1269
    %v1893 = vunpack.c.l.b16 %v1270
    %v1894 = vunpack.c.l.b16 %v1271
    %v1895 = vunpack.c.h.b16 %v1271
    %v1896 = vunpack.c.l.b16 %v1272
    %v1897 = vunpack.c.l.b16 %v1273
    %v1898 = vunpack.c.h.b16 %v1273
    %v1899 = vunpack.c.l.b16 %v1274
    %v1900 = vunpack.c.l.b16 %v1275
    %v1901 = vunpack.c.h.b16 %v1275
    %v1902 = vunpack.c.l.b16 %v1276
    %v1903 = vunpack.c.l.b16 %v1277
    %v1904 = vunpack.c.h.b16 %v1277
    %v1905 = vunpack.c.l.b16 %v1278
    %v1906 = vunpack.c.l.b16 %v1279
    %v1907 = vunpack.c.h.b16 %v1279
    %v1908 = vunpack.c.l.b16 %v1280
    %v1909 = vpack.c.b16 %v1864, %v1861
    %v1910 = vpack.c.b16 %v1865, %v1862
    %v1911 = vpack.c.b16 %v1866, %v1863
    %v1912 = vpack.c.b16 %v1870, %v1867
    %v1913 = vpack.c.b16 %v1871, %v1868
    %v1914 = vpack.c.b16 %v1872, %v1869
    %v1915 = vpack.c.b16 %v1876, %v1873
    %v1916 = vpack.c.b16 %v1877, %v1874
    %v1917 = vpack.c.b16 %v1878, %v1875
    %v1918 = vpack.c.b16 %v1882, %v1879
    %v1919 = vpack.c.b16 %v1883, %v1880
    %v1920 = vpack.c.b16 %v1884, %v1881
    %v1921 = vpack.c.b16 %v1888, %v1885
    %v1922 = vpack.c.b16 %v1889, %v1886
    %v1923 = vpack.c.b16 %v1890, %v1887
    %v1924 = vpack.c.b16 %v1894, %v1891
    %v1925 = vpack.c.b16 %v1895, %v1892
    %v1926 = vpack.c.b16 %v1896, %v1893
    %v1927 = vpack.c.b16 %v1900, %v1897
    %v1928 = vpack.c.b16 %v1901, %v1898
    %v1929 = vpack.c.b16 %v1902, %v1899
    %v1930 = vpack.c.b16 %v1906, %v1903
    %v1931 = vpack.c.b16 %v1907, %v1904
    %v1932 = vpack.c.b16 %v1908, %v1905
    %1957 = vmatprep.subr.bf16.mxu0 %v1931
    %1958 = vmatpush1.bf16.msra.mxu0 %v1930
    %1959 = vmatprep.subr.bf16.mxu0 %v1928
    %1960 = vmatpush1.bf16.msra.mxu0 %v1927
    %1961 = vmatprep.subr.bf16.mxu0 %v1925
    %1962 = vmatpush1.bf16.msra.mxu0 %v1924
    %1963 = vmatprep.subr.bf16.mxu0 %v1922
    %1964 = vmatpush1.bf16.msra.mxu0 %v1921
    %1965 = vmatprep.subr.bf16.mxu0 %v1919
    %1966 = vmatpush1.bf16.msra.mxu0 %v1918
    %1967 = vmatprep.subr.bf16.mxu0 %v1916
    %1968 = vmatpush1.bf16.msra.mxu0 %v1915
    %1969 = vmatprep.subr.bf16.mxu0 %v1913
    %1970 = vmatpush1.bf16.msra.mxu0 %v1912
    %1971 = vmatprep.subr.bf16.mxu0 %v1910
    %1972 = vmatpush1.bf16.msra.mxu0 %v1909
    %1973 = vmatprep.subr.bf16.mxu0 0
    %1974 = vmatpush2.bf16.msra.mxu0 0
    %1975 = vmatprep.subr.bf16.mxu0 0
    %1976 = vmatpush2.bf16.msra.mxu0 0
    %1977 = vmatprep.subr.bf16.mxu0 0
    %1978 = vmatpush2.bf16.msra.mxu0 0
    %1979 = vmatprep.subr.bf16.mxu0 0
    %1980 = vmatpush2.bf16.msra.mxu0 0
    %1981 = vmatprep.subr.bf16.mxu0 0
    %1982 = vmatpush2.bf16.msra.mxu0 0
    %1983 = vmatprep.subr.bf16.mxu0 0
    %1984 = vmatpush2.bf16.msra.mxu0 0
    %1985 = vmatprep.subr.bf16.mxu0 0
    %1986 = vmatpush2.bf16.msra.mxu0 0
    %1987 = vmatprep.subr.bf16.mxu0 0
    %1988 = vmatpush2.bf16.msra.mxu0 0
    %1989 = vmatprep.mubr.bf16.mxu0 0
    %1990 = vmatmul.mubr.bf16.gmra.mxu0 %v1828
    %v1991 = vpop.f32.mrf.mxu0
    %v1992 = vadd.f32 %v1300, %v1991
    %v1993 = vpop.f32.mrf.mxu0
    %v1994 = vadd.f32 %v1304, %v1993
    %v1995 = vpop.f32.mrf.mxu0
    %v1996 = vpop.f32.mrf.mxu0
    %1997 = vdwg.mxu0
    %1998 = vmatprep.subr.bf16.mxu0 0
    %1999 = vmatpush1.bf16.msra.mxu0 %v1932
    %2000 = vmatprep.subr.bf16.mxu0 0
    %2001 = vmatpush1.bf16.msra.mxu0 %v1929
    %2002 = vmatprep.subr.bf16.mxu0 0
    %2003 = vmatpush1.bf16.msra.mxu0 %v1926
    %2004 = vmatprep.subr.bf16.mxu0 0
    %2005 = vmatpush1.bf16.msra.mxu0 %v1923
    %2006 = vmatprep.subr.bf16.mxu0 0
    %2007 = vmatpush1.bf16.msra.mxu0 %v1920
    %2008 = vmatprep.subr.bf16.mxu0 0
    %2009 = vmatpush1.bf16.msra.mxu0 %v1917
    %2010 = vmatprep.subr.bf16.mxu0 0
    %2011 = vmatpush1.bf16.msra.mxu0 %v1914
    %2012 = vmatprep.subr.bf16.mxu0 0
    %2013 = vmatpush1.bf16.msra.mxu0 %v1911
    %2014 = vmatprep.subr.bf16.mxu0 0
    %2015 = vmatpush2.bf16.msra.mxu0 0
    %2016 = vmatprep.subr.bf16.mxu0 0
    %2017 = vmatpush2.bf16.msra.mxu0 0
    %2018 = vmatprep.subr.bf16.mxu0 0
    %2019 = vmatpush2.bf16.msra.mxu0 0
    %2020 = vmatprep.subr.bf16.mxu0 0
    %2021 = vmatpush2.bf16.msra.mxu0 0
    %2022 = vmatprep.subr.bf16.mxu0 0
    %2023 = vmatpush2.bf16.msra.mxu0 0
    %2024 = vmatprep.subr.bf16.mxu0 0
    %2025 = vmatpush2.bf16.msra.mxu0 0
    %2026 = vmatprep.subr.bf16.mxu0 0
    %2027 = vmatpush2.bf16.msra.mxu0 0
    %2028 = vmatprep.subr.bf16.mxu0 0
    %2029 = vmatpush2.bf16.msra.mxu0 0
    %2030 = vmatprep.mubr.bf16.mxu0 0
    %2031 = vmatmul.mubr.bf16.gmra.mxu0 %v1828
    %v2032 = vpop.f32.mrf.mxu0
    %v2033 = vadd.f32 %v1308, %v2032
    %v2034 = vpop.f32.mrf.mxu0
    %v2035 = vpop.f32.mrf.mxu0
    %v2036 = vpop.f32.mrf.mxu0
    %2037 = vdwg.mxu0
    %v2038 = vadd.f32 %v1782, %v1992
    %v2039 = vxor.u32 %v2038, 2147483648
    %v2040 = vmul.f32 %v2039, 1.442695
    %v2041 = vpow.pop %v2040
    %v2042 = vadd.f32 %v2041, 1.0
    %v2043 = vrcp.pop %v2042
    %v2044 = vmul.f32 1.0, %v2043
    %v2045 = vadd.f32 %v1784, %v1994
    %v2046 = vxor.u32 %v2045, 2147483648
    %v2047 = vmul.f32 %v2046, 1.442695
    %v2048 = vpow.pop %v2047
    %v2049 = vadd.f32 %v2048, 1.0
    %v2050 = vrcp.pop %v2049
    %v2051 = vmul.f32 1.0, %v2050
    %v2052 = vmul.f32 %v2044, %v2033
    %v2053 = vadd.f32 %v1823, %v2052
    %v2054 = vtanh.pop %v2053
    %v2055 = vsub.f32 1.0, %v2051
    %v2056 = vmul.f32 %v2055, %v2054
    %v2057 = vmul.f32 %v2051, %v1617
    %v2058 = vadd.f32 %v2056, %v2057
    %s2059 = scalar_lea.vmem %s0, 8
    %v2060 = vld [vmem:[%s2059] sm:$0xff]
    %s2061 = scalar_lea.vmem %s0, 136
    %v2062 = vld [vmem:[%s2061] sm:$0xff]
    %s2063 = scalar_lea.vmem [#allocation4], 8
    %v2064 = vld [vmem:[%s2063] sm:$0xff]
    %s2065 = scalar_lea.vmem [#allocation5], 8
    %v2066 = vld [vmem:[%s2065] sm:$0xff]
    %s2067 = scalar_lea.vmem [#allocation6], 24
    %v2068 = vld [vmem:[%s2067] sm:$0xff]
    %v2069 = vld [vmem:[%s2067 + $0x8] sm:$0xff]
    %v2070 = vld [vmem:[%s2067 + $0x10] sm:$0xff]
    %s2071 = scalar_lea.vmem [#allocation7], 8
    %v2072 = vld [vmem:[%s2071] sm:$0xff]
    %s2073 = scalar_lea.vmem [#allocation8], 8
    %v2074 = vld [vmem:[%s2073] sm:$0xff]
    %v2075 = vmul.f32 %v2062, %v2060
    %v2076 = vsub.f32 1.0, %v2062
    %v2077 = vpack.c.bf16 %v2058, %v2058
    %2078 = vmatprep.subr.bf16.mxu0 0
    %2079 = vmatpush1.bf16.msra.mxu0 %v1365
    %2080 = vmatprep.subr.bf16.mxu0 0
    %2081 = vmatpush1.bf16.msra.mxu0 %v1364
    %2082 = vmatprep.subr.bf16.mxu0 0
    %2083 = vmatpush1.bf16.msra.mxu0 %v1363
    %2084 = vmatprep.subr.bf16.mxu0 0
    %2085 = vmatpush1.bf16.msra.mxu0 %v1362
    %2086 = vmatprep.subr.bf16.mxu0 0
    %2087 = vmatpush1.bf16.msra.mxu0 %v1361
    %2088 = vmatprep.subr.bf16.mxu0 0
    %2089 = vmatpush1.bf16.msra.mxu0 %v1360
    %2090 = vmatprep.subr.bf16.mxu0 0
    %2091 = vmatpush1.bf16.msra.mxu0 %v1359
    %2092 = vmatprep.subr.bf16.mxu0 0
    %2093 = vmatpush1.bf16.msra.mxu0 %v1358
    %2094 = vmatprep.subr.bf16.mxu0 0
    %2095 = vmatpush2.bf16.msra.mxu0 0
    %2096 = vmatprep.subr.bf16.mxu0 0
    %2097 = vmatpush2.bf16.msra.mxu0 0
    %2098 = vmatprep.subr.bf16.mxu0 0
    %2099 = vmatpush2.bf16.msra.mxu0 0
    %2100 = vmatprep.subr.bf16.mxu0 0
    %2101 = vmatpush2.bf16.msra.mxu0 0
    %2102 = vmatprep.subr.bf16.mxu0 0
    %2103 = vmatpush2.bf16.msra.mxu0 0
    %2104 = vmatprep.subr.bf16.mxu0 0
    %2105 = vmatpush2.bf16.msra.mxu0 0
    %2106 = vmatprep.subr.bf16.mxu0 0
    %2107 = vmatpush2.bf16.msra.mxu0 0
    %2108 = vmatprep.subr.bf16.mxu0 0
    %2109 = vmatpush2.bf16.msra.mxu0 0
    %2110 = vmatprep.mubr.bf16.mxu0 0
    %2111 = vmatmul.mubr.bf16.gmra.mxu0 %v2077
    %v2112 = vpop.f32.mrf.mxu0
    %v2113 = vadd.f32 %v1286, %v2112
    %v2114 = vpop.f32.mrf.mxu0
    %v2115 = vpop.f32.mrf.mxu0
    %v2116 = vpop.f32.mrf.mxu0
    %2117 = vdwg.mxu0
    %v2118 = vmul.f32 %v2076, %v2113
    %v2119 = vadd.f32 %v2075, %v2118
    %v2120 = vpack.c.bf16 %v2119, %v2119
    %2121 = vmatprep.subr.bf16.mxu0 0
    %2122 = vmatpush1.bf16.msra.mxu0 %v1456
    %2123 = vmatprep.subr.bf16.mxu0 0
    %2124 = vmatpush1.bf16.msra.mxu0 %v1455
    %2125 = vmatprep.subr.bf16.mxu0 0
    %2126 = vmatpush1.bf16.msra.mxu0 %v1454
    %2127 = vmatprep.subr.bf16.mxu0 0
    %2128 = vmatpush1.bf16.msra.mxu0 %v1453
    %2129 = vmatprep.subr.bf16.mxu0 0
    %2130 = vmatpush1.bf16.msra.mxu0 %v1452
    %2131 = vmatprep.subr.bf16.mxu0 0
    %2132 = vmatpush1.bf16.msra.mxu0 %v1451
    %2133 = vmatprep.subr.bf16.mxu0 0
    %2134 = vmatpush1.bf16.msra.mxu0 %v1450
    %2135 = vmatprep.subr.bf16.mxu0 0
    %2136 = vmatpush1.bf16.msra.mxu0 %v1449
    %2137 = vmatprep.subr.bf16.mxu0 0
    %2138 = vmatpush2.bf16.msra.mxu0 0
    %2139 = vmatprep.subr.bf16.mxu0 0
    %2140 = vmatpush2.bf16.msra.mxu0 0
    %2141 = vmatprep.subr.bf16.mxu0 0
    %2142 = vmatpush2.bf16.msra.mxu0 0
    %2143 = vmatprep.subr.bf16.mxu0 0
    %2144 = vmatpush2.bf16.msra.mxu0 0
    %2145 = vmatprep.subr.bf16.mxu0 0
    %2146 = vmatpush2.bf16.msra.mxu0 0
    %2147 = vmatprep.subr.bf16.mxu0 0
    %2148 = vmatpush2.bf16.msra.mxu0 0
    %2149 = vmatprep.subr.bf16.mxu0 0
    %2150 = vmatpush2.bf16.msra.mxu0 0
    %2151 = vmatprep.subr.bf16.mxu0 0
    %2152 = vmatpush2.bf16.msra.mxu0 0
    %2153 = vmatprep.mubr.bf16.mxu0 0
    %2154 = vmatmul.mubr.bf16.gmra.mxu0 %v2120
    %v2155 = vpop.f32.mrf.mxu0
    %v2156 = vadd.f32 %v2072, %v2155
    %v2157 = vpop.f32.mrf.mxu0
    %v2158 = vpop.f32.mrf.mxu0
    %v2159 = vpop.f32.mrf.mxu0
    %2160 = vdwg.mxu0
    %v2161 = vmul.f32 %v2076, %v2156
    %v2162 = vadd.f32 %v2075, %v2161
    %v2163 = vpack.c.bf16 %v2162, %v2162
    %2164 = vmatprep.subr.bf16.mxu0 0
    %2165 = vmatpush1.bf16.msra.mxu0 %v1547
    %2166 = vmatprep.subr.bf16.mxu0 0
    %2167 = vmatpush1.bf16.msra.mxu0 %v1546
    %2168 = vmatprep.subr.bf16.mxu0 0
    %2169 = vmatpush1.bf16.msra.mxu0 %v1545
    %2170 = vmatprep.subr.bf16.mxu0 0
    %2171 = vmatpush1.bf16.msra.mxu0 %v1544
    %2172 = vmatprep.subr.bf16.mxu0 0
    %2173 = vmatpush1.bf16.msra.mxu0 %v1543
    %2174 = vmatprep.subr.bf16.mxu0 0
    %2175 = vmatpush1.bf16.msra.mxu0 %v1542
    %2176 = vmatprep.subr.bf16.mxu0 0
    %2177 = vmatpush1.bf16.msra.mxu0 %v1541
    %2178 = vmatprep.subr.bf16.mxu0 0
    %2179 = vmatpush1.bf16.msra.mxu0 %v1540
    %2180 = vmatprep.subr.bf16.mxu0 0
    %2181 = vmatpush2.bf16.msra.mxu0 0
    %2182 = vmatprep.subr.bf16.mxu0 0
    %2183 = vmatpush2.bf16.msra.mxu0 0
    %2184 = vmatprep.subr.bf16.mxu0 0
    %2185 = vmatpush2.bf16.msra.mxu0 0
    %2186 = vmatprep.subr.bf16.mxu0 0
    %2187 = vmatpush2.bf16.msra.mxu0 0
    %2188 = vmatprep.subr.bf16.mxu0 0
    %2189 = vmatpush2.bf16.msra.mxu0 0
    %2190 = vmatprep.subr.bf16.mxu0 0
    %2191 = vmatpush2.bf16.msra.mxu0 0
    %2192 = vmatprep.subr.bf16.mxu0 0
    %2193 = vmatpush2.bf16.msra.mxu0 0
    %2194 = vmatprep.subr.bf16.mxu0 0
    %2195 = vmatpush2.bf16.msra.mxu0 0
    %2196 = vmatprep.mubr.bf16.mxu0 0
    %2197 = vmatmul.mubr.bf16.gmra.mxu0 %v2163
    %v2198 = vpop.f32.mrf.mxu0
    %v2199 = vadd.f32 %v1293, %v2198
    %v2200 = vpop.f32.mrf.mxu0
    %v2201 = vpop.f32.mrf.mxu0
    %v2202 = vpop.f32.mrf.mxu0
    %2203 = vdwg.mxu0
    %v2204 = vmul.f32 %v2066, %v2199
    %v2205 = vsub.f32 1.0, %v2066
    %v2206 = vmul.f32 %v2205, %v2113
    %v2207 = vadd.f32 %v2204, %v2206
    %v2208 = vmul.f32 %v2076, %v2207
    %v2209 = vadd.f32 %v2075, %v2208
    %v2210 = vsub.f32 %v2060, %v2113
    %v2211 = vand.u32 2147483647, %v2210
    %v2212 = vsub.f32 %v2060, %v2156
    %v2213 = vand.u32 2147483647, %v2212
    %v2214 = vadd.f32 %v2211, %v2213
    %v2215 = vsub.f32 %v2060, %v2199
    %v2216 = vand.u32 2147483647, %v2215
    %v2217 = vadd.f32 %v2214, %v2216
    %v2218 = vsub.f32 %v2060, %v2207
    %v2219 = vand.u32 2147483647, %v2218
    %v2220 = vadd.f32 %v2217, %v2219
    %v2221 = vmul.f32 %v2220, %v2074
    %v2222 = vadd.f32 %v1614, %v2221
    %s2223 = scalar_lea.vmem %s16, 8
    %2224 = vst [vmem:[%s2223] sm:$0xff] %v2207
    %s2225 = scalar_lea.vmem %s17, 8
    %2226 = vst [vmem:[%s2225] sm:$0xff] %v2209
    %v2227 = vmul.f32 %v2058, %v2064
    %v2228 = vpack.c.bf16 %v2209, %v2209
    %2229 = vmatprep.subr.bf16.mxu0 %v1721
    %2230 = vmatpush1.bf16.msra.mxu0 %v1720
    %2231 = vmatprep.subr.bf16.mxu0 %v1718
    %2232 = vmatpush1.bf16.msra.mxu0 %v1717
    %2233 = vmatprep.subr.bf16.mxu0 %v1715
    %2234 = vmatpush1.bf16.msra.mxu0 %v1714
    %2235 = vmatprep.subr.bf16.mxu0 %v1712
    %2236 = vmatpush1.bf16.msra.mxu0 %v1711
    %2237 = vmatprep.subr.bf16.mxu0 %v1709
    %2238 = vmatpush1.bf16.msra.mxu0 %v1708
    %2239 = vmatprep.subr.bf16.mxu0 %v1706
    %2240 = vmatpush1.bf16.msra.mxu0 %v1705
    %2241 = vmatprep.subr.bf16.mxu0 %v1703
    %2242 = vmatpush1.bf16.msra.mxu0 %v1702
    %2243 = vmatprep.subr.bf16.mxu0 %v1700
    %2244 = vmatpush1.bf16.msra.mxu0 %v1699
    %2245 = vmatprep.subr.bf16.mxu0 0
    %2246 = vmatpush2.bf16.msra.mxu0 0
    %2247 = vmatprep.subr.bf16.mxu0 0
    %2248 = vmatpush2.bf16.msra.mxu0 0
    %2249 = vmatprep.subr.bf16.mxu0 0
    %2250 = vmatpush2.bf16.msra.mxu0 0
    %2251 = vmatprep.subr.bf16.mxu0 0
    %2252 = vmatpush2.bf16.msra.mxu0 0
    %2253 = vmatprep.subr.bf16.mxu0 0
    %2254 = vmatpush2.bf16.msra.mxu0 0
    %2255 = vmatprep.subr.bf16.mxu0 0
    %2256 = vmatpush2.bf16.msra.mxu0 0
    %2257 = vmatprep.subr.bf16.mxu0 0
    %2258 = vmatpush2.bf16.msra.mxu0 0
    %2259 = vmatprep.subr.bf16.mxu0 0
    %2260 = vmatpush2.bf16.msra.mxu0 0
    %2261 = vmatprep.mubr.bf16.mxu0 0
    %2262 = vmatmul.mubr.bf16.gmra.mxu0 %v2228
    %v2263 = vpop.f32.mrf.mxu0
    %v2264 = vadd.f32 %v2068, %v2263
    %v2265 = vpop.f32.mrf.mxu0
    %v2266 = vadd.f32 %v2069, %v2265
    %v2267 = vpop.f32.mrf.mxu0
    %v2268 = vpop.f32.mrf.mxu0
    %2269 = vdwg.mxu0
    %2270 = vmatprep.subr.bf16.mxu0 0
    %2271 = vmatpush1.bf16.msra.mxu0 %v1722
    %2272 = vmatprep.subr.bf16.mxu0 0
    %2273 = vmatpush1.bf16.msra.mxu0 %v1719
    %2274 = vmatprep.subr.bf16.mxu0 0
    %2275 = vmatpush1.bf16.msra.mxu0 %v1716
    %2276 = vmatprep.subr.bf16.mxu0 0
    %2277 = vmatpush1.bf16.msra.mxu0 %v1713
    %2278 = vmatprep.subr.bf16.mxu0 0
    %2279 = vmatpush1.bf16.msra.mxu0 %v1710
    %2280 = vmatprep.subr.bf16.mxu0 0
    %2281 = vmatpush1.bf16.msra.mxu0 %v1707
    %2282 = vmatprep.subr.bf16.mxu0 0
    %2283 = vmatpush1.bf16.msra.mxu0 %v1704
    %2284 = vmatprep.subr.bf16.mxu0 0
    %2285 = vmatpush1.bf16.msra.mxu0 %v1701
    %2286 = vmatprep.subr.bf16.mxu0 0
    %2287 = vmatpush2.bf16.msra.mxu0 0
    %2288 = vmatprep.subr.bf16.mxu0 0
    %2289 = vmatpush2.bf16.msra.mxu0 0
    %2290 = vmatprep.subr.bf16.mxu0 0
    %2291 = vmatpush2.bf16.msra.mxu0 0
    %2292 = vmatprep.subr.bf16.mxu0 0
    %2293 = vmatpush2.bf16.msra.mxu0 0
    %2294 = vmatprep.subr.bf16.mxu0 0
    %2295 = vmatpush2.bf16.msra.mxu0 0
    %2296 = vmatprep.subr.bf16.mxu0 0
    %2297 = vmatpush2.bf16.msra.mxu0 0
    %2298 = vmatprep.subr.bf16.mxu0 0
    %2299 = vmatpush2.bf16.msra.mxu0 0
    %2300 = vmatprep.subr.bf16.mxu0 0
    %2301 = vmatpush2.bf16.msra.mxu0 0
    %2302 = vmatprep.mubr.bf16.mxu0 0
    %2303 = vmatmul.mubr.bf16.gmra.mxu0 %v2228
    %v2304 = vpop.f32.mrf.mxu0
    %v2305 = vadd.f32 %v2070, %v2304
    %v2306 = vpop.f32.mrf.mxu0
    %v2307 = vpop.f32.mrf.mxu0
    %v2308 = vpop.f32.mrf.mxu0
    %2309 = vdwg.mxu0
    %v2310 = vpack.c.bf16 %v2227, %v2227
    %2311 = vmatprep.subr.bf16.mxu0 %v1931
    %2312 = vmatpush1.bf16.msra.mxu0 %v1930
    %2313 = vmatprep.subr.bf16.mxu0 %v1928
    %2314 = vmatpush1.bf16.msra.mxu0 %v1927
    %2315 = vmatprep.subr.bf16.mxu0 %v1925
    %2316 = vmatpush1.bf16.msra.mxu0 %v1924
    %2317 = vmatprep.subr.bf16.mxu0 %v1922
    %2318 = vmatpush1.bf16.msra.mxu0 %v1921
    %2319 = vmatprep.subr.bf16.mxu0 %v1919
    %2320 = vmatpush1.bf16.msra.mxu0 %v1918
    %2321 = vmatprep.subr.bf16.mxu0 %v1916
    %2322 = vmatpush1.bf16.msra.mxu0 %v1915
    %2323 = vmatprep.subr.bf16.mxu0 %v1913
    %2324 = vmatpush1.bf16.msra.mxu0 %v1912
    %2325 = vmatprep.subr.bf16.mxu0 %v1910
    %2326 = vmatpush1.bf16.msra.mxu0 %v1909
    %2327 = vmatprep.subr.bf16.mxu0 0
    %2328 = vmatpush2.bf16.msra.mxu0 0
    %2329 = vmatprep.subr.bf16.mxu0 0
    %2330 = vmatpush2.bf16.msra.mxu0 0
    %2331 = vmatprep.subr.bf16.mxu0 0
    %2332 = vmatpush2.bf16.msra.mxu0 0
    %2333 = vmatprep.subr.bf16.mxu0 0
    %2334 = vmatpush2.bf16.msra.mxu0 0
    %2335 = vmatprep.subr.bf16.mxu0 0
    %2336 = vmatpush2.bf16.msra.mxu0 0
    %2337 = vmatprep.subr.bf16.mxu0 0
    %2338 = vmatpush2.bf16.msra.mxu0 0
    %2339 = vmatprep.subr.bf16.mxu0 0
    %2340 = vmatpush2.bf16.msra.mxu0 0
    %2341 = vmatprep.subr.bf16.mxu0 0
    %2342 = vmatpush2.bf16.msra.mxu0 0
    %2343 = vmatprep.mubr.bf16.mxu0 0
    %2344 = vmatmul.mubr.bf16.gmra.mxu0 %v2310
    %v2345 = vpop.f32.mrf.mxu0
    %v2346 = vadd.f32 %v1300, %v2345
    %v2347 = vpop.f32.mrf.mxu0
    %v2348 = vadd.f32 %v1304, %v2347
    %v2349 = vpop.f32.mrf.mxu0
    %v2350 = vpop.f32.mrf.mxu0
    %2351 = vdwg.mxu0
    %2352 = vmatprep.subr.bf16.mxu0 0
    %2353 = vmatpush1.bf16.msra.mxu0 %v1932
    %2354 = vmatprep.subr.bf16.mxu0 0
    %2355 = vmatpush1.bf16.msra.mxu0 %v1929
    %2356 = vmatprep.subr.bf16.mxu0 0
    %2357 = vmatpush1.bf16.msra.mxu0 %v1926
    %2358 = vmatprep.subr.bf16.mxu0 0
    %2359 = vmatpush1.bf16.msra.mxu0 %v1923
    %2360 = vmatprep.subr.bf16.mxu0 0
    %2361 = vmatpush1.bf16.msra.mxu0 %v1920
    %2362 = vmatprep.subr.bf16.mxu0 0
    %2363 = vmatpush1.bf16.msra.mxu0 %v1917
    %2364 = vmatprep.subr.bf16.mxu0 0
    %2365 = vmatpush1.bf16.msra.mxu0 %v1914
    %2366 = vmatprep.subr.bf16.mxu0 0
    %2367 = vmatpush1.bf16.msra.mxu0 %v1911
    %2368 = vmatprep.subr.bf16.mxu0 0
    %2369 = vmatpush2.bf16.msra.mxu0 0
    %2370 = vmatprep.subr.bf16.mxu0 0
    %2371 = vmatpush2.bf16.msra.mxu0 0
    %2372 = vmatprep.subr.bf16.mxu0 0
    %2373 = vmatpush2.bf16.msra.mxu0 0
    %2374 = vmatprep.subr.bf16.mxu0 0
    %2375 = vmatpush2.bf16.msra.mxu0 0
    %2376 = vmatprep.subr.bf16.mxu0 0
    %2377 = vmatpush2.bf16.msra.mxu0 0
    %2378 = vmatprep.subr.bf16.mxu0 0
    %2379 = vmatpush2.bf16.msra.mxu0 0
    %2380 = vmatprep.subr.bf16.mxu0 0
    %2381 = vmatpush2.bf16.msra.mxu0 0
    %2382 = vmatprep.subr.bf16.mxu0 0
    %2383 = vmatpush2.bf16.msra.mxu0 0
    %2384 = vmatprep.mubr.bf16.mxu0 0
    %2385 = vmatmul.mubr.bf16.gmra.mxu0 %v2310
    %v2386 = vpop.f32.mrf.mxu0
    %v2387 = vadd.f32 %v1308, %v2386
    %v2388 = vpop.f32.mrf.mxu0
    %v2389 = vpop.f32.mrf.mxu0
    %v2390 = vpop.f32.mrf.mxu0
    %2391 = vdwg.mxu0
    %v2392 = vadd.f32 %v2264, %v2346
    %v2393 = vxor.u32 %v2392, 2147483648
    %v2394 = vmul.f32 %v2393, 1.442695
    %v2395 = vpow.pop %v2394
    %v2396 = vadd.f32 %v2395, 1.0
    %v2397 = vrcp.pop %v2396
    %v2398 = vmul.f32 1.0, %v2397
    %v2399 = vadd.f32 %v2266, %v2348
    %v2400 = vxor.u32 %v2399, 2147483648
    %v2401 = vmul.f32 %v2400, 1.442695
    %v2402 = vpow.pop %v2401
    %v2403 = vadd.f32 %v2402, 1.0
    %v2404 = vrcp.pop %v2403
    %v2405 = vmul.f32 1.0, %v2404
    %v2406 = vmul.f32 %v2398, %v2387
    %v2407 = vadd.f32 %v2305, %v2406
    %v2408 = vtanh.pop %v2407
    %v2409 = vsub.f32 1.0, %v2405
    %v2410 = vmul.f32 %v2409, %v2408
    %v2411 = vmul.f32 %v2405, %v2227
    %v2412 = vadd.f32 %v2410, %v2411
    %s2413 = scalar_lea.vmem %s0, 16
    %v2414 = vld [vmem:[%s2413] sm:$0xff]
    %s2415 = scalar_lea.vmem %s0, 144
    %v2416 = vld [vmem:[%s2415] sm:$0xff]
    %s2417 = scalar_lea.vmem [#allocation4], 16
    %v2418 = vld [vmem:[%s2417] sm:$0xff]
    %s2419 = scalar_lea.vmem [#allocation5], 16
    %v2420 = vld [vmem:[%s2419] sm:$0xff]
    %s2421 = scalar_lea.vmem [#allocation6], 48
    %v2422 = vld [vmem:[%s2421] sm:$0xff]
    %v2423 = vld [vmem:[%s2421 + $0x8] sm:$0xff]
    %v2424 = vld [vmem:[%s2421 + $0x10] sm:$0xff]
    %s2425 = scalar_lea.vmem [#allocation7], 16
    %v2426 = vld [vmem:[%s2425] sm:$0xff]
    %s2427 = scalar_lea.vmem [#allocation8], 16
    %v2428 = vld [vmem:[%s2427] sm:$0xff]
    %v2429 = vmul.f32 %v2416, %v2414
    %v2430 = vsub.f32 1.0, %v2416
    %v2431 = vpack.c.bf16 %v2412, %v2412
    %2432 = vmatprep.subr.bf16.mxu0 0
    %2433 = vmatpush1.bf16.msra.mxu0 %v1365
    %2434 = vmatprep.subr.bf16.mxu0 0
    %2435 = vmatpush1.bf16.msra.mxu0 %v1364
    %2436 = vmatprep.subr.bf16.mxu0 0
    %2437 = vmatpush1.bf16.msra.mxu0 %v1363
    %2438 = vmatprep.subr.bf16.mxu0 0
    %2439 = vmatpush1.bf16.msra.mxu0 %v1362
    %2440 = vmatprep.subr.bf16.mxu0 0
    %2441 = vmatpush1.bf16.msra.mxu0 %v1361
    %2442 = vmatprep.subr.bf16.mxu0 0
    %2443 = vmatpush1.bf16.msra.mxu0 %v1360
    %2444 = vmatprep.subr.bf16.mxu0 0
    %2445 = vmatpush1.bf16.msra.mxu0 %v1359
    %2446 = vmatprep.subr.bf16.mxu0 0
    %2447 = vmatpush1.bf16.msra.mxu0 %v1358
    %2448 = vmatprep.subr.bf16.mxu0 0
    %2449 = vmatpush2.bf16.msra.mxu0 0
    %2450 = vmatprep.subr.bf16.mxu0 0
    %2451 = vmatpush2.bf16.msra.mxu0 0
    %2452 = vmatprep.subr.bf16.mxu0 0
    %2453 = vmatpush2.bf16.msra.mxu0 0
    %2454 = vmatprep.subr.bf16.mxu0 0
    %2455 = vmatpush2.bf16.msra.mxu0 0
    %2456 = vmatprep.subr.bf16.mxu0 0
    %2457 = vmatpush2.bf16.msra.mxu0 0
    %2458 = vmatprep.subr.bf16.mxu0 0
    %2459 = vmatpush2.bf16.msra.mxu0 0
    %2460 = vmatprep.subr.bf16.mxu0 0
    %2461 = vmatpush2.bf16.msra.mxu0 0
    %2462 = vmatprep.subr.bf16.mxu0 0
    %2463 = vmatpush2.bf16.msra.mxu0 0
    %2464 = vmatprep.mubr.bf16.mxu0 0
    %2465 = vmatmul.mubr.bf16.gmra.mxu0 %v2431
    %v2466 = vpop.f32.mrf.mxu0
    %v2467 = vadd.f32 %v1286, %v2466
    %v2468 = vpop.f32.mrf.mxu0
    %v2469 = vpop.f32.mrf.mxu0
    %v2470 = vpop.f32.mrf.mxu0
    %2471 = vdwg.mxu0
    %v2472 = vmul.f32 %v2430, %v2467
    %v2473 = vadd.f32 %v2429, %v2472
    %v2474 = vpack.c.bf16 %v2473, %v2473
    %2475 = vmatprep.subr.bf16.mxu0 0
    %2476 = vmatpush1.bf16.msra.mxu0 %v1456
    %2477 = vmatprep.subr.bf16.mxu0 0
    %2478 = vmatpush1.bf16.msra.mxu0 %v1455
    %2479 = vmatprep.subr.bf16.mxu0 0
    %2480 = vmatpush1.bf16.msra.mxu0 %v1454
    %2481 = vmatprep.subr.bf16.mxu0 0
    %2482 = vmatpush1.bf16.msra.mxu0 %v1453
    %2483 = vmatprep.subr.bf16.mxu0 0
    %2484 = vmatpush1.bf16.msra.mxu0 %v1452
    %2485 = vmatprep.subr.bf16.mxu0 0
    %2486 = vmatpush1.bf16.msra.mxu0 %v1451
    %2487 = vmatprep.subr.bf16.mxu0 0
    %2488 = vmatpush1.bf16.msra.mxu0 %v1450
    %2489 = vmatprep.subr.bf16.mxu0 0
    %2490 = vmatpush1.bf16.msra.mxu0 %v1449
    %2491 = vmatprep.subr.bf16.mxu0 0
    %2492 = vmatpush2.bf16.msra.mxu0 0
    %2493 = vmatprep.subr.bf16.mxu0 0
    %2494 = vmatpush2.bf16.msra.mxu0 0
    %2495 = vmatprep.subr.bf16.mxu0 0
    %2496 = vmatpush2.bf16.msra.mxu0 0
    %2497 = vmatprep.subr.bf16.mxu0 0
    %2498 = vmatpush2.bf16.msra.mxu0 0
    %2499 = vmatprep.subr.bf16.mxu0 0
    %2500 = vmatpush2.bf16.msra.mxu0 0
    %2501 = vmatprep.subr.bf16.mxu0 0
    %2502 = vmatpush2.bf16.msra.mxu0 0
    %2503 = vmatprep.subr.bf16.mxu0 0
    %2504 = vmatpush2.bf16.msra.mxu0 0
    %2505 = vmatprep.subr.bf16.mxu0 0
    %2506 = vmatpush2.bf16.msra.mxu0 0
    %2507 = vmatprep.mubr.bf16.mxu0 0
    %2508 = vmatmul.mubr.bf16.gmra.mxu0 %v2474
    %v2509 = vpop.f32.mrf.mxu0
    %v2510 = vadd.f32 %v2426, %v2509
    %v2511 = vpop.f32.mrf.mxu0
    %v2512 = vpop.f32.mrf.mxu0
    %v2513 = vpop.f32.mrf.mxu0
    %2514 = vdwg.mxu0
    %v2515 = vmul.f32 %v2430, %v2510
    %v2516 = vadd.f32 %v2429, %v2515
    %v2517 = vpack.c.bf16 %v2516, %v2516
    %2518 = vmatprep.subr.bf16.mxu0 0
    %2519 = vmatpush1.bf16.msra.mxu0 %v1547
    %2520 = vmatprep.subr.bf16.mxu0 0
    %2521 = vmatpush1.bf16.msra.mxu0 %v1546
    %2522 = vmatprep.subr.bf16.mxu0 0
    %2523 = vmatpush1.bf16.msra.mxu0 %v1545
    %2524 = vmatprep.subr.bf16.mxu0 0
    %2525 = vmatpush1.bf16.msra.mxu0 %v1544
    %2526 = vmatprep.subr.bf16.mxu0 0
    %2527 = vmatpush1.bf16.msra.mxu0 %v1543
    %2528 = vmatprep.subr.bf16.mxu0 0
    %2529 = vmatpush1.bf16.msra.mxu0 %v1542
    %2530 = vmatprep.subr.bf16.mxu0 0
    %2531 = vmatpush1.bf16.msra.mxu0 %v1541
    %2532 = vmatprep.subr.bf16.mxu0 0
    %2533 = vmatpush1.bf16.msra.mxu0 %v1540
    %2534 = vmatprep.subr.bf16.mxu0 0
    %2535 = vmatpush2.bf16.msra.mxu0 0
    %2536 = vmatprep.subr.bf16.mxu0 0
    %2537 = vmatpush2.bf16.msra.mxu0 0
    %2538 = vmatprep.subr.bf16.mxu0 0
    %2539 = vmatpush2.bf16.msra.mxu0 0
    %2540 = vmatprep.subr.bf16.mxu0 0
    %2541 = vmatpush2.bf16.msra.mxu0 0
    %2542 = vmatprep.subr.bf16.mxu0 0
    %2543 = vmatpush2.bf16.msra.mxu0 0
    %2544 = vmatprep.subr.bf16.mxu0 0
    %2545 = vmatpush2.bf16.msra.mxu0 0
    %2546 = vmatprep.subr.bf16.mxu0 0
    %2547 = vmatpush2.bf16.msra.mxu0 0
    %2548 = vmatprep.subr.bf16.mxu0 0
    %2549 = vmatpush2.bf16.msra.mxu0 0
    %2550 = vmatprep.mubr.bf16.mxu0 0
    %2551 = vmatmul.mubr.bf16.gmra.mxu0 %v2517
    %v2552 = vpop.f32.mrf.mxu0
    %v2553 = vadd.f32 %v1293, %v2552
    %v2554 = vpop.f32.mrf.mxu0
    %v2555 = vpop.f32.mrf.mxu0
    %v2556 = vpop.f32.mrf.mxu0
    %2557 = vdwg.mxu0
    %v2558 = vmul.f32 %v2420, %v2553
    %v2559 = vsub.f32 1.0, %v2420
    %v2560 = vmul.f32 %v2559, %v2467
    %v2561 = vadd.f32 %v2558, %v2560
    %v2562 = vmul.f32 %v2430, %v2561
    %v2563 = vadd.f32 %v2429, %v2562
    %v2564 = vsub.f32 %v2414, %v2467
    %v2565 = vand.u32 2147483647, %v2564
    %v2566 = vsub.f32 %v2414, %v2510
    %v2567 = vand.u32 2147483647, %v2566
    %v2568 = vadd.f32 %v2565, %v2567
    %v2569 = vsub.f32 %v2414, %v2553
    %v2570 = vand.u32 2147483647, %v2569
    %v2571 = vadd.f32 %v2568, %v2570
    %v2572 = vsub.f32 %v2414, %v2561
    %v2573 = vand.u32 2147483647, %v2572
    %v2574 = vadd.f32 %v2571, %v2573
    %v2575 = vmul.f32 %v2574, %v2428
    %v2576 = vadd.f32 %v2222, %v2575
    %s2577 = scalar_lea.vmem %s16, 16
    %2578 = vst [vmem:[%s2577] sm:$0xff] %v2561
    %s2579 = scalar_lea.vmem %s17, 16
    %2580 = vst [vmem:[%s2579] sm:$0xff] %v2563
    %v2581 = vmul.f32 %v2412, %v2418
    %v2582 = vpack.c.bf16 %v2563, %v2563
    %2583 = vmatprep.subr.bf16.mxu0 %v1721
    %2584 = vmatpush1.bf16.msra.mxu0 %v1720
    %2585 = vmatprep.subr.bf16.mxu0 %v1718
    %2586 = vmatpush1.bf16.msra.mxu0 %v1717
    %2587 = vmatprep.subr.bf16.mxu0 %v1715
    %2588 = vmatpush1.bf16.msra.mxu0 %v1714
    %2589 = vmatprep.subr.bf16.mxu0 %v1712
    %2590 = vmatpush1.bf16.msra.mxu0 %v1711
    %2591 = vmatprep.subr.bf16.mxu0 %v1709
    %2592 = vmatpush1.bf16.msra.mxu0 %v1708
    %2593 = vmatprep.subr.bf16.mxu0 %v1706
    %2594 = vmatpush1.bf16.msra.mxu0 %v1705
    %2595 = vmatprep.subr.bf16.mxu0 %v1703
    %2596 = vmatpush1.bf16.msra.mxu0 %v1702
    %2597 = vmatprep.subr.bf16.mxu0 %v1700
    %2598 = vmatpush1.bf16.msra.mxu0 %v1699
    %2599 = vmatprep.subr.bf16.mxu0 0
    %2600 = vmatpush2.bf16.msra.mxu0 0
    %2601 = vmatprep.subr.bf16.mxu0 0
    %2602 = vmatpush2.bf16.msra.mxu0 0
    %2603 = vmatprep.subr.bf16.mxu0 0
    %2604 = vmatpush2.bf16.msra.mxu0 0
    %2605 = vmatprep.subr.bf16.mxu0 0
    %2606 = vmatpush2.bf16.msra.mxu0 0
    %2607 = vmatprep.subr.bf16.mxu0 0
    %2608 = vmatpush2.bf16.msra.mxu0 0
    %2609 = vmatprep.subr.bf16.mxu0 0
    %2610 = vmatpush2.bf16.msra.mxu0 0
    %2611 = vmatprep.subr.bf16.mxu0 0
    %2612 = vmatpush2.bf16.msra.mxu0 0
    %2613 = vmatprep.subr.bf16.mxu0 0
    %2614 = vmatpush2.bf16.msra.mxu0 0
    %2615 = vmatprep.mubr.bf16.mxu0 0
    %2616 = vmatmul.mubr.bf16.gmra.mxu0 %v2582
    %v2617 = vpop.f32.mrf.mxu0
    %v2618 = vadd.f32 %v2422, %v2617
    %v2619 = vpop.f32.mrf.mxu0
    %v2620 = vadd.f32 %v2423, %v2619
    %v2621 = vpop.f32.mrf.mxu0
    %v2622 = vpop.f32.mrf.mxu0
    %2623 = vdwg.mxu0
    %2624 = vmatprep.subr.bf16.mxu0 0
    %2625 = vmatpush1.bf16.msra.mxu0 %v1722
    %2626 = vmatprep.subr.bf16.mxu0 0
    %2627 = vmatpush1.bf16.msra.mxu0 %v1719
    %2628 = vmatprep.subr.bf16.mxu0 0
    %2629 = vmatpush1.bf16.msra.mxu0 %v1716
    %2630 = vmatprep.subr.bf16.mxu0 0
    %2631 = vmatpush1.bf16.msra.mxu0 %v1713
    %2632 = vmatprep.subr.bf16.mxu0 0
    %2633 = vmatpush1.bf16.msra.mxu0 %v1710
    %2634 = vmatprep.subr.bf16.mxu0 0
    %2635 = vmatpush1.bf16.msra.mxu0 %v1707
    %2636 = vmatprep.subr.bf16.mxu0 0
    %2637 = vmatpush1.bf16.msra.mxu0 %v1704
    %2638 = vmatprep.subr.bf16.mxu0 0
    %2639 = vmatpush1.bf16.msra.mxu0 %v1701
    %2640 = vmatprep.subr.bf16.mxu0 0
    %2641 = vmatpush2.bf16.msra.mxu0 0
    %2642 = vmatprep.subr.bf16.mxu0 0
    %2643 = vmatpush2.bf16.msra.mxu0 0
    %2644 = vmatprep.subr.bf16.mxu0 0
    %2645 = vmatpush2.bf16.msra.mxu0 0
    %2646 = vmatprep.subr.bf16.mxu0 0
    %2647 = vmatpush2.bf16.msra.mxu0 0
    %2648 = vmatprep.subr.bf16.mxu0 0
    %2649 = vmatpush2.bf16.msra.mxu0 0
    %2650 = vmatprep.subr.bf16.mxu0 0
    %2651 = vmatpush2.bf16.msra.mxu0 0
    %2652 = vmatprep.subr.bf16.mxu0 0
    %2653 = vmatpush2.bf16.msra.mxu0 0
    %2654 = vmatprep.subr.bf16.mxu0 0
    %2655 = vmatpush2.bf16.msra.mxu0 0
    %2656 = vmatprep.mubr.bf16.mxu0 0
    %2657 = vmatmul.mubr.bf16.gmra.mxu0 %v2582
    %v2658 = vpop.f32.mrf.mxu0
    %v2659 = vadd.f32 %v2424, %v2658
    %v2660 = vpop.f32.mrf.mxu0
    %v2661 = vpop.f32.mrf.mxu0
    %v2662 = vpop.f32.mrf.mxu0
    %2663 = vdwg.mxu0
    %v2664 = vpack.c.bf16 %v2581, %v2581
    %2665 = vmatprep.subr.bf16.mxu0 %v1931
    %2666 = vmatpush1.bf16.msra.mxu0 %v1930
    %2667 = vmatprep.subr.bf16.mxu0 %v1928
    %2668 = vmatpush1.bf16.msra.mxu0 %v1927
    %2669 = vmatprep.subr.bf16.mxu0 %v1925
    %2670 = vmatpush1.bf16.msra.mxu0 %v1924
    %2671 = vmatprep.subr.bf16.mxu0 %v1922
    %2672 = vmatpush1.bf16.msra.mxu0 %v1921
    %2673 = vmatprep.subr.bf16.mxu0 %v1919
    %2674 = vmatpush1.bf16.msra.mxu0 %v1918
    %2675 = vmatprep.subr.bf16.mxu0 %v1916
    %2676 = vmatpush1.bf16.msra.mxu0 %v1915
    %2677 = vmatprep.subr.bf16.mxu0 %v1913
    %2678 = vmatpush1.bf16.msra.mxu0 %v1912
    %2679 = vmatprep.subr.bf16.mxu0 %v1910
    %2680 = vmatpush1.bf16.msra.mxu0 %v1909
    %2681 = vmatprep.subr.bf16.mxu0 0
    %2682 = vmatpush2.bf16.msra.mxu0 0
    %2683 = vmatprep.subr.bf16.mxu0 0
    %2684 = vmatpush2.bf16.msra.mxu0 0
    %2685 = vmatprep.subr.bf16.mxu0 0
    %2686 = vmatpush2.bf16.msra.mxu0 0
    %2687 = vmatprep.subr.bf16.mxu0 0
    %2688 = vmatpush2.bf16.msra.mxu0 0
    %2689 = vmatprep.subr.bf16.mxu0 0
    %2690 = vmatpush2.bf16.msra.mxu0 0
    %2691 = vmatprep.subr.bf16.mxu0 0
    %2692 = vmatpush2.bf16.msra.mxu0 0
    %2693 = vmatprep.subr.bf16.mxu0 0
    %2694 = vmatpush2.bf16.msra.mxu0 0
    %2695 = vmatprep.subr.bf16.mxu0 0
    %2696 = vmatpush2.bf16.msra.mxu0 0
    %2697 = vmatprep.mubr.bf16.mxu0 0
    %2698 = vmatmul.mubr.bf16.gmra.mxu0 %v2664
    %v2699 = vpop.f32.mrf.mxu0
    %v2700 = vadd.f32 %v1300, %v2699
    %v2701 = vpop.f32.mrf.mxu0
    %v2702 = vadd.f32 %v1304, %v2701
    %v2703 = vpop.f32.mrf.mxu0
    %v2704 = vpop.f32.mrf.mxu0
    %2705 = vdwg.mxu0
    %2706 = vmatprep.subr.bf16.mxu0 0
    %2707 = vmatpush1.bf16.msra.mxu0 %v1932
    %2708 = vmatprep.subr.bf16.mxu0 0
    %2709 = vmatpush1.bf16.msra.mxu0 %v1929
    %2710 = vmatprep.subr.bf16.mxu0 0
    %2711 = vmatpush1.bf16.msra.mxu0 %v1926
    %2712 = vmatprep.subr.bf16.mxu0 0
    %2713 = vmatpush1.bf16.msra.mxu0 %v1923
    %2714 = vmatprep.subr.bf16.mxu0 0
    %2715 = vmatpush1.bf16.msra.mxu0 %v1920
    %2716 = vmatprep.subr.bf16.mxu0 0
    %2717 = vmatpush1.bf16.msra.mxu0 %v1917
    %2718 = vmatprep.subr.bf16.mxu0 0
    %2719 = vmatpush1.bf16.msra.mxu0 %v1914
    %2720 = vmatprep.subr.bf16.mxu0 0
    %2721 = vmatpush1.bf16.msra.mxu0 %v1911
    %2722 = vmatprep.subr.bf16.mxu0 0
    %2723 = vmatpush2.bf16.msra.mxu0 0
    %2724 = vmatprep.subr.bf16.mxu0 0
    %2725 = vmatpush2.bf16.msra.mxu0 0
    %2726 = vmatprep.subr.bf16.mxu0 0
    %2727 = vmatpush2.bf16.msra.mxu0 0
    %2728 = vmatprep.subr.bf16.mxu0 0
    %2729 = vmatpush2.bf16.msra.mxu0 0
    %2730 = vmatprep.subr.bf16.mxu0 0
    %2731 = vmatpush2.bf16.msra.mxu0 0
    %2732 = vmatprep.subr.bf16.mxu0 0
    %2733 = vmatpush2.bf16.msra.mxu0 0
    %2734 = vmatprep.subr.bf16.mxu0 0
    %2735 = vmatpush2.bf16.msra.mxu0 0
    %2736 = vmatprep.subr.bf16.mxu0 0
    %2737 = vmatpush2.bf16.msra.mxu0 0
    %2738 = vmatprep.mubr.bf16.mxu0 0
    %2739 = vmatmul.mubr.bf16.gmra.mxu0 %v2664
    %v2740 = vpop.f32.mrf.mxu0
    %v2741 = vadd.f32 %v1308, %v2740
    %v2742 = vpop.f32.mrf.mxu0
    %v2743 = vpop.f32.mrf.mxu0
    %v2744 = vpop.f32.mrf.mxu0
    %2745 = vdwg.mxu0
    %v2746 = vadd.f32 %v2618, %v2700
    %v2747 = vxor.u32 %v2746, 2147483648
    %v2748 = vmul.f32 %v2747, 1.442695
    %v2749 = vpow.pop %v2748
    %v2750 = vadd.f32 %v2749, 1.0
    %v2751 = vrcp.pop %v2750
    %v2752 = vmul.f32 1.0, %v2751
    %v2753 = vadd.f32 %v2620, %v2702
    %v2754 = vxor.u32 %v2753, 2147483648
    %v2755 = vmul.f32 %v2754, 1.442695
    %v2756 = vpow.pop %v2755
    %v2757 = vadd.f32 %v2756, 1.0
    %v2758 = vrcp.pop %v2757
    %v2759 = vmul.f32 1.0, %v2758
    %v2760 = vmul.f32 %v2752, %v2741
    %v2761 = vadd.f32 %v2659, %v2760
    %v2762 = vtanh.pop %v2761
    %v2763 = vsub.f32 1.0, %v2759
    %v2764 = vmul.f32 %v2763, %v2762
    %v2765 = vmul.f32 %v2759, %v2581
    %v2766 = vadd.f32 %v2764, %v2765
    %s2767 = scalar_lea.vmem %s0, 24
    %v2768 = vld [vmem:[%s2767] sm:$0xff]
    %s2769 = scalar_lea.vmem %s0, 152
    %v2770 = vld [vmem:[%s2769] sm:$0xff]
    %s2771 = scalar_lea.vmem [#allocation4], 24
    %v2772 = vld [vmem:[%s2771] sm:$0xff]
    %s2773 = scalar_lea.vmem [#allocation5], 24
    %v2774 = vld [vmem:[%s2773] sm:$0xff]
    %s2775 = scalar_lea.vmem [#allocation6], 72
    %v2776 = vld [vmem:[%s2775] sm:$0xff]
    %v2777 = vld [vmem:[%s2775 + $0x8] sm:$0xff]
    %v2778 = vld [vmem:[%s2775 + $0x10] sm:$0xff]
    %s2779 = scalar_lea.vmem [#allocation7], 24
    %v2780 = vld [vmem:[%s2779] sm:$0xff]
    %s2781 = scalar_lea.vmem [#allocation8], 24
    %v2782 = vld [vmem:[%s2781] sm:$0xff]
    %v2783 = vmul.f32 %v2770, %v2768
    %v2784 = vsub.f32 1.0, %v2770
    %v2785 = vpack.c.bf16 %v2766, %v2766
    %2786 = vmatprep.subr.bf16.mxu0 0
    %2787 = vmatpush1.bf16.msra.mxu0 %v1365
    %2788 = vmatprep.subr.bf16.mxu0 0
    %2789 = vmatpush1.bf16.msra.mxu0 %v1364
    %2790 = vmatprep.subr.bf16.mxu0 0
    %2791 = vmatpush1.bf16.msra.mxu0 %v1363
    %2792 = vmatprep.subr.bf16.mxu0 0
    %2793 = vmatpush1.bf16.msra.mxu0 %v1362
    %2794 = vmatprep.subr.bf16.mxu0 0
    %2795 = vmatpush1.bf16.msra.mxu0 %v1361
    %2796 = vmatprep.subr.bf16.mxu0 0
    %2797 = vmatpush1.bf16.msra.mxu0 %v1360
    %2798 = vmatprep.subr.bf16.mxu0 0
    %2799 = vmatpush1.bf16.msra.mxu0 %v1359
    %2800 = vmatprep.subr.bf16.mxu0 0
    %2801 = vmatpush1.bf16.msra.mxu0 %v1358
    %2802 = vmatprep.subr.bf16.mxu0 0
    %2803 = vmatpush2.bf16.msra.mxu0 0
    %2804 = vmatprep.subr.bf16.mxu0 0
    %2805 = vmatpush2.bf16.msra.mxu0 0
    %2806 = vmatprep.subr.bf16.mxu0 0
    %2807 = vmatpush2.bf16.msra.mxu0 0
    %2808 = vmatprep.subr.bf16.mxu0 0
    %2809 = vmatpush2.bf16.msra.mxu0 0
    %2810 = vmatprep.subr.bf16.mxu0 0
    %2811 = vmatpush2.bf16.msra.mxu0 0
    %2812 = vmatprep.subr.bf16.mxu0 0
    %2813 = vmatpush2.bf16.msra.mxu0 0
    %2814 = vmatprep.subr.bf16.mxu0 0
    %2815 = vmatpush2.bf16.msra.mxu0 0
    %2816 = vmatprep.subr.bf16.mxu0 0
    %2817 = vmatpush2.bf16.msra.mxu0 0
    %2818 = vmatprep.mubr.bf16.mxu0 0
    %2819 = vmatmul.mubr.bf16.gmra.mxu0 %v2785
    %v2820 = vpop.f32.mrf.mxu0
    %v2821 = vadd.f32 %v1286, %v2820
    %v2822 = vpop.f32.mrf.mxu0
    %v2823 = vpop.f32.mrf.mxu0
    %v2824 = vpop.f32.mrf.mxu0
    %2825 = vdwg.mxu0
    %v2826 = vmul.f32 %v2784, %v2821
    %v2827 = vadd.f32 %v2783, %v2826
    %v2828 = vpack.c.bf16 %v2827, %v2827
    %2829 = vmatprep.subr.bf16.mxu0 0
    %2830 = vmatpush1.bf16.msra.mxu0 %v1456
    %2831 = vmatprep.subr.bf16.mxu0 0
    %2832 = vmatpush1.bf16.msra.mxu0 %v1455
    %2833 = vmatprep.subr.bf16.mxu0 0
    %2834 = vmatpush1.bf16.msra.mxu0 %v1454
    %2835 = vmatprep.subr.bf16.mxu0 0
    %2836 = vmatpush1.bf16.msra.mxu0 %v1453
    %2837 = vmatprep.subr.bf16.mxu0 0
    %2838 = vmatpush1.bf16.msra.mxu0 %v1452
    %2839 = vmatprep.subr.bf16.mxu0 0
    %2840 = vmatpush1.bf16.msra.mxu0 %v1451
    %2841 = vmatprep.subr.bf16.mxu0 0
    %2842 = vmatpush1.bf16.msra.mxu0 %v1450
    %2843 = vmatprep.subr.bf16.mxu0 0
    %2844 = vmatpush1.bf16.msra.mxu0 %v1449
    %2845 = vmatprep.subr.bf16.mxu0 0
    %2846 = vmatpush2.bf16.msra.mxu0 0
    %2847 = vmatprep.subr.bf16.mxu0 0
    %2848 = vmatpush2.bf16.msra.mxu0 0
    %2849 = vmatprep.subr.bf16.mxu0 0
    %2850 = vmatpush2.bf16.msra.mxu0 0
    %2851 = vmatprep.subr.bf16.mxu0 0
    %2852 = vmatpush2.bf16.msra.mxu0 0
    %2853 = vmatprep.subr.bf16.mxu0 0
    %2854 = vmatpush2.bf16.msra.mxu0 0
    %2855 = vmatprep.subr.bf16.mxu0 0
    %2856 = vmatpush2.bf16.msra.mxu0 0
    %2857 = vmatprep.subr.bf16.mxu0 0
    %2858 = vmatpush2.bf16.msra.mxu0 0
    %2859 = vmatprep.subr.bf16.mxu0 0
    %2860 = vmatpush2.bf16.msra.mxu0 0
    %2861 = vmatprep.mubr.bf16.mxu0 0
    %2862 = vmatmul.mubr.bf16.gmra.mxu0 %v2828
    %v2863 = vpop.f32.mrf.mxu0
    %v2864 = vadd.f32 %v2780, %v2863
    %v2865 = vpop.f32.mrf.mxu0
    %v2866 = vpop.f32.mrf.mxu0
    %v2867 = vpop.f32.mrf.mxu0
    %2868 = vdwg.mxu0
    %v2869 = vmul.f32 %v2784, %v2864
    %v2870 = vadd.f32 %v2783, %v2869
    %v2871 = vpack.c.bf16 %v2870, %v2870
    %2872 = vmatprep.subr.bf16.mxu0 0
    %2873 = vmatpush1.bf16.msra.mxu0 %v1547
    %2874 = vmatprep.subr.bf16.mxu0 0
    %2875 = vmatpush1.bf16.msra.mxu0 %v1546
    %2876 = vmatprep.subr.bf16.mxu0 0
    %2877 = vmatpush1.bf16.msra.mxu0 %v1545
    %2878 = vmatprep.subr.bf16.mxu0 0
    %2879 = vmatpush1.bf16.msra.mxu0 %v1544
    %2880 = vmatprep.subr.bf16.mxu0 0
    %2881 = vmatpush1.bf16.msra.mxu0 %v1543
    %2882 = vmatprep.subr.bf16.mxu0 0
    %2883 = vmatpush1.bf16.msra.mxu0 %v1542
    %2884 = vmatprep.subr.bf16.mxu0 0
    %2885 = vmatpush1.bf16.msra.mxu0 %v1541
    %2886 = vmatprep.subr.bf16.mxu0 0
    %2887 = vmatpush1.bf16.msra.mxu0 %v1540
    %2888 = vmatprep.subr.bf16.mxu0 0
    %2889 = vmatpush2.bf16.msra.mxu0 0
    %2890 = vmatprep.subr.bf16.mxu0 0
    %2891 = vmatpush2.bf16.msra.mxu0 0
    %2892 = vmatprep.subr.bf16.mxu0 0
    %2893 = vmatpush2.bf16.msra.mxu0 0
    %2894 = vmatprep.subr.bf16.mxu0 0
    %2895 = vmatpush2.bf16.msra.mxu0 0
    %2896 = vmatprep.subr.bf16.mxu0 0
    %2897 = vmatpush2.bf16.msra.mxu0 0
    %2898 = vmatprep.subr.bf16.mxu0 0
    %2899 = vmatpush2.bf16.msra.mxu0 0
    %2900 = vmatprep.subr.bf16.mxu0 0
    %2901 = vmatpush2.bf16.msra.mxu0 0
    %2902 = vmatprep.subr.bf16.mxu0 0
    %2903 = vmatpush2.bf16.msra.mxu0 0
    %2904 = vmatprep.mubr.bf16.mxu0 0
    %2905 = vmatmul.mubr.bf16.gmra.mxu0 %v2871
    %v2906 = vpop.f32.mrf.mxu0
    %v2907 = vadd.f32 %v1293, %v2906
    %v2908 = vpop.f32.mrf.mxu0
    %v2909 = vpop.f32.mrf.mxu0
    %v2910 = vpop.f32.mrf.mxu0
    %2911 = vdwg.mxu0
    %v2912 = vmul.f32 %v2774, %v2907
    %v2913 = vsub.f32 1.0, %v2774
    %v2914 = vmul.f32 %v2913, %v2821
    %v2915 = vadd.f32 %v2912, %v2914
    %v2916 = vmul.f32 %v2784, %v2915
    %v2917 = vadd.f32 %v2783, %v2916
    %v2918 = vsub.f32 %v2768, %v2821
    %v2919 = vand.u32 2147483647, %v2918
    %v2920 = vsub.f32 %v2768, %v2864
    %v2921 = vand.u32 2147483647, %v2920
    %v2922 = vadd.f32 %v2919, %v2921
    %v2923 = vsub.f32 %v2768, %v2907
    %v2924 = vand.u32 2147483647, %v2923
    %v2925 = vadd.f32 %v2922, %v2924
    %v2926 = vsub.f32 %v2768, %v2915
    %v2927 = vand.u32 2147483647, %v2926
    %v2928 = vadd.f32 %v2925, %v2927
    %v2929 = vmul.f32 %v2928, %v2782
    %v2930 = vadd.f32 %v2576, %v2929
    %s2931 = scalar_lea.vmem %s16, 24
    %2932 = vst [vmem:[%s2931] sm:$0xff] %v2915
    %s2933 = scalar_lea.vmem %s17, 24
    %2934 = vst [vmem:[%s2933] sm:$0xff] %v2917
    %v2935 = vmul.f32 %v2766, %v2772
    %v2936 = vpack.c.bf16 %v2917, %v2917
    %2937 = vmatprep.subr.bf16.mxu0 %v1721
    %2938 = vmatpush1.bf16.msra.mxu0 %v1720
    %2939 = vmatprep.subr.bf16.mxu0 %v1718
    %2940 = vmatpush1.bf16.msra.mxu0 %v1717
    %2941 = vmatprep.subr.bf16.mxu0 %v1715
    %2942 = vmatpush1.bf16.msra.mxu0 %v1714
    %2943 = vmatprep.subr.bf16.mxu0 %v1712
    %2944 = vmatpush1.bf16.msra.mxu0 %v1711
    %2945 = vmatprep.subr.bf16.mxu0 %v1709
    %2946 = vmatpush1.bf16.msra.mxu0 %v1708
    %2947 = vmatprep.subr.bf16.mxu0 %v1706
    %2948 = vmatpush1.bf16.msra.mxu0 %v1705
    %2949 = vmatprep.subr.bf16.mxu0 %v1703
    %2950 = vmatpush1.bf16.msra.mxu0 %v1702
    %2951 = vmatprep.subr.bf16.mxu0 %v1700
    %2952 = vmatpush1.bf16.msra.mxu0 %v1699
    %2953 = vmatprep.subr.bf16.mxu0 0
    %2954 = vmatpush2.bf16.msra.mxu0 0
    %2955 = vmatprep.subr.bf16.mxu0 0
    %2956 = vmatpush2.bf16.msra.mxu0 0
    %2957 = vmatprep.subr.bf16.mxu0 0
    %2958 = vmatpush2.bf16.msra.mxu0 0
    %2959 = vmatprep.subr.bf16.mxu0 0
    %2960 = vmatpush2.bf16.msra.mxu0 0
    %2961 = vmatprep.subr.bf16.mxu0 0
    %2962 = vmatpush2.bf16.msra.mxu0 0
    %2963 = vmatprep.subr.bf16.mxu0 0
    %2964 = vmatpush2.bf16.msra.mxu0 0
    %2965 = vmatprep.subr.bf16.mxu0 0
    %2966 = vmatpush2.bf16.msra.mxu0 0
    %2967 = vmatprep.subr.bf16.mxu0 0
    %2968 = vmatpush2.bf16.msra.mxu0 0
    %2969 = vmatprep.mubr.bf16.mxu0 0
    %2970 = vmatmul.mubr.bf16.gmra.mxu0 %v2936
    %v2971 = vpop.f32.mrf.mxu0
    %v2972 = vadd.f32 %v2776, %v2971
    %v2973 = vpop.f32.mrf.mxu0
    %v2974 = vadd.f32 %v2777, %v2973
    %v2975 = vpop.f32.mrf.mxu0
    %v2976 = vpop.f32.mrf.mxu0
    %2977 = vdwg.mxu0
    %2978 = vmatprep.subr.bf16.mxu0 0
    %2979 = vmatpush1.bf16.msra.mxu0 %v1722
    %2980 = vmatprep.subr.bf16.mxu0 0
    %2981 = vmatpush1.bf16.msra.mxu0 %v1719
    %2982 = vmatprep.subr.bf16.mxu0 0
    %2983 = vmatpush1.bf16.msra.mxu0 %v1716
    %2984 = vmatprep.subr.bf16.mxu0 0
    %2985 = vmatpush1.bf16.msra.mxu0 %v1713
    %2986 = vmatprep.subr.bf16.mxu0 0
    %2987 = vmatpush1.bf16.msra.mxu0 %v1710
    %2988 = vmatprep.subr.bf16.mxu0 0
    %2989 = vmatpush1.bf16.msra.mxu0 %v1707
    %2990 = vmatprep.subr.bf16.mxu0 0
    %2991 = vmatpush1.bf16.msra.mxu0 %v1704
    %2992 = vmatprep.subr.bf16.mxu0 0
    %2993 = vmatpush1.bf16.msra.mxu0 %v1701
    %2994 = vmatprep.subr.bf16.mxu0 0
    %2995 = vmatpush2.bf16.msra.mxu0 0
    %2996 = vmatprep.subr.bf16.mxu0 0
    %2997 = vmatpush2.bf16.msra.mxu0 0
    %2998 = vmatprep.subr.bf16.mxu0 0
    %2999 = vmatpush2.bf16.msra.mxu0 0
    %3000 = vmatprep.subr.bf16.mxu0 0
    %3001 = vmatpush2.bf16.msra.mxu0 0
    %3002 = vmatprep.subr.bf16.mxu0 0
    %3003 = vmatpush2.bf16.msra.mxu0 0
    %3004 = vmatprep.subr.bf16.mxu0 0
    %3005 = vmatpush2.bf16.msra.mxu0 0
    %3006 = vmatprep.subr.bf16.mxu0 0
    %3007 = vmatpush2.bf16.msra.mxu0 0
    %3008 = vmatprep.subr.bf16.mxu0 0
    %3009 = vmatpush2.bf16.msra.mxu0 0
    %3010 = vmatprep.mubr.bf16.mxu0 0
    %3011 = vmatmul.mubr.bf16.gmra.mxu0 %v2936
    %v3012 = vpop.f32.mrf.mxu0
    %v3013 = vadd.f32 %v2778, %v3012
    %v3014 = vpop.f32.mrf.mxu0
    %v3015 = vpop.f32.mrf.mxu0
    %v3016 = vpop.f32.mrf.mxu0
    %3017 = vdwg.mxu0
    %v3018 = vpack.c.bf16 %v2935, %v2935
    %3019 = vmatprep.subr.bf16.mxu0 %v1931
    %3020 = vmatpush1.bf16.msra.mxu0 %v1930
    %3021 = vmatprep.subr.bf16.mxu0 %v1928
    %3022 = vmatpush1.bf16.msra.mxu0 %v1927
    %3023 = vmatprep.subr.bf16.mxu0 %v1925
    %3024 = vmatpush1.bf16.msra.mxu0 %v1924
    %3025 = vmatprep.subr.bf16.mxu0 %v1922
    %3026 = vmatpush1.bf16.msra.mxu0 %v1921
    %3027 = vmatprep.subr.bf16.mxu0 %v1919
    %3028 = vmatpush1.bf16.msra.mxu0 %v1918
    %3029 = vmatprep.subr.bf16.mxu0 %v1916
    %3030 = vmatpush1.bf16.msra.mxu0 %v1915
    %3031 = vmatprep.subr.bf16.mxu0 %v1913
    %3032 = vmatpush1.bf16.msra.mxu0 %v1912
    %3033 = vmatprep.subr.bf16.mxu0 %v1910
    %3034 = vmatpush1.bf16.msra.mxu0 %v1909
    %3035 = vmatprep.subr.bf16.mxu0 0
    %3036 = vmatpush2.bf16.msra.mxu0 0
    %3037 = vmatprep.subr.bf16.mxu0 0
    %3038 = vmatpush2.bf16.msra.mxu0 0
    %3039 = vmatprep.subr.bf16.mxu0 0
    %3040 = vmatpush2.bf16.msra.mxu0 0
    %3041 = vmatprep.subr.bf16.mxu0 0
    %3042 = vmatpush2.bf16.msra.mxu0 0
    %3043 = vmatprep.subr.bf16.mxu0 0
    %3044 = vmatpush2.bf16.msra.mxu0 0
    %3045 = vmatprep.subr.bf16.mxu0 0
    %3046 = vmatpush2.bf16.msra.mxu0 0
    %3047 = vmatprep.subr.bf16.mxu0 0
    %3048 = vmatpush2.bf16.msra.mxu0 0
    %3049 = vmatprep.subr.bf16.mxu0 0
    %3050 = vmatpush2.bf16.msra.mxu0 0
    %3051 = vmatprep.mubr.bf16.mxu0 0
    %3052 = vmatmul.mubr.bf16.gmra.mxu0 %v3018
    %v3053 = vpop.f32.mrf.mxu0
    %v3054 = vadd.f32 %v1300, %v3053
    %v3055 = vpop.f32.mrf.mxu0
    %v3056 = vadd.f32 %v1304, %v3055
    %v3057 = vpop.f32.mrf.mxu0
    %v3058 = vpop.f32.mrf.mxu0
    %3059 = vdwg.mxu0
    %3060 = vmatprep.subr.bf16.mxu0 0
    %3061 = vmatpush1.bf16.msra.mxu0 %v1932
    %3062 = vmatprep.subr.bf16.mxu0 0
    %3063 = vmatpush1.bf16.msra.mxu0 %v1929
    %3064 = vmatprep.subr.bf16.mxu0 0
    %3065 = vmatpush1.bf16.msra.mxu0 %v1926
    %3066 = vmatprep.subr.bf16.mxu0 0
    %3067 = vmatpush1.bf16.msra.mxu0 %v1923
    %3068 = vmatprep.subr.bf16.mxu0 0
    %3069 = vmatpush1.bf16.msra.mxu0 %v1920
    %3070 = vmatprep.subr.bf16.mxu0 0
    %3071 = vmatpush1.bf16.msra.mxu0 %v1917
    %3072 = vmatprep.subr.bf16.mxu0 0
    %3073 = vmatpush1.bf16.msra.mxu0 %v1914
    %3074 = vmatprep.subr.bf16.mxu0 0
    %3075 = vmatpush1.bf16.msra.mxu0 %v1911
    %3076 = vmatprep.subr.bf16.mxu0 0
    %3077 = vmatpush2.bf16.msra.mxu0 0
    %3078 = vmatprep.subr.bf16.mxu0 0
    %3079 = vmatpush2.bf16.msra.mxu0 0
    %3080 = vmatprep.subr.bf16.mxu0 0
    %3081 = vmatpush2.bf16.msra.mxu0 0
    %3082 = vmatprep.subr.bf16.mxu0 0
    %3083 = vmatpush2.bf16.msra.mxu0 0
    %3084 = vmatprep.subr.bf16.mxu0 0
    %3085 = vmatpush2.bf16.msra.mxu0 0
    %3086 = vmatprep.subr.bf16.mxu0 0
    %3087 = vmatpush2.bf16.msra.mxu0 0
    %3088 = vmatprep.subr.bf16.mxu0 0
    %3089 = vmatpush2.bf16.msra.mxu0 0
    %3090 = vmatprep.subr.bf16.mxu0 0
    %3091 = vmatpush2.bf16.msra.mxu0 0
    %3092 = vmatprep.mubr.bf16.mxu0 0
    %3093 = vmatmul.mubr.bf16.gmra.mxu0 %v3018
    %v3094 = vpop.f32.mrf.mxu0
    %v3095 = vadd.f32 %v1308, %v3094
    %v3096 = vpop.f32.mrf.mxu0
    %v3097 = vpop.f32.mrf.mxu0
    %v3098 = vpop.f32.mrf.mxu0
    %3099 = vdwg.mxu0
    %v3100 = vadd.f32 %v2972, %v3054
    %v3101 = vxor.u32 %v3100, 2147483648
    %v3102 = vmul.f32 %v3101, 1.442695
    %v3103 = vpow.pop %v3102
    %v3104 = vadd.f32 %v3103, 1.0
    %v3105 = vrcp.pop %v3104
    %v3106 = vmul.f32 1.0, %v3105
    %v3107 = vadd.f32 %v2974, %v3056
    %v3108 = vxor.u32 %v3107, 2147483648
    %v3109 = vmul.f32 %v3108, 1.442695
    %v3110 = vpow.pop %v3109
    %v3111 = vadd.f32 %v3110, 1.0
    %v3112 = vrcp.pop %v3111
    %v3113 = vmul.f32 1.0, %v3112
    %v3114 = vmul.f32 %v3106, %v3095
    %v3115 = vadd.f32 %v3013, %v3114
    %v3116 = vtanh.pop %v3115
    %v3117 = vsub.f32 1.0, %v3113
    %v3118 = vmul.f32 %v3117, %v3116
    %v3119 = vmul.f32 %v3113, %v2935
    %v3120 = vadd.f32 %v3118, %v3119
    %s3121 = scalar_lea.vmem %s0, 32
    %v3122 = vld [vmem:[%s3121] sm:$0xff]
    %s3123 = scalar_lea.vmem %s0, 160
    %v3124 = vld [vmem:[%s3123] sm:$0xff]
    %s3125 = scalar_lea.vmem [#allocation4], 32
    %v3126 = vld [vmem:[%s3125] sm:$0xff]
    %s3127 = scalar_lea.vmem [#allocation5], 32
    %v3128 = vld [vmem:[%s3127] sm:$0xff]
    %s3129 = scalar_lea.vmem [#allocation6], 96
    %v3130 = vld [vmem:[%s3129] sm:$0xff]
    %v3131 = vld [vmem:[%s3129 + $0x8] sm:$0xff]
    %v3132 = vld [vmem:[%s3129 + $0x10] sm:$0xff]
    %s3133 = scalar_lea.vmem [#allocation7], 32
    %v3134 = vld [vmem:[%s3133] sm:$0xff]
    %s3135 = scalar_lea.vmem [#allocation8], 32
    %v3136 = vld [vmem:[%s3135] sm:$0xff]
    %v3137 = vmul.f32 %v3124, %v3122
    %v3138 = vsub.f32 1.0, %v3124
    %v3139 = vpack.c.bf16 %v3120, %v3120
    %3140 = vmatprep.subr.bf16.mxu0 0
    %3141 = vmatpush1.bf16.msra.mxu0 %v1365
    %3142 = vmatprep.subr.bf16.mxu0 0
    %3143 = vmatpush1.bf16.msra.mxu0 %v1364
    %3144 = vmatprep.subr.bf16.mxu0 0
    %3145 = vmatpush1.bf16.msra.mxu0 %v1363
    %3146 = vmatprep.subr.bf16.mxu0 0
    %3147 = vmatpush1.bf16.msra.mxu0 %v1362
    %3148 = vmatprep.subr.bf16.mxu0 0
    %3149 = vmatpush1.bf16.msra.mxu0 %v1361
    %3150 = vmatprep.subr.bf16.mxu0 0
    %3151 = vmatpush1.bf16.msra.mxu0 %v1360
    %3152 = vmatprep.subr.bf16.mxu0 0
    %3153 = vmatpush1.bf16.msra.mxu0 %v1359
    %3154 = vmatprep.subr.bf16.mxu0 0
    %3155 = vmatpush1.bf16.msra.mxu0 %v1358
    %3156 = vmatprep.subr.bf16.mxu0 0
    %3157 = vmatpush2.bf16.msra.mxu0 0
    %3158 = vmatprep.subr.bf16.mxu0 0
    %3159 = vmatpush2.bf16.msra.mxu0 0
    %3160 = vmatprep.subr.bf16.mxu0 0
    %3161 = vmatpush2.bf16.msra.mxu0 0
    %3162 = vmatprep.subr.bf16.mxu0 0
    %3163 = vmatpush2.bf16.msra.mxu0 0
    %3164 = vmatprep.subr.bf16.mxu0 0
    %3165 = vmatpush2.bf16.msra.mxu0 0
    %3166 = vmatprep.subr.bf16.mxu0 0
    %3167 = vmatpush2.bf16.msra.mxu0 0
    %3168 = vmatprep.subr.bf16.mxu0 0
    %3169 = vmatpush2.bf16.msra.mxu0 0
    %3170 = vmatprep.subr.bf16.mxu0 0
    %3171 = vmatpush2.bf16.msra.mxu0 0
    %3172 = vmatprep.mubr.bf16.mxu0 0
    %3173 = vmatmul.mubr.bf16.gmra.mxu0 %v3139
    %v3174 = vpop.f32.mrf.mxu0
    %v3175 = vadd.f32 %v1286, %v3174
    %v3176 = vpop.f32.mrf.mxu0
    %v3177 = vpop.f32.mrf.mxu0
    %v3178 = vpop.f32.mrf.mxu0
    %3179 = vdwg.mxu0
    %v3180 = vmul.f32 %v3138, %v3175
    %v3181 = vadd.f32 %v3137, %v3180
    %v3182 = vpack.c.bf16 %v3181, %v3181
    %3183 = vmatprep.subr.bf16.mxu0 0
    %3184 = vmatpush1.bf16.msra.mxu0 %v1456
    %3185 = vmatprep.subr.bf16.mxu0 0
    %3186 = vmatpush1.bf16.msra.mxu0 %v1455
    %3187 = vmatprep.subr.bf16.mxu0 0
    %3188 = vmatpush1.bf16.msra.mxu0 %v1454
    %3189 = vmatprep.subr.bf16.mxu0 0
    %3190 = vmatpush1.bf16.msra.mxu0 %v1453
    %3191 = vmatprep.subr.bf16.mxu0 0
    %3192 = vmatpush1.bf16.msra.mxu0 %v1452
    %3193 = vmatprep.subr.bf16.mxu0 0
    %3194 = vmatpush1.bf16.msra.mxu0 %v1451
    %3195 = vmatprep.subr.bf16.mxu0 0
    %3196 = vmatpush1.bf16.msra.mxu0 %v1450
    %3197 = vmatprep.subr.bf16.mxu0 0
    %3198 = vmatpush1.bf16.msra.mxu0 %v1449
    %3199 = vmatprep.subr.bf16.mxu0 0
    %3200 = vmatpush2.bf16.msra.mxu0 0
    %3201 = vmatprep.subr.bf16.mxu0 0
    %3202 = vmatpush2.bf16.msra.mxu0 0
    %3203 = vmatprep.subr.bf16.mxu0 0
    %3204 = vmatpush2.bf16.msra.mxu0 0
    %3205 = vmatprep.subr.bf16.mxu0 0
    %3206 = vmatpush2.bf16.msra.mxu0 0
    %3207 = vmatprep.subr.bf16.mxu0 0
    %3208 = vmatpush2.bf16.msra.mxu0 0
    %3209 = vmatprep.subr.bf16.mxu0 0
    %3210 = vmatpush2.bf16.msra.mxu0 0
    %3211 = vmatprep.subr.bf16.mxu0 0
    %3212 = vmatpush2.bf16.msra.mxu0 0
    %3213 = vmatprep.subr.bf16.mxu0 0
    %3214 = vmatpush2.bf16.msra.mxu0 0
    %3215 = vmatprep.mubr.bf16.mxu0 0
    %3216 = vmatmul.mubr.bf16.gmra.mxu0 %v3182
    %v3217 = vpop.f32.mrf.mxu0
    %v3218 = vadd.f32 %v3134, %v3217
    %v3219 = vpop.f32.mrf.mxu0
    %v3220 = vpop.f32.mrf.mxu0
    %v3221 = vpop.f32.mrf.mxu0
    %3222 = vdwg.mxu0
    %v3223 = vmul.f32 %v3138, %v3218
    %v3224 = vadd.f32 %v3137, %v3223
    %v3225 = vpack.c.bf16 %v3224, %v3224
    %3226 = vmatprep.subr.bf16.mxu0 0
    %3227 = vmatpush1.bf16.msra.mxu0 %v1547
    %3228 = vmatprep.subr.bf16.mxu0 0
    %3229 = vmatpush1.bf16.msra.mxu0 %v1546
    %3230 = vmatprep.subr.bf16.mxu0 0
    %3231 = vmatpush1.bf16.msra.mxu0 %v1545
    %3232 = vmatprep.subr.bf16.mxu0 0
    %3233 = vmatpush1.bf16.msra.mxu0 %v1544
    %3234 = vmatprep.subr.bf16.mxu0 0
    %3235 = vmatpush1.bf16.msra.mxu0 %v1543
    %3236 = vmatprep.subr.bf16.mxu0 0
    %3237 = vmatpush1.bf16.msra.mxu0 %v1542
    %3238 = vmatprep.subr.bf16.mxu0 0
    %3239 = vmatpush1.bf16.msra.mxu0 %v1541
    %3240 = vmatprep.subr.bf16.mxu0 0
    %3241 = vmatpush1.bf16.msra.mxu0 %v1540
    %3242 = vmatprep.subr.bf16.mxu0 0
    %3243 = vmatpush2.bf16.msra.mxu0 0
    %3244 = vmatprep.subr.bf16.mxu0 0
    %3245 = vmatpush2.bf16.msra.mxu0 0
    %3246 = vmatprep.subr.bf16.mxu0 0
    %3247 = vmatpush2.bf16.msra.mxu0 0
    %3248 = vmatprep.subr.bf16.mxu0 0
    %3249 = vmatpush2.bf16.msra.mxu0 0
    %3250 = vmatprep.subr.bf16.mxu0 0
    %3251 = vmatpush2.bf16.msra.mxu0 0
    %3252 = vmatprep.subr.bf16.mxu0 0
    %3253 = vmatpush2.bf16.msra.mxu0 0
    %3254 = vmatprep.subr.bf16.mxu0 0
    %3255 = vmatpush2.bf16.msra.mxu0 0
    %3256 = vmatprep.subr.bf16.mxu0 0
    %3257 = vmatpush2.bf16.msra.mxu0 0
    %3258 = vmatprep.mubr.bf16.mxu0 0
    %3259 = vmatmul.mubr.bf16.gmra.mxu0 %v3225
    %v3260 = vpop.f32.mrf.mxu0
    %v3261 = vadd.f32 %v1293, %v3260
    %v3262 = vpop.f32.mrf.mxu0
    %v3263 = vpop.f32.mrf.mxu0
    %v3264 = vpop.f32.mrf.mxu0
    %3265 = vdwg.mxu0
    %v3266 = vmul.f32 %v3128, %v3261
    %v3267 = vsub.f32 1.0, %v3128
    %v3268 = vmul.f32 %v3267, %v3175
    %v3269 = vadd.f32 %v3266, %v3268
    %v3270 = vmul.f32 %v3138, %v3269
    %v3271 = vadd.f32 %v3137, %v3270
    %v3272 = vsub.f32 %v3122, %v3175
    %v3273 = vand.u32 2147483647, %v3272
    %v3274 = vsub.f32 %v3122, %v3218
    %v3275 = vand.u32 2147483647, %v3274
    %v3276 = vadd.f32 %v3273, %v3275
    %v3277 = vsub.f32 %v3122, %v3261
    %v3278 = vand.u32 2147483647, %v3277
    %v3279 = vadd.f32 %v3276, %v3278
    %v3280 = vsub.f32 %v3122, %v3269
    %v3281 = vand.u32 2147483647, %v3280
    %v3282 = vadd.f32 %v3279, %v3281
    %v3283 = vmul.f32 %v3282, %v3136
    %v3284 = vadd.f32 %v2930, %v3283
    %s3285 = scalar_lea.vmem %s16, 32
    %3286 = vst [vmem:[%s3285] sm:$0xff] %v3269
    %s3287 = scalar_lea.vmem %s17, 32
    %3288 = vst [vmem:[%s3287] sm:$0xff] %v3271
    %v3289 = vmul.f32 %v3120, %v3126
    %v3290 = vpack.c.bf16 %v3271, %v3271
    %3291 = vmatprep.subr.bf16.mxu0 %v1721
    %3292 = vmatpush1.bf16.msra.mxu0 %v1720
    %3293 = vmatprep.subr.bf16.mxu0 %v1718
    %3294 = vmatpush1.bf16.msra.mxu0 %v1717
    %3295 = vmatprep.subr.bf16.mxu0 %v1715
    %3296 = vmatpush1.bf16.msra.mxu0 %v1714
    %3297 = vmatprep.subr.bf16.mxu0 %v1712
    %3298 = vmatpush1.bf16.msra.mxu0 %v1711
    %3299 = vmatprep.subr.bf16.mxu0 %v1709
    %3300 = vmatpush1.bf16.msra.mxu0 %v1708
    %3301 = vmatprep.subr.bf16.mxu0 %v1706
    %3302 = vmatpush1.bf16.msra.mxu0 %v1705
    %3303 = vmatprep.subr.bf16.mxu0 %v1703
    %3304 = vmatpush1.bf16.msra.mxu0 %v1702
    %3305 = vmatprep.subr.bf16.mxu0 %v1700
    %3306 = vmatpush1.bf16.msra.mxu0 %v1699
    %3307 = vmatprep.subr.bf16.mxu0 0
    %3308 = vmatpush2.bf16.msra.mxu0 0
    %3309 = vmatprep.subr.bf16.mxu0 0
    %3310 = vmatpush2.bf16.msra.mxu0 0
    %3311 = vmatprep.subr.bf16.mxu0 0
    %3312 = vmatpush2.bf16.msra.mxu0 0
    %3313 = vmatprep.subr.bf16.mxu0 0
    %3314 = vmatpush2.bf16.msra.mxu0 0
    %3315 = vmatprep.subr.bf16.mxu0 0
    %3316 = vmatpush2.bf16.msra.mxu0 0
    %3317 = vmatprep.subr.bf16.mxu0 0
    %3318 = vmatpush2.bf16.msra.mxu0 0
    %3319 = vmatprep.subr.bf16.mxu0 0
    %3320 = vmatpush2.bf16.msra.mxu0 0
    %3321 = vmatprep.subr.bf16.mxu0 0
    %3322 = vmatpush2.bf16.msra.mxu0 0
    %3323 = vmatprep.mubr.bf16.mxu0 0
    %3324 = vmatmul.mubr.bf16.gmra.mxu0 %v3290
    %v3325 = vpop.f32.mrf.mxu0
    %v3326 = vadd.f32 %v3130, %v3325
    %v3327 = vpop.f32.mrf.mxu0
    %v3328 = vadd.f32 %v3131, %v3327
    %v3329 = vpop.f32.mrf.mxu0
    %v3330 = vpop.f32.mrf.mxu0
    %3331 = vdwg.mxu0
    %3332 = vmatprep.subr.bf16.mxu0 0
    %3333 = vmatpush1.bf16.msra.mxu0 %v1722
    %3334 = vmatprep.subr.bf16.mxu0 0
    %3335 = vmatpush1.bf16.msra.mxu0 %v1719
    %3336 = vmatprep.subr.bf16.mxu0 0
    %3337 = vmatpush1.bf16.msra.mxu0 %v1716
    %3338 = vmatprep.subr.bf16.mxu0 0
    %3339 = vmatpush1.bf16.msra.mxu0 %v1713
    %3340 = vmatprep.subr.bf16.mxu0 0
    %3341 = vmatpush1.bf16.msra.mxu0 %v1710
    %3342 = vmatprep.subr.bf16.mxu0 0
    %3343 = vmatpush1.bf16.msra.mxu0 %v1707
    %3344 = vmatprep.subr.bf16.mxu0 0
    %3345 = vmatpush1.bf16.msra.mxu0 %v1704
    %3346 = vmatprep.subr.bf16.mxu0 0
    %3347 = vmatpush1.bf16.msra.mxu0 %v1701
    %3348 = vmatprep.subr.bf16.mxu0 0
    %3349 = vmatpush2.bf16.msra.mxu0 0
    %3350 = vmatprep.subr.bf16.mxu0 0
    %3351 = vmatpush2.bf16.msra.mxu0 0
    %3352 = vmatprep.subr.bf16.mxu0 0
    %3353 = vmatpush2.bf16.msra.mxu0 0
    %3354 = vmatprep.subr.bf16.mxu0 0
    %3355 = vmatpush2.bf16.msra.mxu0 0
    %3356 = vmatprep.subr.bf16.mxu0 0
    %3357 = vmatpush2.bf16.msra.mxu0 0
    %3358 = vmatprep.subr.bf16.mxu0 0
    %3359 = vmatpush2.bf16.msra.mxu0 0
    %3360 = vmatprep.subr.bf16.mxu0 0
    %3361 = vmatpush2.bf16.msra.mxu0 0
    %3362 = vmatprep.subr.bf16.mxu0 0
    %3363 = vmatpush2.bf16.msra.mxu0 0
    %3364 = vmatprep.mubr.bf16.mxu0 0
    %3365 = vmatmul.mubr.bf16.gmra.mxu0 %v3290
    %v3366 = vpop.f32.mrf.mxu0
    %v3367 = vadd.f32 %v3132, %v3366
    %v3368 = vpop.f32.mrf.mxu0
    %v3369 = vpop.f32.mrf.mxu0
    %v3370 = vpop.f32.mrf.mxu0
    %3371 = vdwg.mxu0
    %v3372 = vpack.c.bf16 %v3289, %v3289
    %3373 = vmatprep.subr.bf16.mxu0 %v1931
    %3374 = vmatpush1.bf16.msra.mxu0 %v1930
    %3375 = vmatprep.subr.bf16.mxu0 %v1928
    %3376 = vmatpush1.bf16.msra.mxu0 %v1927
    %3377 = vmatprep.subr.bf16.mxu0 %v1925
    %3378 = vmatpush1.bf16.msra.mxu0 %v1924
    %3379 = vmatprep.subr.bf16.mxu0 %v1922
    %3380 = vmatpush1.bf16.msra.mxu0 %v1921
    %3381 = vmatprep.subr.bf16.mxu0 %v1919
    %3382 = vmatpush1.bf16.msra.mxu0 %v1918
    %3383 = vmatprep.subr.bf16.mxu0 %v1916
    %3384 = vmatpush1.bf16.msra.mxu0 %v1915
    %3385 = vmatprep.subr.bf16.mxu0 %v1913
    %3386 = vmatpush1.bf16.msra.mxu0 %v1912
    %3387 = vmatprep.subr.bf16.mxu0 %v1910
    %3388 = vmatpush1.bf16.msra.mxu0 %v1909
    %3389 = vmatprep.subr.bf16.mxu0 0
    %3390 = vmatpush2.bf16.msra.mxu0 0
    %3391 = vmatprep.subr.bf16.mxu0 0
    %3392 = vmatpush2.bf16.msra.mxu0 0
    %3393 = vmatprep.subr.bf16.mxu0 0
    %3394 = vmatpush2.bf16.msra.mxu0 0
    %3395 = vmatprep.subr.bf16.mxu0 0
    %3396 = vmatpush2.bf16.msra.mxu0 0
    %3397 = vmatprep.subr.bf16.mxu0 0
    %3398 = vmatpush2.bf16.msra.mxu0 0
    %3399 = vmatprep.subr.bf16.mxu0 0
    %3400 = vmatpush2.bf16.msra.mxu0 0
    %3401 = vmatprep.subr.bf16.mxu0 0
    %3402 = vmatpush2.bf16.msra.mxu0 0
    %3403 = vmatprep.subr.bf16.mxu0 0
    %3404 = vmatpush2.bf16.msra.mxu0 0
    %3405 = vmatprep.mubr.bf16.mxu0 0
    %3406 = vmatmul.mubr.bf16.gmra.mxu0 %v3372
    %v3407 = vpop.f32.mrf.mxu0
    %v3408 = vadd.f32 %v1300, %v3407
    %v3409 = vpop.f32.mrf.mxu0
    %v3410 = vadd.f32 %v1304, %v3409
    %v3411 = vpop.f32.mrf.mxu0
    %v3412 = vpop.f32.mrf.mxu0
    %3413 = vdwg.mxu0
    %3414 = vmatprep.subr.bf16.mxu0 0
    %3415 = vmatpush1.bf16.msra.mxu0 %v1932
    %3416 = vmatprep.subr.bf16.mxu0 0
    %3417 = vmatpush1.bf16.msra.mxu0 %v1929
    %3418 = vmatprep.subr.bf16.mxu0 0
    %3419 = vmatpush1.bf16.msra.mxu0 %v1926
    %3420 = vmatprep.subr.bf16.mxu0 0
    %3421 = vmatpush1.bf16.msra.mxu0 %v1923
    %3422 = vmatprep.subr.bf16.mxu0 0
    %3423 = vmatpush1.bf16.msra.mxu0 %v1920
    %3424 = vmatprep.subr.bf16.mxu0 0
    %3425 = vmatpush1.bf16.msra.mxu0 %v1917
    %3426 = vmatprep.subr.bf16.mxu0 0
    %3427 = vmatpush1.bf16.msra.mxu0 %v1914
    %3428 = vmatprep.subr.bf16.mxu0 0
    %3429 = vmatpush1.bf16.msra.mxu0 %v1911
    %3430 = vmatprep.subr.bf16.mxu0 0
    %3431 = vmatpush2.bf16.msra.mxu0 0
    %3432 = vmatprep.subr.bf16.mxu0 0
    %3433 = vmatpush2.bf16.msra.mxu0 0
    %3434 = vmatprep.subr.bf16.mxu0 0
    %3435 = vmatpush2.bf16.msra.mxu0 0
    %3436 = vmatprep.subr.bf16.mxu0 0
    %3437 = vmatpush2.bf16.msra.mxu0 0
    %3438 = vmatprep.subr.bf16.mxu0 0
    %3439 = vmatpush2.bf16.msra.mxu0 0
    %3440 = vmatprep.subr.bf16.mxu0 0
    %3441 = vmatpush2.bf16.msra.mxu0 0
    %3442 = vmatprep.subr.bf16.mxu0 0
    %3443 = vmatpush2.bf16.msra.mxu0 0
    %3444 = vmatprep.subr.bf16.mxu0 0
    %3445 = vmatpush2.bf16.msra.mxu0 0
    %3446 = vmatprep.mubr.bf16.mxu0 0
    %3447 = vmatmul.mubr.bf16.gmra.mxu0 %v3372
    %v3448 = vpop.f32.mrf.mxu0
    %v3449 = vadd.f32 %v1308, %v3448
    %v3450 = vpop.f32.mrf.mxu0
    %v3451 = vpop.f32.mrf.mxu0
    %v3452 = vpop.f32.mrf.mxu0
    %3453 = vdwg.mxu0
    %v3454 = vadd.f32 %v3326, %v3408
    %v3455 = vxor.u32 %v3454, 2147483648
    %v3456 = vmul.f32 %v3455, 1.442695
    %v3457 = vpow.pop %v3456
    %v3458 = vadd.f32 %v3457, 1.0
    %v3459 = vrcp.pop %v3458
    %v3460 = vmul.f32 1.0, %v3459
    %v3461 = vadd.f32 %v3328, %v3410
    %v3462 = vxor.u32 %v3461, 2147483648
    %v3463 = vmul.f32 %v3462, 1.442695
    %v3464 = vpow.pop %v3463
    %v3465 = vadd.f32 %v3464, 1.0
    %v3466 = vrcp.pop %v3465
    %v3467 = vmul.f32 1.0, %v3466
    %v3468 = vmul.f32 %v3460, %v3449
    %v3469 = vadd.f32 %v3367, %v3468
    %v3470 = vtanh.pop %v3469
    %v3471 = vsub.f32 1.0, %v3467
    %v3472 = vmul.f32 %v3471, %v3470
    %v3473 = vmul.f32 %v3467, %v3289
    %v3474 = vadd.f32 %v3472, %v3473
    %s3475 = scalar_lea.vmem %s0, 40
    %v3476 = vld [vmem:[%s3475] sm:$0xff]
    %s3477 = scalar_lea.vmem %s0, 168
    %v3478 = vld [vmem:[%s3477] sm:$0xff]
    %s3479 = scalar_lea.vmem [#allocation4], 40
    %v3480 = vld [vmem:[%s3479] sm:$0xff]
    %s3481 = scalar_lea.vmem [#allocation5], 40
    %v3482 = vld [vmem:[%s3481] sm:$0xff]
    %s3483 = scalar_lea.vmem [#allocation6], 120
    %v3484 = vld [vmem:[%s3483] sm:$0xff]
    %v3485 = vld [vmem:[%s3483 + $0x8] sm:$0xff]
    %v3486 = vld [vmem:[%s3483 + $0x10] sm:$0xff]
    %s3487 = scalar_lea.vmem [#allocation7], 40
    %v3488 = vld [vmem:[%s3487] sm:$0xff]
    %s3489 = scalar_lea.vmem [#allocation8], 40
    %v3490 = vld [vmem:[%s3489] sm:$0xff]
    %v3491 = vmul.f32 %v3478, %v3476
    %v3492 = vsub.f32 1.0, %v3478
    %v3493 = vpack.c.bf16 %v3474, %v3474
    %3494 = vmatprep.subr.bf16.mxu0 0
    %3495 = vmatpush1.bf16.msra.mxu0 %v1365
    %3496 = vmatprep.subr.bf16.mxu0 0
    %3497 = vmatpush1.bf16.msra.mxu0 %v1364
    %3498 = vmatprep.subr.bf16.mxu0 0
    %3499 = vmatpush1.bf16.msra.mxu0 %v1363
    %3500 = vmatprep.subr.bf16.mxu0 0
    %3501 = vmatpush1.bf16.msra.mxu0 %v1362
    %3502 = vmatprep.subr.bf16.mxu0 0
    %3503 = vmatpush1.bf16.msra.mxu0 %v1361
    %3504 = vmatprep.subr.bf16.mxu0 0
    %3505 = vmatpush1.bf16.msra.mxu0 %v1360
    %3506 = vmatprep.subr.bf16.mxu0 0
    %3507 = vmatpush1.bf16.msra.mxu0 %v1359
    %3508 = vmatprep.subr.bf16.mxu0 0
    %3509 = vmatpush1.bf16.msra.mxu0 %v1358
    %3510 = vmatprep.subr.bf16.mxu0 0
    %3511 = vmatpush2.bf16.msra.mxu0 0
    %3512 = vmatprep.subr.bf16.mxu0 0
    %3513 = vmatpush2.bf16.msra.mxu0 0
    %3514 = vmatprep.subr.bf16.mxu0 0
    %3515 = vmatpush2.bf16.msra.mxu0 0
    %3516 = vmatprep.subr.bf16.mxu0 0
    %3517 = vmatpush2.bf16.msra.mxu0 0
    %3518 = vmatprep.subr.bf16.mxu0 0
    %3519 = vmatpush2.bf16.msra.mxu0 0
    %3520 = vmatprep.subr.bf16.mxu0 0
    %3521 = vmatpush2.bf16.msra.mxu0 0
    %3522 = vmatprep.subr.bf16.mxu0 0
    %3523 = vmatpush2.bf16.msra.mxu0 0
    %3524 = vmatprep.subr.bf16.mxu0 0
    %3525 = vmatpush2.bf16.msra.mxu0 0
    %3526 = vmatprep.mubr.bf16.mxu0 0
    %3527 = vmatmul.mubr.bf16.gmra.mxu0 %v3493
    %v3528 = vpop.f32.mrf.mxu0
    %v3529 = vadd.f32 %v1286, %v3528
    %v3530 = vpop.f32.mrf.mxu0
    %v3531 = vpop.f32.mrf.mxu0
    %v3532 = vpop.f32.mrf.mxu0
    %3533 = vdwg.mxu0
    %v3534 = vmul.f32 %v3492, %v3529
    %v3535 = vadd.f32 %v3491, %v3534
    %v3536 = vpack.c.bf16 %v3535, %v3535
    %3537 = vmatprep.subr.bf16.mxu0 0
    %3538 = vmatpush1.bf16.msra.mxu0 %v1456
    %3539 = vmatprep.subr.bf16.mxu0 0
    %3540 = vmatpush1.bf16.msra.mxu0 %v1455
    %3541 = vmatprep.subr.bf16.mxu0 0
    %3542 = vmatpush1.bf16.msra.mxu0 %v1454
    %3543 = vmatprep.subr.bf16.mxu0 0
    %3544 = vmatpush1.bf16.msra.mxu0 %v1453
    %3545 = vmatprep.subr.bf16.mxu0 0
    %3546 = vmatpush1.bf16.msra.mxu0 %v1452
    %3547 = vmatprep.subr.bf16.mxu0 0
    %3548 = vmatpush1.bf16.msra.mxu0 %v1451
    %3549 = vmatprep.subr.bf16.mxu0 0
    %3550 = vmatpush1.bf16.msra.mxu0 %v1450
    %3551 = vmatprep.subr.bf16.mxu0 0
    %3552 = vmatpush1.bf16.msra.mxu0 %v1449
    %3553 = vmatprep.subr.bf16.mxu0 0
    %3554 = vmatpush2.bf16.msra.mxu0 0
    %3555 = vmatprep.subr.bf16.mxu0 0
    %3556 = vmatpush2.bf16.msra.mxu0 0
    %3557 = vmatprep.subr.bf16.mxu0 0
    %3558 = vmatpush2.bf16.msra.mxu0 0
    %3559 = vmatprep.subr.bf16.mxu0 0
    %3560 = vmatpush2.bf16.msra.mxu0 0
    %3561 = vmatprep.subr.bf16.mxu0 0
    %3562 = vmatpush2.bf16.msra.mxu0 0
    %3563 = vmatprep.subr.bf16.mxu0 0
    %3564 = vmatpush2.bf16.msra.mxu0 0
    %3565 = vmatprep.subr.bf16.mxu0 0
    %3566 = vmatpush2.bf16.msra.mxu0 0
    %3567 = vmatprep.subr.bf16.mxu0 0
    %3568 = vmatpush2.bf16.msra.mxu0 0
    %3569 = vmatprep.mubr.bf16.mxu0 0
    %3570 = vmatmul.mubr.bf16.gmra.mxu0 %v3536
    %v3571 = vpop.f32.mrf.mxu0
    %v3572 = vadd.f32 %v3488, %v3571
    %v3573 = vpop.f32.mrf.mxu0
    %v3574 = vpop.f32.mrf.mxu0
    %v3575 = vpop.f32.mrf.mxu0
    %3576 = vdwg.mxu0
    %v3577 = vmul.f32 %v3492, %v3572
    %v3578 = vadd.f32 %v3491, %v3577
    %v3579 = vpack.c.bf16 %v3578, %v3578
    %3580 = vmatprep.subr.bf16.mxu0 0
    %3581 = vmatpush1.bf16.msra.mxu0 %v1547
    %3582 = vmatprep.subr.bf16.mxu0 0
    %3583 = vmatpush1.bf16.msra.mxu0 %v1546
    %3584 = vmatprep.subr.bf16.mxu0 0
    %3585 = vmatpush1.bf16.msra.mxu0 %v1545
    %3586 = vmatprep.subr.bf16.mxu0 0
    %3587 = vmatpush1.bf16.msra.mxu0 %v1544
    %3588 = vmatprep.subr.bf16.mxu0 0
    %3589 = vmatpush1.bf16.msra.mxu0 %v1543
    %3590 = vmatprep.subr.bf16.mxu0 0
    %3591 = vmatpush1.bf16.msra.mxu0 %v1542
    %3592 = vmatprep.subr.bf16.mxu0 0
    %3593 = vmatpush1.bf16.msra.mxu0 %v1541
    %3594 = vmatprep.subr.bf16.mxu0 0
    %3595 = vmatpush1.bf16.msra.mxu0 %v1540
    %3596 = vmatprep.subr.bf16.mxu0 0
    %3597 = vmatpush2.bf16.msra.mxu0 0
    %3598 = vmatprep.subr.bf16.mxu0 0
    %3599 = vmatpush2.bf16.msra.mxu0 0
    %3600 = vmatprep.subr.bf16.mxu0 0
    %3601 = vmatpush2.bf16.msra.mxu0 0
    %3602 = vmatprep.subr.bf16.mxu0 0
    %3603 = vmatpush2.bf16.msra.mxu0 0
    %3604 = vmatprep.subr.bf16.mxu0 0
    %3605 = vmatpush2.bf16.msra.mxu0 0
    %3606 = vmatprep.subr.bf16.mxu0 0
    %3607 = vmatpush2.bf16.msra.mxu0 0
    %3608 = vmatprep.subr.bf16.mxu0 0
    %3609 = vmatpush2.bf16.msra.mxu0 0
    %3610 = vmatprep.subr.bf16.mxu0 0
    %3611 = vmatpush2.bf16.msra.mxu0 0
    %3612 = vmatprep.mubr.bf16.mxu0 0
    %3613 = vmatmul.mubr.bf16.gmra.mxu0 %v3579
    %v3614 = vpop.f32.mrf.mxu0
    %v3615 = vadd.f32 %v1293, %v3614
    %v3616 = vpop.f32.mrf.mxu0
    %v3617 = vpop.f32.mrf.mxu0
    %v3618 = vpop.f32.mrf.mxu0
    %3619 = vdwg.mxu0
    %v3620 = vmul.f32 %v3482, %v3615
    %v3621 = vsub.f32 1.0, %v3482
    %v3622 = vmul.f32 %v3621, %v3529
    %v3623 = vadd.f32 %v3620, %v3622
    %v3624 = vmul.f32 %v3492, %v3623
    %v3625 = vadd.f32 %v3491, %v3624
    %v3626 = vsub.f32 %v3476, %v3529
    %v3627 = vand.u32 2147483647, %v3626
    %v3628 = vsub.f32 %v3476, %v3572
    %v3629 = vand.u32 2147483647, %v3628
    %v3630 = vadd.f32 %v3627, %v3629
    %v3631 = vsub.f32 %v3476, %v3615
    %v3632 = vand.u32 2147483647, %v3631
    %v3633 = vadd.f32 %v3630, %v3632
    %v3634 = vsub.f32 %v3476, %v3623
    %v3635 = vand.u32 2147483647, %v3634
    %v3636 = vadd.f32 %v3633, %v3635
    %v3637 = vmul.f32 %v3636, %v3490
    %v3638 = vadd.f32 %v3284, %v3637
    %s3639 = scalar_lea.vmem %s16, 40
    %3640 = vst [vmem:[%s3639] sm:$0xff] %v3623
    %s3641 = scalar_lea.vmem %s17, 40
    %3642 = vst [vmem:[%s3641] sm:$0xff] %v3625
    %v3643 = vmul.f32 %v3474, %v3480
    %v3644 = vpack.c.bf16 %v3625, %v3625
    %3645 = vmatprep.subr.bf16.mxu0 %v1721
    %3646 = vmatpush1.bf16.msra.mxu0 %v1720
    %3647 = vmatprep.subr.bf16.mxu0 %v1718
    %3648 = vmatpush1.bf16.msra.mxu0 %v1717
    %3649 = vmatprep.subr.bf16.mxu0 %v1715
    %3650 = vmatpush1.bf16.msra.mxu0 %v1714
    %3651 = vmatprep.subr.bf16.mxu0 %v1712
    %3652 = vmatpush1.bf16.msra.mxu0 %v1711
    %3653 = vmatprep.subr.bf16.mxu0 %v1709
    %3654 = vmatpush1.bf16.msra.mxu0 %v1708
    %3655 = vmatprep.subr.bf16.mxu0 %v1706
    %3656 = vmatpush1.bf16.msra.mxu0 %v1705
    %3657 = vmatprep.subr.bf16.mxu0 %v1703
    %3658 = vmatpush1.bf16.msra.mxu0 %v1702
    %3659 = vmatprep.subr.bf16.mxu0 %v1700
    %3660 = vmatpush1.bf16.msra.mxu0 %v1699
    %3661 = vmatprep.subr.bf16.mxu0 0
    %3662 = vmatpush2.bf16.msra.mxu0 0
    %3663 = vmatprep.subr.bf16.mxu0 0
    %3664 = vmatpush2.bf16.msra.mxu0 0
    %3665 = vmatprep.subr.bf16.mxu0 0
    %3666 = vmatpush2.bf16.msra.mxu0 0
    %3667 = vmatprep.subr.bf16.mxu0 0
    %3668 = vmatpush2.bf16.msra.mxu0 0
    %3669 = vmatprep.subr.bf16.mxu0 0
    %3670 = vmatpush2.bf16.msra.mxu0 0
    %3671 = vmatprep.subr.bf16.mxu0 0
    %3672 = vmatpush2.bf16.msra.mxu0 0
    %3673 = vmatprep.subr.bf16.mxu0 0
    %3674 = vmatpush2.bf16.msra.mxu0 0
    %3675 = vmatprep.subr.bf16.mxu0 0
    %3676 = vmatpush2.bf16.msra.mxu0 0
    %3677 = vmatprep.mubr.bf16.mxu0 0
    %3678 = vmatmul.mubr.bf16.gmra.mxu0 %v3644
    %v3679 = vpop.f32.mrf.mxu0
    %v3680 = vadd.f32 %v3484, %v3679
    %v3681 = vpop.f32.mrf.mxu0
    %v3682 = vadd.f32 %v3485, %v3681
    %v3683 = vpop.f32.mrf.mxu0
    %v3684 = vpop.f32.mrf.mxu0
    %3685 = vdwg.mxu0
    %3686 = vmatprep.subr.bf16.mxu0 0
    %3687 = vmatpush1.bf16.msra.mxu0 %v1722
    %3688 = vmatprep.subr.bf16.mxu0 0
    %3689 = vmatpush1.bf16.msra.mxu0 %v1719
    %3690 = vmatprep.subr.bf16.mxu0 0
    %3691 = vmatpush1.bf16.msra.mxu0 %v1716
    %3692 = vmatprep.subr.bf16.mxu0 0
    %3693 = vmatpush1.bf16.msra.mxu0 %v1713
    %3694 = vmatprep.subr.bf16.mxu0 0
    %3695 = vmatpush1.bf16.msra.mxu0 %v1710
    %3696 = vmatprep.subr.bf16.mxu0 0
    %3697 = vmatpush1.bf16.msra.mxu0 %v1707
    %3698 = vmatprep.subr.bf16.mxu0 0
    %3699 = vmatpush1.bf16.msra.mxu0 %v1704
    %3700 = vmatprep.subr.bf16.mxu0 0
    %3701 = vmatpush1.bf16.msra.mxu0 %v1701
    %3702 = vmatprep.subr.bf16.mxu0 0
    %3703 = vmatpush2.bf16.msra.mxu0 0
    %3704 = vmatprep.subr.bf16.mxu0 0
    %3705 = vmatpush2.bf16.msra.mxu0 0
    %3706 = vmatprep.subr.bf16.mxu0 0
    %3707 = vmatpush2.bf16.msra.mxu0 0
    %3708 = vmatprep.subr.bf16.mxu0 0
    %3709 = vmatpush2.bf16.msra.mxu0 0
    %3710 = vmatprep.subr.bf16.mxu0 0
    %3711 = vmatpush2.bf16.msra.mxu0 0
    %3712 = vmatprep.subr.bf16.mxu0 0
    %3713 = vmatpush2.bf16.msra.mxu0 0
    %3714 = vmatprep.subr.bf16.mxu0 0
    %3715 = vmatpush2.bf16.msra.mxu0 0
    %3716 = vmatprep.subr.bf16.mxu0 0
    %3717 = vmatpush2.bf16.msra.mxu0 0
    %3718 = vmatprep.mubr.bf16.mxu0 0
    %3719 = vmatmul.mubr.bf16.gmra.mxu0 %v3644
    %v3720 = vpop.f32.mrf.mxu0
    %v3721 = vadd.f32 %v3486, %v3720
    %v3722 = vpop.f32.mrf.mxu0
    %v3723 = vpop.f32.mrf.mxu0
    %v3724 = vpop.f32.mrf.mxu0
    %3725 = vdwg.mxu0
    %v3726 = vpack.c.bf16 %v3643, %v3643
    %3727 = vmatprep.subr.bf16.mxu0 %v1931
    %3728 = vmatpush1.bf16.msra.mxu0 %v1930
    %3729 = vmatprep.subr.bf16.mxu0 %v1928
    %3730 = vmatpush1.bf16.msra.mxu0 %v1927
    %3731 = vmatprep.subr.bf16.mxu0 %v1925
    %3732 = vmatpush1.bf16.msra.mxu0 %v1924
    %3733 = vmatprep.subr.bf16.mxu0 %v1922
    %3734 = vmatpush1.bf16.msra.mxu0 %v1921
    %3735 = vmatprep.subr.bf16.mxu0 %v1919
    %3736 = vmatpush1.bf16.msra.mxu0 %v1918
    %3737 = vmatprep.subr.bf16.mxu0 %v1916
    %3738 = vmatpush1.bf16.msra.mxu0 %v1915
    %3739 = vmatprep.subr.bf16.mxu0 %v1913
    %3740 = vmatpush1.bf16.msra.mxu0 %v1912
    %3741 = vmatprep.subr.bf16.mxu0 %v1910
    %3742 = vmatpush1.bf16.msra.mxu0 %v1909
    %3743 = vmatprep.subr.bf16.mxu0 0
    %3744 = vmatpush2.bf16.msra.mxu0 0
    %3745 = vmatprep.subr.bf16.mxu0 0
    %3746 = vmatpush2.bf16.msra.mxu0 0
    %3747 = vmatprep.subr.bf16.mxu0 0
    %3748 = vmatpush2.bf16.msra.mxu0 0
    %3749 = vmatprep.subr.bf16.mxu0 0
    %3750 = vmatpush2.bf16.msra.mxu0 0
    %3751 = vmatprep.subr.bf16.mxu0 0
    %3752 = vmatpush2.bf16.msra.mxu0 0
    %3753 = vmatprep.subr.bf16.mxu0 0
    %3754 = vmatpush2.bf16.msra.mxu0 0
    %3755 = vmatprep.subr.bf16.mxu0 0
    %3756 = vmatpush2.bf16.msra.mxu0 0
    %3757 = vmatprep.subr.bf16.mxu0 0
    %3758 = vmatpush2.bf16.msra.mxu0 0
    %3759 = vmatprep.mubr.bf16.mxu0 0
    %3760 = vmatmul.mubr.bf16.gmra.mxu0 %v3726
    %v3761 = vpop.f32.mrf.mxu0
    %v3762 = vadd.f32 %v1300, %v3761
    %v3763 = vpop.f32.mrf.mxu0
    %v3764 = vadd.f32 %v1304, %v3763
    %v3765 = vpop.f32.mrf.mxu0
    %v3766 = vpop.f32.mrf.mxu0
    %3767 = vdwg.mxu0
    %3768 = vmatprep.subr.bf16.mxu0 0
    %3769 = vmatpush1.bf16.msra.mxu0 %v1932
    %3770 = vmatprep.subr.bf16.mxu0 0
    %3771 = vmatpush1.bf16.msra.mxu0 %v1929
    %3772 = vmatprep.subr.bf16.mxu0 0
    %3773 = vmatpush1.bf16.msra.mxu0 %v1926
    %3774 = vmatprep.subr.bf16.mxu0 0
    %3775 = vmatpush1.bf16.msra.mxu0 %v1923
    %3776 = vmatprep.subr.bf16.mxu0 0
    %3777 = vmatpush1.bf16.msra.mxu0 %v1920
    %3778 = vmatprep.subr.bf16.mxu0 0
    %3779 = vmatpush1.bf16.msra.mxu0 %v1917
    %3780 = vmatprep.subr.bf16.mxu0 0
    %3781 = vmatpush1.bf16.msra.mxu0 %v1914
    %3782 = vmatprep.subr.bf16.mxu0 0
    %3783 = vmatpush1.bf16.msra.mxu0 %v1911
    %3784 = vmatprep.subr.bf16.mxu0 0
    %3785 = vmatpush2.bf16.msra.mxu0 0
    %3786 = vmatprep.subr.bf16.mxu0 0
    %3787 = vmatpush2.bf16.msra.mxu0 0
    %3788 = vmatprep.subr.bf16.mxu0 0
    %3789 = vmatpush2.bf16.msra.mxu0 0
    %3790 = vmatprep.subr.bf16.mxu0 0
    %3791 = vmatpush2.bf16.msra.mxu0 0
    %3792 = vmatprep.subr.bf16.mxu0 0
    %3793 = vmatpush2.bf16.msra.mxu0 0
    %3794 = vmatprep.subr.bf16.mxu0 0
    %3795 = vmatpush2.bf16.msra.mxu0 0
    %3796 = vmatprep.subr.bf16.mxu0 0
    %3797 = vmatpush2.bf16.msra.mxu0 0
    %3798 = vmatprep.subr.bf16.mxu0 0
    %3799 = vmatpush2.bf16.msra.mxu0 0
    %3800 = vmatprep.mubr.bf16.mxu0 0
    %3801 = vmatmul.mubr.bf16.gmra.mxu0 %v3726
    %v3802 = vpop.f32.mrf.mxu0
    %v3803 = vadd.f32 %v1308, %v3802
    %v3804 = vpop.f32.mrf.mxu0
    %v3805 = vpop.f32.mrf.mxu0
    %v3806 = vpop.f32.mrf.mxu0
    %3807 = vdwg.mxu0
    %v3808 = vadd.f32 %v3680, %v3762
    %v3809 = vxor.u32 %v3808, 2147483648
    %v3810 = vmul.f32 %v3809, 1.442695
    %v3811 = vpow.pop %v3810
    %v3812 = vadd.f32 %v3811, 1.0
    %v3813 = vrcp.pop %v3812
    %v3814 = vmul.f32 1.0, %v3813
    %v3815 = vadd.f32 %v3682, %v3764
    %v3816 = vxor.u32 %v3815, 2147483648
    %v3817 = vmul.f32 %v3816, 1.442695
    %v3818 = vpow.pop %v3817
    %v3819 = vadd.f32 %v3818, 1.0
    %v3820 = vrcp.pop %v3819
    %v3821 = vmul.f32 1.0, %v3820
    %v3822 = vmul.f32 %v3814, %v3803
    %v3823 = vadd.f32 %v3721, %v3822
    %v3824 = vtanh.pop %v3823
    %v3825 = vsub.f32 1.0, %v3821
    %v3826 = vmul.f32 %v3825, %v3824
    %v3827 = vmul.f32 %v3821, %v3643
    %v3828 = vadd.f32 %v3826, %v3827
    %s3829 = scalar_lea.vmem %s0, 48
    %v3830 = vld [vmem:[%s3829] sm:$0xff]
    %s3831 = scalar_lea.vmem %s0, 176
    %v3832 = vld [vmem:[%s3831] sm:$0xff]
    %s3833 = scalar_lea.vmem [#allocation4], 48
    %v3834 = vld [vmem:[%s3833] sm:$0xff]
    %s3835 = scalar_lea.vmem [#allocation5], 48
    %v3836 = vld [vmem:[%s3835] sm:$0xff]
    %s3837 = scalar_lea.vmem [#allocation6], 144
    %v3838 = vld [vmem:[%s3837] sm:$0xff]
    %v3839 = vld [vmem:[%s3837 + $0x8] sm:$0xff]
    %v3840 = vld [vmem:[%s3837 + $0x10] sm:$0xff]
    %s3841 = scalar_lea.vmem [#allocation7], 48
    %v3842 = vld [vmem:[%s3841] sm:$0xff]
    %s3843 = scalar_lea.vmem [#allocation8], 48
    %v3844 = vld [vmem:[%s3843] sm:$0xff]
    %v3845 = vmul.f32 %v3832, %v3830
    %v3846 = vsub.f32 1.0, %v3832
    %v3847 = vpack.c.bf16 %v3828, %v3828
    %3848 = vmatprep.subr.bf16.mxu0 0
    %3849 = vmatpush1.bf16.msra.mxu0 %v1365
    %3850 = vmatprep.subr.bf16.mxu0 0
    %3851 = vmatpush1.bf16.msra.mxu0 %v1364
    %3852 = vmatprep.subr.bf16.mxu0 0
    %3853 = vmatpush1.bf16.msra.mxu0 %v1363
    %3854 = vmatprep.subr.bf16.mxu0 0
    %3855 = vmatpush1.bf16.msra.mxu0 %v1362
    %3856 = vmatprep.subr.bf16.mxu0 0
    %3857 = vmatpush1.bf16.msra.mxu0 %v1361
    %3858 = vmatprep.subr.bf16.mxu0 0
    %3859 = vmatpush1.bf16.msra.mxu0 %v1360
    %3860 = vmatprep.subr.bf16.mxu0 0
    %3861 = vmatpush1.bf16.msra.mxu0 %v1359
    %3862 = vmatprep.subr.bf16.mxu0 0
    %3863 = vmatpush1.bf16.msra.mxu0 %v1358
    %3864 = vmatprep.subr.bf16.mxu0 0
    %3865 = vmatpush2.bf16.msra.mxu0 0
    %3866 = vmatprep.subr.bf16.mxu0 0
    %3867 = vmatpush2.bf16.msra.mxu0 0
    %3868 = vmatprep.subr.bf16.mxu0 0
    %3869 = vmatpush2.bf16.msra.mxu0 0
    %3870 = vmatprep.subr.bf16.mxu0 0
    %3871 = vmatpush2.bf16.msra.mxu0 0
    %3872 = vmatprep.subr.bf16.mxu0 0
    %3873 = vmatpush2.bf16.msra.mxu0 0
    %3874 = vmatprep.subr.bf16.mxu0 0
    %3875 = vmatpush2.bf16.msra.mxu0 0
    %3876 = vmatprep.subr.bf16.mxu0 0
    %3877 = vmatpush2.bf16.msra.mxu0 0
    %3878 = vmatprep.subr.bf16.mxu0 0
    %3879 = vmatpush2.bf16.msra.mxu0 0
    %3880 = vmatprep.mubr.bf16.mxu0 0
    %3881 = vmatmul.mubr.bf16.gmra.mxu0 %v3847
    %v3882 = vpop.f32.mrf.mxu0
    %v3883 = vadd.f32 %v1286, %v3882
    %v3884 = vpop.f32.mrf.mxu0
    %v3885 = vpop.f32.mrf.mxu0
    %v3886 = vpop.f32.mrf.mxu0
    %3887 = vdwg.mxu0
    %v3888 = vmul.f32 %v3846, %v3883
    %v3889 = vadd.f32 %v3845, %v3888
    %v3890 = vpack.c.bf16 %v3889, %v3889
    %3891 = vmatprep.subr.bf16.mxu0 0
    %3892 = vmatpush1.bf16.msra.mxu0 %v1456
    %3893 = vmatprep.subr.bf16.mxu0 0
    %3894 = vmatpush1.bf16.msra.mxu0 %v1455
    %3895 = vmatprep.subr.bf16.mxu0 0
    %3896 = vmatpush1.bf16.msra.mxu0 %v1454
    %3897 = vmatprep.subr.bf16.mxu0 0
    %3898 = vmatpush1.bf16.msra.mxu0 %v1453
    %3899 = vmatprep.subr.bf16.mxu0 0
    %3900 = vmatpush1.bf16.msra.mxu0 %v1452
    %3901 = vmatprep.subr.bf16.mxu0 0
    %3902 = vmatpush1.bf16.msra.mxu0 %v1451
    %3903 = vmatprep.subr.bf16.mxu0 0
    %3904 = vmatpush1.bf16.msra.mxu0 %v1450
    %3905 = vmatprep.subr.bf16.mxu0 0
    %3906 = vmatpush1.bf16.msra.mxu0 %v1449
    %3907 = vmatprep.subr.bf16.mxu0 0
    %3908 = vmatpush2.bf16.msra.mxu0 0
    %3909 = vmatprep.subr.bf16.mxu0 0
    %3910 = vmatpush2.bf16.msra.mxu0 0
    %3911 = vmatprep.subr.bf16.mxu0 0
    %3912 = vmatpush2.bf16.msra.mxu0 0
    %3913 = vmatprep.subr.bf16.mxu0 0
    %3914 = vmatpush2.bf16.msra.mxu0 0
    %3915 = vmatprep.subr.bf16.mxu0 0
    %3916 = vmatpush2.bf16.msra.mxu0 0
    %3917 = vmatprep.subr.bf16.mxu0 0
    %3918 = vmatpush2.bf16.msra.mxu0 0
    %3919 = vmatprep.subr.bf16.mxu0 0
    %3920 = vmatpush2.bf16.msra.mxu0 0
    %3921 = vmatprep.subr.bf16.mxu0 0
    %3922 = vmatpush2.bf16.msra.mxu0 0
    %3923 = vmatprep.mubr.bf16.mxu0 0
    %3924 = vmatmul.mubr.bf16.gmra.mxu0 %v3890
    %v3925 = vpop.f32.mrf.mxu0
    %v3926 = vadd.f32 %v3842, %v3925
    %v3927 = vpop.f32.mrf.mxu0
    %v3928 = vpop.f32.mrf.mxu0
    %v3929 = vpop.f32.mrf.mxu0
    %3930 = vdwg.mxu0
    %v3931 = vmul.f32 %v3846, %v3926
    %v3932 = vadd.f32 %v3845, %v3931
    %v3933 = vpack.c.bf16 %v3932, %v3932
    %3934 = vmatprep.subr.bf16.mxu0 0
    %3935 = vmatpush1.bf16.msra.mxu0 %v1547
    %3936 = vmatprep.subr.bf16.mxu0 0
    %3937 = vmatpush1.bf16.msra.mxu0 %v1546
    %3938 = vmatprep.subr.bf16.mxu0 0
    %3939 = vmatpush1.bf16.msra.mxu0 %v1545
    %3940 = vmatprep.subr.bf16.mxu0 0
    %3941 = vmatpush1.bf16.msra.mxu0 %v1544
    %3942 = vmatprep.subr.bf16.mxu0 0
    %3943 = vmatpush1.bf16.msra.mxu0 %v1543
    %3944 = vmatprep.subr.bf16.mxu0 0
    %3945 = vmatpush1.bf16.msra.mxu0 %v1542
    %3946 = vmatprep.subr.bf16.mxu0 0
    %3947 = vmatpush1.bf16.msra.mxu0 %v1541
    %3948 = vmatprep.subr.bf16.mxu0 0
    %3949 = vmatpush1.bf16.msra.mxu0 %v1540
    %3950 = vmatprep.subr.bf16.mxu0 0
    %3951 = vmatpush2.bf16.msra.mxu0 0
    %3952 = vmatprep.subr.bf16.mxu0 0
    %3953 = vmatpush2.bf16.msra.mxu0 0
    %3954 = vmatprep.subr.bf16.mxu0 0
    %3955 = vmatpush2.bf16.msra.mxu0 0
    %3956 = vmatprep.subr.bf16.mxu0 0
    %3957 = vmatpush2.bf16.msra.mxu0 0
    %3958 = vmatprep.subr.bf16.mxu0 0
    %3959 = vmatpush2.bf16.msra.mxu0 0
    %3960 = vmatprep.subr.bf16.mxu0 0
    %3961 = vmatpush2.bf16.msra.mxu0 0
    %3962 = vmatprep.subr.bf16.mxu0 0
    %3963 = vmatpush2.bf16.msra.mxu0 0
    %3964 = vmatprep.subr.bf16.mxu0 0
    %3965 = vmatpush2.bf16.msra.mxu0 0
    %3966 = vmatprep.mubr.bf16.mxu0 0
    %3967 = vmatmul.mubr.bf16.gmra.mxu0 %v3933
    %v3968 = vpop.f32.mrf.mxu0
    %v3969 = vadd.f32 %v1293, %v3968
    %v3970 = vpop.f32.mrf.mxu0
    %v3971 = vpop.f32.mrf.mxu0
    %v3972 = vpop.f32.mrf.mxu0
    %3973 = vdwg.mxu0
    %v3974 = vmul.f32 %v3836, %v3969
    %v3975 = vsub.f32 1.0, %v3836
    %v3976 = vmul.f32 %v3975, %v3883
    %v3977 = vadd.f32 %v3974, %v3976
    %v3978 = vmul.f32 %v3846, %v3977
    %v3979 = vadd.f32 %v3845, %v3978
    %v3980 = vsub.f32 %v3830, %v3883
    %v3981 = vand.u32 2147483647, %v3980
    %v3982 = vsub.f32 %v3830, %v3926
    %v3983 = vand.u32 2147483647, %v3982
    %v3984 = vadd.f32 %v3981, %v3983
    %v3985 = vsub.f32 %v3830, %v3969
    %v3986 = vand.u32 2147483647, %v3985
    %v3987 = vadd.f32 %v3984, %v3986
    %v3988 = vsub.f32 %v3830, %v3977
    %v3989 = vand.u32 2147483647, %v3988
    %v3990 = vadd.f32 %v3987, %v3989
    %v3991 = vmul.f32 %v3990, %v3844
    %v3992 = vadd.f32 %v3638, %v3991
    %s3993 = scalar_lea.vmem %s16, 48
    %3994 = vst [vmem:[%s3993] sm:$0xff] %v3977
    %s3995 = scalar_lea.vmem %s17, 48
    %3996 = vst [vmem:[%s3995] sm:$0xff] %v3979
    %v3997 = vmul.f32 %v3828, %v3834
    %v3998 = vpack.c.bf16 %v3979, %v3979
    %3999 = vmatprep.subr.bf16.mxu0 %v1721
    %4000 = vmatpush1.bf16.msra.mxu0 %v1720
    %4001 = vmatprep.subr.bf16.mxu0 %v1718
    %4002 = vmatpush1.bf16.msra.mxu0 %v1717
    %4003 = vmatprep.subr.bf16.mxu0 %v1715
    %4004 = vmatpush1.bf16.msra.mxu0 %v1714
    %4005 = vmatprep.subr.bf16.mxu0 %v1712
    %4006 = vmatpush1.bf16.msra.mxu0 %v1711
    %4007 = vmatprep.subr.bf16.mxu0 %v1709
    %4008 = vmatpush1.bf16.msra.mxu0 %v1708
    %4009 = vmatprep.subr.bf16.mxu0 %v1706
    %4010 = vmatpush1.bf16.msra.mxu0 %v1705
    %4011 = vmatprep.subr.bf16.mxu0 %v1703
    %4012 = vmatpush1.bf16.msra.mxu0 %v1702
    %4013 = vmatprep.subr.bf16.mxu0 %v1700
    %4014 = vmatpush1.bf16.msra.mxu0 %v1699
    %4015 = vmatprep.subr.bf16.mxu0 0
    %4016 = vmatpush2.bf16.msra.mxu0 0
    %4017 = vmatprep.subr.bf16.mxu0 0
    %4018 = vmatpush2.bf16.msra.mxu0 0
    %4019 = vmatprep.subr.bf16.mxu0 0
    %4020 = vmatpush2.bf16.msra.mxu0 0
    %4021 = vmatprep.subr.bf16.mxu0 0
    %4022 = vmatpush2.bf16.msra.mxu0 0
    %4023 = vmatprep.subr.bf16.mxu0 0
    %4024 = vmatpush2.bf16.msra.mxu0 0
    %4025 = vmatprep.subr.bf16.mxu0 0
    %4026 = vmatpush2.bf16.msra.mxu0 0
    %4027 = vmatprep.subr.bf16.mxu0 0
    %4028 = vmatpush2.bf16.msra.mxu0 0
    %4029 = vmatprep.subr.bf16.mxu0 0
    %4030 = vmatpush2.bf16.msra.mxu0 0
    %4031 = vmatprep.mubr.bf16.mxu0 0
    %4032 = vmatmul.mubr.bf16.gmra.mxu0 %v3998
    %v4033 = vpop.f32.mrf.mxu0
    %v4034 = vadd.f32 %v3838, %v4033
    %v4035 = vpop.f32.mrf.mxu0
    %v4036 = vadd.f32 %v3839, %v4035
    %v4037 = vpop.f32.mrf.mxu0
    %v4038 = vpop.f32.mrf.mxu0
    %4039 = vdwg.mxu0
    %4040 = vmatprep.subr.bf16.mxu0 0
    %4041 = vmatpush1.bf16.msra.mxu0 %v1722
    %4042 = vmatprep.subr.bf16.mxu0 0
    %4043 = vmatpush1.bf16.msra.mxu0 %v1719
    %4044 = vmatprep.subr.bf16.mxu0 0
    %4045 = vmatpush1.bf16.msra.mxu0 %v1716
    %4046 = vmatprep.subr.bf16.mxu0 0
    %4047 = vmatpush1.bf16.msra.mxu0 %v1713
    %4048 = vmatprep.subr.bf16.mxu0 0
    %4049 = vmatpush1.bf16.msra.mxu0 %v1710
    %4050 = vmatprep.subr.bf16.mxu0 0
    %4051 = vmatpush1.bf16.msra.mxu0 %v1707
    %4052 = vmatprep.subr.bf16.mxu0 0
    %4053 = vmatpush1.bf16.msra.mxu0 %v1704
    %4054 = vmatprep.subr.bf16.mxu0 0
    %4055 = vmatpush1.bf16.msra.mxu0 %v1701
    %4056 = vmatprep.subr.bf16.mxu0 0
    %4057 = vmatpush2.bf16.msra.mxu0 0
    %4058 = vmatprep.subr.bf16.mxu0 0
    %4059 = vmatpush2.bf16.msra.mxu0 0
    %4060 = vmatprep.subr.bf16.mxu0 0
    %4061 = vmatpush2.bf16.msra.mxu0 0
    %4062 = vmatprep.subr.bf16.mxu0 0
    %4063 = vmatpush2.bf16.msra.mxu0 0
    %4064 = vmatprep.subr.bf16.mxu0 0
    %4065 = vmatpush2.bf16.msra.mxu0 0
    %4066 = vmatprep.subr.bf16.mxu0 0
    %4067 = vmatpush2.bf16.msra.mxu0 0
    %4068 = vmatprep.subr.bf16.mxu0 0
    %4069 = vmatpush2.bf16.msra.mxu0 0
    %4070 = vmatprep.subr.bf16.mxu0 0
    %4071 = vmatpush2.bf16.msra.mxu0 0
    %4072 = vmatprep.mubr.bf16.mxu0 0
    %4073 = vmatmul.mubr.bf16.gmra.mxu0 %v3998
    %v4074 = vpop.f32.mrf.mxu0
    %v4075 = vadd.f32 %v3840, %v4074
    %v4076 = vpop.f32.mrf.mxu0
    %v4077 = vpop.f32.mrf.mxu0
    %v4078 = vpop.f32.mrf.mxu0
    %4079 = vdwg.mxu0
    %v4080 = vpack.c.bf16 %v3997, %v3997
    %4081 = vmatprep.subr.bf16.mxu0 %v1931
    %4082 = vmatpush1.bf16.msra.mxu0 %v1930
    %4083 = vmatprep.subr.bf16.mxu0 %v1928
    %4084 = vmatpush1.bf16.msra.mxu0 %v1927
    %4085 = vmatprep.subr.bf16.mxu0 %v1925
    %4086 = vmatpush1.bf16.msra.mxu0 %v1924
    %4087 = vmatprep.subr.bf16.mxu0 %v1922
    %4088 = vmatpush1.bf16.msra.mxu0 %v1921
    %4089 = vmatprep.subr.bf16.mxu0 %v1919
    %4090 = vmatpush1.bf16.msra.mxu0 %v1918
    %4091 = vmatprep.subr.bf16.mxu0 %v1916
    %4092 = vmatpush1.bf16.msra.mxu0 %v1915
    %4093 = vmatprep.subr.bf16.mxu0 %v1913
    %4094 = vmatpush1.bf16.msra.mxu0 %v1912
    %4095 = vmatprep.subr.bf16.mxu0 %v1910
    %4096 = vmatpush1.bf16.msra.mxu0 %v1909
    %4097 = vmatprep.subr.bf16.mxu0 0
    %4098 = vmatpush2.bf16.msra.mxu0 0
    %4099 = vmatprep.subr.bf16.mxu0 0
    %4100 = vmatpush2.bf16.msra.mxu0 0
    %4101 = vmatprep.subr.bf16.mxu0 0
    %4102 = vmatpush2.bf16.msra.mxu0 0
    %4103 = vmatprep.subr.bf16.mxu0 0
    %4104 = vmatpush2.bf16.msra.mxu0 0
    %4105 = vmatprep.subr.bf16.mxu0 0
    %4106 = vmatpush2.bf16.msra.mxu0 0
    %4107 = vmatprep.subr.bf16.mxu0 0
    %4108 = vmatpush2.bf16.msra.mxu0 0
    %4109 = vmatprep.subr.bf16.mxu0 0
    %4110 = vmatpush2.bf16.msra.mxu0 0
    %4111 = vmatprep.subr.bf16.mxu0 0
    %4112 = vmatpush2.bf16.msra.mxu0 0
    %4113 = vmatprep.mubr.bf16.mxu0 0
    %4114 = vmatmul.mubr.bf16.gmra.mxu0 %v4080
    %v4115 = vpop.f32.mrf.mxu0
    %v4116 = vadd.f32 %v1300, %v4115
    %v4117 = vpop.f32.mrf.mxu0
    %v4118 = vadd.f32 %v1304, %v4117
    %v4119 = vpop.f32.mrf.mxu0
    %v4120 = vpop.f32.mrf.mxu0
    %4121 = vdwg.mxu0
    %4122 = vmatprep.subr.bf16.mxu0 0
    %4123 = vmatpush1.bf16.msra.mxu0 %v1932
    %4124 = vmatprep.subr.bf16.mxu0 0
    %4125 = vmatpush1.bf16.msra.mxu0 %v1929
    %4126 = vmatprep.subr.bf16.mxu0 0
    %4127 = vmatpush1.bf16.msra.mxu0 %v1926
    %4128 = vmatprep.subr.bf16.mxu0 0
    %4129 = vmatpush1.bf16.msra.mxu0 %v1923
    %4130 = vmatprep.subr.bf16.mxu0 0
    %4131 = vmatpush1.bf16.msra.mxu0 %v1920
    %4132 = vmatprep.subr.bf16.mxu0 0
    %4133 = vmatpush1.bf16.msra.mxu0 %v1917
    %4134 = vmatprep.subr.bf16.mxu0 0
    %4135 = vmatpush1.bf16.msra.mxu0 %v1914
    %4136 = vmatprep.subr.bf16.mxu0 0
    %4137 = vmatpush1.bf16.msra.mxu0 %v1911
    %4138 = vmatprep.subr.bf16.mxu0 0
    %4139 = vmatpush2.bf16.msra.mxu0 0
    %4140 = vmatprep.subr.bf16.mxu0 0
    %4141 = vmatpush2.bf16.msra.mxu0 0
    %4142 = vmatprep.subr.bf16.mxu0 0
    %4143 = vmatpush2.bf16.msra.mxu0 0
    %4144 = vmatprep.subr.bf16.mxu0 0
    %4145 = vmatpush2.bf16.msra.mxu0 0
    %4146 = vmatprep.subr.bf16.mxu0 0
    %4147 = vmatpush2.bf16.msra.mxu0 0
    %4148 = vmatprep.subr.bf16.mxu0 0
    %4149 = vmatpush2.bf16.msra.mxu0 0
    %4150 = vmatprep.subr.bf16.mxu0 0
    %4151 = vmatpush2.bf16.msra.mxu0 0
    %4152 = vmatprep.subr.bf16.mxu0 0
    %4153 = vmatpush2.bf16.msra.mxu0 0
    %4154 = vmatprep.mubr.bf16.mxu0 0
    %4155 = vmatmul.mubr.bf16.gmra.mxu0 %v4080
    %v4156 = vpop.f32.mrf.mxu0
    %v4157 = vadd.f32 %v1308, %v4156
    %v4158 = vpop.f32.mrf.mxu0
    %v4159 = vpop.f32.mrf.mxu0
    %v4160 = vpop.f32.mrf.mxu0
    %4161 = vdwg.mxu0
    %v4162 = vadd.f32 %v4034, %v4116
    %v4163 = vxor.u32 %v4162, 2147483648
    %v4164 = vmul.f32 %v4163, 1.442695
    %v4165 = vpow.pop %v4164
    %v4166 = vadd.f32 %v4165, 1.0
    %v4167 = vrcp.pop %v4166
    %v4168 = vmul.f32 1.0, %v4167
    %v4169 = vadd.f32 %v4036, %v4118
    %v4170 = vxor.u32 %v4169, 2147483648
    %v4171 = vmul.f32 %v4170, 1.442695
    %v4172 = vpow.pop %v4171
    %v4173 = vadd.f32 %v4172, 1.0
    %v4174 = vrcp.pop %v4173
    %v4175 = vmul.f32 1.0, %v4174
    %v4176 = vmul.f32 %v4168, %v4157
    %v4177 = vadd.f32 %v4075, %v4176
    %v4178 = vtanh.pop %v4177
    %v4179 = vsub.f32 1.0, %v4175
    %v4180 = vmul.f32 %v4179, %v4178
    %v4181 = vmul.f32 %v4175, %v3997
    %v4182 = vadd.f32 %v4180, %v4181
    %s4183 = scalar_lea.vmem %s0, 56
    %v4184 = vld [vmem:[%s4183] sm:$0xff]
    %s4185 = scalar_lea.vmem %s0, 184
    %v4186 = vld [vmem:[%s4185] sm:$0xff]
    %s4187 = scalar_lea.vmem [#allocation4], 56
    %v4188 = vld [vmem:[%s4187] sm:$0xff]
    %s4189 = scalar_lea.vmem [#allocation5], 56
    %v4190 = vld [vmem:[%s4189] sm:$0xff]
    %s4191 = scalar_lea.vmem [#allocation6], 168
    %v4192 = vld [vmem:[%s4191] sm:$0xff]
    %v4193 = vld [vmem:[%s4191 + $0x8] sm:$0xff]
    %v4194 = vld [vmem:[%s4191 + $0x10] sm:$0xff]
    %s4195 = scalar_lea.vmem [#allocation7], 56
    %v4196 = vld [vmem:[%s4195] sm:$0xff]
    %s4197 = scalar_lea.vmem [#allocation8], 56
    %v4198 = vld [vmem:[%s4197] sm:$0xff]
    %v4199 = vmul.f32 %v4186, %v4184
    %v4200 = vsub.f32 1.0, %v4186
    %v4201 = vpack.c.bf16 %v4182, %v4182
    %4202 = vmatprep.subr.bf16.mxu0 0
    %4203 = vmatpush1.bf16.msra.mxu0 %v1365
    %4204 = vmatprep.subr.bf16.mxu0 0
    %4205 = vmatpush1.bf16.msra.mxu0 %v1364
    %4206 = vmatprep.subr.bf16.mxu0 0
    %4207 = vmatpush1.bf16.msra.mxu0 %v1363
    %4208 = vmatprep.subr.bf16.mxu0 0
    %4209 = vmatpush1.bf16.msra.mxu0 %v1362
    %4210 = vmatprep.subr.bf16.mxu0 0
    %4211 = vmatpush1.bf16.msra.mxu0 %v1361
    %4212 = vmatprep.subr.bf16.mxu0 0
    %4213 = vmatpush1.bf16.msra.mxu0 %v1360
    %4214 = vmatprep.subr.bf16.mxu0 0
    %4215 = vmatpush1.bf16.msra.mxu0 %v1359
    %4216 = vmatprep.subr.bf16.mxu0 0
    %4217 = vmatpush1.bf16.msra.mxu0 %v1358
    %4218 = vmatprep.subr.bf16.mxu0 0
    %4219 = vmatpush2.bf16.msra.mxu0 0
    %4220 = vmatprep.subr.bf16.mxu0 0
    %4221 = vmatpush2.bf16.msra.mxu0 0
    %4222 = vmatprep.subr.bf16.mxu0 0
    %4223 = vmatpush2.bf16.msra.mxu0 0
    %4224 = vmatprep.subr.bf16.mxu0 0
    %4225 = vmatpush2.bf16.msra.mxu0 0
    %4226 = vmatprep.subr.bf16.mxu0 0
    %4227 = vmatpush2.bf16.msra.mxu0 0
    %4228 = vmatprep.subr.bf16.mxu0 0
    %4229 = vmatpush2.bf16.msra.mxu0 0
    %4230 = vmatprep.subr.bf16.mxu0 0
    %4231 = vmatpush2.bf16.msra.mxu0 0
    %4232 = vmatprep.subr.bf16.mxu0 0
    %4233 = vmatpush2.bf16.msra.mxu0 0
    %4234 = vmatprep.mubr.bf16.mxu0 0
    %4235 = vmatmul.mubr.bf16.gmra.mxu0 %v4201
    %v4236 = vpop.f32.mrf.mxu0
    %v4237 = vadd.f32 %v1286, %v4236
    %v4238 = vpop.f32.mrf.mxu0
    %v4239 = vpop.f32.mrf.mxu0
    %v4240 = vpop.f32.mrf.mxu0
    %4241 = vdwg.mxu0
    %v4242 = vmul.f32 %v4200, %v4237
    %v4243 = vadd.f32 %v4199, %v4242
    %v4244 = vpack.c.bf16 %v4243, %v4243
    %4245 = vmatprep.subr.bf16.mxu0 0
    %4246 = vmatpush1.bf16.msra.mxu0 %v1456
    %4247 = vmatprep.subr.bf16.mxu0 0
    %4248 = vmatpush1.bf16.msra.mxu0 %v1455
    %4249 = vmatprep.subr.bf16.mxu0 0
    %4250 = vmatpush1.bf16.msra.mxu0 %v1454
    %4251 = vmatprep.subr.bf16.mxu0 0
    %4252 = vmatpush1.bf16.msra.mxu0 %v1453
    %4253 = vmatprep.subr.bf16.mxu0 0
    %4254 = vmatpush1.bf16.msra.mxu0 %v1452
    %4255 = vmatprep.subr.bf16.mxu0 0
    %4256 = vmatpush1.bf16.msra.mxu0 %v1451
    %4257 = vmatprep.subr.bf16.mxu0 0
    %4258 = vmatpush1.bf16.msra.mxu0 %v1450
    %4259 = vmatprep.subr.bf16.mxu0 0
    %4260 = vmatpush1.bf16.msra.mxu0 %v1449
    %4261 = vmatprep.subr.bf16.mxu0 0
    %4262 = vmatpush2.bf16.msra.mxu0 0
    %4263 = vmatprep.subr.bf16.mxu0 0
    %4264 = vmatpush2.bf16.msra.mxu0 0
    %4265 = vmatprep.subr.bf16.mxu0 0
    %4266 = vmatpush2.bf16.msra.mxu0 0
    %4267 = vmatprep.subr.bf16.mxu0 0
    %4268 = vmatpush2.bf16.msra.mxu0 0
    %4269 = vmatprep.subr.bf16.mxu0 0
    %4270 = vmatpush2.bf16.msra.mxu0 0
    %4271 = vmatprep.subr.bf16.mxu0 0
    %4272 = vmatpush2.bf16.msra.mxu0 0
    %4273 = vmatprep.subr.bf16.mxu0 0
    %4274 = vmatpush2.bf16.msra.mxu0 0
    %4275 = vmatprep.subr.bf16.mxu0 0
    %4276 = vmatpush2.bf16.msra.mxu0 0
    %4277 = vmatprep.mubr.bf16.mxu0 0
    %4278 = vmatmul.mubr.bf16.gmra.mxu0 %v4244
    %v4279 = vpop.f32.mrf.mxu0
    %v4280 = vadd.f32 %v4196, %v4279
    %v4281 = vpop.f32.mrf.mxu0
    %v4282 = vpop.f32.mrf.mxu0
    %v4283 = vpop.f32.mrf.mxu0
    %4284 = vdwg.mxu0
    %v4285 = vmul.f32 %v4200, %v4280
    %v4286 = vadd.f32 %v4199, %v4285
    %v4287 = vpack.c.bf16 %v4286, %v4286
    %4288 = vmatprep.subr.bf16.mxu0 0
    %4289 = vmatpush1.bf16.msra.mxu0 %v1547
    %4290 = vmatprep.subr.bf16.mxu0 0
    %4291 = vmatpush1.bf16.msra.mxu0 %v1546
    %4292 = vmatprep.subr.bf16.mxu0 0
    %4293 = vmatpush1.bf16.msra.mxu0 %v1545
    %4294 = vmatprep.subr.bf16.mxu0 0
    %4295 = vmatpush1.bf16.msra.mxu0 %v1544
    %4296 = vmatprep.subr.bf16.mxu0 0
    %4297 = vmatpush1.bf16.msra.mxu0 %v1543
    %4298 = vmatprep.subr.bf16.mxu0 0
    %4299 = vmatpush1.bf16.msra.mxu0 %v1542
    %4300 = vmatprep.subr.bf16.mxu0 0
    %4301 = vmatpush1.bf16.msra.mxu0 %v1541
    %4302 = vmatprep.subr.bf16.mxu0 0
    %4303 = vmatpush1.bf16.msra.mxu0 %v1540
    %4304 = vmatprep.subr.bf16.mxu0 0
    %4305 = vmatpush2.bf16.msra.mxu0 0
    %4306 = vmatprep.subr.bf16.mxu0 0
    %4307 = vmatpush2.bf16.msra.mxu0 0
    %4308 = vmatprep.subr.bf16.mxu0 0
    %4309 = vmatpush2.bf16.msra.mxu0 0
    %4310 = vmatprep.subr.bf16.mxu0 0
    %4311 = vmatpush2.bf16.msra.mxu0 0
    %4312 = vmatprep.subr.bf16.mxu0 0
    %4313 = vmatpush2.bf16.msra.mxu0 0
    %4314 = vmatprep.subr.bf16.mxu0 0
    %4315 = vmatpush2.bf16.msra.mxu0 0
    %4316 = vmatprep.subr.bf16.mxu0 0
    %4317 = vmatpush2.bf16.msra.mxu0 0
    %4318 = vmatprep.subr.bf16.mxu0 0
    %4319 = vmatpush2.bf16.msra.mxu0 0
    %4320 = vmatprep.mubr.bf16.mxu0 0
    %4321 = vmatmul.mubr.bf16.gmra.mxu0 %v4287
    %v4322 = vpop.f32.mrf.mxu0
    %v4323 = vadd.f32 %v1293, %v4322
    %v4324 = vpop.f32.mrf.mxu0
    %v4325 = vpop.f32.mrf.mxu0
    %v4326 = vpop.f32.mrf.mxu0
    %4327 = vdwg.mxu0
    %v4328 = vmul.f32 %v4190, %v4323
    %v4329 = vsub.f32 1.0, %v4190
    %v4330 = vmul.f32 %v4329, %v4237
    %v4331 = vadd.f32 %v4328, %v4330
    %v4332 = vmul.f32 %v4200, %v4331
    %v4333 = vadd.f32 %v4199, %v4332
    %v4334 = vsub.f32 %v4184, %v4237
    %v4335 = vand.u32 2147483647, %v4334
    %v4336 = vsub.f32 %v4184, %v4280
    %v4337 = vand.u32 2147483647, %v4336
    %v4338 = vadd.f32 %v4335, %v4337
    %v4339 = vsub.f32 %v4184, %v4323
    %v4340 = vand.u32 2147483647, %v4339
    %v4341 = vadd.f32 %v4338, %v4340
    %v4342 = vsub.f32 %v4184, %v4331
    %v4343 = vand.u32 2147483647, %v4342
    %v4344 = vadd.f32 %v4341, %v4343
    %v4345 = vmul.f32 %v4344, %v4198
    %v4346 = vadd.f32 %v3992, %v4345
    %s4347 = scalar_lea.vmem %s16, 56
    %4348 = vst [vmem:[%s4347] sm:$0xff] %v4331
    %s4349 = scalar_lea.vmem %s17, 56
    %4350 = vst [vmem:[%s4349] sm:$0xff] %v4333
    %v4351 = vmul.f32 %v4182, %v4188
    %v4352 = vpack.c.bf16 %v4333, %v4333
    %4353 = vmatprep.subr.bf16.mxu0 %v1721
    %4354 = vmatpush1.bf16.msra.mxu0 %v1720
    %4355 = vmatprep.subr.bf16.mxu0 %v1718
    %4356 = vmatpush1.bf16.msra.mxu0 %v1717
    %4357 = vmatprep.subr.bf16.mxu0 %v1715
    %4358 = vmatpush1.bf16.msra.mxu0 %v1714
    %4359 = vmatprep.subr.bf16.mxu0 %v1712
    %4360 = vmatpush1.bf16.msra.mxu0 %v1711
    %4361 = vmatprep.subr.bf16.mxu0 %v1709
    %4362 = vmatpush1.bf16.msra.mxu0 %v1708
    %4363 = vmatprep.subr.bf16.mxu0 %v1706
    %4364 = vmatpush1.bf16.msra.mxu0 %v1705
    %4365 = vmatprep.subr.bf16.mxu0 %v1703
    %4366 = vmatpush1.bf16.msra.mxu0 %v1702
    %4367 = vmatprep.subr.bf16.mxu0 %v1700
    %4368 = vmatpush1.bf16.msra.mxu0 %v1699
    %4369 = vmatprep.subr.bf16.mxu0 0
    %4370 = vmatpush2.bf16.msra.mxu0 0
    %4371 = vmatprep.subr.bf16.mxu0 0
    %4372 = vmatpush2.bf16.msra.mxu0 0
    %4373 = vmatprep.subr.bf16.mxu0 0
    %4374 = vmatpush2.bf16.msra.mxu0 0
    %4375 = vmatprep.subr.bf16.mxu0 0
    %4376 = vmatpush2.bf16.msra.mxu0 0
    %4377 = vmatprep.subr.bf16.mxu0 0
    %4378 = vmatpush2.bf16.msra.mxu0 0
    %4379 = vmatprep.subr.bf16.mxu0 0
    %4380 = vmatpush2.bf16.msra.mxu0 0
    %4381 = vmatprep.subr.bf16.mxu0 0
    %4382 = vmatpush2.bf16.msra.mxu0 0
    %4383 = vmatprep.subr.bf16.mxu0 0
    %4384 = vmatpush2.bf16.msra.mxu0 0
    %4385 = vmatprep.mubr.bf16.mxu0 0
    %4386 = vmatmul.mubr.bf16.gmra.mxu0 %v4352
    %v4387 = vpop.f32.mrf.mxu0
    %v4388 = vadd.f32 %v4192, %v4387
    %v4389 = vpop.f32.mrf.mxu0
    %v4390 = vadd.f32 %v4193, %v4389
    %v4391 = vpop.f32.mrf.mxu0
    %v4392 = vpop.f32.mrf.mxu0
    %4393 = vdwg.mxu0
    %4394 = vmatprep.subr.bf16.mxu0 0
    %4395 = vmatpush1.bf16.msra.mxu0 %v1722
    %4396 = vmatprep.subr.bf16.mxu0 0
    %4397 = vmatpush1.bf16.msra.mxu0 %v1719
    %4398 = vmatprep.subr.bf16.mxu0 0
    %4399 = vmatpush1.bf16.msra.mxu0 %v1716
    %4400 = vmatprep.subr.bf16.mxu0 0
    %4401 = vmatpush1.bf16.msra.mxu0 %v1713
    %4402 = vmatprep.subr.bf16.mxu0 0
    %4403 = vmatpush1.bf16.msra.mxu0 %v1710
    %4404 = vmatprep.subr.bf16.mxu0 0
    %4405 = vmatpush1.bf16.msra.mxu0 %v1707
    %4406 = vmatprep.subr.bf16.mxu0 0
    %4407 = vmatpush1.bf16.msra.mxu0 %v1704
    %4408 = vmatprep.subr.bf16.mxu0 0
    %4409 = vmatpush1.bf16.msra.mxu0 %v1701
    %4410 = vmatprep.subr.bf16.mxu0 0
    %4411 = vmatpush2.bf16.msra.mxu0 0
    %4412 = vmatprep.subr.bf16.mxu0 0
    %4413 = vmatpush2.bf16.msra.mxu0 0
    %4414 = vmatprep.subr.bf16.mxu0 0
    %4415 = vmatpush2.bf16.msra.mxu0 0
    %4416 = vmatprep.subr.bf16.mxu0 0
    %4417 = vmatpush2.bf16.msra.mxu0 0
    %4418 = vmatprep.subr.bf16.mxu0 0
    %4419 = vmatpush2.bf16.msra.mxu0 0
    %4420 = vmatprep.subr.bf16.mxu0 0
    %4421 = vmatpush2.bf16.msra.mxu0 0
    %4422 = vmatprep.subr.bf16.mxu0 0
    %4423 = vmatpush2.bf16.msra.mxu0 0
    %4424 = vmatprep.subr.bf16.mxu0 0
    %4425 = vmatpush2.bf16.msra.mxu0 0
    %4426 = vmatprep.mubr.bf16.mxu0 0
    %4427 = vmatmul.mubr.bf16.gmra.mxu0 %v4352
    %v4428 = vpop.f32.mrf.mxu0
    %v4429 = vadd.f32 %v4194, %v4428
    %v4430 = vpop.f32.mrf.mxu0
    %v4431 = vpop.f32.mrf.mxu0
    %v4432 = vpop.f32.mrf.mxu0
    %4433 = vdwg.mxu0
    %v4434 = vpack.c.bf16 %v4351, %v4351
    %4435 = vmatprep.subr.bf16.mxu0 %v1931
    %4436 = vmatpush1.bf16.msra.mxu0 %v1930
    %4437 = vmatprep.subr.bf16.mxu0 %v1928
    %4438 = vmatpush1.bf16.msra.mxu0 %v1927
    %4439 = vmatprep.subr.bf16.mxu0 %v1925
    %4440 = vmatpush1.bf16.msra.mxu0 %v1924
    %4441 = vmatprep.subr.bf16.mxu0 %v1922
    %4442 = vmatpush1.bf16.msra.mxu0 %v1921
    %4443 = vmatprep.subr.bf16.mxu0 %v1919
    %4444 = vmatpush1.bf16.msra.mxu0 %v1918
    %4445 = vmatprep.subr.bf16.mxu0 %v1916
    %4446 = vmatpush1.bf16.msra.mxu0 %v1915
    %4447 = vmatprep.subr.bf16.mxu0 %v1913
    %4448 = vmatpush1.bf16.msra.mxu0 %v1912
    %4449 = vmatprep.subr.bf16.mxu0 %v1910
    %4450 = vmatpush1.bf16.msra.mxu0 %v1909
    %4451 = vmatprep.subr.bf16.mxu0 0
    %4452 = vmatpush2.bf16.msra.mxu0 0
    %4453 = vmatprep.subr.bf16.mxu0 0
    %4454 = vmatpush2.bf16.msra.mxu0 0
    %4455 = vmatprep.subr.bf16.mxu0 0
    %4456 = vmatpush2.bf16.msra.mxu0 0
    %4457 = vmatprep.subr.bf16.mxu0 0
    %4458 = vmatpush2.bf16.msra.mxu0 0
    %4459 = vmatprep.subr.bf16.mxu0 0
    %4460 = vmatpush2.bf16.msra.mxu0 0
    %4461 = vmatprep.subr.bf16.mxu0 0
    %4462 = vmatpush2.bf16.msra.mxu0 0
    %4463 = vmatprep.subr.bf16.mxu0 0
    %4464 = vmatpush2.bf16.msra.mxu0 0
    %4465 = vmatprep.subr.bf16.mxu0 0
    %4466 = vmatpush2.bf16.msra.mxu0 0
    %4467 = vmatprep.mubr.bf16.mxu0 0
    %4468 = vmatmul.mubr.bf16.gmra.mxu0 %v4434
    %v4469 = vpop.f32.mrf.mxu0
    %v4470 = vadd.f32 %v1300, %v4469
    %v4471 = vpop.f32.mrf.mxu0
    %v4472 = vadd.f32 %v1304, %v4471
    %v4473 = vpop.f32.mrf.mxu0
    %v4474 = vpop.f32.mrf.mxu0
    %4475 = vdwg.mxu0
    %4476 = vmatprep.subr.bf16.mxu0 0
    %4477 = vmatpush1.bf16.msra.mxu0 %v1932
    %4478 = vmatprep.subr.bf16.mxu0 0
    %4479 = vmatpush1.bf16.msra.mxu0 %v1929
    %4480 = vmatprep.subr.bf16.mxu0 0
    %4481 = vmatpush1.bf16.msra.mxu0 %v1926
    %4482 = vmatprep.subr.bf16.mxu0 0
    %4483 = vmatpush1.bf16.msra.mxu0 %v1923
    %4484 = vmatprep.subr.bf16.mxu0 0
    %4485 = vmatpush1.bf16.msra.mxu0 %v1920
    %4486 = vmatprep.subr.bf16.mxu0 0
    %4487 = vmatpush1.bf16.msra.mxu0 %v1917
    %4488 = vmatprep.subr.bf16.mxu0 0
    %4489 = vmatpush1.bf16.msra.mxu0 %v1914
    %4490 = vmatprep.subr.bf16.mxu0 0
    %4491 = vmatpush1.bf16.msra.mxu0 %v1911
    %4492 = vmatprep.subr.bf16.mxu0 0
    %4493 = vmatpush2.bf16.msra.mxu0 0
    %4494 = vmatprep.subr.bf16.mxu0 0
    %4495 = vmatpush2.bf16.msra.mxu0 0
    %4496 = vmatprep.subr.bf16.mxu0 0
    %4497 = vmatpush2.bf16.msra.mxu0 0
    %4498 = vmatprep.subr.bf16.mxu0 0
    %4499 = vmatpush2.bf16.msra.mxu0 0
    %4500 = vmatprep.subr.bf16.mxu0 0
    %4501 = vmatpush2.bf16.msra.mxu0 0
    %4502 = vmatprep.subr.bf16.mxu0 0
    %4503 = vmatpush2.bf16.msra.mxu0 0
    %4504 = vmatprep.subr.bf16.mxu0 0
    %4505 = vmatpush2.bf16.msra.mxu0 0
    %4506 = vmatprep.subr.bf16.mxu0 0
    %4507 = vmatpush2.bf16.msra.mxu0 0
    %4508 = vmatprep.mubr.bf16.mxu0 0
    %4509 = vmatmul.mubr.bf16.gmra.mxu0 %v4434
    %v4510 = vpop.f32.mrf.mxu0
    %v4511 = vadd.f32 %v1308, %v4510
    %v4512 = vpop.f32.mrf.mxu0
    %v4513 = vpop.f32.mrf.mxu0
    %v4514 = vpop.f32.mrf.mxu0
    %4515 = vdwg.mxu0
    %v4516 = vadd.f32 %v4388, %v4470
    %v4517 = vxor.u32 %v4516, 2147483648
    %v4518 = vmul.f32 %v4517, 1.442695
    %v4519 = vpow.pop %v4518
    %v4520 = vadd.f32 %v4519, 1.0
    %v4521 = vrcp.pop %v4520
    %v4522 = vmul.f32 1.0, %v4521
    %v4523 = vadd.f32 %v4390, %v4472
    %v4524 = vxor.u32 %v4523, 2147483648
    %v4525 = vmul.f32 %v4524, 1.442695
    %v4526 = vpow.pop %v4525
    %v4527 = vadd.f32 %v4526, 1.0
    %v4528 = vrcp.pop %v4527
    %v4529 = vmul.f32 1.0, %v4528
    %v4530 = vmul.f32 %v4522, %v4511
    %v4531 = vadd.f32 %v4429, %v4530
    %v4532 = vtanh.pop %v4531
    %v4533 = vsub.f32 1.0, %v4529
    %v4534 = vmul.f32 %v4533, %v4532
    %v4535 = vmul.f32 %v4529, %v4351
    %v4536 = vadd.f32 %v4534, %v4535
    %4537 = vst [vmem:[#allocation2] sm:$0xff] %v4536
    %4538 = vst [vmem:[#allocation3] sm:$0xff] %v4346
    // Predicated region
    $region70: #{mgru_rbf_forward.1} parent=1 // pred_check
      %p4539 = pneg %p58
    $region71: #{mgru_rbf_forward.1} parent=1 // pred_check_branch
      %4541 = sbr.rel (%p4539) target = $region73
    $region72: #{mgru_rbf_forward.1} parent=1 // pred_region
      %4542 = vadd.xlane.f32.xlu0 %v4346
      %v4543 = vpop.xlane.xlu0 %4542
      %v4544 = vrot.slane %v4543, 4
      %v4545 = vadd.f32 %v4543, %v4544
      %v4546 = vrot.slane %v4545, 2
      %v4547 = vadd.f32 %v4545, %v4546
      %v4548 = vrot.slane %v4547, 1
      %v4549 = vadd.f32 %v4547, %v4548
      %s4550 = vtos %v4549
      %v4551 = vstv %s4550
      %vm4552 = vcmask 0
      %4553 = vst.msk [vmem:[#allocation9] sm:$0x1] %vm4552, %v4551
    $region73: #{mgru_rbf_forward.1} parent=1 // pred_fallthru
      _
    // Predicated region
    $region74: #{mgru_rbf_forward.1} parent=1 // pred_check
      _
    $region75: #{mgru_rbf_forward.1} parent=1 // pred_check_branch
      %4555 = sbr.rel (0) target = $region77
    $region76: #{mgru_rbf_forward.1} parent=1 // pred_region
      _
    $region77: #{mgru_rbf_forward.1} parent=1 // pred_fallthru
      _
    // Predicated region
    $region78: #{mgru_rbf_forward.1} parent=1 // pred_check
      _
    $region79: #{mgru_rbf_forward.1} parent=1 // pred_check_branch
      %4557 = sbr.rel (0) target = $region81
    $region80: #{mgru_rbf_forward.1} parent=1 // pred_region
      _
    $region81: #{mgru_rbf_forward.1} parent=1 // pred_fallthru
      _
    // Predicated region
    $region82: #{mgru_rbf_forward.1} parent=1 // pred_check
      _
    $region83: #{mgru_rbf_forward.1} parent=1 // pred_check_branch
      %4559 = sbr.rel (0) target = $region85
    $region84: #{mgru_rbf_forward.1} parent=1 // pred_region
      %s4561 = ssub.s32 16, 16
      %4562 = vsyncadd [#allocation10], %s4561
      %s4564 = sshll.u32 [#allocation9], 4
      %s4565 = int_to_ptr.vmem [resolvable:$true] %s4564
      %4567 = dma.vmem_to_hbm [thread:$0]  %s4565, 16, %s18, [#allocation10]
    $region85: #{mgru_rbf_forward.1} parent=1 // pred_fallthru
      _
    // Predicated region
    $region86: #{mgru_rbf_forward.1} parent=1 // pred_check
      _
    $region87: #{mgru_rbf_forward.1} parent=1 // pred_check_branch
      %4569 = sbr.rel (0) target = $region89
    $region88: #{mgru_rbf_forward.1} parent=1 // pred_region
      _
    $region89: #{mgru_rbf_forward.1} parent=1 // pred_fallthru
      _
    // Predicated region
    $region90: #{mgru_rbf_forward.1} parent=1 // pred_check
      _
    $region91: #{mgru_rbf_forward.1} parent=1 // pred_check_branch
      %4571 = sbr.rel (0) target = $region93
    $region92: #{mgru_rbf_forward.1} parent=1 // pred_region
      _
    $region93: #{mgru_rbf_forward.1} parent=1 // pred_fallthru
      _
    // Predicated region
    $region94: #{mgru_rbf_forward.1} parent=1 // pred_check
      _
    $region95: #{mgru_rbf_forward.1} parent=1 // pred_check_branch
      %4573 = sbr.rel (0) target = $region97
    $region96: #{mgru_rbf_forward.1} parent=1 // pred_region
      %4574 = dma.done [#allocation10], 16
    $region97: #{mgru_rbf_forward.1} parent=1 // pred_fallthru
      _
    %4575 = vsyncpa [#allocation10], 1

</llo_original>
